<compile_context>
chip_gen: v6e
topology: v6e:2x2x1
jax: 0.10.0
libtpu: 0.0.40
codegen_flags: <defaults>
</compile_context>

<pallas_src>
import functools

import jax
import jax.numpy as jnp
from jax import lax
from jax.experimental import pallas as pl
from jax.experimental.pallas import tpu as pltpu

# Model constants (from the PyTorch module).
K1, S1 = 8, 4
K2, S2 = 4, 2
K3, S3 = 3, 1
C1, C2, C3 = 32, 64, 64
FC_DIM = 512
NEG_SLOPE = 0.01  # F.leaky_relu default


def conv_shape(v, k, s, p=0):
    return (v + 2 * p - k) // s + 1


def _round_up(v, m):
    return ((v + m - 1) // m) * m


# ---------------------------------------------------------------------------
# Fused forward kernel
# ---------------------------------------------------------------------------
def fused_forward_kernel(p1x_ref, w1_ref, b1_ref, w2_ref, b2_ref, w3_ref, b3_ref,
                         fc1w_ref, fc1b_ref, fc2b_ref, encb_ref,
                         fc2w_hbm, encw_hbm,
                         out_ref,
                         p2_s, a2_s, fc2w_v, encw_v, dma_sem,
                         *, n_g, m2p, n_k3, b_pad):
    f32, bf16 = jnp.float32, jnp.bfloat16

    # Kick off the FC-tail weight DMAs immediately; they overlap the conv stack.
    cp_fc2 = pltpu.make_async_copy(fc2w_hbm, fc2w_v, dma_sem.at[0])
    cp_enc = pltpu.make_async_copy(encw_hbm, encw_v, dma_sem.at[1])
    cp_fc2.start()
    cp_enc.start()

    def leaky(v):
        return jnp.maximum(v, NEG_SLOPE * v)

    # conv1 as 4 block-diagonal GEMMs (N=128); each writes a full, lane-aligned
    # 128-lane column slab of the conv2 patch matrix.  Bias broadcast hoisted.
    gw = K2 * C1                                          # 128-lane group width
    b1b = jnp.broadcast_to(b1_ref[...], (m2p, gw))
    w1 = w1_ref[...]
    for g in range(n_g):
        a1 = jnp.dot(p1x_ref[g * m2p:(g + 1) * m2p, :], w1,
                     preferred_element_type=f32)          # (m2p, 128)
        p2_s[:, g * gw:(g + 1) * gw] = leaky(a1 + b1b).astype(bf16)

    # conv2: one wide GEMM on the VMEM-resident bf16 patch matrix.
    a2 = jnp.dot(p2_s[...], w2_ref[...], preferred_element_type=f32)
    a2_s[...] = leaky(a2 + b2_ref[...])

    # conv3: its 3x3 kernel spans the whole 3x3 conv2 output, so it is 9
    # MXU-accumulating dots over sublane-aligned row blocks (no patch scatter).
    acc3 = jnp.broadcast_to(b3_ref[...], (b_pad, C3))
    for j in range(n_k3):
        acc3 = acc3 + jnp.dot(a2_s[j * b_pad:(j + 1) * b_pad, :].astype(bf16),
                              w3_ref[j * C2:(j + 1) * C2, :],
                              preferred_element_type=f32)
    a3 = leaky(acc3)                                      # (b_pad, C3) == flatten

    # Fully connected head (relu, relu, linear).
    h = jnp.dot(a3.astype(bf16), fc1w_ref[...], preferred_element_type=f32)
    h = jnp.maximum(h + fc1b_ref[...], 0.0)
    cp_fc2.wait()
    h = jnp.dot(h.astype(bf16), fc2w_v[...], preferred_element_type=f32)
    h = jnp.maximum(h + fc2b_ref[...], 0.0)
    cp_enc.wait()
    out = jnp.dot(h.astype(bf16), encw_v[...], preferred_element_type=f32)
    out_ref[...] = out + encb_ref[...]                    # full (b_pad, 512) store


# ---------------------------------------------------------------------------
# One-time weight packing (outside the hot path)
# ---------------------------------------------------------------------------
def pack_params(params):
    """Pack torch-layout weights into GEMM-ready (K, N) bf16 matrices."""
    bf16 = jnp.bfloat16

    def conv_pack(w):  # (O, I, kh, kw) -> rows ordered (kh, kw, I), cols = O
        return jnp.transpose(w, (2, 3, 1, 0)).reshape(-1, w.shape[0]).astype(bf16)

    # conv1: 4-wide block-diagonal pack -> one N=128 GEMM per conv2-kernel row.
    w1 = params["conv1_w"].reshape(params["conv1_w"].shape[0], -1).T  # (256, 32)
    kin = w1.shape[0]
    w1_bd = jnp.zeros((K2 * kin, K2 * C1), jnp.float32)
    for q in range(K2):
        w1_bd = w1_bd.at[q * kin:(q + 1) * kin, q * C1:(q + 1) * C1].set(w1)

    return {
        "w1_bd": w1_bd.astype(bf16),
        "b1": jnp.tile(params["conv1_b"], K2).reshape(1, -1).astype(jnp.float32),
        "w2": conv_pack(params["conv2_w"]),
        "b2": params["conv2_b"].reshape(1, -1).astype(jnp.float32),
        "w3": conv_pack(params["conv3_w"]),
        "b3": params["conv3_b"].reshape(1, -1).astype(jnp.float32),
        # conv3 output is 1x1 spatial, so torch's NCHW flatten == channel order.
        "fc1w": params["fc1_w"].T.astype(bf16),
        "fc1b": params["fc1_b"].reshape(1, -1).astype(jnp.float32),
        "fc2w": params["fc2_w"].T.astype(bf16),
        "fc2b": params["fc2_b"].reshape(1, -1).astype(jnp.float32),
        "encw": params["enc_w"].T.astype(bf16),
        "encb": params["enc_b"].reshape(1, -1).astype(jnp.float32),
    }


# ---------------------------------------------------------------------------
# Input-side im2col (pure data movement, fused by XLA), grouped 4-wide
# ---------------------------------------------------------------------------
def _conv1_patches_grouped(x, oh1, ow1, oh2, ow2, b_pad, m2p):
    """Conv1 im2col grouped for the block-diagonal conv1 GEMM.

    Row block g (height m2p, 16-aligned) holds conv2-kernel row kh2=g with rows
    ordered (oh2, ow2, padded_batch); its K2 column groups q=kw2 each carry the
    conv1 patch columns ordered (c, kh1, kw1) to match conv1_w.reshape(32,-1)."""
    B, C = x.shape[0], x.shape[1]
    cols = []
    for kh in range(K1):
        for kw in range(K1):
            cols.append(x[:, :, kh:kh + S1 * oh1:S1, kw:kw + S1 * ow1:S1])
    p = jnp.stack(cols, axis=2)                      # (B, C, K1*K1, OH1, OW1)
    p = p.reshape(B, C * K1 * K1, oh1, ow1)
    p = p.transpose(0, 2, 3, 1)                      # (B, OH1, OW1, C*K1*K1)

    m2 = oh2 * ow2 * b_pad
    groups = []
    for kh2 in range(K2):
        qblocks = []
        for kw2 in range(K2):
            blk = p[:, kh2:kh2 + S2 * oh2:S2, kw2:kw2 + S2 * ow2:S2, :]
            blk = blk.transpose(1, 2, 0, 3)          # (OH2, OW2, B, C*K1*K1)
            blk = jnp.pad(blk, ((0, 0), (0, 0), (0, b_pad - B), (0, 0)))
            qblocks.append(blk.reshape(m2, -1))      # (m2, 256)
        grp = jnp.concatenate(qblocks, axis=1)       # (m2, K2*256)
        groups.append(jnp.pad(grp, ((0, m2p - m2), (0, 0))))
    return jnp.concatenate(groups, axis=0).astype(jnp.bfloat16)   # (K2*m2p, K2*256)


# ---------------------------------------------------------------------------
# Forward wrapper (single fused pallas_call)
# ---------------------------------------------------------------------------
@jax.jit
def predictor_forward(packed, inputs):
    B, _, H, W = inputs.shape
    oh1, ow1 = conv_shape(H, K1, S1), conv_shape(W, K1, S1)
    oh2, ow2 = conv_shape(oh1, K2, S2), conv_shape(ow1, K2, S2)
    oh3, ow3 = conv_shape(oh2, K3, S3), conv_shape(ow2, K3, S3)
    # TODO(synk): the accumulating conv3 assumes its kernel spans the whole
    # conv2 output (1x1 conv3 output); larger spatial sizes need a gather loop.
    assert oh3 == 1 and ow3 == 1 and K3 == oh2 and K3 == ow2

    b_pad = _round_up(B, 8)
    m2 = oh2 * ow2 * b_pad              # rows of the conv2 patch matrix
    m2p = _round_up(m2, 16)             # bf16 sublane-tile aligned group height
    n_k2, n_k3 = K2 * K2, K3 * K3
    n_g = K2                            # block-diagonal groups (one per kh2)

    p1x = _conv1_patches_grouped(inputs.astype(jnp.float32),
                                 oh1, ow1, oh2, ow2, b_pad, m2p)

    args = (p1x, packed["w1_bd"], packed["b1"], packed["w2"], packed["b2"],
            packed["w3"], packed["b3"], packed["fc1w"], packed["fc1b"],
            packed["fc2b"], packed["encb"], packed["fc2w"], packed["encw"])

    in_specs = ([pl.BlockSpec(a.shape, lambda i: (0, 0)) for a in args[:-2]]
                + [pl.BlockSpec(memory_space=pl.ANY),     # fc2w: manual DMA
                   pl.BlockSpec(memory_space=pl.ANY)])    # encw: manual DMA

    kernel = functools.partial(fused_forward_kernel, n_g=n_g, m2p=m2p,
                               n_k3=n_k3, b_pad=b_pad)

    out = pl.pallas_call(
        kernel,
        grid=(1,),  # TODO(synk): add a 'parallel' row-block grid axis (v7x
                    # megacore) once the batch is non-toy; at B=2 one step is optimal.
        in_specs=in_specs,
        out_specs=pl.BlockSpec((b_pad, FC_DIM), lambda i: (0, 0)),
        out_shape=jax.ShapeDtypeStruct((b_pad, FC_DIM), jnp.float32),
        scratch_shapes=[
            pltpu.VMEM((m2p, n_k2 * C1), jnp.bfloat16),   # conv2 patch matrix
            pltpu.VMEM((m2p, C2), jnp.float32),           # conv2 output
            pltpu.VMEM(packed["fc2w"].shape, jnp.bfloat16),
            pltpu.VMEM(packed["encw"].shape, jnp.bfloat16),
            pltpu.SemaphoreType.DMA((2,)),
        ],
        compiler_params=pltpu.CompilerParams(
            dimension_semantics=("arbitrary",)),
    )(*args)
    return out[:B, :]


# ---------------------------------------------------------------------------
# Deterministic synthetic parameters
# ---------------------------------------------------------------------------
def init_params(key, state_shape):
    c, w, h = state_shape
    c1w, c1h = conv_shape(w, K1, S1), conv_shape(h, K1, S1)
    c2w, c2h = conv_shape(c1w, K2, S2), conv_shape(c1h, K2, S2)
    c3w, c3h = conv_shape(c2w, K3, S3), conv_shape(c2h, K3, S3)
    flatten = c3w * c3h * C3

    ks = jax.random.split(key, 12)

    def wi(k, shape, fan_in):
        return jax.random.normal(k, shape, jnp.float32) * jnp.sqrt(2.0 / fan_in)

    def bi(k, shape):
        return 0.1 * jax.random.normal(k, shape, jnp.float32)

    # TODO(synk): torch uses orthogonal_ init with gain sqrt(2); init values do
    # not affect forward-pass semantics, so a scaled normal is used here.
    return {
        "conv1_w": wi(ks[0], (C1, c, K1, K1), c * K1 * K1),
        "conv1_b": bi(ks[1], (C1,)),
        "conv2_w": wi(ks[2], (C2, C1, K2, K2), C1 * K2 * K2),
        "conv2_b": bi(ks[3], (C2,)),
        "conv3_w": wi(ks[4], (C3, C2, K3, K3), C2 * K3 * K3),
        "conv3_b": bi(ks[5], (C3,)),
        "fc1_w": wi(ks[6], (FC_DIM, flatten), flatten),
        "fc1_b": bi(ks[7], (FC_DIM,)),
        "fc2_w": wi(ks[8], (FC_DIM, FC_DIM), FC_DIM),
        "fc2_b": bi(ks[9], (FC_DIM,)),
        "enc_w": wi(ks[10], (FC_DIM, FC_DIM), FC_DIM),
        "enc_b": bi(ks[11], (FC_DIM,)),
    }


# ---------------------------------------------------------------------------
# Pure-JAX f32 reference (for correctness check)
# ---------------------------------------------------------------------------
def reference_forward(params, inputs):
    hi = lax.Precision.HIGHEST

    def conv(x, w, b, s):
        y = lax.conv_general_dilated(x, w, (s, s), "VALID",
                                     dimension_numbers=("NCHW", "OIHW", "NCHW"),
                                     precision=hi)
        return jax.nn.leaky_relu(y + b.reshape(1, -1, 1, 1), NEG_SLOPE)

    x = conv(inputs, params["conv1_w"], params["conv1_b"], S1)
    x = conv(x, params["conv2_w"], params["conv2_b"], S2)
    x = conv(x, params["conv3_w"], params["conv3_b"], S3)
    x = x.reshape(x.shape[0], -1)

    def lin(h, w, b):
        return jnp.dot(h, w.T, precision=hi) + b

    h = jax.nn.relu(lin(x, params["fc1_w"], params["fc1_b"]))
    h = jax.nn.relu(lin(h, params["fc2_w"], params["fc2_b"]))
    return lin(h, params["enc_w"], params["enc_b"])


# ---------------------------------------------------------------------------
if __name__ == "__main__":
    key = jax.random.PRNGKey(0)
    state_shape = (4, 36, 36)   # (C, W, H): smallest spatial that survives the conv stack
    batch = 2

    k_par, k_inp = jax.random.split(key)
    params = init_params(k_par, state_shape)
    inputs = jax.random.uniform(k_inp, (batch,) + state_shape, jnp.float32)

    packed = pack_params(params)            # one-time weight packing
    out = predictor_forward(packed, inputs)
    out = jax.block_until_ready(out)

    ref = reference_forward(params, inputs)
    assert out.shape == (batch, FC_DIM)
    max_err = float(jnp.max(jnp.abs(out - ref)))
    assert jnp.allclose(out, ref, rtol=2e-2, atol=2e-2), f"max abs err {max_err}"
    print("KERNEL_OK")
</pallas_src>

<mosaic_0001>
module attributes {stable_mosaic.version = 11 : i64} {
  func.func @fused_forward_kernel(%arg0: i32, %arg1: memref<320x1024xbf16, #tpu.memory_space<vmem>>, %arg2: memref<1024x128xbf16, #tpu.memory_space<vmem>>, %arg3: memref<1x128xf32, #tpu.memory_space<vmem>>, %arg4: memref<512x64xbf16, #tpu.memory_space<vmem>>, %arg5: memref<1x64xf32, #tpu.memory_space<vmem>>, %arg6: memref<576x64xbf16, #tpu.memory_space<vmem>>, %arg7: memref<1x64xf32, #tpu.memory_space<vmem>>, %arg8: memref<64x512xbf16, #tpu.memory_space<vmem>>, %arg9: memref<1x512xf32, #tpu.memory_space<vmem>>, %arg10: memref<1x512xf32, #tpu.memory_space<vmem>>, %arg11: memref<1x512xf32, #tpu.memory_space<vmem>>, %arg12: memref<512x512xbf16, #tpu.memory_space<any>>, %arg13: memref<512x512xbf16, #tpu.memory_space<any>>, %arg14: memref<8x512xf32, #tpu.memory_space<vmem>>, %arg15: memref<80x512xbf16, #tpu.memory_space<vmem>>, %arg16: memref<80x64xf32, #tpu.memory_space<vmem>>, %arg17: memref<512x512xbf16, #tpu.memory_space<vmem>>, %arg18: memref<512x512xbf16, #tpu.memory_space<vmem>>, %arg19: memref<2x!tpu.dma_semaphore, #tpu.memory_space<semaphore_mem>>) attributes {dimension_semantics = [#tpu.dimension_semantics<arbitrary>], iteration_bounds = array<i64: 1>, scalar_prefetch = 0 : i64, scratch_operands = 5 : i64, tpu.core_type = #tpu.core_type<tc>, window_params = [{pipeline_mode = #tpu.pipeline_mode<synchronous>, transform_indices = @transform_0, window_bounds = array<i64: 320, 1024>}, {pipeline_mode = #tpu.pipeline_mode<synchronous>, transform_indices = @transform_1, window_bounds = array<i64: 1024, 128>}, {pipeline_mode = #tpu.pipeline_mode<synchronous>, transform_indices = @transform_2, window_bounds = array<i64: 1, 128>}, {pipeline_mode = #tpu.pipeline_mode<synchronous>, transform_indices = @transform_3, window_bounds = array<i64: 512, 64>}, {pipeline_mode = #tpu.pipeline_mode<synchronous>, transform_indices = @transform_4, window_bounds = array<i64: 1, 64>}, {pipeline_mode = #tpu.pipeline_mode<synchronous>, transform_indices = @transform_5, window_bounds = array<i64: 576, 64>}, {pipeline_mode = #tpu.pipeline_mode<synchronous>, transform_indices = @transform_6, window_bounds = array<i64: 1, 64>}, {pipeline_mode = #tpu.pipeline_mode<synchronous>, transform_indices = @transform_7, window_bounds = array<i64: 64, 512>}, {pipeline_mode = #tpu.pipeline_mode<synchronous>, transform_indices = @transform_8, window_bounds = array<i64: 1, 512>}, {pipeline_mode = #tpu.pipeline_mode<synchronous>, transform_indices = @transform_9, window_bounds = array<i64: 1, 512>}, {pipeline_mode = #tpu.pipeline_mode<synchronous>, transform_indices = @transform_10, window_bounds = array<i64: 1, 512>}, {}, {}, {pipeline_mode = #tpu.pipeline_mode<synchronous>, transform_indices = @transform_13, window_bounds = array<i64: 8, 512>}]} {
    %c0_i32 = arith.constant 0 : i32
    %0 = tpu.memref_slice %arg19[%c0_i32] : memref<2x!tpu.dma_semaphore, #tpu.memory_space<semaphore_mem>> -> memref<1x!tpu.dma_semaphore, #tpu.memory_space<semaphore_mem>>
    %1 = tpu.memref_squeeze %0 : memref<1x!tpu.dma_semaphore, #tpu.memory_space<semaphore_mem>> -> memref<!tpu.dma_semaphore, #tpu.memory_space<semaphore_mem>>
    tpu.enqueue_dma source(%arg12 : memref<512x512xbf16, #tpu.memory_space<any>>) target(%arg17 : memref<512x512xbf16, #tpu.memory_space<vmem>>) target_semaphore(%1 : memref<!tpu.dma_semaphore, #tpu.memory_space<semaphore_mem>>)
    %c1_i32 = arith.constant 1 : i32
    %2 = tpu.memref_slice %arg19[%c1_i32] : memref<2x!tpu.dma_semaphore, #tpu.memory_space<semaphore_mem>> -> memref<1x!tpu.dma_semaphore, #tpu.memory_space<semaphore_mem>>
    %3 = tpu.memref_squeeze %2 : memref<1x!tpu.dma_semaphore, #tpu.memory_space<semaphore_mem>> -> memref<!tpu.dma_semaphore, #tpu.memory_space<semaphore_mem>>
    tpu.enqueue_dma source(%arg13 : memref<512x512xbf16, #tpu.memory_space<any>>) target(%arg18 : memref<512x512xbf16, #tpu.memory_space<vmem>>) target_semaphore(%3 : memref<!tpu.dma_semaphore, #tpu.memory_space<semaphore_mem>>)
    %c0 = arith.constant 0 : index
    %c0_0 = arith.constant 0 : index
    %4 = vector.load %arg3[%c0, %c0_0] : memref<1x128xf32, #tpu.memory_space<vmem>>, vector<1x128xf32>
    %5 = vector.shape_cast %4 : vector<1x128xf32> to vector<1x128xf32>
    %6 = vector.broadcast %5 : vector<1x128xf32> to vector<80x128xf32>
    %c0_1 = arith.constant 0 : index
    %c0_2 = arith.constant 0 : index
    %7 = vector.load %arg2[%c0_1, %c0_2] : memref<1024x128xbf16, #tpu.memory_space<vmem>>, vector<1024x128xbf16>
    %c0_3 = arith.constant 0 : index
    %c0_4 = arith.constant 0 : index
    %8 = vector.load %arg1[%c0_3, %c0_4] : memref<320x1024xbf16, #tpu.memory_space<vmem>>, vector<80x1024xbf16>
    %cst = arith.constant dense<0.000000e+00> : vector<80x128xf32>
    %9 = tpu.matmul %8, %7, %cst {dimension_numbers = #tpu.dot_dimension_numbers<[1], [0], [0], [1], [0, 0, 1, 1], [], []>} : vector<80x1024xbf16>, vector<1024x128xbf16>, vector<80x128xf32> -> vector<80x128xf32>
    %10 = arith.addf %9, %6 : vector<80x128xf32>
    %cst_5 = arith.constant 0.00999999977 : f32
    %11 = vector.broadcast %cst_5 : f32 to vector<80x128xf32>
    %12 = arith.mulf %11, %10 : vector<80x128xf32>
    %13 = arith.maximumf %10, %12 : vector<80x128xf32>
    %14 = arith.truncf %13 : vector<80x128xf32> to vector<80x128xbf16>
    %c0_6 = arith.constant 0 : index
    %c0_7 = arith.constant 0 : index
    %15 = vector.load %arg15[%c0_6, %c0_7] : memref<80x512xbf16, #tpu.memory_space<vmem>>, vector<80x128xbf16>
    tpu.vector_store %arg15[%c0_6, %c0_7], %14 {strides = array<i32>} : memref<80x512xbf16, #tpu.memory_space<vmem>>, vector<80x128xbf16>,
    %c80 = arith.constant 80 : index
    %c0_8 = arith.constant 0 : index
    %16 = vector.load %arg1[%c80, %c0_8] : memref<320x1024xbf16, #tpu.memory_space<vmem>>, vector<80x1024xbf16>
    %cst_9 = arith.constant dense<0.000000e+00> : vector<80x128xf32>
    %17 = tpu.matmul %16, %7, %cst_9 {dimension_numbers = #tpu.dot_dimension_numbers<[1], [0], [0], [1], [0, 0, 1, 1], [], []>} : vector<80x1024xbf16>, vector<1024x128xbf16>, vector<80x128xf32> -> vector<80x128xf32>
    %18 = arith.addf %17, %6 : vector<80x128xf32>
    %cst_10 = arith.constant 0.00999999977 : f32
    %19 = vector.broadcast %cst_10 : f32 to vector<80x128xf32>
    %20 = arith.mulf %19, %18 : vector<80x128xf32>
    %21 = arith.maximumf %18, %20 : vector<80x128xf32>
    %22 = arith.truncf %21 : vector<80x128xf32> to vector<80x128xbf16>
    %c0_11 = arith.constant 0 : index
    %c128 = arith.constant 128 : index
    %23 = vector.load %arg15[%c0_11, %c128] : memref<80x512xbf16, #tpu.memory_space<vmem>>, vector<80x128xbf16>
    tpu.vector_store %arg15[%c0_11, %c128], %22 {strides = array<i32>} : memref<80x512xbf16, #tpu.memory_space<vmem>>, vector<80x128xbf16>,
    %c160 = arith.constant 160 : index
    %c0_12 = arith.constant 0 : index
    %24 = vector.load %arg1[%c160, %c0_12] : memref<320x1024xbf16, #tpu.memory_space<vmem>>, vector<80x1024xbf16>
    %cst_13 = arith.constant dense<0.000000e+00> : vector<80x128xf32>
    %25 = tpu.matmul %24, %7, %cst_13 {dimension_numbers = #tpu.dot_dimension_numbers<[1], [0], [0], [1], [0, 0, 1, 1], [], []>} : vector<80x1024xbf16>, vector<1024x128xbf16>, vector<80x128xf32> -> vector<80x128xf32>
    %26 = arith.addf %25, %6 : vector<80x128xf32>
    %cst_14 = arith.constant 0.00999999977 : f32
    %27 = vector.broadcast %cst_14 : f32 to vector<80x128xf32>
    %28 = arith.mulf %27, %26 : vector<80x128xf32>
    %29 = arith.maximumf %26, %28 : vector<80x128xf32>
    %30 = arith.truncf %29 : vector<80x128xf32> to vector<80x128xbf16>
    %c0_15 = arith.constant 0 : index
    %c256 = arith.constant 256 : index
    %31 = vector.load %arg15[%c0_15, %c256] : memref<80x512xbf16, #tpu.memory_space<vmem>>, vector<80x128xbf16>
    tpu.vector_store %arg15[%c0_15, %c256], %30 {strides = array<i32>} : memref<80x512xbf16, #tpu.memory_space<vmem>>, vector<80x128xbf16>,
    %c240 = arith.constant 240 : index
    %c0_16 = arith.constant 0 : index
    %32 = vector.load %arg1[%c240, %c0_16] : memref<320x1024xbf16, #tpu.memory_space<vmem>>, vector<80x1024xbf16>
    %cst_17 = arith.constant dense<0.000000e+00> : vector<80x128xf32>
    %33 = tpu.matmul %32, %7, %cst_17 {dimension_numbers = #tpu.dot_dimension_numbers<[1], [0], [0], [1], [0, 0, 1, 1], [], []>} : vector<80x1024xbf16>, vector<1024x128xbf16>, vector<80x128xf32> -> vector<80x128xf32>
    %34 = arith.addf %33, %6 : vector<80x128xf32>
    %cst_18 = arith.constant 0.00999999977 : f32
    %35 = vector.broadcast %cst_18 : f32 to vector<80x128xf32>
    %36 = arith.mulf %35, %34 : vector<80x128xf32>
    %37 = arith.maximumf %34, %36 : vector<80x128xf32>
    %38 = arith.truncf %37 : vector<80x128xf32> to vector<80x128xbf16>
    %c0_19 = arith.constant 0 : index
    %c384 = arith.constant 384 : index
    %39 = vector.load %arg15[%c0_19, %c384] : memref<80x512xbf16, #tpu.memory_space<vmem>>, vector<80x128xbf16>
    tpu.vector_store %arg15[%c0_19, %c384], %38 {strides = array<i32>} : memref<80x512xbf16, #tpu.memory_space<vmem>>, vector<80x128xbf16>,
    %c0_20 = arith.constant 0 : index
    %c0_21 = arith.constant 0 : index
    %40 = vector.load %arg15[%c0_20, %c0_21] : memref<80x512xbf16, #tpu.memory_space<vmem>>, vector<80x512xbf16>
    %c0_22 = arith.constant 0 : index
    %c0_23 = arith.constant 0 : index
    %41 = vector.load %arg4[%c0_22, %c0_23] : memref<512x64xbf16, #tpu.memory_space<vmem>>, vector<512x64xbf16>
    %cst_24 = arith.constant dense<0.000000e+00> : vector<80x64xf32>
    %42 = tpu.matmul %40, %41, %cst_24 {dimension_numbers = #tpu.dot_dimension_numbers<[1], [0], [0], [1], [0, 0, 1, 1], [], []>} : vector<80x512xbf16>, vector<512x64xbf16>, vector<80x64xf32> -> vector<80x64xf32>
    %c0_25 = arith.constant 0 : index
    %c0_26 = arith.constant 0 : index
    %43 = vector.load %arg5[%c0_25, %c0_26] : memref<1x64xf32, #tpu.memory_space<vmem>>, vector<1x64xf32>
    %44 = vector.broadcast %43 : vector<1x64xf32> to vector<80x64xf32>
    %45 = arith.addf %42, %44 : vector<80x64xf32>
    %cst_27 = arith.constant 0.00999999977 : f32
    %46 = vector.broadcast %cst_27 : f32 to vector<80x64xf32>
    %47 = arith.mulf %46, %45 : vector<80x64xf32>
    %48 = arith.maximumf %45, %47 : vector<80x64xf32>
    %c0_28 = arith.constant 0 : index
    %c0_29 = arith.constant 0 : index
    %49 = vector.load %arg16[%c0_28, %c0_29] : memref<80x64xf32, #tpu.memory_space<vmem>>, vector<80x64xf32>
    tpu.vector_store %arg16[%c0_28, %c0_29], %48 {strides = array<i32>} : memref<80x64xf32, #tpu.memory_space<vmem>>, vector<80x64xf32>,
    %c0_30 = arith.constant 0 : index
    %c0_31 = arith.constant 0 : index
    %50 = vector.load %arg7[%c0_30, %c0_31] : memref<1x64xf32, #tpu.memory_space<vmem>>, vector<1x64xf32>
    %51 = vector.shape_cast %50 : vector<1x64xf32> to vector<1x64xf32>
    %52 = vector.broadcast %51 : vector<1x64xf32> to vector<8x64xf32>
    %c0_32 = arith.constant 0 : index
    %c0_33 = arith.constant 0 : index
    %53 = vector.load %arg16[%c0_32, %c0_33] : memref<80x64xf32, #tpu.memory_space<vmem>>, vector<8x64xf32>
    %54 = arith.truncf %53 : vector<8x64xf32> to vector<8x64xbf16>
    %c0_34 = arith.constant 0 : index
    %c0_35 = arith.constant 0 : index
    %55 = vector.load %arg6[%c0_34, %c0_35] : memref<576x64xbf16, #tpu.memory_space<vmem>>, vector<64x64xbf16>
    %cst_36 = arith.constant dense<0.000000e+00> : vector<8x64xf32>
    %56 = tpu.matmul %54, %55, %cst_36 {dimension_numbers = #tpu.dot_dimension_numbers<[1], [0], [0], [1], [0, 0, 1, 1], [], []>} : vector<8x64xbf16>, vector<64x64xbf16>, vector<8x64xf32> -> vector<8x64xf32>
    %57 = arith.addf %52, %56 : vector<8x64xf32>
    %c8 = arith.constant 8 : index
    %c0_37 = arith.constant 0 : index
    %58 = vector.load %arg16[%c8, %c0_37] : memref<80x64xf32, #tpu.memory_space<vmem>>, vector<8x64xf32>
    %59 = arith.truncf %58 : vector<8x64xf32> to vector<8x64xbf16>
    %c64 = arith.constant 64 : index
    %c0_38 = arith.constant 0 : index
    %60 = vector.load %arg6[%c64, %c0_38] : memref<576x64xbf16, #tpu.memory_space<vmem>>, vector<64x64xbf16>
    %cst_39 = arith.constant dense<0.000000e+00> : vector<8x64xf32>
    %61 = tpu.matmul %59, %60, %cst_39 {dimension_numbers = #tpu.dot_dimension_numbers<[1], [0], [0], [1], [0, 0, 1, 1], [], []>} : vector<8x64xbf16>, vector<64x64xbf16>, vector<8x64xf32> -> vector<8x64xf32>
    %62 = arith.addf %57, %61 : vector<8x64xf32>
    %c16 = arith.constant 16 : index
    %c0_40 = arith.constant 0 : index
    %63 = vector.load %arg16[%c16, %c0_40] : memref<80x64xf32, #tpu.memory_space<vmem>>, vector<8x64xf32>
    %64 = arith.truncf %63 : vector<8x64xf32> to vector<8x64xbf16>
    %c128_41 = arith.constant 128 : index
    %c0_42 = arith.constant 0 : index
    %65 = vector.load %arg6[%c128_41, %c0_42] : memref<576x64xbf16, #tpu.memory_space<vmem>>, vector<64x64xbf16>
    %cst_43 = arith.constant dense<0.000000e+00> : vector<8x64xf32>
    %66 = tpu.matmul %64, %65, %cst_43 {dimension_numbers = #tpu.dot_dimension_numbers<[1], [0], [0], [1], [0, 0, 1, 1], [], []>} : vector<8x64xbf16>, vector<64x64xbf16>, vector<8x64xf32> -> vector<8x64xf32>
    %67 = arith.addf %62, %66 : vector<8x64xf32>
    %c24 = arith.constant 24 : index
    %c0_44 = arith.constant 0 : index
    %68 = vector.load %arg16[%c24, %c0_44] : memref<80x64xf32, #tpu.memory_space<vmem>>, vector<8x64xf32>
    %69 = arith.truncf %68 : vector<8x64xf32> to vector<8x64xbf16>
    %c192 = arith.constant 192 : index
    %c0_45 = arith.constant 0 : index
    %70 = vector.load %arg6[%c192, %c0_45] : memref<576x64xbf16, #tpu.memory_space<vmem>>, vector<64x64xbf16>
    %cst_46 = arith.constant dense<0.000000e+00> : vector<8x64xf32>
    %71 = tpu.matmul %69, %70, %cst_46 {dimension_numbers = #tpu.dot_dimension_numbers<[1], [0], [0], [1], [0, 0, 1, 1], [], []>} : vector<8x64xbf16>, vector<64x64xbf16>, vector<8x64xf32> -> vector<8x64xf32>
    %72 = arith.addf %67, %71 : vector<8x64xf32>
    %c32 = arith.constant 32 : index
    %c0_47 = arith.constant 0 : index
    %73 = vector.load %arg16[%c32, %c0_47] : memref<80x64xf32, #tpu.memory_space<vmem>>, vector<8x64xf32>
    %74 = arith.truncf %73 : vector<8x64xf32> to vector<8x64xbf16>
    %c256_48 = arith.constant 256 : index
    %c0_49 = arith.constant 0 : index
    %75 = vector.load %arg6[%c256_48, %c0_49] : memref<576x64xbf16, #tpu.memory_space<vmem>>, vector<64x64xbf16>
    %cst_50 = arith.constant dense<0.000000e+00> : vector<8x64xf32>
    %76 = tpu.matmul %74, %75, %cst_50 {dimension_numbers = #tpu.dot_dimension_numbers<[1], [0], [0], [1], [0, 0, 1, 1], [], []>} : vector<8x64xbf16>, vector<64x64xbf16>, vector<8x64xf32> -> vector<8x64xf32>
    %77 = arith.addf %72, %76 : vector<8x64xf32>
    %c40 = arith.constant 40 : index
    %c0_51 = arith.constant 0 : index
    %78 = vector.load %arg16[%c40, %c0_51] : memref<80x64xf32, #tpu.memory_space<vmem>>, vector<8x64xf32>
    %79 = arith.truncf %78 : vector<8x64xf32> to vector<8x64xbf16>
    %c320 = arith.constant 320 : index
    %c0_52 = arith.constant 0 : index
    %80 = vector.load %arg6[%c320, %c0_52] : memref<576x64xbf16, #tpu.memory_space<vmem>>, vector<64x64xbf16>
    %cst_53 = arith.constant dense<0.000000e+00> : vector<8x64xf32>
    %81 = tpu.matmul %79, %80, %cst_53 {dimension_numbers = #tpu.dot_dimension_numbers<[1], [0], [0], [1], [0, 0, 1, 1], [], []>} : vector<8x64xbf16>, vector<64x64xbf16>, vector<8x64xf32> -> vector<8x64xf32>
    %82 = arith.addf %77, %81 : vector<8x64xf32>
    %c48 = arith.constant 48 : index
    %c0_54 = arith.constant 0 : index
    %83 = vector.load %arg16[%c48, %c0_54] : memref<80x64xf32, #tpu.memory_space<vmem>>, vector<8x64xf32>
    %84 = arith.truncf %83 : vector<8x64xf32> to vector<8x64xbf16>
    %c384_55 = arith.constant 384 : index
    %c0_56 = arith.constant 0 : index
    %85 = vector.load %arg6[%c384_55, %c0_56] : memref<576x64xbf16, #tpu.memory_space<vmem>>, vector<64x64xbf16>
    %cst_57 = arith.constant dense<0.000000e+00> : vector<8x64xf32>
    %86 = tpu.matmul %84, %85, %cst_57 {dimension_numbers = #tpu.dot_dimension_numbers<[1], [0], [0], [1], [0, 0, 1, 1], [], []>} : vector<8x64xbf16>, vector<64x64xbf16>, vector<8x64xf32> -> vector<8x64xf32>
    %87 = arith.addf %82, %86 : vector<8x64xf32>
    %c56 = arith.constant 56 : index
    %c0_58 = arith.constant 0 : index
    %88 = vector.load %arg16[%c56, %c0_58] : memref<80x64xf32, #tpu.memory_space<vmem>>, vector<8x64xf32>
    %89 = arith.truncf %88 : vector<8x64xf32> to vector<8x64xbf16>
    %c448 = arith.constant 448 : index
    %c0_59 = arith.constant 0 : index
    %90 = vector.load %arg6[%c448, %c0_59] : memref<576x64xbf16, #tpu.memory_space<vmem>>, vector<64x64xbf16>
    %cst_60 = arith.constant dense<0.000000e+00> : vector<8x64xf32>
    %91 = tpu.matmul %89, %90, %cst_60 {dimension_numbers = #tpu.dot_dimension_numbers<[1], [0], [0], [1], [0, 0, 1, 1], [], []>} : vector<8x64xbf16>, vector<64x64xbf16>, vector<8x64xf32> -> vector<8x64xf32>
    %92 = arith.addf %87, %91 : vector<8x64xf32>
    %c64_61 = arith.constant 64 : index
    %c0_62 = arith.constant 0 : index
    %93 = vector.load %arg16[%c64_61, %c0_62] : memref<80x64xf32, #tpu.memory_space<vmem>>, vector<8x64xf32>
    %94 = arith.truncf %93 : vector<8x64xf32> to vector<8x64xbf16>
    %c512 = arith.constant 512 : index
    %c0_63 = arith.constant 0 : index
    %95 = vector.load %arg6[%c512, %c0_63] : memref<576x64xbf16, #tpu.memory_space<vmem>>, vector<64x64xbf16>
    %cst_64 = arith.constant dense<0.000000e+00> : vector<8x64xf32>
    %96 = tpu.matmul %94, %95, %cst_64 {dimension_numbers = #tpu.dot_dimension_numbers<[1], [0], [0], [1], [0, 0, 1, 1], [], []>} : vector<8x64xbf16>, vector<64x64xbf16>, vector<8x64xf32> -> vector<8x64xf32>
    %97 = arith.addf %92, %96 : vector<8x64xf32>
    %cst_65 = arith.constant 0.00999999977 : f32
    %98 = vector.broadcast %cst_65 : f32 to vector<8x64xf32>
    %99 = arith.mulf %98, %97 : vector<8x64xf32>
    %100 = arith.maximumf %97, %99 : vector<8x64xf32>
    %101 = arith.truncf %100 : vector<8x64xf32> to vector<8x64xbf16>
    %c0_66 = arith.constant 0 : index
    %c0_67 = arith.constant 0 : index
    %102 = vector.load %arg8[%c0_66, %c0_67] : memref<64x512xbf16, #tpu.memory_space<vmem>>, vector<64x512xbf16>
    %cst_68 = arith.constant dense<0.000000e+00> : vector<8x512xf32>
    %103 = tpu.matmul %101, %102, %cst_68 {dimension_numbers = #tpu.dot_dimension_numbers<[1], [0], [0], [1], [0, 0, 1, 1], [], []>} : vector<8x64xbf16>, vector<64x512xbf16>, vector<8x512xf32> -> vector<8x512xf32>
    %c0_69 = arith.constant 0 : index
    %c0_70 = arith.constant 0 : index
    %104 = vector.load %arg9[%c0_69, %c0_70] : memref<1x512xf32, #tpu.memory_space<vmem>>, vector<1x512xf32>
    %105 = vector.broadcast %104 : vector<1x512xf32> to vector<8x512xf32>
    %106 = arith.addf %103, %105 : vector<8x512xf32>
    %cst_71 = arith.constant 0.000000e+00 : f32
    %107 = vector.broadcast %cst_71 : f32 to vector<8x512xf32>
    %108 = arith.maximumf %106, %107 : vector<8x512xf32>
    %c0_i32_72 = arith.constant 0 : i32
    %109 = tpu.memref_slice %arg19[%c0_i32_72] : memref<2x!tpu.dma_semaphore, #tpu.memory_space<semaphore_mem>> -> memref<1x!tpu.dma_semaphore, #tpu.memory_space<semaphore_mem>>
    %110 = tpu.memref_squeeze %109 : memref<1x!tpu.dma_semaphore, #tpu.memory_space<semaphore_mem>> -> memref<!tpu.dma_semaphore, #tpu.memory_space<semaphore_mem>>
    tpu.wait_dma2 semaphore(%110 : memref<!tpu.dma_semaphore, #tpu.memory_space<semaphore_mem>>) src(%arg12 : memref<512x512xbf16, #tpu.memory_space<any>>) dst(%arg17 : memref<512x512xbf16, #tpu.memory_space<vmem>>)
    %111 = arith.truncf %108 : vector<8x512xf32> to vector<8x512xbf16>
    %c0_73 = arith.constant 0 : index
    %c0_74 = arith.constant 0 : index
    %112 = vector.load %arg17[%c0_73, %c0_74] : memref<512x512xbf16, #tpu.memory_space<vmem>>, vector<512x512xbf16>
    %cst_75 = arith.constant dense<0.000000e+00> : vector<8x512xf32>
    %113 = tpu.matmul %111, %112, %cst_75 {dimension_numbers = #tpu.dot_dimension_numbers<[1], [0], [0], [1], [0, 0, 1, 1], [], []>} : vector<8x512xbf16>, vector<512x512xbf16>, vector<8x512xf32> -> vector<8x512xf32>
    %c0_76 = arith.constant 0 : index
    %c0_77 = arith.constant 0 : index
    %114 = vector.load %arg10[%c0_76, %c0_77] : memref<1x512xf32, #tpu.memory_space<vmem>>, vector<1x512xf32>
    %115 = vector.broadcast %114 : vector<1x512xf32> to vector<8x512xf32>
    %116 = arith.addf %113, %115 : vector<8x512xf32>
    %cst_78 = arith.constant 0.000000e+00 : f32
    %117 = vector.broadcast %cst_78 : f32 to vector<8x512xf32>
    %118 = arith.maximumf %116, %117 : vector<8x512xf32>
    %c1_i32_79 = arith.constant 1 : i32
    %119 = tpu.memref_slice %arg19[%c1_i32_79] : memref<2x!tpu.dma_semaphore, #tpu.memory_space<semaphore_mem>> -> memref<1x!tpu.dma_semaphore, #tpu.memory_space<semaphore_mem>>
    %120 = tpu.memref_squeeze %119 : memref<1x!tpu.dma_semaphore, #tpu.memory_space<semaphore_mem>> -> memref<!tpu.dma_semaphore, #tpu.memory_space<semaphore_mem>>
    tpu.wait_dma2 semaphore(%120 : memref<!tpu.dma_semaphore, #tpu.memory_space<semaphore_mem>>) src(%arg13 : memref<512x512xbf16, #tpu.memory_space<any>>) dst(%arg18 : memref<512x512xbf16, #tpu.memory_space<vmem>>)
    %121 = arith.truncf %118 : vector<8x512xf32> to vector<8x512xbf16>
    %c0_80 = arith.constant 0 : index
    %c0_81 = arith.constant 0 : index
    %122 = vector.load %arg18[%c0_80, %c0_81] : memref<512x512xbf16, #tpu.memory_space<vmem>>, vector<512x512xbf16>
    %cst_82 = arith.constant dense<0.000000e+00> : vector<8x512xf32>
    %123 = tpu.matmul %121, %122, %cst_82 {dimension_numbers = #tpu.dot_dimension_numbers<[1], [0], [0], [1], [0, 0, 1, 1], [], []>} : vector<8x512xbf16>, vector<512x512xbf16>, vector<8x512xf32> -> vector<8x512xf32>
    %c0_83 = arith.constant 0 : index
    %c0_84 = arith.constant 0 : index
    %124 = vector.load %arg11[%c0_83, %c0_84] : memref<1x512xf32, #tpu.memory_space<vmem>>, vector<1x512xf32>
    %125 = vector.broadcast %124 : vector<1x512xf32> to vector<8x512xf32>
    %126 = arith.addf %123, %125 : vector<8x512xf32>
    %c0_85 = arith.constant 0 : index
    %c0_86 = arith.constant 0 : index
    %127 = vector.load %arg14[%c0_85, %c0_86] : memref<8x512xf32, #tpu.memory_space<vmem>>, vector<8x512xf32>
    tpu.vector_store %arg14[%c0_85, %c0_86], %126 {strides = array<i32>} : memref<8x512xf32, #tpu.memory_space<vmem>>, vector<8x512xf32>,
    return
  }
  func.func @transform_0(%arg0: i32) -> (i32, i32) {
    %c0_i32 = arith.constant 0 : i32
    %c0_i32_0 = arith.constant 0 : i32
    %c0_i32_1 = arith.constant 0 : i32
    return %c0_i32, %c0_i32_0 : i32, i32
  }
  func.func @transform_1(%arg0: i32) -> (i32, i32) {
    %c0_i32 = arith.constant 0 : i32
    %c0_i32_0 = arith.constant 0 : i32
    %c0_i32_1 = arith.constant 0 : i32
    return %c0_i32, %c0_i32_0 : i32, i32
  }
  func.func @transform_2(%arg0: i32) -> (i32, i32) {
    %c0_i32 = arith.constant 0 : i32
    %c0_i32_0 = arith.constant 0 : i32
    %c0_i32_1 = arith.constant 0 : i32
    return %c0_i32, %c0_i32_0 : i32, i32
  }
  func.func @transform_3(%arg0: i32) -> (i32, i32) {
    %c0_i32 = arith.constant 0 : i32
    %c0_i32_0 = arith.constant 0 : i32
    %c0_i32_1 = arith.constant 0 : i32
    return %c0_i32, %c0_i32_0 : i32, i32
  }
  func.func @transform_4(%arg0: i32) -> (i32, i32) {
    %c0_i32 = arith.constant 0 : i32
    %c0_i32_0 = arith.constant 0 : i32
    %c0_i32_1 = arith.constant 0 : i32
    return %c0_i32, %c0_i32_0 : i32, i32
  }
  func.func @transform_5(%arg0: i32) -> (i32, i32) {
    %c0_i32 = arith.constant 0 : i32
    %c0_i32_0 = arith.constant 0 : i32
    %c0_i32_1 = arith.constant 0 : i32
    return %c0_i32, %c0_i32_0 : i32, i32
  }
  func.func @transform_6(%arg0: i32) -> (i32, i32) {
    %c0_i32 = arith.constant 0 : i32
    %c0_i32_0 = arith.constant 0 : i32
    %c0_i32_1 = arith.constant 0 : i32
    return %c0_i32, %c0_i32_0 : i32, i32
  }
  func.func @transform_7(%arg0: i32) -> (i32, i32) {
    %c0_i32 = arith.constant 0 : i32
    %c0_i32_0 = arith.constant 0 : i32
    %c0_i32_1 = arith.constant 0 : i32
    return %c0_i32, %c0_i32_0 : i32, i32
  }
  func.func @transform_8(%arg0: i32) -> (i32, i32) {
    %c0_i32 = arith.constant 0 : i32
    %c0_i32_0 = arith.constant 0 : i32
    %c0_i32_1 = arith.constant 0 : i32
    return %c0_i32, %c0_i32_0 : i32, i32
  }
  func.func @transform_9(%arg0: i32) -> (i32, i32) {
    %c0_i32 = arith.constant 0 : i32
    %c0_i32_0 = arith.constant 0 : i32
    %c0_i32_1 = arith.constant 0 : i32
    return %c0_i32, %c0_i32_0 : i32, i32
  }
  func.func @transform_10(%arg0: i32) -> (i32, i32) {
    %c0_i32 = arith.constant 0 : i32
    %c0_i32_0 = arith.constant 0 : i32
    %c0_i32_1 = arith.constant 0 : i32
    return %c0_i32, %c0_i32_0 : i32, i32
  }
  func.func @transform_13(%arg0: i32) -> (i32, i32) {
    %c0_i32 = arith.constant 0 : i32
    %c0_i32_0 = arith.constant 0 : i32
    %c0_i32_1 = arith.constant 0 : i32
    return %c0_i32, %c0_i32_0 : i32, i32
  }
}

</mosaic_0001>

<llo_original>
// kernel: predictor_forward.1
$region0: #{predictor_forward.1}
  #allocation0 [shape = 'u32[]', space=smem, size = 0x4, offset = 0x4, fixed_abs, tag = 'smem constant byte address 0x4 - core index']
  #allocation1 [shape = 'u32[144,128]{1,0:T(1,128)}', space=vmem, size = 0x12000, scoped, tag = 'internal scratch']
  #allocation2 [shape = 'bf16[80,512]{1,0:T(8,128)(2,1)}', space=vmem, size = 0x14000, scoped, tag = 'scratch operand']
  #allocation3 [shape = 'f32[80,64]{1,0:T(8,128)}', space=vmem, size = 0xa000, scoped, tag = 'scratch operand']
  #allocation4 [shape = 'bf16[512,512]{1,0:T(8,128)(2,1)}', space=vmem, size = 0x80000, scoped, tag = 'scratch operand']
  #allocation5 [shape = 'bf16[512,512]{1,0:T(8,128)(2,1)}', space=vmem, size = 0x80000, scoped, tag = 'scratch operand']
  #allocation6 [shape = 's32[2]{0}', space=sflag, size = 0x8, scoped, tag = 'scratch operand']
  #allocation7 [shape = 's32[]', space=sflag, size = 0x4, offset = 0, fixed_abs, tag = 'sflag constant byte address 0x0 - dummy sync flag']
  #allocation8 [shape = 's32[]', space=sflag, size = 0x4, offset = 0, fixed_abs, tag = 'sflag constant byte address 0x0 - dummy sync flag']
  %s0 = inlined_call_operand.vmem [shape: bf16[320,1024], index: 0, kind: input, shape index: {}]
  %s1 = inlined_call_operand.vmem [shape: bf16[1024,128], index: 1, kind: input, shape index: {}]
  %s2 = inlined_call_operand.vmem [shape: f32[1,128], index: 2, kind: input, shape index: {}]
  %s3 = inlined_call_operand.vmem [shape: bf16[512,64], index: 3, kind: input, shape index: {}]
  %s4 = inlined_call_operand.vmem [shape: f32[1,64], index: 4, kind: input, shape index: {}]
  %s5 = inlined_call_operand.vmem [shape: bf16[576,64], index: 5, kind: input, shape index: {}]
  %s6 = inlined_call_operand.vmem [shape: f32[1,64], index: 6, kind: input, shape index: {}]
  %s7 = inlined_call_operand.vmem [shape: bf16[64,512], index: 7, kind: input, shape index: {}]
  %s8 = inlined_call_operand.vmem [shape: f32[1,512], index: 8, kind: input, shape index: {}]
  %s9 = inlined_call_operand.vmem [shape: f32[1,512], index: 9, kind: input, shape index: {}]
  %s10 = inlined_call_operand.vmem [shape: f32[1,512], index: 10, kind: input, shape index: {}]
  %s11 = inlined_call_operand.vmem [shape: bf16[512,512], index: 11, kind: input, shape index: {}]
  %s12 = inlined_call_operand.vmem [shape: bf16[512,512], index: 12, kind: input, shape index: {}]
  %s13 = inlined_call_operand.vmem [shape: f32[8,512], index: 13, kind: output, shape index: {}]
  %s14 = sld [smem:[#allocation0]]
  $region122: #{predictor_forward.1} parent=0
    _
  %s16 = ssub.s32 1, %s14
  %s17 = scalar_select 0, %s16, %s14
  // Predicated region
  $region2: #{predictor_forward.1} parent=0 // pred_check
    _
  $region3: #{predictor_forward.1} parent=0 // pred_check_branch
    %19 = sbr.rel (0) target = $region5
  $region4: #{predictor_forward.1} parent=0 // pred_region
    _
  $region5: #{predictor_forward.1} parent=0 // pred_fallthru
    _
  // Predicated region
  $region6: #{predictor_forward.1} parent=0 // pred_check
    _
  $region7: #{predictor_forward.1} parent=0 // pred_check_branch
    %21 = sbr.rel (0) target = $region9
  $region8: #{predictor_forward.1} parent=0 // pred_region
    _
  $region9: #{predictor_forward.1} parent=0 // pred_fallthru
    _
  // Predicated region
  $region10: #{predictor_forward.1} parent=0 // pred_check
    _
  $region11: #{predictor_forward.1} parent=0 // pred_check_branch
    %23 = sbr.rel (0) target = $region13
  $region12: #{predictor_forward.1} parent=0 // pred_region
    _
  $region13: #{predictor_forward.1} parent=0 // pred_fallthru
    _
  // Predicated region
  $region14: #{predictor_forward.1} parent=0 // pred_check
    _
  $region15: #{predictor_forward.1} parent=0 // pred_check_branch
    %25 = sbr.rel (0) target = $region17
  $region16: #{predictor_forward.1} parent=0 // pred_region
    _
  $region17: #{predictor_forward.1} parent=0 // pred_fallthru
    _
  // Predicated region
  $region18: #{predictor_forward.1} parent=0 // pred_check
    _
  $region19: #{predictor_forward.1} parent=0 // pred_check_branch
    %27 = sbr.rel (0) target = $region21
  $region20: #{predictor_forward.1} parent=0 // pred_region
    _
  $region21: #{predictor_forward.1} parent=0 // pred_fallthru
    _
  // Predicated region
  $region22: #{predictor_forward.1} parent=0 // pred_check
    _
  $region23: #{predictor_forward.1} parent=0 // pred_check_branch
    %29 = sbr.rel (0) target = $region25
  $region24: #{predictor_forward.1} parent=0 // pred_region
    _
  $region25: #{predictor_forward.1} parent=0 // pred_fallthru
    _
  // Predicated region
  $region26: #{predictor_forward.1} parent=0 // pred_check
    _
  $region27: #{predictor_forward.1} parent=0 // pred_check_branch
    %31 = sbr.rel (0) target = $region29
  $region28: #{predictor_forward.1} parent=0 // pred_region
    _
  $region29: #{predictor_forward.1} parent=0 // pred_fallthru
    _
  // Predicated region
  $region30: #{predictor_forward.1} parent=0 // pred_check
    _
  $region31: #{predictor_forward.1} parent=0 // pred_check_branch
    %33 = sbr.rel (0) target = $region33
  $region32: #{predictor_forward.1} parent=0 // pred_region
    _
  $region33: #{predictor_forward.1} parent=0 // pred_fallthru
    _
  // Predicated region
  $region34: #{predictor_forward.1} parent=0 // pred_check
    _
  $region35: #{predictor_forward.1} parent=0 // pred_check_branch
    %35 = sbr.rel (0) target = $region37
  $region36: #{predictor_forward.1} parent=0 // pred_region
    _
  $region37: #{predictor_forward.1} parent=0 // pred_fallthru
    _
  // Predicated region
  $region38: #{predictor_forward.1} parent=0 // pred_check
    _
  $region39: #{predictor_forward.1} parent=0 // pred_check_branch
    %37 = sbr.rel (0) target = $region41
  $region40: #{predictor_forward.1} parent=0 // pred_region
    _
  $region41: #{predictor_forward.1} parent=0 // pred_fallthru
    _
  // Predicated region
  $region42: #{predictor_forward.1} parent=0 // pred_check
    _
  $region43: #{predictor_forward.1} parent=0 // pred_check_branch
    %39 = sbr.rel (0) target = $region45
  $region44: #{predictor_forward.1} parent=0 // pred_region
    _
  $region45: #{predictor_forward.1} parent=0 // pred_fallthru
    _
  %p42 = scmp.lt.u32.totalorder 1024, 8
  %p43 = pneg %p42
  // Predicated region
  $region46: #{predictor_forward.1} parent=0 // pred_check
    _
  $region47: #{predictor_forward.1} parent=0 // pred_check_branch
    %45 = sbr.rel (%p42) target = $region49
  $region48: #{predictor_forward.1} parent=0 // pred_region
    %s61 = sand.u32 1024, 7
    %p62 = scmp.eq.s32.totalorder %s61, 0
    // Predicated region
    $region61: #{predictor_forward.1} parent=48 // pred_check
      %p63 = pneg %p62
    $region62: #{predictor_forward.1} parent=48 // pred_check_branch
      %65 = sbr.rel (%p63) target = $region64
    $region63: #{predictor_forward.1} parent=48 // pred_region
      loop: start=0, step=1, limit=1
      $region65: #{predictor_forward.1} parent=63 // loop_pre_header
        _
      $region66: #{predictor_forward.1} parent=63 // loop_header
        %s67 = sphi 0, %s71
        %p68 = scmp.ge.s32.totalorder %s67, 1
        %s72 = sphi %s11, %s11
        %s73 = sphi [#allocation4], [#allocation4]
      $region67: #{predictor_forward.1} parent=63 // loop_header_branch
        %70 = sbr.rel (%p68) target = $region71
      $region68: #{predictor_forward.1} parent=63 // loop_body
        %v74 = vld [vmem:[%s72] sm:$0xff]
        %75 = vst [vmem:[%s73] sm:$0xff] %v74
        %v76 = vld [vmem:[%s72 + $0x8] sm:$0xff]
        %77 = vst [vmem:[%s73 + $0x8] sm:$0xff] %v76
        %v78 = vld [vmem:[%s72 + $0x10] sm:$0xff]
        %79 = vst [vmem:[%s73 + $0x10] sm:$0xff] %v78
        %v80 = vld [vmem:[%s72 + $0x18] sm:$0xff]
        %81 = vst [vmem:[%s73 + $0x18] sm:$0xff] %v80
        %v82 = vld [vmem:[%s72 + $0x20] sm:$0xff]
        %83 = vst [vmem:[%s73 + $0x20] sm:$0xff] %v82
        %v84 = vld [vmem:[%s72 + $0x28] sm:$0xff]
        %85 = vst [vmem:[%s73 + $0x28] sm:$0xff] %v84
        %v86 = vld [vmem:[%s72 + $0x30] sm:$0xff]
        %87 = vst [vmem:[%s73 + $0x30] sm:$0xff] %v86
        %v88 = vld [vmem:[%s72 + $0x38] sm:$0xff]
        %89 = vst [vmem:[%s73 + $0x38] sm:$0xff] %v88
        %v90 = vld [vmem:[%s72 + $0x40] sm:$0xff]
        %91 = vst [vmem:[%s73 + $0x40] sm:$0xff] %v90
        %v92 = vld [vmem:[%s72 + $0x48] sm:$0xff]
        %93 = vst [vmem:[%s73 + $0x48] sm:$0xff] %v92
        %v94 = vld [vmem:[%s72 + $0x50] sm:$0xff]
        %95 = vst [vmem:[%s73 + $0x50] sm:$0xff] %v94
        %v96 = vld [vmem:[%s72 + $0x58] sm:$0xff]
        %97 = vst [vmem:[%s73 + $0x58] sm:$0xff] %v96
        %v98 = vld [vmem:[%s72 + $0x60] sm:$0xff]
        %99 = vst [vmem:[%s73 + $0x60] sm:$0xff] %v98
        %v100 = vld [vmem:[%s72 + $0x68] sm:$0xff]
        %101 = vst [vmem:[%s73 + $0x68] sm:$0xff] %v100
        %v102 = vld [vmem:[%s72 + $0x70] sm:$0xff]
        %103 = vst [vmem:[%s73 + $0x70] sm:$0xff] %v102
        %v104 = vld [vmem:[%s72 + $0x78] sm:$0xff]
        %105 = vst [vmem:[%s73 + $0x78] sm:$0xff] %v104
        %v106 = vld [vmem:[%s72 + $0x80] sm:$0xff]
        %107 = vst [vmem:[%s73 + $0x80] sm:$0xff] %v106
        %v108 = vld [vmem:[%s72 + $0x88] sm:$0xff]
        %109 = vst [vmem:[%s73 + $0x88] sm:$0xff] %v108
        %v110 = vld [vmem:[%s72 + $0x90] sm:$0xff]
        %111 = vst [vmem:[%s73 + $0x90] sm:$0xff] %v110
        %v112 = vld [vmem:[%s72 + $0x98] sm:$0xff]
        %113 = vst [vmem:[%s73 + $0x98] sm:$0xff] %v112
        %v114 = vld [vmem:[%s72 + $0xa0] sm:$0xff]
        %115 = vst [vmem:[%s73 + $0xa0] sm:$0xff] %v114
        %v116 = vld [vmem:[%s72 + $0xa8] sm:$0xff]
        %117 = vst [vmem:[%s73 + $0xa8] sm:$0xff] %v116
        %v118 = vld [vmem:[%s72 + $0xb0] sm:$0xff]
        %119 = vst [vmem:[%s73 + $0xb0] sm:$0xff] %v118
        %v120 = vld [vmem:[%s72 + $0xb8] sm:$0xff]
        %121 = vst [vmem:[%s73 + $0xb8] sm:$0xff] %v120
        %v122 = vld [vmem:[%s72 + $0xc0] sm:$0xff]
        %123 = vst [vmem:[%s73 + $0xc0] sm:$0xff] %v122
        %v124 = vld [vmem:[%s72 + $0xc8] sm:$0xff]
        %125 = vst [vmem:[%s73 + $0xc8] sm:$0xff] %v124
        %v126 = vld [vmem:[%s72 + $0xd0] sm:$0xff]
        %127 = vst [vmem:[%s73 + $0xd0] sm:$0xff] %v126
        %v128 = vld [vmem:[%s72 + $0xd8] sm:$0xff]
        %129 = vst [vmem:[%s73 + $0xd8] sm:$0xff] %v128
        %v130 = vld [vmem:[%s72 + $0xe0] sm:$0xff]
        %131 = vst [vmem:[%s73 + $0xe0] sm:$0xff] %v130
        %v132 = vld [vmem:[%s72 + $0xe8] sm:$0xff]
        %133 = vst [vmem:[%s73 + $0xe8] sm:$0xff] %v132
        %v134 = vld [vmem:[%s72 + $0xf0] sm:$0xff]
        %135 = vst [vmem:[%s73 + $0xf0] sm:$0xff] %v134
        %v136 = vld [vmem:[%s72 + $0xf8] sm:$0xff]
        %137 = vst [vmem:[%s73 + $0xf8] sm:$0xff] %v136
        %v138 = vld [vmem:[%s72 + $0x100] sm:$0xff]
        %139 = vst [vmem:[%s73 + $0x100] sm:$0xff] %v138
        %v140 = vld [vmem:[%s72 + $0x108] sm:$0xff]
        %141 = vst [vmem:[%s73 + $0x108] sm:$0xff] %v140
        %v142 = vld [vmem:[%s72 + $0x110] sm:$0xff]
        %143 = vst [vmem:[%s73 + $0x110] sm:$0xff] %v142
        %v144 = vld [vmem:[%s72 + $0x118] sm:$0xff]
        %145 = vst [vmem:[%s73 + $0x118] sm:$0xff] %v144
        %v146 = vld [vmem:[%s72 + $0x120] sm:$0xff]
        %147 = vst [vmem:[%s73 + $0x120] sm:$0xff] %v146
        %v148 = vld [vmem:[%s72 + $0x128] sm:$0xff]
        %149 = vst [vmem:[%s73 + $0x128] sm:$0xff] %v148
        %v150 = vld [vmem:[%s72 + $0x130] sm:$0xff]
        %151 = vst [vmem:[%s73 + $0x130] sm:$0xff] %v150
        %v152 = vld [vmem:[%s72 + $0x138] sm:$0xff]
        %153 = vst [vmem:[%s73 + $0x138] sm:$0xff] %v152
        %v154 = vld [vmem:[%s72 + $0x140] sm:$0xff]
        %155 = vst [vmem:[%s73 + $0x140] sm:$0xff] %v154
        %v156 = vld [vmem:[%s72 + $0x148] sm:$0xff]
        %157 = vst [vmem:[%s73 + $0x148] sm:$0xff] %v156
        %v158 = vld [vmem:[%s72 + $0x150] sm:$0xff]
        %159 = vst [vmem:[%s73 + $0x150] sm:$0xff] %v158
        %v160 = vld [vmem:[%s72 + $0x158] sm:$0xff]
        %161 = vst [vmem:[%s73 + $0x158] sm:$0xff] %v160
        %v162 = vld [vmem:[%s72 + $0x160] sm:$0xff]
        %163 = vst [vmem:[%s73 + $0x160] sm:$0xff] %v162
        %v164 = vld [vmem:[%s72 + $0x168] sm:$0xff]
        %165 = vst [vmem:[%s73 + $0x168] sm:$0xff] %v164
        %v166 = vld [vmem:[%s72 + $0x170] sm:$0xff]
        %167 = vst [vmem:[%s73 + $0x170] sm:$0xff] %v166
        %v168 = vld [vmem:[%s72 + $0x178] sm:$0xff]
        %169 = vst [vmem:[%s73 + $0x178] sm:$0xff] %v168
        %v170 = vld [vmem:[%s72 + $0x180] sm:$0xff]
        %171 = vst [vmem:[%s73 + $0x180] sm:$0xff] %v170
        %v172 = vld [vmem:[%s72 + $0x188] sm:$0xff]
        %173 = vst [vmem:[%s73 + $0x188] sm:$0xff] %v172
        %v174 = vld [vmem:[%s72 + $0x190] sm:$0xff]
        %175 = vst [vmem:[%s73 + $0x190] sm:$0xff] %v174
        %v176 = vld [vmem:[%s72 + $0x198] sm:$0xff]
        %177 = vst [vmem:[%s73 + $0x198] sm:$0xff] %v176
        %v178 = vld [vmem:[%s72 + $0x1a0] sm:$0xff]
        %179 = vst [vmem:[%s73 + $0x1a0] sm:$0xff] %v178
        %v180 = vld [vmem:[%s72 + $0x1a8] sm:$0xff]
        %181 = vst [vmem:[%s73 + $0x1a8] sm:$0xff] %v180
        %v182 = vld [vmem:[%s72 + $0x1b0] sm:$0xff]
        %183 = vst [vmem:[%s73 + $0x1b0] sm:$0xff] %v182
        %v184 = vld [vmem:[%s72 + $0x1b8] sm:$0xff]
        %185 = vst [vmem:[%s73 + $0x1b8] sm:$0xff] %v184
        %v186 = vld [vmem:[%s72 + $0x1c0] sm:$0xff]
        %187 = vst [vmem:[%s73 + $0x1c0] sm:$0xff] %v186
        %v188 = vld [vmem:[%s72 + $0x1c8] sm:$0xff]
        %189 = vst [vmem:[%s73 + $0x1c8] sm:$0xff] %v188
        %v190 = vld [vmem:[%s72 + $0x1d0] sm:$0xff]
        %191 = vst [vmem:[%s73 + $0x1d0] sm:$0xff] %v190
        %v192 = vld [vmem:[%s72 + $0x1d8] sm:$0xff]
        %193 = vst [vmem:[%s73 + $0x1d8] sm:$0xff] %v192
        %v194 = vld [vmem:[%s72 + $0x1e0] sm:$0xff]
        %195 = vst [vmem:[%s73 + $0x1e0] sm:$0xff] %v194
        %v196 = vld [vmem:[%s72 + $0x1e8] sm:$0xff]
        %197 = vst [vmem:[%s73 + $0x1e8] sm:$0xff] %v196
        %v198 = vld [vmem:[%s72 + $0x1f0] sm:$0xff]
        %199 = vst [vmem:[%s73 + $0x1f0] sm:$0xff] %v198
        %v200 = vld [vmem:[%s72 + $0x1f8] sm:$0xff]
        %201 = vst [vmem:[%s73 + $0x1f8] sm:$0xff] %v200
        %v202 = vld [vmem:[%s72 + $0x200] sm:$0xff]
        %203 = vst [vmem:[%s73 + $0x200] sm:$0xff] %v202
        %v204 = vld [vmem:[%s72 + $0x208] sm:$0xff]
        %205 = vst [vmem:[%s73 + $0x208] sm:$0xff] %v204
        %v206 = vld [vmem:[%s72 + $0x210] sm:$0xff]
        %207 = vst [vmem:[%s73 + $0x210] sm:$0xff] %v206
        %v208 = vld [vmem:[%s72 + $0x218] sm:$0xff]
        %209 = vst [vmem:[%s73 + $0x218] sm:$0xff] %v208
        %v210 = vld [vmem:[%s72 + $0x220] sm:$0xff]
        %211 = vst [vmem:[%s73 + $0x220] sm:$0xff] %v210
        %v212 = vld [vmem:[%s72 + $0x228] sm:$0xff]
        %213 = vst [vmem:[%s73 + $0x228] sm:$0xff] %v212
        %v214 = vld [vmem:[%s72 + $0x230] sm:$0xff]
        %215 = vst [vmem:[%s73 + $0x230] sm:$0xff] %v214
        %v216 = vld [vmem:[%s72 + $0x238] sm:$0xff]
        %217 = vst [vmem:[%s73 + $0x238] sm:$0xff] %v216
        %v218 = vld [vmem:[%s72 + $0x240] sm:$0xff]
        %219 = vst [vmem:[%s73 + $0x240] sm:$0xff] %v218
        %v220 = vld [vmem:[%s72 + $0x248] sm:$0xff]
        %221 = vst [vmem:[%s73 + $0x248] sm:$0xff] %v220
        %v222 = vld [vmem:[%s72 + $0x250] sm:$0xff]
        %223 = vst [vmem:[%s73 + $0x250] sm:$0xff] %v222
        %v224 = vld [vmem:[%s72 + $0x258] sm:$0xff]
        %225 = vst [vmem:[%s73 + $0x258] sm:$0xff] %v224
        %v226 = vld [vmem:[%s72 + $0x260] sm:$0xff]
        %227 = vst [vmem:[%s73 + $0x260] sm:$0xff] %v226
        %v228 = vld [vmem:[%s72 + $0x268] sm:$0xff]
        %229 = vst [vmem:[%s73 + $0x268] sm:$0xff] %v228
        %v230 = vld [vmem:[%s72 + $0x270] sm:$0xff]
        %231 = vst [vmem:[%s73 + $0x270] sm:$0xff] %v230
        %v232 = vld [vmem:[%s72 + $0x278] sm:$0xff]
        %233 = vst [vmem:[%s73 + $0x278] sm:$0xff] %v232
        %v234 = vld [vmem:[%s72 + $0x280] sm:$0xff]
        %235 = vst [vmem:[%s73 + $0x280] sm:$0xff] %v234
        %v236 = vld [vmem:[%s72 + $0x288] sm:$0xff]
        %237 = vst [vmem:[%s73 + $0x288] sm:$0xff] %v236
        %v238 = vld [vmem:[%s72 + $0x290] sm:$0xff]
        %239 = vst [vmem:[%s73 + $0x290] sm:$0xff] %v238
        %v240 = vld [vmem:[%s72 + $0x298] sm:$0xff]
        %241 = vst [vmem:[%s73 + $0x298] sm:$0xff] %v240
        %v242 = vld [vmem:[%s72 + $0x2a0] sm:$0xff]
        %243 = vst [vmem:[%s73 + $0x2a0] sm:$0xff] %v242
        %v244 = vld [vmem:[%s72 + $0x2a8] sm:$0xff]
        %245 = vst [vmem:[%s73 + $0x2a8] sm:$0xff] %v244
        %v246 = vld [vmem:[%s72 + $0x2b0] sm:$0xff]
        %247 = vst [vmem:[%s73 + $0x2b0] sm:$0xff] %v246
        %v248 = vld [vmem:[%s72 + $0x2b8] sm:$0xff]
        %249 = vst [vmem:[%s73 + $0x2b8] sm:$0xff] %v248
        %v250 = vld [vmem:[%s72 + $0x2c0] sm:$0xff]
        %251 = vst [vmem:[%s73 + $0x2c0] sm:$0xff] %v250
        %v252 = vld [vmem:[%s72 + $0x2c8] sm:$0xff]
        %253 = vst [vmem:[%s73 + $0x2c8] sm:$0xff] %v252
        %v254 = vld [vmem:[%s72 + $0x2d0] sm:$0xff]
        %255 = vst [vmem:[%s73 + $0x2d0] sm:$0xff] %v254
        %v256 = vld [vmem:[%s72 + $0x2d8] sm:$0xff]
        %257 = vst [vmem:[%s73 + $0x2d8] sm:$0xff] %v256
        %v258 = vld [vmem:[%s72 + $0x2e0] sm:$0xff]
        %259 = vst [vmem:[%s73 + $0x2e0] sm:$0xff] %v258
        %v260 = vld [vmem:[%s72 + $0x2e8] sm:$0xff]
        %261 = vst [vmem:[%s73 + $0x2e8] sm:$0xff] %v260
        %v262 = vld [vmem:[%s72 + $0x2f0] sm:$0xff]
        %263 = vst [vmem:[%s73 + $0x2f0] sm:$0xff] %v262
        %v264 = vld [vmem:[%s72 + $0x2f8] sm:$0xff]
        %265 = vst [vmem:[%s73 + $0x2f8] sm:$0xff] %v264
        %v266 = vld [vmem:[%s72 + $0x300] sm:$0xff]
        %267 = vst [vmem:[%s73 + $0x300] sm:$0xff] %v266
        %v268 = vld [vmem:[%s72 + $0x308] sm:$0xff]
        %269 = vst [vmem:[%s73 + $0x308] sm:$0xff] %v268
        %v270 = vld [vmem:[%s72 + $0x310] sm:$0xff]
        %271 = vst [vmem:[%s73 + $0x310] sm:$0xff] %v270
        %v272 = vld [vmem:[%s72 + $0x318] sm:$0xff]
        %273 = vst [vmem:[%s73 + $0x318] sm:$0xff] %v272
        %v274 = vld [vmem:[%s72 + $0x320] sm:$0xff]
        %275 = vst [vmem:[%s73 + $0x320] sm:$0xff] %v274
        %v276 = vld [vmem:[%s72 + $0x328] sm:$0xff]
        %277 = vst [vmem:[%s73 + $0x328] sm:$0xff] %v276
        %v278 = vld [vmem:[%s72 + $0x330] sm:$0xff]
        %279 = vst [vmem:[%s73 + $0x330] sm:$0xff] %v278
        %v280 = vld [vmem:[%s72 + $0x338] sm:$0xff]
        %281 = vst [vmem:[%s73 + $0x338] sm:$0xff] %v280
        %v282 = vld [vmem:[%s72 + $0x340] sm:$0xff]
        %283 = vst [vmem:[%s73 + $0x340] sm:$0xff] %v282
        %v284 = vld [vmem:[%s72 + $0x348] sm:$0xff]
        %285 = vst [vmem:[%s73 + $0x348] sm:$0xff] %v284
        %v286 = vld [vmem:[%s72 + $0x350] sm:$0xff]
        %287 = vst [vmem:[%s73 + $0x350] sm:$0xff] %v286
        %v288 = vld [vmem:[%s72 + $0x358] sm:$0xff]
        %289 = vst [vmem:[%s73 + $0x358] sm:$0xff] %v288
        %v290 = vld [vmem:[%s72 + $0x360] sm:$0xff]
        %291 = vst [vmem:[%s73 + $0x360] sm:$0xff] %v290
        %v292 = vld [vmem:[%s72 + $0x368] sm:$0xff]
        %293 = vst [vmem:[%s73 + $0x368] sm:$0xff] %v292
        %v294 = vld [vmem:[%s72 + $0x370] sm:$0xff]
        %295 = vst [vmem:[%s73 + $0x370] sm:$0xff] %v294
        %v296 = vld [vmem:[%s72 + $0x378] sm:$0xff]
        %297 = vst [vmem:[%s73 + $0x378] sm:$0xff] %v296
        %v298 = vld [vmem:[%s72 + $0x380] sm:$0xff]
        %299 = vst [vmem:[%s73 + $0x380] sm:$0xff] %v298
        %v300 = vld [vmem:[%s72 + $0x388] sm:$0xff]
        %301 = vst [vmem:[%s73 + $0x388] sm:$0xff] %v300
        %v302 = vld [vmem:[%s72 + $0x390] sm:$0xff]
        %303 = vst [vmem:[%s73 + $0x390] sm:$0xff] %v302
        %v304 = vld [vmem:[%s72 + $0x398] sm:$0xff]
        %305 = vst [vmem:[%s73 + $0x398] sm:$0xff] %v304
        %v306 = vld [vmem:[%s72 + $0x3a0] sm:$0xff]
        %307 = vst [vmem:[%s73 + $0x3a0] sm:$0xff] %v306
        %v308 = vld [vmem:[%s72 + $0x3a8] sm:$0xff]
        %309 = vst [vmem:[%s73 + $0x3a8] sm:$0xff] %v308
        %v310 = vld [vmem:[%s72 + $0x3b0] sm:$0xff]
        %311 = vst [vmem:[%s73 + $0x3b0] sm:$0xff] %v310
        %v312 = vld [vmem:[%s72 + $0x3b8] sm:$0xff]
        %313 = vst [vmem:[%s73 + $0x3b8] sm:$0xff] %v312
        %v314 = vld [vmem:[%s72 + $0x3c0] sm:$0xff]
        %315 = vst [vmem:[%s73 + $0x3c0] sm:$0xff] %v314
        %v316 = vld [vmem:[%s72 + $0x3c8] sm:$0xff]
        %317 = vst [vmem:[%s73 + $0x3c8] sm:$0xff] %v316
        %v318 = vld [vmem:[%s72 + $0x3d0] sm:$0xff]
        %319 = vst [vmem:[%s73 + $0x3d0] sm:$0xff] %v318
        %v320 = vld [vmem:[%s72 + $0x3d8] sm:$0xff]
        %321 = vst [vmem:[%s73 + $0x3d8] sm:$0xff] %v320
        %v322 = vld [vmem:[%s72 + $0x3e0] sm:$0xff]
        %323 = vst [vmem:[%s73 + $0x3e0] sm:$0xff] %v322
        %v324 = vld [vmem:[%s72 + $0x3e8] sm:$0xff]
        %325 = vst [vmem:[%s73 + $0x3e8] sm:$0xff] %v324
        %v326 = vld [vmem:[%s72 + $0x3f0] sm:$0xff]
        %327 = vst [vmem:[%s73 + $0x3f0] sm:$0xff] %v326
        %v328 = vld [vmem:[%s72 + $0x3f8] sm:$0xff]
        %329 = vst [vmem:[%s73 + $0x3f8] sm:$0xff] %v328
      $region69: #{predictor_forward.1} parent=63 // loop_footer
        %s71 = sadd.s32 1, %s67
      $region70: #{predictor_forward.1} parent=63 // loop_footer_branch
        %66 = sbr.rel target = $region66
      $region71: #{predictor_forward.1} parent=63 // loop_exit
        _
    $region64: #{predictor_forward.1} parent=48 // pred_fallthru
      _
    %p330 = pneg %p62
    // Predicated region
    $region72: #{predictor_forward.1} parent=48 // pred_check
      _
    $region73: #{predictor_forward.1} parent=48 // pred_check_branch
      %332 = sbr.rel (%p62) target = $region75
    $region74: #{predictor_forward.1} parent=48 // pred_region
      %s333 = sand.u32 1024, 7
    $region75: #{predictor_forward.1} parent=48 // pred_fallthru
      _
  $region49: #{predictor_forward.1} parent=0 // pred_fallthru
    _
  // Predicated region
  $region50: #{predictor_forward.1} parent=0 // pred_check
    %p46 = pneg %p42
  $region51: #{predictor_forward.1} parent=0 // pred_check_branch
    %48 = sbr.rel (%p46) target = $region53
  $region52: #{predictor_forward.1} parent=0 // pred_region
    %s49 = sshll.u32 1, 1024
    %s50 = ssub.s32 %s49, 1
    loop: start=0, step=1, limit=1
    $region54: #{predictor_forward.1} parent=52 // loop_pre_header
      _
    $region55: #{predictor_forward.1} parent=52 // loop_header
      %s52 = sphi 0, %s56
      %p53 = scmp.ge.s32.totalorder %s52, 1
      %s57 = sphi %s11, %s11
      %s58 = sphi [#allocation4], [#allocation4]
    $region56: #{predictor_forward.1} parent=52 // loop_header_branch
      %55 = sbr.rel (%p53) target = $region60
    $region57: #{predictor_forward.1} parent=52 // loop_body
      %v59 = vld [vmem:[%s57] sm:%s50]
      %60 = vst [vmem:[%s58] sm:%s50] %v59
    $region58: #{predictor_forward.1} parent=52 // loop_footer
      %s56 = sadd.s32 1, %s52
    $region59: #{predictor_forward.1} parent=52 // loop_footer_branch
      %51 = sbr.rel target = $region55
    $region60: #{predictor_forward.1} parent=52 // loop_exit
      _
  $region53: #{predictor_forward.1} parent=0 // pred_fallthru
    _
  // Predicated region
  $region76: #{predictor_forward.1} parent=0 // pred_check
    _
  $region77: #{predictor_forward.1} parent=0 // pred_check_branch
    %336 = sbr.rel (0) target = $region79
  $region78: #{predictor_forward.1} parent=0 // pred_region
    %337 = vsyncadd [#allocation6], 16384
  $region79: #{predictor_forward.1} parent=0 // pred_fallthru
    _
  %s338 = scalar_lea.sflag [#allocation6], 1
  %p340 = scmp.lt.u32.totalorder 1024, 8
  %p341 = pneg %p340
  // Predicated region
  $region80: #{predictor_forward.1} parent=0 // pred_check
    _
  $region81: #{predictor_forward.1} parent=0 // pred_check_branch
    %343 = sbr.rel (%p340) target = $region83
  $region82: #{predictor_forward.1} parent=0 // pred_region
    %s359 = sand.u32 1024, 7
    %p360 = scmp.eq.s32.totalorder %s359, 0
    // Predicated region
    $region95: #{predictor_forward.1} parent=82 // pred_check
      %p361 = pneg %p360
    $region96: #{predictor_forward.1} parent=82 // pred_check_branch
      %363 = sbr.rel (%p361) target = $region98
    $region97: #{predictor_forward.1} parent=82 // pred_region
      loop: start=0, step=1, limit=1
      $region99: #{predictor_forward.1} parent=97 // loop_pre_header
        _
      $region100: #{predictor_forward.1} parent=97 // loop_header
        %s365 = sphi 0, %s369
        %p366 = scmp.ge.s32.totalorder %s365, 1
        %s370 = sphi %s12, %s12
        %s371 = sphi [#allocation5], [#allocation5]
      $region101: #{predictor_forward.1} parent=97 // loop_header_branch
        %368 = sbr.rel (%p366) target = $region105
      $region102: #{predictor_forward.1} parent=97 // loop_body
        %v372 = vld [vmem:[%s370] sm:$0xff]
        %373 = vst [vmem:[%s371] sm:$0xff] %v372
        %v374 = vld [vmem:[%s370 + $0x8] sm:$0xff]
        %375 = vst [vmem:[%s371 + $0x8] sm:$0xff] %v374
        %v376 = vld [vmem:[%s370 + $0x10] sm:$0xff]
        %377 = vst [vmem:[%s371 + $0x10] sm:$0xff] %v376
        %v378 = vld [vmem:[%s370 + $0x18] sm:$0xff]
        %379 = vst [vmem:[%s371 + $0x18] sm:$0xff] %v378
        %v380 = vld [vmem:[%s370 + $0x20] sm:$0xff]
        %381 = vst [vmem:[%s371 + $0x20] sm:$0xff] %v380
        %v382 = vld [vmem:[%s370 + $0x28] sm:$0xff]
        %383 = vst [vmem:[%s371 + $0x28] sm:$0xff] %v382
        %v384 = vld [vmem:[%s370 + $0x30] sm:$0xff]
        %385 = vst [vmem:[%s371 + $0x30] sm:$0xff] %v384
        %v386 = vld [vmem:[%s370 + $0x38] sm:$0xff]
        %387 = vst [vmem:[%s371 + $0x38] sm:$0xff] %v386
        %v388 = vld [vmem:[%s370 + $0x40] sm:$0xff]
        %389 = vst [vmem:[%s371 + $0x40] sm:$0xff] %v388
        %v390 = vld [vmem:[%s370 + $0x48] sm:$0xff]
        %391 = vst [vmem:[%s371 + $0x48] sm:$0xff] %v390
        %v392 = vld [vmem:[%s370 + $0x50] sm:$0xff]
        %393 = vst [vmem:[%s371 + $0x50] sm:$0xff] %v392
        %v394 = vld [vmem:[%s370 + $0x58] sm:$0xff]
        %395 = vst [vmem:[%s371 + $0x58] sm:$0xff] %v394
        %v396 = vld [vmem:[%s370 + $0x60] sm:$0xff]
        %397 = vst [vmem:[%s371 + $0x60] sm:$0xff] %v396
        %v398 = vld [vmem:[%s370 + $0x68] sm:$0xff]
        %399 = vst [vmem:[%s371 + $0x68] sm:$0xff] %v398
        %v400 = vld [vmem:[%s370 + $0x70] sm:$0xff]
        %401 = vst [vmem:[%s371 + $0x70] sm:$0xff] %v400
        %v402 = vld [vmem:[%s370 + $0x78] sm:$0xff]
        %403 = vst [vmem:[%s371 + $0x78] sm:$0xff] %v402
        %v404 = vld [vmem:[%s370 + $0x80] sm:$0xff]
        %405 = vst [vmem:[%s371 + $0x80] sm:$0xff] %v404
        %v406 = vld [vmem:[%s370 + $0x88] sm:$0xff]
        %407 = vst [vmem:[%s371 + $0x88] sm:$0xff] %v406
        %v408 = vld [vmem:[%s370 + $0x90] sm:$0xff]
        %409 = vst [vmem:[%s371 + $0x90] sm:$0xff] %v408
        %v410 = vld [vmem:[%s370 + $0x98] sm:$0xff]
        %411 = vst [vmem:[%s371 + $0x98] sm:$0xff] %v410
        %v412 = vld [vmem:[%s370 + $0xa0] sm:$0xff]
        %413 = vst [vmem:[%s371 + $0xa0] sm:$0xff] %v412
        %v414 = vld [vmem:[%s370 + $0xa8] sm:$0xff]
        %415 = vst [vmem:[%s371 + $0xa8] sm:$0xff] %v414
        %v416 = vld [vmem:[%s370 + $0xb0] sm:$0xff]
        %417 = vst [vmem:[%s371 + $0xb0] sm:$0xff] %v416
        %v418 = vld [vmem:[%s370 + $0xb8] sm:$0xff]
        %419 = vst [vmem:[%s371 + $0xb8] sm:$0xff] %v418
        %v420 = vld [vmem:[%s370 + $0xc0] sm:$0xff]
        %421 = vst [vmem:[%s371 + $0xc0] sm:$0xff] %v420
        %v422 = vld [vmem:[%s370 + $0xc8] sm:$0xff]
        %423 = vst [vmem:[%s371 + $0xc8] sm:$0xff] %v422
        %v424 = vld [vmem:[%s370 + $0xd0] sm:$0xff]
        %425 = vst [vmem:[%s371 + $0xd0] sm:$0xff] %v424
        %v426 = vld [vmem:[%s370 + $0xd8] sm:$0xff]
        %427 = vst [vmem:[%s371 + $0xd8] sm:$0xff] %v426
        %v428 = vld [vmem:[%s370 + $0xe0] sm:$0xff]
        %429 = vst [vmem:[%s371 + $0xe0] sm:$0xff] %v428
        %v430 = vld [vmem:[%s370 + $0xe8] sm:$0xff]
        %431 = vst [vmem:[%s371 + $0xe8] sm:$0xff] %v430
        %v432 = vld [vmem:[%s370 + $0xf0] sm:$0xff]
        %433 = vst [vmem:[%s371 + $0xf0] sm:$0xff] %v432
        %v434 = vld [vmem:[%s370 + $0xf8] sm:$0xff]
        %435 = vst [vmem:[%s371 + $0xf8] sm:$0xff] %v434
        %v436 = vld [vmem:[%s370 + $0x100] sm:$0xff]
        %437 = vst [vmem:[%s371 + $0x100] sm:$0xff] %v436
        %v438 = vld [vmem:[%s370 + $0x108] sm:$0xff]
        %439 = vst [vmem:[%s371 + $0x108] sm:$0xff] %v438
        %v440 = vld [vmem:[%s370 + $0x110] sm:$0xff]
        %441 = vst [vmem:[%s371 + $0x110] sm:$0xff] %v440
        %v442 = vld [vmem:[%s370 + $0x118] sm:$0xff]
        %443 = vst [vmem:[%s371 + $0x118] sm:$0xff] %v442
        %v444 = vld [vmem:[%s370 + $0x120] sm:$0xff]
        %445 = vst [vmem:[%s371 + $0x120] sm:$0xff] %v444
        %v446 = vld [vmem:[%s370 + $0x128] sm:$0xff]
        %447 = vst [vmem:[%s371 + $0x128] sm:$0xff] %v446
        %v448 = vld [vmem:[%s370 + $0x130] sm:$0xff]
        %449 = vst [vmem:[%s371 + $0x130] sm:$0xff] %v448
        %v450 = vld [vmem:[%s370 + $0x138] sm:$0xff]
        %451 = vst [vmem:[%s371 + $0x138] sm:$0xff] %v450
        %v452 = vld [vmem:[%s370 + $0x140] sm:$0xff]
        %453 = vst [vmem:[%s371 + $0x140] sm:$0xff] %v452
        %v454 = vld [vmem:[%s370 + $0x148] sm:$0xff]
        %455 = vst [vmem:[%s371 + $0x148] sm:$0xff] %v454
        %v456 = vld [vmem:[%s370 + $0x150] sm:$0xff]
        %457 = vst [vmem:[%s371 + $0x150] sm:$0xff] %v456
        %v458 = vld [vmem:[%s370 + $0x158] sm:$0xff]
        %459 = vst [vmem:[%s371 + $0x158] sm:$0xff] %v458
        %v460 = vld [vmem:[%s370 + $0x160] sm:$0xff]
        %461 = vst [vmem:[%s371 + $0x160] sm:$0xff] %v460
        %v462 = vld [vmem:[%s370 + $0x168] sm:$0xff]
        %463 = vst [vmem:[%s371 + $0x168] sm:$0xff] %v462
        %v464 = vld [vmem:[%s370 + $0x170] sm:$0xff]
        %465 = vst [vmem:[%s371 + $0x170] sm:$0xff] %v464
        %v466 = vld [vmem:[%s370 + $0x178] sm:$0xff]
        %467 = vst [vmem:[%s371 + $0x178] sm:$0xff] %v466
        %v468 = vld [vmem:[%s370 + $0x180] sm:$0xff]
        %469 = vst [vmem:[%s371 + $0x180] sm:$0xff] %v468
        %v470 = vld [vmem:[%s370 + $0x188] sm:$0xff]
        %471 = vst [vmem:[%s371 + $0x188] sm:$0xff] %v470
        %v472 = vld [vmem:[%s370 + $0x190] sm:$0xff]
        %473 = vst [vmem:[%s371 + $0x190] sm:$0xff] %v472
        %v474 = vld [vmem:[%s370 + $0x198] sm:$0xff]
        %475 = vst [vmem:[%s371 + $0x198] sm:$0xff] %v474
        %v476 = vld [vmem:[%s370 + $0x1a0] sm:$0xff]
        %477 = vst [vmem:[%s371 + $0x1a0] sm:$0xff] %v476
        %v478 = vld [vmem:[%s370 + $0x1a8] sm:$0xff]
        %479 = vst [vmem:[%s371 + $0x1a8] sm:$0xff] %v478
        %v480 = vld [vmem:[%s370 + $0x1b0] sm:$0xff]
        %481 = vst [vmem:[%s371 + $0x1b0] sm:$0xff] %v480
        %v482 = vld [vmem:[%s370 + $0x1b8] sm:$0xff]
        %483 = vst [vmem:[%s371 + $0x1b8] sm:$0xff] %v482
        %v484 = vld [vmem:[%s370 + $0x1c0] sm:$0xff]
        %485 = vst [vmem:[%s371 + $0x1c0] sm:$0xff] %v484
        %v486 = vld [vmem:[%s370 + $0x1c8] sm:$0xff]
        %487 = vst [vmem:[%s371 + $0x1c8] sm:$0xff] %v486
        %v488 = vld [vmem:[%s370 + $0x1d0] sm:$0xff]
        %489 = vst [vmem:[%s371 + $0x1d0] sm:$0xff] %v488
        %v490 = vld [vmem:[%s370 + $0x1d8] sm:$0xff]
        %491 = vst [vmem:[%s371 + $0x1d8] sm:$0xff] %v490
        %v492 = vld [vmem:[%s370 + $0x1e0] sm:$0xff]
        %493 = vst [vmem:[%s371 + $0x1e0] sm:$0xff] %v492
        %v494 = vld [vmem:[%s370 + $0x1e8] sm:$0xff]
        %495 = vst [vmem:[%s371 + $0x1e8] sm:$0xff] %v494
        %v496 = vld [vmem:[%s370 + $0x1f0] sm:$0xff]
        %497 = vst [vmem:[%s371 + $0x1f0] sm:$0xff] %v496
        %v498 = vld [vmem:[%s370 + $0x1f8] sm:$0xff]
        %499 = vst [vmem:[%s371 + $0x1f8] sm:$0xff] %v498
        %v500 = vld [vmem:[%s370 + $0x200] sm:$0xff]
        %501 = vst [vmem:[%s371 + $0x200] sm:$0xff] %v500
        %v502 = vld [vmem:[%s370 + $0x208] sm:$0xff]
        %503 = vst [vmem:[%s371 + $0x208] sm:$0xff] %v502
        %v504 = vld [vmem:[%s370 + $0x210] sm:$0xff]
        %505 = vst [vmem:[%s371 + $0x210] sm:$0xff] %v504
        %v506 = vld [vmem:[%s370 + $0x218] sm:$0xff]
        %507 = vst [vmem:[%s371 + $0x218] sm:$0xff] %v506
        %v508 = vld [vmem:[%s370 + $0x220] sm:$0xff]
        %509 = vst [vmem:[%s371 + $0x220] sm:$0xff] %v508
        %v510 = vld [vmem:[%s370 + $0x228] sm:$0xff]
        %511 = vst [vmem:[%s371 + $0x228] sm:$0xff] %v510
        %v512 = vld [vmem:[%s370 + $0x230] sm:$0xff]
        %513 = vst [vmem:[%s371 + $0x230] sm:$0xff] %v512
        %v514 = vld [vmem:[%s370 + $0x238] sm:$0xff]
        %515 = vst [vmem:[%s371 + $0x238] sm:$0xff] %v514
        %v516 = vld [vmem:[%s370 + $0x240] sm:$0xff]
        %517 = vst [vmem:[%s371 + $0x240] sm:$0xff] %v516
        %v518 = vld [vmem:[%s370 + $0x248] sm:$0xff]
        %519 = vst [vmem:[%s371 + $0x248] sm:$0xff] %v518
        %v520 = vld [vmem:[%s370 + $0x250] sm:$0xff]
        %521 = vst [vmem:[%s371 + $0x250] sm:$0xff] %v520
        %v522 = vld [vmem:[%s370 + $0x258] sm:$0xff]
        %523 = vst [vmem:[%s371 + $0x258] sm:$0xff] %v522
        %v524 = vld [vmem:[%s370 + $0x260] sm:$0xff]
        %525 = vst [vmem:[%s371 + $0x260] sm:$0xff] %v524
        %v526 = vld [vmem:[%s370 + $0x268] sm:$0xff]
        %527 = vst [vmem:[%s371 + $0x268] sm:$0xff] %v526
        %v528 = vld [vmem:[%s370 + $0x270] sm:$0xff]
        %529 = vst [vmem:[%s371 + $0x270] sm:$0xff] %v528
        %v530 = vld [vmem:[%s370 + $0x278] sm:$0xff]
        %531 = vst [vmem:[%s371 + $0x278] sm:$0xff] %v530
        %v532 = vld [vmem:[%s370 + $0x280] sm:$0xff]
        %533 = vst [vmem:[%s371 + $0x280] sm:$0xff] %v532
        %v534 = vld [vmem:[%s370 + $0x288] sm:$0xff]
        %535 = vst [vmem:[%s371 + $0x288] sm:$0xff] %v534
        %v536 = vld [vmem:[%s370 + $0x290] sm:$0xff]
        %537 = vst [vmem:[%s371 + $0x290] sm:$0xff] %v536
        %v538 = vld [vmem:[%s370 + $0x298] sm:$0xff]
        %539 = vst [vmem:[%s371 + $0x298] sm:$0xff] %v538
        %v540 = vld [vmem:[%s370 + $0x2a0] sm:$0xff]
        %541 = vst [vmem:[%s371 + $0x2a0] sm:$0xff] %v540
        %v542 = vld [vmem:[%s370 + $0x2a8] sm:$0xff]
        %543 = vst [vmem:[%s371 + $0x2a8] sm:$0xff] %v542
        %v544 = vld [vmem:[%s370 + $0x2b0] sm:$0xff]
        %545 = vst [vmem:[%s371 + $0x2b0] sm:$0xff] %v544
        %v546 = vld [vmem:[%s370 + $0x2b8] sm:$0xff]
        %547 = vst [vmem:[%s371 + $0x2b8] sm:$0xff] %v546
        %v548 = vld [vmem:[%s370 + $0x2c0] sm:$0xff]
        %549 = vst [vmem:[%s371 + $0x2c0] sm:$0xff] %v548
        %v550 = vld [vmem:[%s370 + $0x2c8] sm:$0xff]
        %551 = vst [vmem:[%s371 + $0x2c8] sm:$0xff] %v550
        %v552 = vld [vmem:[%s370 + $0x2d0] sm:$0xff]
        %553 = vst [vmem:[%s371 + $0x2d0] sm:$0xff] %v552
        %v554 = vld [vmem:[%s370 + $0x2d8] sm:$0xff]
        %555 = vst [vmem:[%s371 + $0x2d8] sm:$0xff] %v554
        %v556 = vld [vmem:[%s370 + $0x2e0] sm:$0xff]
        %557 = vst [vmem:[%s371 + $0x2e0] sm:$0xff] %v556
        %v558 = vld [vmem:[%s370 + $0x2e8] sm:$0xff]
        %559 = vst [vmem:[%s371 + $0x2e8] sm:$0xff] %v558
        %v560 = vld [vmem:[%s370 + $0x2f0] sm:$0xff]
        %561 = vst [vmem:[%s371 + $0x2f0] sm:$0xff] %v560
        %v562 = vld [vmem:[%s370 + $0x2f8] sm:$0xff]
        %563 = vst [vmem:[%s371 + $0x2f8] sm:$0xff] %v562
        %v564 = vld [vmem:[%s370 + $0x300] sm:$0xff]
        %565 = vst [vmem:[%s371 + $0x300] sm:$0xff] %v564
        %v566 = vld [vmem:[%s370 + $0x308] sm:$0xff]
        %567 = vst [vmem:[%s371 + $0x308] sm:$0xff] %v566
        %v568 = vld [vmem:[%s370 + $0x310] sm:$0xff]
        %569 = vst [vmem:[%s371 + $0x310] sm:$0xff] %v568
        %v570 = vld [vmem:[%s370 + $0x318] sm:$0xff]
        %571 = vst [vmem:[%s371 + $0x318] sm:$0xff] %v570
        %v572 = vld [vmem:[%s370 + $0x320] sm:$0xff]
        %573 = vst [vmem:[%s371 + $0x320] sm:$0xff] %v572
        %v574 = vld [vmem:[%s370 + $0x328] sm:$0xff]
        %575 = vst [vmem:[%s371 + $0x328] sm:$0xff] %v574
        %v576 = vld [vmem:[%s370 + $0x330] sm:$0xff]
        %577 = vst [vmem:[%s371 + $0x330] sm:$0xff] %v576
        %v578 = vld [vmem:[%s370 + $0x338] sm:$0xff]
        %579 = vst [vmem:[%s371 + $0x338] sm:$0xff] %v578
        %v580 = vld [vmem:[%s370 + $0x340] sm:$0xff]
        %581 = vst [vmem:[%s371 + $0x340] sm:$0xff] %v580
        %v582 = vld [vmem:[%s370 + $0x348] sm:$0xff]
        %583 = vst [vmem:[%s371 + $0x348] sm:$0xff] %v582
        %v584 = vld [vmem:[%s370 + $0x350] sm:$0xff]
        %585 = vst [vmem:[%s371 + $0x350] sm:$0xff] %v584
        %v586 = vld [vmem:[%s370 + $0x358] sm:$0xff]
        %587 = vst [vmem:[%s371 + $0x358] sm:$0xff] %v586
        %v588 = vld [vmem:[%s370 + $0x360] sm:$0xff]
        %589 = vst [vmem:[%s371 + $0x360] sm:$0xff] %v588
        %v590 = vld [vmem:[%s370 + $0x368] sm:$0xff]
        %591 = vst [vmem:[%s371 + $0x368] sm:$0xff] %v590
        %v592 = vld [vmem:[%s370 + $0x370] sm:$0xff]
        %593 = vst [vmem:[%s371 + $0x370] sm:$0xff] %v592
        %v594 = vld [vmem:[%s370 + $0x378] sm:$0xff]
        %595 = vst [vmem:[%s371 + $0x378] sm:$0xff] %v594
        %v596 = vld [vmem:[%s370 + $0x380] sm:$0xff]
        %597 = vst [vmem:[%s371 + $0x380] sm:$0xff] %v596
        %v598 = vld [vmem:[%s370 + $0x388] sm:$0xff]
        %599 = vst [vmem:[%s371 + $0x388] sm:$0xff] %v598
        %v600 = vld [vmem:[%s370 + $0x390] sm:$0xff]
        %601 = vst [vmem:[%s371 + $0x390] sm:$0xff] %v600
        %v602 = vld [vmem:[%s370 + $0x398] sm:$0xff]
        %603 = vst [vmem:[%s371 + $0x398] sm:$0xff] %v602
        %v604 = vld [vmem:[%s370 + $0x3a0] sm:$0xff]
        %605 = vst [vmem:[%s371 + $0x3a0] sm:$0xff] %v604
        %v606 = vld [vmem:[%s370 + $0x3a8] sm:$0xff]
        %607 = vst [vmem:[%s371 + $0x3a8] sm:$0xff] %v606
        %v608 = vld [vmem:[%s370 + $0x3b0] sm:$0xff]
        %609 = vst [vmem:[%s371 + $0x3b0] sm:$0xff] %v608
        %v610 = vld [vmem:[%s370 + $0x3b8] sm:$0xff]
        %611 = vst [vmem:[%s371 + $0x3b8] sm:$0xff] %v610
        %v612 = vld [vmem:[%s370 + $0x3c0] sm:$0xff]
        %613 = vst [vmem:[%s371 + $0x3c0] sm:$0xff] %v612
        %v614 = vld [vmem:[%s370 + $0x3c8] sm:$0xff]
        %615 = vst [vmem:[%s371 + $0x3c8] sm:$0xff] %v614
        %v616 = vld [vmem:[%s370 + $0x3d0] sm:$0xff]
        %617 = vst [vmem:[%s371 + $0x3d0] sm:$0xff] %v616
        %v618 = vld [vmem:[%s370 + $0x3d8] sm:$0xff]
        %619 = vst [vmem:[%s371 + $0x3d8] sm:$0xff] %v618
        %v620 = vld [vmem:[%s370 + $0x3e0] sm:$0xff]
        %621 = vst [vmem:[%s371 + $0x3e0] sm:$0xff] %v620
        %v622 = vld [vmem:[%s370 + $0x3e8] sm:$0xff]
        %623 = vst [vmem:[%s371 + $0x3e8] sm:$0xff] %v622
        %v624 = vld [vmem:[%s370 + $0x3f0] sm:$0xff]
        %625 = vst [vmem:[%s371 + $0x3f0] sm:$0xff] %v624
        %v626 = vld [vmem:[%s370 + $0x3f8] sm:$0xff]
        %627 = vst [vmem:[%s371 + $0x3f8] sm:$0xff] %v626
      $region103: #{predictor_forward.1} parent=97 // loop_footer
        %s369 = sadd.s32 1, %s365
      $region104: #{predictor_forward.1} parent=97 // loop_footer_branch
        %364 = sbr.rel target = $region100
      $region105: #{predictor_forward.1} parent=97 // loop_exit
        _
    $region98: #{predictor_forward.1} parent=82 // pred_fallthru
      _
    %p628 = pneg %p360
    // Predicated region
    $region106: #{predictor_forward.1} parent=82 // pred_check
      _
    $region107: #{predictor_forward.1} parent=82 // pred_check_branch
      %630 = sbr.rel (%p360) target = $region109
    $region108: #{predictor_forward.1} parent=82 // pred_region
      %s631 = sand.u32 1024, 7
    $region109: #{predictor_forward.1} parent=82 // pred_fallthru
      _
  $region83: #{predictor_forward.1} parent=0 // pred_fallthru
    _
  // Predicated region
  $region84: #{predictor_forward.1} parent=0 // pred_check
    %p344 = pneg %p340
  $region85: #{predictor_forward.1} parent=0 // pred_check_branch
    %346 = sbr.rel (%p344) target = $region87
  $region86: #{predictor_forward.1} parent=0 // pred_region
    %s347 = sshll.u32 1, 1024
    %s348 = ssub.s32 %s347, 1
    loop: start=0, step=1, limit=1
    $region88: #{predictor_forward.1} parent=86 // loop_pre_header
      _
    $region89: #{predictor_forward.1} parent=86 // loop_header
      %s350 = sphi 0, %s354
      %p351 = scmp.ge.s32.totalorder %s350, 1
      %s355 = sphi %s12, %s12
      %s356 = sphi [#allocation5], [#allocation5]
    $region90: #{predictor_forward.1} parent=86 // loop_header_branch
      %353 = sbr.rel (%p351) target = $region94
    $region91: #{predictor_forward.1} parent=86 // loop_body
      %v357 = vld [vmem:[%s355] sm:%s348]
      %358 = vst [vmem:[%s356] sm:%s348] %v357
    $region92: #{predictor_forward.1} parent=86 // loop_footer
      %s354 = sadd.s32 1, %s350
    $region93: #{predictor_forward.1} parent=86 // loop_footer_branch
      %349 = sbr.rel target = $region89
    $region94: #{predictor_forward.1} parent=86 // loop_exit
      _
  $region87: #{predictor_forward.1} parent=0 // pred_fallthru
    _
  // Predicated region
  $region110: #{predictor_forward.1} parent=0 // pred_check
    _
  $region111: #{predictor_forward.1} parent=0 // pred_check_branch
    %634 = sbr.rel (0) target = $region113
  $region112: #{predictor_forward.1} parent=0 // pred_region
    %635 = vsyncadd %s338, 16384
  $region113: #{predictor_forward.1} parent=0 // pred_fallthru
    _
  %v636 = vld [vmem:[%s2] sm:$0x1]
  %v638 = vlaneseq
  %v639 = vshrl.u32 %v638, 7
  %v640 = vsub.s32 0, %v639
  %v641 = vrot.slane %v636, %v640
  %v643 = vld [vmem:[%s1] sm:$0xf]
  %v644 = vld [vmem:[%s1 + $0x4] sm:$0xf]
  %v645 = vld [vmem:[%s1 + $0x8] sm:$0xf]
  %v646 = vld [vmem:[%s1 + $0xc] sm:$0xf]
  %v647 = vld [vmem:[%s1 + $0x10] sm:$0xf]
  %v648 = vld [vmem:[%s1 + $0x14] sm:$0xf]
  %v649 = vld [vmem:[%s1 + $0x18] sm:$0xf]
  %v650 = vld [vmem:[%s1 + $0x1c] sm:$0xf]
  %v651 = vld [vmem:[%s1 + $0x20] sm:$0xf]
  %v652 = vld [vmem:[%s1 + $0x24] sm:$0xf]
  %v653 = vld [vmem:[%s1 + $0x28] sm:$0xf]
  %v654 = vld [vmem:[%s1 + $0x2c] sm:$0xf]
  %v655 = vld [vmem:[%s1 + $0x30] sm:$0xf]
  %v656 = vld [vmem:[%s1 + $0x34] sm:$0xf]
  %v657 = vld [vmem:[%s1 + $0x38] sm:$0xf]
  %v658 = vld [vmem:[%s1 + $0x3c] sm:$0xf]
  %v659 = vld [vmem:[%s1 + $0x40] sm:$0xf]
  %v660 = vld [vmem:[%s1 + $0x44] sm:$0xf]
  %v661 = vld [vmem:[%s1 + $0x48] sm:$0xf]
  %v662 = vld [vmem:[%s1 + $0x4c] sm:$0xf]
  %v663 = vld [vmem:[%s1 + $0x50] sm:$0xf]
  %v664 = vld [vmem:[%s1 + $0x54] sm:$0xf]
  %v665 = vld [vmem:[%s1 + $0x58] sm:$0xf]
  %v666 = vld [vmem:[%s1 + $0x5c] sm:$0xf]
  %v667 = vld [vmem:[%s1 + $0x60] sm:$0xf]
  %v668 = vld [vmem:[%s1 + $0x64] sm:$0xf]
  %v669 = vld [vmem:[%s1 + $0x68] sm:$0xf]
  %v670 = vld [vmem:[%s1 + $0x6c] sm:$0xf]
  %v671 = vld [vmem:[%s1 + $0x70] sm:$0xf]
  %v672 = vld [vmem:[%s1 + $0x74] sm:$0xf]
  %v673 = vld [vmem:[%s1 + $0x78] sm:$0xf]
  %v674 = vld [vmem:[%s1 + $0x7c] sm:$0xf]
  %v675 = vld [vmem:[%s1 + $0x80] sm:$0xf]
  %v676 = vld [vmem:[%s1 + $0x84] sm:$0xf]
  %v677 = vld [vmem:[%s1 + $0x88] sm:$0xf]
  %v678 = vld [vmem:[%s1 + $0x8c] sm:$0xf]
  %v679 = vld [vmem:[%s1 + $0x90] sm:$0xf]
  %v680 = vld [vmem:[%s1 + $0x94] sm:$0xf]
  %v681 = vld [vmem:[%s1 + $0x98] sm:$0xf]
  %v682 = vld [vmem:[%s1 + $0x9c] sm:$0xf]
  %v683 = vld [vmem:[%s1 + $0xa0] sm:$0xf]
  %v684 = vld [vmem:[%s1 + $0xa4] sm:$0xf]
  %v685 = vld [vmem:[%s1 + $0xa8] sm:$0xf]
  %v686 = vld [vmem:[%s1 + $0xac] sm:$0xf]
  %v687 = vld [vmem:[%s1 + $0xb0] sm:$0xf]
  %v688 = vld [vmem:[%s1 + $0xb4] sm:$0xf]
  %v689 = vld [vmem:[%s1 + $0xb8] sm:$0xf]
  %v690 = vld [vmem:[%s1 + $0xbc] sm:$0xf]
  %v691 = vld [vmem:[%s1 + $0xc0] sm:$0xf]
  %v692 = vld [vmem:[%s1 + $0xc4] sm:$0xf]
  %v693 = vld [vmem:[%s1 + $0xc8] sm:$0xf]
  %v694 = vld [vmem:[%s1 + $0xcc] sm:$0xf]
  %v695 = vld [vmem:[%s1 + $0xd0] sm:$0xf]
  %v696 = vld [vmem:[%s1 + $0xd4] sm:$0xf]
  %v697 = vld [vmem:[%s1 + $0xd8] sm:$0xf]
  %v698 = vld [vmem:[%s1 + $0xdc] sm:$0xf]
  %v699 = vld [vmem:[%s1 + $0xe0] sm:$0xf]
  %v700 = vld [vmem:[%s1 + $0xe4] sm:$0xf]
  %v701 = vld [vmem:[%s1 + $0xe8] sm:$0xf]
  %v702 = vld [vmem:[%s1 + $0xec] sm:$0xf]
  %v703 = vld [vmem:[%s1 + $0xf0] sm:$0xf]
  %v704 = vld [vmem:[%s1 + $0xf4] sm:$0xf]
  %v705 = vld [vmem:[%s1 + $0xf8] sm:$0xf]
  %v706 = vld [vmem:[%s1 + $0xfc] sm:$0xf]
  %v707 = vld [vmem:[%s1 + $0x100] sm:$0xf]
  %v708 = vld [vmem:[%s1 + $0x104] sm:$0xf]
  %v709 = vld [vmem:[%s1 + $0x108] sm:$0xf]
  %v710 = vld [vmem:[%s1 + $0x10c] sm:$0xf]
  %v711 = vld [vmem:[%s1 + $0x110] sm:$0xf]
  %v712 = vld [vmem:[%s1 + $0x114] sm:$0xf]
  %v713 = vld [vmem:[%s1 + $0x118] sm:$0xf]
  %v714 = vld [vmem:[%s1 + $0x11c] sm:$0xf]
  %v715 = vld [vmem:[%s1 + $0x120] sm:$0xf]
  %v716 = vld [vmem:[%s1 + $0x124] sm:$0xf]
  %v717 = vld [vmem:[%s1 + $0x128] sm:$0xf]
  %v718 = vld [vmem:[%s1 + $0x12c] sm:$0xf]
  %v719 = vld [vmem:[%s1 + $0x130] sm:$0xf]
  %v720 = vld [vmem:[%s1 + $0x134] sm:$0xf]
  %v721 = vld [vmem:[%s1 + $0x138] sm:$0xf]
  %v722 = vld [vmem:[%s1 + $0x13c] sm:$0xf]
  %v723 = vld [vmem:[%s1 + $0x140] sm:$0xf]
  %v724 = vld [vmem:[%s1 + $0x144] sm:$0xf]
  %v725 = vld [vmem:[%s1 + $0x148] sm:$0xf]
  %v726 = vld [vmem:[%s1 + $0x14c] sm:$0xf]
  %v727 = vld [vmem:[%s1 + $0x150] sm:$0xf]
  %v728 = vld [vmem:[%s1 + $0x154] sm:$0xf]
  %v729 = vld [vmem:[%s1 + $0x158] sm:$0xf]
  %v730 = vld [vmem:[%s1 + $0x15c] sm:$0xf]
  %v731 = vld [vmem:[%s1 + $0x160] sm:$0xf]
  %v732 = vld [vmem:[%s1 + $0x164] sm:$0xf]
  %v733 = vld [vmem:[%s1 + $0x168] sm:$0xf]
  %v734 = vld [vmem:[%s1 + $0x16c] sm:$0xf]
  %v735 = vld [vmem:[%s1 + $0x170] sm:$0xf]
  %v736 = vld [vmem:[%s1 + $0x174] sm:$0xf]
  %v737 = vld [vmem:[%s1 + $0x178] sm:$0xf]
  %v738 = vld [vmem:[%s1 + $0x17c] sm:$0xf]
  %v739 = vld [vmem:[%s1 + $0x180] sm:$0xf]
  %v740 = vld [vmem:[%s1 + $0x184] sm:$0xf]
  %v741 = vld [vmem:[%s1 + $0x188] sm:$0xf]
  %v742 = vld [vmem:[%s1 + $0x18c] sm:$0xf]
  %v743 = vld [vmem:[%s1 + $0x190] sm:$0xf]
  %v744 = vld [vmem:[%s1 + $0x194] sm:$0xf]
  %v745 = vld [vmem:[%s1 + $0x198] sm:$0xf]
  %v746 = vld [vmem:[%s1 + $0x19c] sm:$0xf]
  %v747 = vld [vmem:[%s1 + $0x1a0] sm:$0xf]
  %v748 = vld [vmem:[%s1 + $0x1a4] sm:$0xf]
  %v749 = vld [vmem:[%s1 + $0x1a8] sm:$0xf]
  %v750 = vld [vmem:[%s1 + $0x1ac] sm:$0xf]
  %v751 = vld [vmem:[%s1 + $0x1b0] sm:$0xf]
  %v752 = vld [vmem:[%s1 + $0x1b4] sm:$0xf]
  %v753 = vld [vmem:[%s1 + $0x1b8] sm:$0xf]
  %v754 = vld [vmem:[%s1 + $0x1bc] sm:$0xf]
  %v755 = vld [vmem:[%s1 + $0x1c0] sm:$0xf]
  %v756 = vld [vmem:[%s1 + $0x1c4] sm:$0xf]
  %v757 = vld [vmem:[%s1 + $0x1c8] sm:$0xf]
  %v758 = vld [vmem:[%s1 + $0x1cc] sm:$0xf]
  %v759 = vld [vmem:[%s1 + $0x1d0] sm:$0xf]
  %v760 = vld [vmem:[%s1 + $0x1d4] sm:$0xf]
  %v761 = vld [vmem:[%s1 + $0x1d8] sm:$0xf]
  %v762 = vld [vmem:[%s1 + $0x1dc] sm:$0xf]
  %v763 = vld [vmem:[%s1 + $0x1e0] sm:$0xf]
  %v764 = vld [vmem:[%s1 + $0x1e4] sm:$0xf]
  %v765 = vld [vmem:[%s1 + $0x1e8] sm:$0xf]
  %v766 = vld [vmem:[%s1 + $0x1ec] sm:$0xf]
  %v767 = vld [vmem:[%s1 + $0x1f0] sm:$0xf]
  %v768 = vld [vmem:[%s1 + $0x1f4] sm:$0xf]
  %v769 = vld [vmem:[%s1 + $0x1f8] sm:$0xf]
  %v770 = vld [vmem:[%s1 + $0x1fc] sm:$0xf]
  %v771 = vld [vmem:[%s0] sm:$0xff]
  %v772 = vld [vmem:[%s0 + $0x8] sm:$0xff]
  %v773 = vld [vmem:[%s0 + $0x10] sm:$0xff]
  %v774 = vld [vmem:[%s0 + $0x18] sm:$0xff]
  %v775 = vld [vmem:[%s0 + $0x20] sm:$0xff]
  %v776 = vld [vmem:[%s0 + $0x28] sm:$0xff]
  %v777 = vld [vmem:[%s0 + $0x30] sm:$0xff]
  %v778 = vld [vmem:[%s0 + $0x38] sm:$0xff]
  %v779 = vld [vmem:[%s0 + $0x40] sm:$0xff]
  %v780 = vld [vmem:[%s0 + $0x48] sm:$0xff]
  %v781 = vld [vmem:[%s0 + $0x50] sm:$0xff]
  %v782 = vld [vmem:[%s0 + $0x58] sm:$0xff]
  %v783 = vld [vmem:[%s0 + $0x60] sm:$0xff]
  %v784 = vld [vmem:[%s0 + $0x68] sm:$0xff]
  %v785 = vld [vmem:[%s0 + $0x70] sm:$0xff]
  %v786 = vld [vmem:[%s0 + $0x78] sm:$0xff]
  %v787 = vld [vmem:[%s0 + $0x80] sm:$0xff]
  %v788 = vld [vmem:[%s0 + $0x88] sm:$0xff]
  %v789 = vld [vmem:[%s0 + $0x90] sm:$0xff]
  %v790 = vld [vmem:[%s0 + $0x98] sm:$0xff]
  %v791 = vld [vmem:[%s0 + $0xa0] sm:$0xff]
  %v792 = vld [vmem:[%s0 + $0xa8] sm:$0xff]
  %v793 = vld [vmem:[%s0 + $0xb0] sm:$0xff]
  %v794 = vld [vmem:[%s0 + $0xb8] sm:$0xff]
  %v795 = vld [vmem:[%s0 + $0xc0] sm:$0xff]
  %v796 = vld [vmem:[%s0 + $0xc8] sm:$0xff]
  %v797 = vld [vmem:[%s0 + $0xd0] sm:$0xff]
  %v798 = vld [vmem:[%s0 + $0xd8] sm:$0xff]
  %v799 = vld [vmem:[%s0 + $0xe0] sm:$0xff]
  %v800 = vld [vmem:[%s0 + $0xe8] sm:$0xff]
  %v801 = vld [vmem:[%s0 + $0xf0] sm:$0xff]
  %v802 = vld [vmem:[%s0 + $0xf8] sm:$0xff]
  %v803 = vld [vmem:[%s0 + $0x100] sm:$0xff]
  %v804 = vld [vmem:[%s0 + $0x108] sm:$0xff]
  %v805 = vld [vmem:[%s0 + $0x110] sm:$0xff]
  %v806 = vld [vmem:[%s0 + $0x118] sm:$0xff]
  %v807 = vld [vmem:[%s0 + $0x120] sm:$0xff]
  %v808 = vld [vmem:[%s0 + $0x128] sm:$0xff]
  %v809 = vld [vmem:[%s0 + $0x130] sm:$0xff]
  %v810 = vld [vmem:[%s0 + $0x138] sm:$0xff]
  %v851 = vunpack.c.l.b16 %v771
  %v852 = vunpack.c.h.b16 %v771
  %v853 = vunpack.c.l.b16 %v772
  %v854 = vunpack.c.h.b16 %v772
  %v855 = vunpack.c.l.b16 %v773
  %v856 = vunpack.c.h.b16 %v773
  %v857 = vunpack.c.l.b16 %v774
  %v858 = vunpack.c.h.b16 %v774
  %v859 = vunpack.c.l.b16 %v775
  %v860 = vunpack.c.h.b16 %v775
  %v861 = vunpack.c.l.b16 %v776
  %v862 = vunpack.c.h.b16 %v776
  %v863 = vunpack.c.l.b16 %v777
  %v864 = vunpack.c.h.b16 %v777
  %v865 = vunpack.c.l.b16 %v778
  %v866 = vunpack.c.h.b16 %v778
  %v867 = vunpack.c.l.b16 %v779
  %v868 = vunpack.c.h.b16 %v779
  %v869 = vunpack.c.l.b16 %v780
  %v870 = vunpack.c.h.b16 %v780
  %v871 = vunpack.c.l.b16 %v781
  %v872 = vunpack.c.h.b16 %v781
  %v873 = vunpack.c.l.b16 %v782
  %v874 = vunpack.c.h.b16 %v782
  %v875 = vunpack.c.l.b16 %v783
  %v876 = vunpack.c.h.b16 %v783
  %v877 = vunpack.c.l.b16 %v784
  %v878 = vunpack.c.h.b16 %v784
  %v879 = vunpack.c.l.b16 %v785
  %v880 = vunpack.c.h.b16 %v785
  %v881 = vunpack.c.l.b16 %v786
  %v882 = vunpack.c.h.b16 %v786
  %v883 = vunpack.c.l.b16 %v787
  %v884 = vunpack.c.h.b16 %v787
  %v885 = vunpack.c.l.b16 %v788
  %v886 = vunpack.c.h.b16 %v788
  %v887 = vunpack.c.l.b16 %v789
  %v888 = vunpack.c.h.b16 %v789
  %v889 = vunpack.c.l.b16 %v790
  %v890 = vunpack.c.h.b16 %v790
  %v891 = vunpack.c.l.b16 %v791
  %v892 = vunpack.c.h.b16 %v791
  %v893 = vunpack.c.l.b16 %v792
  %v894 = vunpack.c.h.b16 %v792
  %v895 = vunpack.c.l.b16 %v793
  %v896 = vunpack.c.h.b16 %v793
  %v897 = vunpack.c.l.b16 %v794
  %v898 = vunpack.c.h.b16 %v794
  %v899 = vunpack.c.l.b16 %v795
  %v900 = vunpack.c.h.b16 %v795
  %v901 = vunpack.c.l.b16 %v796
  %v902 = vunpack.c.h.b16 %v796
  %v903 = vunpack.c.l.b16 %v797
  %v904 = vunpack.c.h.b16 %v797
  %v905 = vunpack.c.l.b16 %v798
  %v906 = vunpack.c.h.b16 %v798
  %v907 = vunpack.c.l.b16 %v799
  %v908 = vunpack.c.h.b16 %v799
  %v909 = vunpack.c.l.b16 %v800
  %v910 = vunpack.c.h.b16 %v800
  %v911 = vunpack.c.l.b16 %v801
  %v912 = vunpack.c.h.b16 %v801
  %v913 = vunpack.c.l.b16 %v802
  %v914 = vunpack.c.h.b16 %v802
  %v915 = vunpack.c.l.b16 %v803
  %v916 = vunpack.c.h.b16 %v803
  %v917 = vunpack.c.l.b16 %v804
  %v918 = vunpack.c.h.b16 %v804
  %v919 = vunpack.c.l.b16 %v805
  %v920 = vunpack.c.h.b16 %v805
  %v921 = vunpack.c.l.b16 %v806
  %v922 = vunpack.c.h.b16 %v806
  %v923 = vunpack.c.l.b16 %v807
  %v924 = vunpack.c.h.b16 %v807
  %v925 = vunpack.c.l.b16 %v808
  %v926 = vunpack.c.h.b16 %v808
  %v927 = vunpack.c.l.b16 %v809
  %v928 = vunpack.c.h.b16 %v809
  %v929 = vunpack.c.l.b16 %v810
  %v930 = vunpack.c.h.b16 %v810
  %v931 = vpack.c.b16 %v859, %v851
  %v932 = vpack.c.b16 %v860, %v852
  %v933 = vpack.c.b16 %v861, %v853
  %v934 = vpack.c.b16 %v862, %v854
  %v935 = vpack.c.b16 %v863, %v855
  %v936 = vpack.c.b16 %v864, %v856
  %v937 = vpack.c.b16 %v865, %v857
  %v938 = vpack.c.b16 %v866, %v858
  %v939 = vpack.c.b16 %v875, %v867
  %v940 = vpack.c.b16 %v876, %v868
  %v941 = vpack.c.b16 %v877, %v869
  %v942 = vpack.c.b16 %v878, %v870
  %v943 = vpack.c.b16 %v879, %v871
  %v944 = vpack.c.b16 %v880, %v872
  %v945 = vpack.c.b16 %v881, %v873
  %v946 = vpack.c.b16 %v882, %v874
  %v947 = vpack.c.b16 %v891, %v883
  %v948 = vpack.c.b16 %v892, %v884
  %v949 = vpack.c.b16 %v893, %v885
  %v950 = vpack.c.b16 %v894, %v886
  %v951 = vpack.c.b16 %v895, %v887
  %v952 = vpack.c.b16 %v896, %v888
  %v953 = vpack.c.b16 %v897, %v889
  %v954 = vpack.c.b16 %v898, %v890
  %v955 = vpack.c.b16 %v907, %v899
  %v956 = vpack.c.b16 %v908, %v900
  %v957 = vpack.c.b16 %v909, %v901
  %v958 = vpack.c.b16 %v910, %v902
  %v959 = vpack.c.b16 %v911, %v903
  %v960 = vpack.c.b16 %v912, %v904
  %v961 = vpack.c.b16 %v913, %v905
  %v962 = vpack.c.b16 %v914, %v906
  %v963 = vpack.c.b16 %v923, %v915
  %v964 = vpack.c.b16 %v924, %v916
  %v965 = vpack.c.b16 %v925, %v917
  %v966 = vpack.c.b16 %v926, %v918
  %v967 = vpack.c.b16 %v927, %v919
  %v968 = vpack.c.b16 %v928, %v920
  %v969 = vpack.c.b16 %v929, %v921
  %v970 = vpack.c.b16 %v930, %v922
  %v1139 = vunpack.c.l.b16 %v643
  %v1140 = vunpack.c.l.b16 %v644
  %v1141 = vunpack.c.l.b16 %v645
  %v1142 = vunpack.c.l.b16 %v646
  %v1143 = vunpack.c.l.b16 %v647
  %v1144 = vunpack.c.l.b16 %v648
  %v1145 = vunpack.c.l.b16 %v649
  %v1146 = vunpack.c.l.b16 %v650
  %v1147 = vunpack.c.l.b16 %v651
  %v1148 = vunpack.c.l.b16 %v652
  %v1149 = vunpack.c.l.b16 %v653
  %v1150 = vunpack.c.l.b16 %v654
  %v1151 = vunpack.c.l.b16 %v655
  %v1152 = vunpack.c.l.b16 %v656
  %v1153 = vunpack.c.l.b16 %v657
  %v1154 = vunpack.c.l.b16 %v658
  %v1155 = vunpack.c.l.b16 %v659
  %v1156 = vunpack.c.l.b16 %v660
  %v1157 = vunpack.c.l.b16 %v661
  %v1158 = vunpack.c.l.b16 %v662
  %v1159 = vunpack.c.l.b16 %v663
  %v1160 = vunpack.c.l.b16 %v664
  %v1161 = vunpack.c.l.b16 %v665
  %v1162 = vunpack.c.l.b16 %v666
  %v1163 = vunpack.c.l.b16 %v667
  %v1164 = vunpack.c.l.b16 %v668
  %v1165 = vunpack.c.l.b16 %v669
  %v1166 = vunpack.c.l.b16 %v670
  %v1167 = vunpack.c.l.b16 %v671
  %v1168 = vunpack.c.l.b16 %v672
  %v1169 = vunpack.c.l.b16 %v673
  %v1170 = vunpack.c.l.b16 %v674
  %v1171 = vunpack.c.l.b16 %v675
  %v1172 = vunpack.c.l.b16 %v676
  %v1173 = vunpack.c.l.b16 %v677
  %v1174 = vunpack.c.l.b16 %v678
  %v1175 = vunpack.c.l.b16 %v679
  %v1176 = vunpack.c.l.b16 %v680
  %v1177 = vunpack.c.l.b16 %v681
  %v1178 = vunpack.c.l.b16 %v682
  %v1179 = vunpack.c.l.b16 %v683
  %v1180 = vunpack.c.l.b16 %v684
  %v1181 = vunpack.c.l.b16 %v685
  %v1182 = vunpack.c.l.b16 %v686
  %v1183 = vunpack.c.l.b16 %v687
  %v1184 = vunpack.c.l.b16 %v688
  %v1185 = vunpack.c.l.b16 %v689
  %v1186 = vunpack.c.l.b16 %v690
  %v1187 = vunpack.c.l.b16 %v691
  %v1188 = vunpack.c.l.b16 %v692
  %v1189 = vunpack.c.l.b16 %v693
  %v1190 = vunpack.c.l.b16 %v694
  %v1191 = vunpack.c.l.b16 %v695
  %v1192 = vunpack.c.l.b16 %v696
  %v1193 = vunpack.c.l.b16 %v697
  %v1194 = vunpack.c.l.b16 %v698
  %v1195 = vunpack.c.l.b16 %v699
  %v1196 = vunpack.c.l.b16 %v700
  %v1197 = vunpack.c.l.b16 %v701
  %v1198 = vunpack.c.l.b16 %v702
  %v1199 = vunpack.c.l.b16 %v703
  %v1200 = vunpack.c.l.b16 %v704
  %v1201 = vunpack.c.l.b16 %v705
  %v1202 = vunpack.c.l.b16 %v706
  %v1203 = vunpack.c.l.b16 %v707
  %v1204 = vunpack.c.l.b16 %v708
  %v1205 = vunpack.c.l.b16 %v709
  %v1206 = vunpack.c.l.b16 %v710
  %v1207 = vunpack.c.l.b16 %v711
  %v1208 = vunpack.c.l.b16 %v712
  %v1209 = vunpack.c.l.b16 %v713
  %v1210 = vunpack.c.l.b16 %v714
  %v1211 = vunpack.c.l.b16 %v715
  %v1212 = vunpack.c.l.b16 %v716
  %v1213 = vunpack.c.l.b16 %v717
  %v1214 = vunpack.c.l.b16 %v718
  %v1215 = vunpack.c.l.b16 %v719
  %v1216 = vunpack.c.l.b16 %v720
  %v1217 = vunpack.c.l.b16 %v721
  %v1218 = vunpack.c.l.b16 %v722
  %v1219 = vunpack.c.l.b16 %v723
  %v1220 = vunpack.c.l.b16 %v724
  %v1221 = vunpack.c.l.b16 %v725
  %v1222 = vunpack.c.l.b16 %v726
  %v1223 = vunpack.c.l.b16 %v727
  %v1224 = vunpack.c.l.b16 %v728
  %v1225 = vunpack.c.l.b16 %v729
  %v1226 = vunpack.c.l.b16 %v730
  %v1227 = vunpack.c.l.b16 %v731
  %v1228 = vunpack.c.l.b16 %v732
  %v1229 = vunpack.c.l.b16 %v733
  %v1230 = vunpack.c.l.b16 %v734
  %v1231 = vunpack.c.l.b16 %v735
  %v1232 = vunpack.c.l.b16 %v736
  %v1233 = vunpack.c.l.b16 %v737
  %v1234 = vunpack.c.l.b16 %v738
  %v1235 = vunpack.c.l.b16 %v739
  %v1236 = vunpack.c.l.b16 %v740
  %v1237 = vunpack.c.l.b16 %v741
  %v1238 = vunpack.c.l.b16 %v742
  %v1239 = vunpack.c.l.b16 %v743
  %v1240 = vunpack.c.l.b16 %v744
  %v1241 = vunpack.c.l.b16 %v745
  %v1242 = vunpack.c.l.b16 %v746
  %v1243 = vunpack.c.l.b16 %v747
  %v1244 = vunpack.c.l.b16 %v748
  %v1245 = vunpack.c.l.b16 %v749
  %v1246 = vunpack.c.l.b16 %v750
  %v1247 = vunpack.c.l.b16 %v751
  %v1248 = vunpack.c.l.b16 %v752
  %v1249 = vunpack.c.l.b16 %v753
  %v1250 = vunpack.c.l.b16 %v754
  %v1251 = vunpack.c.l.b16 %v755
  %v1252 = vunpack.c.l.b16 %v756
  %v1253 = vunpack.c.l.b16 %v757
  %v1254 = vunpack.c.l.b16 %v758
  %v1255 = vunpack.c.l.b16 %v759
  %v1256 = vunpack.c.l.b16 %v760
  %v1257 = vunpack.c.l.b16 %v761
  %v1258 = vunpack.c.l.b16 %v762
  %v1259 = vunpack.c.l.b16 %v763
  %v1260 = vunpack.c.l.b16 %v764
  %v1261 = vunpack.c.l.b16 %v765
  %v1262 = vunpack.c.l.b16 %v766
  %v1263 = vunpack.c.l.b16 %v767
  %v1264 = vunpack.c.l.b16 %v768
  %v1265 = vunpack.c.l.b16 %v769
  %v1266 = vunpack.c.l.b16 %v770
  %v1267 = vpack.c.b16 %v1140, %v1139
  %v1268 = vpack.c.b16 %v1142, %v1141
  %v1269 = vpack.c.b16 %v1144, %v1143
  %v1270 = vpack.c.b16 %v1146, %v1145
  %v1271 = vpack.c.b16 %v1148, %v1147
  %v1272 = vpack.c.b16 %v1150, %v1149
  %v1273 = vpack.c.b16 %v1152, %v1151
  %v1274 = vpack.c.b16 %v1154, %v1153
  %v1275 = vpack.c.b16 %v1156, %v1155
  %v1276 = vpack.c.b16 %v1158, %v1157
  %v1277 = vpack.c.b16 %v1160, %v1159
  %v1278 = vpack.c.b16 %v1162, %v1161
  %v1279 = vpack.c.b16 %v1164, %v1163
  %v1280 = vpack.c.b16 %v1166, %v1165
  %v1281 = vpack.c.b16 %v1168, %v1167
  %v1282 = vpack.c.b16 %v1170, %v1169
  %v1283 = vpack.c.b16 %v1172, %v1171
  %v1284 = vpack.c.b16 %v1174, %v1173
  %v1285 = vpack.c.b16 %v1176, %v1175
  %v1286 = vpack.c.b16 %v1178, %v1177
  %v1287 = vpack.c.b16 %v1180, %v1179
  %v1288 = vpack.c.b16 %v1182, %v1181
  %v1289 = vpack.c.b16 %v1184, %v1183
  %v1290 = vpack.c.b16 %v1186, %v1185
  %v1291 = vpack.c.b16 %v1188, %v1187
  %v1292 = vpack.c.b16 %v1190, %v1189
  %v1293 = vpack.c.b16 %v1192, %v1191
  %v1294 = vpack.c.b16 %v1194, %v1193
  %v1295 = vpack.c.b16 %v1196, %v1195
  %v1296 = vpack.c.b16 %v1198, %v1197
  %v1297 = vpack.c.b16 %v1200, %v1199
  %v1298 = vpack.c.b16 %v1202, %v1201
  %v1299 = vpack.c.b16 %v1204, %v1203
  %v1300 = vpack.c.b16 %v1206, %v1205
  %v1301 = vpack.c.b16 %v1208, %v1207
  %v1302 = vpack.c.b16 %v1210, %v1209
  %v1303 = vpack.c.b16 %v1212, %v1211
  %v1304 = vpack.c.b16 %v1214, %v1213
  %v1305 = vpack.c.b16 %v1216, %v1215
  %v1306 = vpack.c.b16 %v1218, %v1217
  %v1307 = vpack.c.b16 %v1220, %v1219
  %v1308 = vpack.c.b16 %v1222, %v1221
  %v1309 = vpack.c.b16 %v1224, %v1223
  %v1310 = vpack.c.b16 %v1226, %v1225
  %v1311 = vpack.c.b16 %v1228, %v1227
  %v1312 = vpack.c.b16 %v1230, %v1229
  %v1313 = vpack.c.b16 %v1232, %v1231
  %v1314 = vpack.c.b16 %v1234, %v1233
  %v1315 = vpack.c.b16 %v1236, %v1235
  %v1316 = vpack.c.b16 %v1238, %v1237
  %v1317 = vpack.c.b16 %v1240, %v1239
  %v1318 = vpack.c.b16 %v1242, %v1241
  %v1319 = vpack.c.b16 %v1244, %v1243
  %v1320 = vpack.c.b16 %v1246, %v1245
  %v1321 = vpack.c.b16 %v1248, %v1247
  %v1322 = vpack.c.b16 %v1250, %v1249
  %v1323 = vpack.c.b16 %v1252, %v1251
  %v1324 = vpack.c.b16 %v1254, %v1253
  %v1325 = vpack.c.b16 %v1256, %v1255
  %v1326 = vpack.c.b16 %v1258, %v1257
  %v1327 = vpack.c.b16 %v1260, %v1259
  %v1328 = vpack.c.b16 %v1262, %v1261
  %v1329 = vpack.c.b16 %v1264, %v1263
  %v1330 = vpack.c.b16 %v1266, %v1265
  %1395 = vmatprep.subr.bf16.mxu0 0
  %1396 = vmatpush1.bf16.msra.mxu0 %v1274
  %1397 = vmatprep.subr.bf16.mxu0 0
  %1398 = vmatpush1.bf16.msra.mxu0 %v1273
  %1399 = vmatprep.subr.bf16.mxu0 0
  %1400 = vmatpush1.bf16.msra.mxu0 %v1272
  %1401 = vmatprep.subr.bf16.mxu0 0
  %1402 = vmatpush1.bf16.msra.mxu0 %v1271
  %1403 = vmatprep.subr.bf16.mxu0 0
  %1404 = vmatpush1.bf16.msra.mxu0 %v1270
  %1405 = vmatprep.subr.bf16.mxu0 0
  %1406 = vmatpush1.bf16.msra.mxu0 %v1269
  %1407 = vmatprep.subr.bf16.mxu0 0
  %1408 = vmatpush1.bf16.msra.mxu0 %v1268
  %1409 = vmatprep.subr.bf16.mxu0 0
  %1410 = vmatpush1.bf16.msra.mxu0 %v1267
  %1411 = vmatprep.subr.bf16.mxu0 0
  %1412 = vmatpush2.bf16.msra.mxu0 %v1282
  %1413 = vmatprep.subr.bf16.mxu0 0
  %1414 = vmatpush2.bf16.msra.mxu0 %v1281
  %1415 = vmatprep.subr.bf16.mxu0 0
  %1416 = vmatpush2.bf16.msra.mxu0 %v1280
  %1417 = vmatprep.subr.bf16.mxu0 0
  %1418 = vmatpush2.bf16.msra.mxu0 %v1279
  %1419 = vmatprep.subr.bf16.mxu0 0
  %1420 = vmatpush2.bf16.msra.mxu0 %v1278
  %1421 = vmatprep.subr.bf16.mxu0 0
  %1422 = vmatpush2.bf16.msra.mxu0 %v1277
  %1423 = vmatprep.subr.bf16.mxu0 0
  %1424 = vmatpush2.bf16.msra.mxu0 %v1276
  %1425 = vmatprep.subr.bf16.mxu0 0
  %1426 = vmatpush2.bf16.msra.mxu0 %v1275
  %1427 = vmatprep.mubr.bf16.mxu0 %v932
  %1428 = vmatmul.mubr.bf16.gmra.mxu0 %v931
  %v1429 = vpop.f32.mrf.mxu0
  %v1430 = vadd.f32 %v641, %v1429
  %v1431 = vpop.f32.mrf.mxu0
  %v1432 = vpop.f32.mrf.mxu0
  %v1433 = vadd.f32 %v641, %v1432
  %v1434 = vpop.f32.mrf.mxu0
  %1435 = vmatprep.mubr.bf16.mxu0 %v940
  %1436 = vmatmul.mubr.bf16.gmra.mxu0 %v939
  %v1437 = vpop.f32.mrf.mxu0
  %v1438 = vadd.f32 %v641, %v1437
  %v1439 = vpop.f32.mrf.mxu0
  %v1440 = vpop.f32.mrf.mxu0
  %v1441 = vadd.f32 %v641, %v1440
  %v1442 = vpop.f32.mrf.mxu0
  %1443 = vmatprep.mubr.bf16.mxu0 %v948
  %1444 = vmatmul.mubr.bf16.gmra.mxu0 %v947
  %v1445 = vpop.f32.mrf.mxu0
  %v1446 = vadd.f32 %v641, %v1445
  %v1447 = vpop.f32.mrf.mxu0
  %v1448 = vpop.f32.mrf.mxu0
  %v1449 = vadd.f32 %v641, %v1448
  %v1450 = vpop.f32.mrf.mxu0
  %1451 = vmatprep.mubr.bf16.mxu0 %v956
  %1452 = vmatmul.mubr.bf16.gmra.mxu0 %v955
  %v1453 = vpop.f32.mrf.mxu0
  %v1454 = vadd.f32 %v641, %v1453
  %v1455 = vpop.f32.mrf.mxu0
  %v1456 = vpop.f32.mrf.mxu0
  %v1457 = vadd.f32 %v641, %v1456
  %v1458 = vpop.f32.mrf.mxu0
  %1459 = vmatprep.mubr.bf16.mxu0 %v964
  %1460 = vmatmul.mubr.bf16.gmra.mxu0 %v963
  %v1461 = vpop.f32.mrf.mxu0
  %v1462 = vadd.f32 %v641, %v1461
  %v1463 = vpop.f32.mrf.mxu0
  %v1464 = vpop.f32.mrf.mxu0
  %v1465 = vadd.f32 %v641, %v1464
  %v1466 = vpop.f32.mrf.mxu0
  %1467 = vdwg.mxu0
  %1468 = vmatprep.subr.bf16.mxu0 0
  %1469 = vmatpush1.bf16.msra.mxu0 %v1290
  %1470 = vmatprep.subr.bf16.mxu0 0
  %1471 = vmatpush1.bf16.msra.mxu0 %v1289
  %1472 = vmatprep.subr.bf16.mxu0 0
  %1473 = vmatpush1.bf16.msra.mxu0 %v1288
  %1474 = vmatprep.subr.bf16.mxu0 0
  %1475 = vmatpush1.bf16.msra.mxu0 %v1287
  %1476 = vmatprep.subr.bf16.mxu0 0
  %1477 = vmatpush1.bf16.msra.mxu0 %v1286
  %1478 = vmatprep.subr.bf16.mxu0 0
  %1479 = vmatpush1.bf16.msra.mxu0 %v1285
  %1480 = vmatprep.subr.bf16.mxu0 0
  %1481 = vmatpush1.bf16.msra.mxu0 %v1284
  %1482 = vmatprep.subr.bf16.mxu0 0
  %1483 = vmatpush1.bf16.msra.mxu0 %v1283
  %1484 = vmatprep.subr.bf16.mxu0 0
  %1485 = vmatpush2.bf16.msra.mxu0 %v1298
  %1486 = vmatprep.subr.bf16.mxu0 0
  %1487 = vmatpush2.bf16.msra.mxu0 %v1297
  %1488 = vmatprep.subr.bf16.mxu0 0
  %1489 = vmatpush2.bf16.msra.mxu0 %v1296
  %1490 = vmatprep.subr.bf16.mxu0 0
  %1491 = vmatpush2.bf16.msra.mxu0 %v1295
  %1492 = vmatprep.subr.bf16.mxu0 0
  %1493 = vmatpush2.bf16.msra.mxu0 %v1294
  %1494 = vmatprep.subr.bf16.mxu0 0
  %1495 = vmatpush2.bf16.msra.mxu0 %v1293
  %1496 = vmatprep.subr.bf16.mxu0 0
  %1497 = vmatpush2.bf16.msra.mxu0 %v1292
  %1498 = vmatprep.subr.bf16.mxu0 0
  %1499 = vmatpush2.bf16.msra.mxu0 %v1291
  %1500 = vmatprep.mubr.bf16.mxu0 %v934
  %1501 = vmatmul.mubr.bf16.gmra.mxu0 %v933
  %v1502 = vpop.f32.mrf.mxu0
  %v1503 = vadd.f32 %v1430, %v1502
  %v1504 = vpop.f32.mrf.mxu0
  %v1505 = vpop.f32.mrf.mxu0
  %v1506 = vadd.f32 %v1433, %v1505
  %v1507 = vpop.f32.mrf.mxu0
  %1508 = vmatprep.mubr.bf16.mxu0 %v942
  %1509 = vmatmul.mubr.bf16.gmra.mxu0 %v941
  %v1510 = vpop.f32.mrf.mxu0
  %v1511 = vadd.f32 %v1438, %v1510
  %v1512 = vpop.f32.mrf.mxu0
  %v1513 = vpop.f32.mrf.mxu0
  %v1514 = vadd.f32 %v1441, %v1513
  %v1515 = vpop.f32.mrf.mxu0
  %1516 = vmatprep.mubr.bf16.mxu0 %v950
  %1517 = vmatmul.mubr.bf16.gmra.mxu0 %v949
  %v1518 = vpop.f32.mrf.mxu0
  %v1519 = vadd.f32 %v1446, %v1518
  %v1520 = vpop.f32.mrf.mxu0
  %v1521 = vpop.f32.mrf.mxu0
  %v1522 = vadd.f32 %v1449, %v1521
  %v1523 = vpop.f32.mrf.mxu0
  %1524 = vmatprep.mubr.bf16.mxu0 %v958
  %1525 = vmatmul.mubr.bf16.gmra.mxu0 %v957
  %v1526 = vpop.f32.mrf.mxu0
  %v1527 = vadd.f32 %v1454, %v1526
  %v1528 = vpop.f32.mrf.mxu0
  %v1529 = vpop.f32.mrf.mxu0
  %v1530 = vadd.f32 %v1457, %v1529
  %v1531 = vpop.f32.mrf.mxu0
  %1532 = vmatprep.mubr.bf16.mxu0 %v966
  %1533 = vmatmul.mubr.bf16.gmra.mxu0 %v965
  %v1534 = vpop.f32.mrf.mxu0
  %v1535 = vadd.f32 %v1462, %v1534
  %v1536 = vpop.f32.mrf.mxu0
  %v1537 = vpop.f32.mrf.mxu0
  %v1538 = vadd.f32 %v1465, %v1537
  %v1539 = vpop.f32.mrf.mxu0
  %1540 = vdwg.mxu0
  %1541 = vmatprep.subr.bf16.mxu0 0
  %1542 = vmatpush1.bf16.msra.mxu0 %v1306
  %1543 = vmatprep.subr.bf16.mxu0 0
  %1544 = vmatpush1.bf16.msra.mxu0 %v1305
  %1545 = vmatprep.subr.bf16.mxu0 0
  %1546 = vmatpush1.bf16.msra.mxu0 %v1304
  %1547 = vmatprep.subr.bf16.mxu0 0
  %1548 = vmatpush1.bf16.msra.mxu0 %v1303
  %1549 = vmatprep.subr.bf16.mxu0 0
  %1550 = vmatpush1.bf16.msra.mxu0 %v1302
  %1551 = vmatprep.subr.bf16.mxu0 0
  %1552 = vmatpush1.bf16.msra.mxu0 %v1301
  %1553 = vmatprep.subr.bf16.mxu0 0
  %1554 = vmatpush1.bf16.msra.mxu0 %v1300
  %1555 = vmatprep.subr.bf16.mxu0 0
  %1556 = vmatpush1.bf16.msra.mxu0 %v1299
  %1557 = vmatprep.subr.bf16.mxu0 0
  %1558 = vmatpush2.bf16.msra.mxu0 %v1314
  %1559 = vmatprep.subr.bf16.mxu0 0
  %1560 = vmatpush2.bf16.msra.mxu0 %v1313
  %1561 = vmatprep.subr.bf16.mxu0 0
  %1562 = vmatpush2.bf16.msra.mxu0 %v1312
  %1563 = vmatprep.subr.bf16.mxu0 0
  %1564 = vmatpush2.bf16.msra.mxu0 %v1311
  %1565 = vmatprep.subr.bf16.mxu0 0
  %1566 = vmatpush2.bf16.msra.mxu0 %v1310
  %1567 = vmatprep.subr.bf16.mxu0 0
  %1568 = vmatpush2.bf16.msra.mxu0 %v1309
  %1569 = vmatprep.subr.bf16.mxu0 0
  %1570 = vmatpush2.bf16.msra.mxu0 %v1308
  %1571 = vmatprep.subr.bf16.mxu0 0
  %1572 = vmatpush2.bf16.msra.mxu0 %v1307
  %1573 = vmatprep.mubr.bf16.mxu0 %v936
  %1574 = vmatmul.mubr.bf16.gmra.mxu0 %v935
  %v1575 = vpop.f32.mrf.mxu0
  %v1576 = vadd.f32 %v1503, %v1575
  %v1577 = vpop.f32.mrf.mxu0
  %v1578 = vpop.f32.mrf.mxu0
  %v1579 = vadd.f32 %v1506, %v1578
  %v1580 = vpop.f32.mrf.mxu0
  %1581 = vmatprep.mubr.bf16.mxu0 %v944
  %1582 = vmatmul.mubr.bf16.gmra.mxu0 %v943
  %v1583 = vpop.f32.mrf.mxu0
  %v1584 = vadd.f32 %v1511, %v1583
  %v1585 = vpop.f32.mrf.mxu0
  %v1586 = vpop.f32.mrf.mxu0
  %v1587 = vadd.f32 %v1514, %v1586
  %v1588 = vpop.f32.mrf.mxu0
  %1589 = vmatprep.mubr.bf16.mxu0 %v952
  %1590 = vmatmul.mubr.bf16.gmra.mxu0 %v951
  %v1591 = vpop.f32.mrf.mxu0
  %v1592 = vadd.f32 %v1519, %v1591
  %v1593 = vpop.f32.mrf.mxu0
  %v1594 = vpop.f32.mrf.mxu0
  %v1595 = vadd.f32 %v1522, %v1594
  %v1596 = vpop.f32.mrf.mxu0
  %1597 = vmatprep.mubr.bf16.mxu0 %v960
  %1598 = vmatmul.mubr.bf16.gmra.mxu0 %v959
  %v1599 = vpop.f32.mrf.mxu0
  %v1600 = vadd.f32 %v1527, %v1599
  %v1601 = vpop.f32.mrf.mxu0
  %v1602 = vpop.f32.mrf.mxu0
  %v1603 = vadd.f32 %v1530, %v1602
  %v1604 = vpop.f32.mrf.mxu0
  %1605 = vmatprep.mubr.bf16.mxu0 %v968
  %1606 = vmatmul.mubr.bf16.gmra.mxu0 %v967
  %v1607 = vpop.f32.mrf.mxu0
  %v1608 = vadd.f32 %v1535, %v1607
  %v1609 = vpop.f32.mrf.mxu0
  %v1610 = vpop.f32.mrf.mxu0
  %v1611 = vadd.f32 %v1538, %v1610
  %v1612 = vpop.f32.mrf.mxu0
  %1613 = vdwg.mxu0
  %1614 = vmatprep.subr.bf16.mxu0 0
  %1615 = vmatpush1.bf16.msra.mxu0 %v1322
  %1616 = vmatprep.subr.bf16.mxu0 0
  %1617 = vmatpush1.bf16.msra.mxu0 %v1321
  %1618 = vmatprep.subr.bf16.mxu0 0
  %1619 = vmatpush1.bf16.msra.mxu0 %v1320
  %1620 = vmatprep.subr.bf16.mxu0 0
  %1621 = vmatpush1.bf16.msra.mxu0 %v1319
  %1622 = vmatprep.subr.bf16.mxu0 0
  %1623 = vmatpush1.bf16.msra.mxu0 %v1318
  %1624 = vmatprep.subr.bf16.mxu0 0
  %1625 = vmatpush1.bf16.msra.mxu0 %v1317
  %1626 = vmatprep.subr.bf16.mxu0 0
  %1627 = vmatpush1.bf16.msra.mxu0 %v1316
  %1628 = vmatprep.subr.bf16.mxu0 0
  %1629 = vmatpush1.bf16.msra.mxu0 %v1315
  %1630 = vmatprep.subr.bf16.mxu0 0
  %1631 = vmatpush2.bf16.msra.mxu0 %v1330
  %1632 = vmatprep.subr.bf16.mxu0 0
  %1633 = vmatpush2.bf16.msra.mxu0 %v1329
  %1634 = vmatprep.subr.bf16.mxu0 0
  %1635 = vmatpush2.bf16.msra.mxu0 %v1328
  %1636 = vmatprep.subr.bf16.mxu0 0
  %1637 = vmatpush2.bf16.msra.mxu0 %v1327
  %1638 = vmatprep.subr.bf16.mxu0 0
  %1639 = vmatpush2.bf16.msra.mxu0 %v1326
  %1640 = vmatprep.subr.bf16.mxu0 0
  %1641 = vmatpush2.bf16.msra.mxu0 %v1325
  %1642 = vmatprep.subr.bf16.mxu0 0
  %1643 = vmatpush2.bf16.msra.mxu0 %v1324
  %1644 = vmatprep.subr.bf16.mxu0 0
  %1645 = vmatpush2.bf16.msra.mxu0 %v1323
  %1646 = vmatprep.mubr.bf16.mxu0 %v938
  %1647 = vmatmul.mubr.bf16.gmra.mxu0 %v937
  %v1648 = vpop.f32.mrf.mxu0
  %v1649 = vadd.f32 %v1576, %v1648
  %v1650 = vpop.f32.mrf.mxu0
  %v1651 = vpop.f32.mrf.mxu0
  %v1652 = vadd.f32 %v1579, %v1651
  %v1653 = vpop.f32.mrf.mxu0
  %1654 = vmatprep.mubr.bf16.mxu0 %v946
  %1655 = vmatmul.mubr.bf16.gmra.mxu0 %v945
  %v1656 = vpop.f32.mrf.mxu0
  %v1657 = vadd.f32 %v1584, %v1656
  %v1658 = vpop.f32.mrf.mxu0
  %v1659 = vpop.f32.mrf.mxu0
  %v1660 = vadd.f32 %v1587, %v1659
  %v1661 = vpop.f32.mrf.mxu0
  %1662 = vmatprep.mubr.bf16.mxu0 %v954
  %1663 = vmatmul.mubr.bf16.gmra.mxu0 %v953
  %v1664 = vpop.f32.mrf.mxu0
  %v1665 = vadd.f32 %v1592, %v1664
  %v1666 = vpop.f32.mrf.mxu0
  %v1667 = vpop.f32.mrf.mxu0
  %v1668 = vadd.f32 %v1595, %v1667
  %v1669 = vpop.f32.mrf.mxu0
  %1670 = vmatprep.mubr.bf16.mxu0 %v962
  %1671 = vmatmul.mubr.bf16.gmra.mxu0 %v961
  %v1672 = vpop.f32.mrf.mxu0
  %v1673 = vadd.f32 %v1600, %v1672
  %v1674 = vpop.f32.mrf.mxu0
  %v1675 = vpop.f32.mrf.mxu0
  %v1676 = vadd.f32 %v1603, %v1675
  %v1677 = vpop.f32.mrf.mxu0
  %1678 = vmatprep.mubr.bf16.mxu0 %v970
  %1679 = vmatmul.mubr.bf16.gmra.mxu0 %v969
  %v1680 = vpop.f32.mrf.mxu0
  %v1681 = vadd.f32 %v1608, %v1680
  %v1682 = vpop.f32.mrf.mxu0
  %v1683 = vpop.f32.mrf.mxu0
  %v1684 = vadd.f32 %v1611, %v1683
  %v1685 = vpop.f32.mrf.mxu0
  %1686 = vdwg.mxu0
  %v1687 = vmul.f32 %v1649, 0.01
  %v1688 = vmul.f32 %v1652, 0.01
  %v1689 = vmul.f32 %v1657, 0.01
  %v1690 = vmul.f32 %v1660, 0.01
  %v1691 = vmul.f32 %v1665, 0.01
  %v1692 = vmul.f32 %v1668, 0.01
  %v1693 = vmul.f32 %v1673, 0.01
  %v1694 = vmul.f32 %v1676, 0.01
  %v1695 = vmul.f32 %v1681, 0.01
  %v1696 = vmul.f32 %v1684, 0.01
  %v1697 = vmax.f32 %v1649, %v1687
  %v1698 = vmax.f32 %v1652, %v1688
  %v1699 = vmax.f32 %v1657, %v1689
  %v1700 = vmax.f32 %v1660, %v1690
  %v1701 = vmax.f32 %v1665, %v1691
  %v1702 = vmax.f32 %v1668, %v1692
  %v1703 = vmax.f32 %v1673, %v1693
  %v1704 = vmax.f32 %v1676, %v1694
  %v1705 = vmax.f32 %v1681, %v1695
  %v1706 = vmax.f32 %v1684, %v1696
  %v1707 = vpack.c.bf16 %v1698, %v1697
  %v1708 = vpack.c.bf16 %v1700, %v1699
  %v1709 = vpack.c.bf16 %v1702, %v1701
  %v1710 = vpack.c.bf16 %v1704, %v1703
  %v1711 = vpack.c.bf16 %v1706, %v1705
  %v1717 = vunpack.c.l.b16 %v1707
  %v1718 = vunpack.c.h.b16 %v1707
  %v1719 = vunpack.c.l.b16 %v1708
  %v1720 = vunpack.c.h.b16 %v1708
  %v1721 = vunpack.c.l.b16 %v1709
  %v1722 = vunpack.c.h.b16 %v1709
  %v1723 = vunpack.c.l.b16 %v1710
  %v1724 = vunpack.c.h.b16 %v1710
  %v1725 = vunpack.c.l.b16 %v1711
  %v1726 = vunpack.c.h.b16 %v1711
  %v1727 = vpack.c.b16 %v1717, %v1717
  %v1728 = vpack.c.b16 %v1718, %v1718
  %v1729 = vpack.c.b16 %v1719, %v1719
  %v1730 = vpack.c.b16 %v1720, %v1720
  %v1731 = vpack.c.b16 %v1721, %v1721
  %v1732 = vpack.c.b16 %v1722, %v1722
  %v1733 = vpack.c.b16 %v1723, %v1723
  %v1734 = vpack.c.b16 %v1724, %v1724
  %v1735 = vpack.c.b16 %v1725, %v1725
  %v1736 = vpack.c.b16 %v1726, %v1726
  %1747 = vst [vmem:[#allocation2] sm:$0xf] %v1727
  %1748 = vst [vmem:[#allocation2 + $0x10] sm:$0xf] %v1728
  %1749 = vst [vmem:[#allocation2 + $0x20] sm:$0xf] %v1729
  %1750 = vst [vmem:[#allocation2 + $0x30] sm:$0xf] %v1730
  %1751 = vst [vmem:[#allocation2 + $0x40] sm:$0xf] %v1731
  %1752 = vst [vmem:[#allocation2 + $0x50] sm:$0xf] %v1732
  %1753 = vst [vmem:[#allocation2 + $0x60] sm:$0xf] %v1733
  %1754 = vst [vmem:[#allocation2 + $0x70] sm:$0xf] %v1734
  %1755 = vst [vmem:[#allocation2 + $0x80] sm:$0xf] %v1735
  %1756 = vst [vmem:[#allocation2 + $0x90] sm:$0xf] %v1736
  %v1757 = vld [vmem:[%s0 + $0x140] sm:$0xff]
  %v1758 = vld [vmem:[%s0 + $0x148] sm:$0xff]
  %v1759 = vld [vmem:[%s0 + $0x150] sm:$0xff]
  %v1760 = vld [vmem:[%s0 + $0x158] sm:$0xff]
  %v1761 = vld [vmem:[%s0 + $0x160] sm:$0xff]
  %v1762 = vld [vmem:[%s0 + $0x168] sm:$0xff]
  %v1763 = vld [vmem:[%s0 + $0x170] sm:$0xff]
  %v1764 = vld [vmem:[%s0 + $0x178] sm:$0xff]
  %v1765 = vld [vmem:[%s0 + $0x180] sm:$0xff]
  %v1766 = vld [vmem:[%s0 + $0x188] sm:$0xff]
  %v1767 = vld [vmem:[%s0 + $0x190] sm:$0xff]
  %v1768 = vld [vmem:[%s0 + $0x198] sm:$0xff]
  %v1769 = vld [vmem:[%s0 + $0x1a0] sm:$0xff]
  %v1770 = vld [vmem:[%s0 + $0x1a8] sm:$0xff]
  %v1771 = vld [vmem:[%s0 + $0x1b0] sm:$0xff]
  %v1772 = vld [vmem:[%s0 + $0x1b8] sm:$0xff]
  %v1773 = vld [vmem:[%s0 + $0x1c0] sm:$0xff]
  %v1774 = vld [vmem:[%s0 + $0x1c8] sm:$0xff]
  %v1775 = vld [vmem:[%s0 + $0x1d0] sm:$0xff]
  %v1776 = vld [vmem:[%s0 + $0x1d8] sm:$0xff]
  %v1777 = vld [vmem:[%s0 + $0x1e0] sm:$0xff]
  %v1778 = vld [vmem:[%s0 + $0x1e8] sm:$0xff]
  %v1779 = vld [vmem:[%s0 + $0x1f0] sm:$0xff]
  %v1780 = vld [vmem:[%s0 + $0x1f8] sm:$0xff]
  %v1781 = vld [vmem:[%s0 + $0x200] sm:$0xff]
  %v1782 = vld [vmem:[%s0 + $0x208] sm:$0xff]
  %v1783 = vld [vmem:[%s0 + $0x210] sm:$0xff]
  %v1784 = vld [vmem:[%s0 + $0x218] sm:$0xff]
  %v1785 = vld [vmem:[%s0 + $0x220] sm:$0xff]
  %v1786 = vld [vmem:[%s0 + $0x228] sm:$0xff]
  %v1787 = vld [vmem:[%s0 + $0x230] sm:$0xff]
  %v1788 = vld [vmem:[%s0 + $0x238] sm:$0xff]
  %v1789 = vld [vmem:[%s0 + $0x240] sm:$0xff]
  %v1790 = vld [vmem:[%s0 + $0x248] sm:$0xff]
  %v1791 = vld [vmem:[%s0 + $0x250] sm:$0xff]
  %v1792 = vld [vmem:[%s0 + $0x258] sm:$0xff]
  %v1793 = vld [vmem:[%s0 + $0x260] sm:$0xff]
  %v1794 = vld [vmem:[%s0 + $0x268] sm:$0xff]
  %v1795 = vld [vmem:[%s0 + $0x270] sm:$0xff]
  %v1796 = vld [vmem:[%s0 + $0x278] sm:$0xff]
  %v1837 = vunpack.c.l.b16 %v1757
  %v1838 = vunpack.c.h.b16 %v1757
  %v1839 = vunpack.c.l.b16 %v1758
  %v1840 = vunpack.c.h.b16 %v1758
  %v1841 = vunpack.c.l.b16 %v1759
  %v1842 = vunpack.c.h.b16 %v1759
  %v1843 = vunpack.c.l.b16 %v1760
  %v1844 = vunpack.c.h.b16 %v1760
  %v1845 = vunpack.c.l.b16 %v1761
  %v1846 = vunpack.c.h.b16 %v1761
  %v1847 = vunpack.c.l.b16 %v1762
  %v1848 = vunpack.c.h.b16 %v1762
  %v1849 = vunpack.c.l.b16 %v1763
  %v1850 = vunpack.c.h.b16 %v1763
  %v1851 = vunpack.c.l.b16 %v1764
  %v1852 = vunpack.c.h.b16 %v1764
  %v1853 = vunpack.c.l.b16 %v1765
  %v1854 = vunpack.c.h.b16 %v1765
  %v1855 = vunpack.c.l.b16 %v1766
  %v1856 = vunpack.c.h.b16 %v1766
  %v1857 = vunpack.c.l.b16 %v1767
  %v1858 = vunpack.c.h.b16 %v1767
  %v1859 = vunpack.c.l.b16 %v1768
  %v1860 = vunpack.c.h.b16 %v1768
  %v1861 = vunpack.c.l.b16 %v1769
  %v1862 = vunpack.c.h.b16 %v1769
  %v1863 = vunpack.c.l.b16 %v1770
  %v1864 = vunpack.c.h.b16 %v1770
  %v1865 = vunpack.c.l.b16 %v1771
  %v1866 = vunpack.c.h.b16 %v1771
  %v1867 = vunpack.c.l.b16 %v1772
  %v1868 = vunpack.c.h.b16 %v1772
  %v1869 = vunpack.c.l.b16 %v1773
  %v1870 = vunpack.c.h.b16 %v1773
  %v1871 = vunpack.c.l.b16 %v1774
  %v1872 = vunpack.c.h.b16 %v1774
  %v1873 = vunpack.c.l.b16 %v1775
  %v1874 = vunpack.c.h.b16 %v1775
  %v1875 = vunpack.c.l.b16 %v1776
  %v1876 = vunpack.c.h.b16 %v1776
  %v1877 = vunpack.c.l.b16 %v1777
  %v1878 = vunpack.c.h.b16 %v1777
  %v1879 = vunpack.c.l.b16 %v1778
  %v1880 = vunpack.c.h.b16 %v1778
  %v1881 = vunpack.c.l.b16 %v1779
  %v1882 = vunpack.c.h.b16 %v1779
  %v1883 = vunpack.c.l.b16 %v1780
  %v1884 = vunpack.c.h.b16 %v1780
  %v1885 = vunpack.c.l.b16 %v1781
  %v1886 = vunpack.c.h.b16 %v1781
  %v1887 = vunpack.c.l.b16 %v1782
  %v1888 = vunpack.c.h.b16 %v1782
  %v1889 = vunpack.c.l.b16 %v1783
  %v1890 = vunpack.c.h.b16 %v1783
  %v1891 = vunpack.c.l.b16 %v1784
  %v1892 = vunpack.c.h.b16 %v1784
  %v1893 = vunpack.c.l.b16 %v1785
  %v1894 = vunpack.c.h.b16 %v1785
  %v1895 = vunpack.c.l.b16 %v1786
  %v1896 = vunpack.c.h.b16 %v1786
  %v1897 = vunpack.c.l.b16 %v1787
  %v1898 = vunpack.c.h.b16 %v1787
  %v1899 = vunpack.c.l.b16 %v1788
  %v1900 = vunpack.c.h.b16 %v1788
  %v1901 = vunpack.c.l.b16 %v1789
  %v1902 = vunpack.c.h.b16 %v1789
  %v1903 = vunpack.c.l.b16 %v1790
  %v1904 = vunpack.c.h.b16 %v1790
  %v1905 = vunpack.c.l.b16 %v1791
  %v1906 = vunpack.c.h.b16 %v1791
  %v1907 = vunpack.c.l.b16 %v1792
  %v1908 = vunpack.c.h.b16 %v1792
  %v1909 = vunpack.c.l.b16 %v1793
  %v1910 = vunpack.c.h.b16 %v1793
  %v1911 = vunpack.c.l.b16 %v1794
  %v1912 = vunpack.c.h.b16 %v1794
  %v1913 = vunpack.c.l.b16 %v1795
  %v1914 = vunpack.c.h.b16 %v1795
  %v1915 = vunpack.c.l.b16 %v1796
  %v1916 = vunpack.c.h.b16 %v1796
  %v1917 = vpack.c.b16 %v1845, %v1837
  %v1918 = vpack.c.b16 %v1846, %v1838
  %v1919 = vpack.c.b16 %v1847, %v1839
  %v1920 = vpack.c.b16 %v1848, %v1840
  %v1921 = vpack.c.b16 %v1849, %v1841
  %v1922 = vpack.c.b16 %v1850, %v1842
  %v1923 = vpack.c.b16 %v1851, %v1843
  %v1924 = vpack.c.b16 %v1852, %v1844
  %v1925 = vpack.c.b16 %v1861, %v1853
  %v1926 = vpack.c.b16 %v1862, %v1854
  %v1927 = vpack.c.b16 %v1863, %v1855
  %v1928 = vpack.c.b16 %v1864, %v1856
  %v1929 = vpack.c.b16 %v1865, %v1857
  %v1930 = vpack.c.b16 %v1866, %v1858
  %v1931 = vpack.c.b16 %v1867, %v1859
  %v1932 = vpack.c.b16 %v1868, %v1860
  %v1933 = vpack.c.b16 %v1877, %v1869
  %v1934 = vpack.c.b16 %v1878, %v1870
  %v1935 = vpack.c.b16 %v1879, %v1871
  %v1936 = vpack.c.b16 %v1880, %v1872
  %v1937 = vpack.c.b16 %v1881, %v1873
  %v1938 = vpack.c.b16 %v1882, %v1874
  %v1939 = vpack.c.b16 %v1883, %v1875
  %v1940 = vpack.c.b16 %v1884, %v1876
  %v1941 = vpack.c.b16 %v1893, %v1885
  %v1942 = vpack.c.b16 %v1894, %v1886
  %v1943 = vpack.c.b16 %v1895, %v1887
  %v1944 = vpack.c.b16 %v1896, %v1888
  %v1945 = vpack.c.b16 %v1897, %v1889
  %v1946 = vpack.c.b16 %v1898, %v1890
  %v1947 = vpack.c.b16 %v1899, %v1891
  %v1948 = vpack.c.b16 %v1900, %v1892
  %v1949 = vpack.c.b16 %v1909, %v1901
  %v1950 = vpack.c.b16 %v1910, %v1902
  %v1951 = vpack.c.b16 %v1911, %v1903
  %v1952 = vpack.c.b16 %v1912, %v1904
  %v1953 = vpack.c.b16 %v1913, %v1905
  %v1954 = vpack.c.b16 %v1914, %v1906
  %v1955 = vpack.c.b16 %v1915, %v1907
  %v1956 = vpack.c.b16 %v1916, %v1908
  %1997 = vmatprep.subr.bf16.mxu0 0
  %1998 = vmatpush1.bf16.msra.mxu0 %v1274
  %1999 = vmatprep.subr.bf16.mxu0 0
  %2000 = vmatpush1.bf16.msra.mxu0 %v1273
  %2001 = vmatprep.subr.bf16.mxu0 0
  %2002 = vmatpush1.bf16.msra.mxu0 %v1272
  %2003 = vmatprep.subr.bf16.mxu0 0
  %2004 = vmatpush1.bf16.msra.mxu0 %v1271
  %2005 = vmatprep.subr.bf16.mxu0 0
  %2006 = vmatpush1.bf16.msra.mxu0 %v1270
  %2007 = vmatprep.subr.bf16.mxu0 0
  %2008 = vmatpush1.bf16.msra.mxu0 %v1269
  %2009 = vmatprep.subr.bf16.mxu0 0
  %2010 = vmatpush1.bf16.msra.mxu0 %v1268
  %2011 = vmatprep.subr.bf16.mxu0 0
  %2012 = vmatpush1.bf16.msra.mxu0 %v1267
  %2013 = vmatprep.subr.bf16.mxu0 0
  %2014 = vmatpush2.bf16.msra.mxu0 %v1282
  %2015 = vmatprep.subr.bf16.mxu0 0
  %2016 = vmatpush2.bf16.msra.mxu0 %v1281
  %2017 = vmatprep.subr.bf16.mxu0 0
  %2018 = vmatpush2.bf16.msra.mxu0 %v1280
  %2019 = vmatprep.subr.bf16.mxu0 0
  %2020 = vmatpush2.bf16.msra.mxu0 %v1279
  %2021 = vmatprep.subr.bf16.mxu0 0
  %2022 = vmatpush2.bf16.msra.mxu0 %v1278
  %2023 = vmatprep.subr.bf16.mxu0 0
  %2024 = vmatpush2.bf16.msra.mxu0 %v1277
  %2025 = vmatprep.subr.bf16.mxu0 0
  %2026 = vmatpush2.bf16.msra.mxu0 %v1276
  %2027 = vmatprep.subr.bf16.mxu0 0
  %2028 = vmatpush2.bf16.msra.mxu0 %v1275
  %2029 = vmatprep.mubr.bf16.mxu0 %v1918
  %2030 = vmatmul.mubr.bf16.gmra.mxu0 %v1917
  %v2031 = vpop.f32.mrf.mxu0
  %v2032 = vadd.f32 %v641, %v2031
  %v2033 = vpop.f32.mrf.mxu0
  %v2034 = vpop.f32.mrf.mxu0
  %v2035 = vadd.f32 %v641, %v2034
  %v2036 = vpop.f32.mrf.mxu0
  %2037 = vmatprep.mubr.bf16.mxu0 %v1926
  %2038 = vmatmul.mubr.bf16.gmra.mxu0 %v1925
  %v2039 = vpop.f32.mrf.mxu0
  %v2040 = vadd.f32 %v641, %v2039
  %v2041 = vpop.f32.mrf.mxu0
  %v2042 = vpop.f32.mrf.mxu0
  %v2043 = vadd.f32 %v641, %v2042
  %v2044 = vpop.f32.mrf.mxu0
  %2045 = vmatprep.mubr.bf16.mxu0 %v1934
  %2046 = vmatmul.mubr.bf16.gmra.mxu0 %v1933
  %v2047 = vpop.f32.mrf.mxu0
  %v2048 = vadd.f32 %v641, %v2047
  %v2049 = vpop.f32.mrf.mxu0
  %v2050 = vpop.f32.mrf.mxu0
  %v2051 = vadd.f32 %v641, %v2050
  %v2052 = vpop.f32.mrf.mxu0
  %2053 = vmatprep.mubr.bf16.mxu0 %v1942
  %2054 = vmatmul.mubr.bf16.gmra.mxu0 %v1941
  %v2055 = vpop.f32.mrf.mxu0
  %v2056 = vadd.f32 %v641, %v2055
  %v2057 = vpop.f32.mrf.mxu0
  %v2058 = vpop.f32.mrf.mxu0
  %v2059 = vadd.f32 %v641, %v2058
  %v2060 = vpop.f32.mrf.mxu0
  %2061 = vmatprep.mubr.bf16.mxu0 %v1950
  %2062 = vmatmul.mubr.bf16.gmra.mxu0 %v1949
  %v2063 = vpop.f32.mrf.mxu0
  %v2064 = vadd.f32 %v641, %v2063
  %v2065 = vpop.f32.mrf.mxu0
  %v2066 = vpop.f32.mrf.mxu0
  %v2067 = vadd.f32 %v641, %v2066
  %v2068 = vpop.f32.mrf.mxu0
  %2069 = vdwg.mxu0
  %2070 = vmatprep.subr.bf16.mxu0 0
  %2071 = vmatpush1.bf16.msra.mxu0 %v1290
  %2072 = vmatprep.subr.bf16.mxu0 0
  %2073 = vmatpush1.bf16.msra.mxu0 %v1289
  %2074 = vmatprep.subr.bf16.mxu0 0
  %2075 = vmatpush1.bf16.msra.mxu0 %v1288
  %2076 = vmatprep.subr.bf16.mxu0 0
  %2077 = vmatpush1.bf16.msra.mxu0 %v1287
  %2078 = vmatprep.subr.bf16.mxu0 0
  %2079 = vmatpush1.bf16.msra.mxu0 %v1286
  %2080 = vmatprep.subr.bf16.mxu0 0
  %2081 = vmatpush1.bf16.msra.mxu0 %v1285
  %2082 = vmatprep.subr.bf16.mxu0 0
  %2083 = vmatpush1.bf16.msra.mxu0 %v1284
  %2084 = vmatprep.subr.bf16.mxu0 0
  %2085 = vmatpush1.bf16.msra.mxu0 %v1283
  %2086 = vmatprep.subr.bf16.mxu0 0
  %2087 = vmatpush2.bf16.msra.mxu0 %v1298
  %2088 = vmatprep.subr.bf16.mxu0 0
  %2089 = vmatpush2.bf16.msra.mxu0 %v1297
  %2090 = vmatprep.subr.bf16.mxu0 0
  %2091 = vmatpush2.bf16.msra.mxu0 %v1296
  %2092 = vmatprep.subr.bf16.mxu0 0
  %2093 = vmatpush2.bf16.msra.mxu0 %v1295
  %2094 = vmatprep.subr.bf16.mxu0 0
  %2095 = vmatpush2.bf16.msra.mxu0 %v1294
  %2096 = vmatprep.subr.bf16.mxu0 0
  %2097 = vmatpush2.bf16.msra.mxu0 %v1293
  %2098 = vmatprep.subr.bf16.mxu0 0
  %2099 = vmatpush2.bf16.msra.mxu0 %v1292
  %2100 = vmatprep.subr.bf16.mxu0 0
  %2101 = vmatpush2.bf16.msra.mxu0 %v1291
  %2102 = vmatprep.mubr.bf16.mxu0 %v1920
  %2103 = vmatmul.mubr.bf16.gmra.mxu0 %v1919
  %v2104 = vpop.f32.mrf.mxu0
  %v2105 = vadd.f32 %v2032, %v2104
  %v2106 = vpop.f32.mrf.mxu0
  %v2107 = vpop.f32.mrf.mxu0
  %v2108 = vadd.f32 %v2035, %v2107
  %v2109 = vpop.f32.mrf.mxu0
  %2110 = vmatprep.mubr.bf16.mxu0 %v1928
  %2111 = vmatmul.mubr.bf16.gmra.mxu0 %v1927
  %v2112 = vpop.f32.mrf.mxu0
  %v2113 = vadd.f32 %v2040, %v2112
  %v2114 = vpop.f32.mrf.mxu0
  %v2115 = vpop.f32.mrf.mxu0
  %v2116 = vadd.f32 %v2043, %v2115
  %v2117 = vpop.f32.mrf.mxu0
  %2118 = vmatprep.mubr.bf16.mxu0 %v1936
  %2119 = vmatmul.mubr.bf16.gmra.mxu0 %v1935
  %v2120 = vpop.f32.mrf.mxu0
  %v2121 = vadd.f32 %v2048, %v2120
  %v2122 = vpop.f32.mrf.mxu0
  %v2123 = vpop.f32.mrf.mxu0
  %v2124 = vadd.f32 %v2051, %v2123
  %v2125 = vpop.f32.mrf.mxu0
  %2126 = vmatprep.mubr.bf16.mxu0 %v1944
  %2127 = vmatmul.mubr.bf16.gmra.mxu0 %v1943
  %v2128 = vpop.f32.mrf.mxu0
  %v2129 = vadd.f32 %v2056, %v2128
  %v2130 = vpop.f32.mrf.mxu0
  %v2131 = vpop.f32.mrf.mxu0
  %v2132 = vadd.f32 %v2059, %v2131
  %v2133 = vpop.f32.mrf.mxu0
  %2134 = vmatprep.mubr.bf16.mxu0 %v1952
  %2135 = vmatmul.mubr.bf16.gmra.mxu0 %v1951
  %v2136 = vpop.f32.mrf.mxu0
  %v2137 = vadd.f32 %v2064, %v2136
  %v2138 = vpop.f32.mrf.mxu0
  %v2139 = vpop.f32.mrf.mxu0
  %v2140 = vadd.f32 %v2067, %v2139
  %v2141 = vpop.f32.mrf.mxu0
  %2142 = vdwg.mxu0
  %2143 = vmatprep.subr.bf16.mxu0 0
  %2144 = vmatpush1.bf16.msra.mxu0 %v1306
  %2145 = vmatprep.subr.bf16.mxu0 0
  %2146 = vmatpush1.bf16.msra.mxu0 %v1305
  %2147 = vmatprep.subr.bf16.mxu0 0
  %2148 = vmatpush1.bf16.msra.mxu0 %v1304
  %2149 = vmatprep.subr.bf16.mxu0 0
  %2150 = vmatpush1.bf16.msra.mxu0 %v1303
  %2151 = vmatprep.subr.bf16.mxu0 0
  %2152 = vmatpush1.bf16.msra.mxu0 %v1302
  %2153 = vmatprep.subr.bf16.mxu0 0
  %2154 = vmatpush1.bf16.msra.mxu0 %v1301
  %2155 = vmatprep.subr.bf16.mxu0 0
  %2156 = vmatpush1.bf16.msra.mxu0 %v1300
  %2157 = vmatprep.subr.bf16.mxu0 0
  %2158 = vmatpush1.bf16.msra.mxu0 %v1299
  %2159 = vmatprep.subr.bf16.mxu0 0
  %2160 = vmatpush2.bf16.msra.mxu0 %v1314
  %2161 = vmatprep.subr.bf16.mxu0 0
  %2162 = vmatpush2.bf16.msra.mxu0 %v1313
  %2163 = vmatprep.subr.bf16.mxu0 0
  %2164 = vmatpush2.bf16.msra.mxu0 %v1312
  %2165 = vmatprep.subr.bf16.mxu0 0
  %2166 = vmatpush2.bf16.msra.mxu0 %v1311
  %2167 = vmatprep.subr.bf16.mxu0 0
  %2168 = vmatpush2.bf16.msra.mxu0 %v1310
  %2169 = vmatprep.subr.bf16.mxu0 0
  %2170 = vmatpush2.bf16.msra.mxu0 %v1309
  %2171 = vmatprep.subr.bf16.mxu0 0
  %2172 = vmatpush2.bf16.msra.mxu0 %v1308
  %2173 = vmatprep.subr.bf16.mxu0 0
  %2174 = vmatpush2.bf16.msra.mxu0 %v1307
  %2175 = vmatprep.mubr.bf16.mxu0 %v1922
  %2176 = vmatmul.mubr.bf16.gmra.mxu0 %v1921
  %v2177 = vpop.f32.mrf.mxu0
  %v2178 = vadd.f32 %v2105, %v2177
  %v2179 = vpop.f32.mrf.mxu0
  %v2180 = vpop.f32.mrf.mxu0
  %v2181 = vadd.f32 %v2108, %v2180
  %v2182 = vpop.f32.mrf.mxu0
  %2183 = vmatprep.mubr.bf16.mxu0 %v1930
  %2184 = vmatmul.mubr.bf16.gmra.mxu0 %v1929
  %v2185 = vpop.f32.mrf.mxu0
  %v2186 = vadd.f32 %v2113, %v2185
  %v2187 = vpop.f32.mrf.mxu0
  %v2188 = vpop.f32.mrf.mxu0
  %v2189 = vadd.f32 %v2116, %v2188
  %v2190 = vpop.f32.mrf.mxu0
  %2191 = vmatprep.mubr.bf16.mxu0 %v1938
  %2192 = vmatmul.mubr.bf16.gmra.mxu0 %v1937
  %v2193 = vpop.f32.mrf.mxu0
  %v2194 = vadd.f32 %v2121, %v2193
  %v2195 = vpop.f32.mrf.mxu0
  %v2196 = vpop.f32.mrf.mxu0
  %v2197 = vadd.f32 %v2124, %v2196
  %v2198 = vpop.f32.mrf.mxu0
  %2199 = vmatprep.mubr.bf16.mxu0 %v1946
  %2200 = vmatmul.mubr.bf16.gmra.mxu0 %v1945
  %v2201 = vpop.f32.mrf.mxu0
  %v2202 = vadd.f32 %v2129, %v2201
  %v2203 = vpop.f32.mrf.mxu0
  %v2204 = vpop.f32.mrf.mxu0
  %v2205 = vadd.f32 %v2132, %v2204
  %v2206 = vpop.f32.mrf.mxu0
  %2207 = vmatprep.mubr.bf16.mxu0 %v1954
  %2208 = vmatmul.mubr.bf16.gmra.mxu0 %v1953
  %v2209 = vpop.f32.mrf.mxu0
  %v2210 = vadd.f32 %v2137, %v2209
  %v2211 = vpop.f32.mrf.mxu0
  %v2212 = vpop.f32.mrf.mxu0
  %v2213 = vadd.f32 %v2140, %v2212
  %v2214 = vpop.f32.mrf.mxu0
  %2215 = vdwg.mxu0
  %2216 = vmatprep.subr.bf16.mxu0 0
  %2217 = vmatpush1.bf16.msra.mxu0 %v1322
  %2218 = vmatprep.subr.bf16.mxu0 0
  %2219 = vmatpush1.bf16.msra.mxu0 %v1321
  %2220 = vmatprep.subr.bf16.mxu0 0
  %2221 = vmatpush1.bf16.msra.mxu0 %v1320
  %2222 = vmatprep.subr.bf16.mxu0 0
  %2223 = vmatpush1.bf16.msra.mxu0 %v1319
  %2224 = vmatprep.subr.bf16.mxu0 0
  %2225 = vmatpush1.bf16.msra.mxu0 %v1318
  %2226 = vmatprep.subr.bf16.mxu0 0
  %2227 = vmatpush1.bf16.msra.mxu0 %v1317
  %2228 = vmatprep.subr.bf16.mxu0 0
  %2229 = vmatpush1.bf16.msra.mxu0 %v1316
  %2230 = vmatprep.subr.bf16.mxu0 0
  %2231 = vmatpush1.bf16.msra.mxu0 %v1315
  %2232 = vmatprep.subr.bf16.mxu0 0
  %2233 = vmatpush2.bf16.msra.mxu0 %v1330
  %2234 = vmatprep.subr.bf16.mxu0 0
  %2235 = vmatpush2.bf16.msra.mxu0 %v1329
  %2236 = vmatprep.subr.bf16.mxu0 0
  %2237 = vmatpush2.bf16.msra.mxu0 %v1328
  %2238 = vmatprep.subr.bf16.mxu0 0
  %2239 = vmatpush2.bf16.msra.mxu0 %v1327
  %2240 = vmatprep.subr.bf16.mxu0 0
  %2241 = vmatpush2.bf16.msra.mxu0 %v1326
  %2242 = vmatprep.subr.bf16.mxu0 0
  %2243 = vmatpush2.bf16.msra.mxu0 %v1325
  %2244 = vmatprep.subr.bf16.mxu0 0
  %2245 = vmatpush2.bf16.msra.mxu0 %v1324
  %2246 = vmatprep.subr.bf16.mxu0 0
  %2247 = vmatpush2.bf16.msra.mxu0 %v1323
  %2248 = vmatprep.mubr.bf16.mxu0 %v1924
  %2249 = vmatmul.mubr.bf16.gmra.mxu0 %v1923
  %v2250 = vpop.f32.mrf.mxu0
  %v2251 = vadd.f32 %v2178, %v2250
  %v2252 = vpop.f32.mrf.mxu0
  %v2253 = vpop.f32.mrf.mxu0
  %v2254 = vadd.f32 %v2181, %v2253
  %v2255 = vpop.f32.mrf.mxu0
  %2256 = vmatprep.mubr.bf16.mxu0 %v1932
  %2257 = vmatmul.mubr.bf16.gmra.mxu0 %v1931
  %v2258 = vpop.f32.mrf.mxu0
  %v2259 = vadd.f32 %v2186, %v2258
  %v2260 = vpop.f32.mrf.mxu0
  %v2261 = vpop.f32.mrf.mxu0
  %v2262 = vadd.f32 %v2189, %v2261
  %v2263 = vpop.f32.mrf.mxu0
  %2264 = vmatprep.mubr.bf16.mxu0 %v1940
  %2265 = vmatmul.mubr.bf16.gmra.mxu0 %v1939
  %v2266 = vpop.f32.mrf.mxu0
  %v2267 = vadd.f32 %v2194, %v2266
  %v2268 = vpop.f32.mrf.mxu0
  %v2269 = vpop.f32.mrf.mxu0
  %v2270 = vadd.f32 %v2197, %v2269
  %v2271 = vpop.f32.mrf.mxu0
  %2272 = vmatprep.mubr.bf16.mxu0 %v1948
  %2273 = vmatmul.mubr.bf16.gmra.mxu0 %v1947
  %v2274 = vpop.f32.mrf.mxu0
  %v2275 = vadd.f32 %v2202, %v2274
  %v2276 = vpop.f32.mrf.mxu0
  %v2277 = vpop.f32.mrf.mxu0
  %v2278 = vadd.f32 %v2205, %v2277
  %v2279 = vpop.f32.mrf.mxu0
  %2280 = vmatprep.mubr.bf16.mxu0 %v1956
  %2281 = vmatmul.mubr.bf16.gmra.mxu0 %v1955
  %v2282 = vpop.f32.mrf.mxu0
  %v2283 = vadd.f32 %v2210, %v2282
  %v2284 = vpop.f32.mrf.mxu0
  %v2285 = vpop.f32.mrf.mxu0
  %v2286 = vadd.f32 %v2213, %v2285
  %v2287 = vpop.f32.mrf.mxu0
  %2288 = vdwg.mxu0
  %v2289 = vmul.f32 %v2251, 0.01
  %v2290 = vmul.f32 %v2254, 0.01
  %v2291 = vmul.f32 %v2259, 0.01
  %v2292 = vmul.f32 %v2262, 0.01
  %v2293 = vmul.f32 %v2267, 0.01
  %v2294 = vmul.f32 %v2270, 0.01
  %v2295 = vmul.f32 %v2275, 0.01
  %v2296 = vmul.f32 %v2278, 0.01
  %v2297 = vmul.f32 %v2283, 0.01
  %v2298 = vmul.f32 %v2286, 0.01
  %v2299 = vmax.f32 %v2251, %v2289
  %v2300 = vmax.f32 %v2254, %v2290
  %v2301 = vmax.f32 %v2259, %v2291
  %v2302 = vmax.f32 %v2262, %v2292
  %v2303 = vmax.f32 %v2267, %v2293
  %v2304 = vmax.f32 %v2270, %v2294
  %v2305 = vmax.f32 %v2275, %v2295
  %v2306 = vmax.f32 %v2278, %v2296
  %v2307 = vmax.f32 %v2283, %v2297
  %v2308 = vmax.f32 %v2286, %v2298
  %v2309 = vpack.c.bf16 %v2300, %v2299
  %v2310 = vpack.c.bf16 %v2302, %v2301
  %v2311 = vpack.c.bf16 %v2304, %v2303
  %v2312 = vpack.c.bf16 %v2306, %v2305
  %v2313 = vpack.c.bf16 %v2308, %v2307
  %v2319 = vunpack.c.l.b16 %v2309
  %v2320 = vunpack.c.h.b16 %v2309
  %v2321 = vunpack.c.l.b16 %v2310
  %v2322 = vunpack.c.h.b16 %v2310
  %v2323 = vunpack.c.l.b16 %v2311
  %v2324 = vunpack.c.h.b16 %v2311
  %v2325 = vunpack.c.l.b16 %v2312
  %v2326 = vunpack.c.h.b16 %v2312
  %v2327 = vunpack.c.l.b16 %v2313
  %v2328 = vunpack.c.h.b16 %v2313
  %v2329 = vpack.c.b16 %v2319, %v2319
  %v2330 = vpack.c.b16 %v2320, %v2320
  %v2331 = vpack.c.b16 %v2321, %v2321
  %v2332 = vpack.c.b16 %v2322, %v2322
  %v2333 = vpack.c.b16 %v2323, %v2323
  %v2334 = vpack.c.b16 %v2324, %v2324
  %v2335 = vpack.c.b16 %v2325, %v2325
  %v2336 = vpack.c.b16 %v2326, %v2326
  %v2337 = vpack.c.b16 %v2327, %v2327
  %v2338 = vpack.c.b16 %v2328, %v2328
  %2349 = vst [vmem:[#allocation2 + $0x4] sm:$0xf] %v2329
  %2350 = vst [vmem:[#allocation2 + $0x14] sm:$0xf] %v2330
  %2351 = vst [vmem:[#allocation2 + $0x24] sm:$0xf] %v2331
  %2352 = vst [vmem:[#allocation2 + $0x34] sm:$0xf] %v2332
  %2353 = vst [vmem:[#allocation2 + $0x44] sm:$0xf] %v2333
  %2354 = vst [vmem:[#allocation2 + $0x54] sm:$0xf] %v2334
  %2355 = vst [vmem:[#allocation2 + $0x64] sm:$0xf] %v2335
  %2356 = vst [vmem:[#allocation2 + $0x74] sm:$0xf] %v2336
  %2357 = vst [vmem:[#allocation2 + $0x84] sm:$0xf] %v2337
  %2358 = vst [vmem:[#allocation2 + $0x94] sm:$0xf] %v2338
  %v2359 = vld [vmem:[%s0 + $0x280] sm:$0xff]
  %v2360 = vld [vmem:[%s0 + $0x288] sm:$0xff]
  %v2361 = vld [vmem:[%s0 + $0x290] sm:$0xff]
  %v2362 = vld [vmem:[%s0 + $0x298] sm:$0xff]
  %v2363 = vld [vmem:[%s0 + $0x2a0] sm:$0xff]
  %v2364 = vld [vmem:[%s0 + $0x2a8] sm:$0xff]
  %v2365 = vld [vmem:[%s0 + $0x2b0] sm:$0xff]
  %v2366 = vld [vmem:[%s0 + $0x2b8] sm:$0xff]
  %v2367 = vld [vmem:[%s0 + $0x2c0] sm:$0xff]
  %v2368 = vld [vmem:[%s0 + $0x2c8] sm:$0xff]
  %v2369 = vld [vmem:[%s0 + $0x2d0] sm:$0xff]
  %v2370 = vld [vmem:[%s0 + $0x2d8] sm:$0xff]
  %v2371 = vld [vmem:[%s0 + $0x2e0] sm:$0xff]
  %v2372 = vld [vmem:[%s0 + $0x2e8] sm:$0xff]
  %v2373 = vld [vmem:[%s0 + $0x2f0] sm:$0xff]
  %v2374 = vld [vmem:[%s0 + $0x2f8] sm:$0xff]
  %v2375 = vld [vmem:[%s0 + $0x300] sm:$0xff]
  %v2376 = vld [vmem:[%s0 + $0x308] sm:$0xff]
  %v2377 = vld [vmem:[%s0 + $0x310] sm:$0xff]
  %v2378 = vld [vmem:[%s0 + $0x318] sm:$0xff]
  %v2379 = vld [vmem:[%s0 + $0x320] sm:$0xff]
  %v2380 = vld [vmem:[%s0 + $0x328] sm:$0xff]
  %v2381 = vld [vmem:[%s0 + $0x330] sm:$0xff]
  %v2382 = vld [vmem:[%s0 + $0x338] sm:$0xff]
  %v2383 = vld [vmem:[%s0 + $0x340] sm:$0xff]
  %v2384 = vld [vmem:[%s0 + $0x348] sm:$0xff]
  %v2385 = vld [vmem:[%s0 + $0x350] sm:$0xff]
  %v2386 = vld [vmem:[%s0 + $0x358] sm:$0xff]
  %v2387 = vld [vmem:[%s0 + $0x360] sm:$0xff]
  %v2388 = vld [vmem:[%s0 + $0x368] sm:$0xff]
  %v2389 = vld [vmem:[%s0 + $0x370] sm:$0xff]
  %v2390 = vld [vmem:[%s0 + $0x378] sm:$0xff]
  %v2391 = vld [vmem:[%s0 + $0x380] sm:$0xff]
  %v2392 = vld [vmem:[%s0 + $0x388] sm:$0xff]
  %v2393 = vld [vmem:[%s0 + $0x390] sm:$0xff]
  %v2394 = vld [vmem:[%s0 + $0x398] sm:$0xff]
  %v2395 = vld [vmem:[%s0 + $0x3a0] sm:$0xff]
  %v2396 = vld [vmem:[%s0 + $0x3a8] sm:$0xff]
  %v2397 = vld [vmem:[%s0 + $0x3b0] sm:$0xff]
  %v2398 = vld [vmem:[%s0 + $0x3b8] sm:$0xff]
  %v2439 = vunpack.c.l.b16 %v2359
  %v2440 = vunpack.c.h.b16 %v2359
  %v2441 = vunpack.c.l.b16 %v2360
  %v2442 = vunpack.c.h.b16 %v2360
  %v2443 = vunpack.c.l.b16 %v2361
  %v2444 = vunpack.c.h.b16 %v2361
  %v2445 = vunpack.c.l.b16 %v2362
  %v2446 = vunpack.c.h.b16 %v2362
  %v2447 = vunpack.c.l.b16 %v2363
  %v2448 = vunpack.c.h.b16 %v2363
  %v2449 = vunpack.c.l.b16 %v2364
  %v2450 = vunpack.c.h.b16 %v2364
  %v2451 = vunpack.c.l.b16 %v2365
  %v2452 = vunpack.c.h.b16 %v2365
  %v2453 = vunpack.c.l.b16 %v2366
  %v2454 = vunpack.c.h.b16 %v2366
  %v2455 = vunpack.c.l.b16 %v2367
  %v2456 = vunpack.c.h.b16 %v2367
  %v2457 = vunpack.c.l.b16 %v2368
  %v2458 = vunpack.c.h.b16 %v2368
  %v2459 = vunpack.c.l.b16 %v2369
  %v2460 = vunpack.c.h.b16 %v2369
  %v2461 = vunpack.c.l.b16 %v2370
  %v2462 = vunpack.c.h.b16 %v2370
  %v2463 = vunpack.c.l.b16 %v2371
  %v2464 = vunpack.c.h.b16 %v2371
  %v2465 = vunpack.c.l.b16 %v2372
  %v2466 = vunpack.c.h.b16 %v2372
  %v2467 = vunpack.c.l.b16 %v2373
  %v2468 = vunpack.c.h.b16 %v2373
  %v2469 = vunpack.c.l.b16 %v2374
  %v2470 = vunpack.c.h.b16 %v2374
  %v2471 = vunpack.c.l.b16 %v2375
  %v2472 = vunpack.c.h.b16 %v2375
  %v2473 = vunpack.c.l.b16 %v2376
  %v2474 = vunpack.c.h.b16 %v2376
  %v2475 = vunpack.c.l.b16 %v2377
  %v2476 = vunpack.c.h.b16 %v2377
  %v2477 = vunpack.c.l.b16 %v2378
  %v2478 = vunpack.c.h.b16 %v2378
  %v2479 = vunpack.c.l.b16 %v2379
  %v2480 = vunpack.c.h.b16 %v2379
  %v2481 = vunpack.c.l.b16 %v2380
  %v2482 = vunpack.c.h.b16 %v2380
  %v2483 = vunpack.c.l.b16 %v2381
  %v2484 = vunpack.c.h.b16 %v2381
  %v2485 = vunpack.c.l.b16 %v2382
  %v2486 = vunpack.c.h.b16 %v2382
  %v2487 = vunpack.c.l.b16 %v2383
  %v2488 = vunpack.c.h.b16 %v2383
  %v2489 = vunpack.c.l.b16 %v2384
  %v2490 = vunpack.c.h.b16 %v2384
  %v2491 = vunpack.c.l.b16 %v2385
  %v2492 = vunpack.c.h.b16 %v2385
  %v2493 = vunpack.c.l.b16 %v2386
  %v2494 = vunpack.c.h.b16 %v2386
  %v2495 = vunpack.c.l.b16 %v2387
  %v2496 = vunpack.c.h.b16 %v2387
  %v2497 = vunpack.c.l.b16 %v2388
  %v2498 = vunpack.c.h.b16 %v2388
  %v2499 = vunpack.c.l.b16 %v2389
  %v2500 = vunpack.c.h.b16 %v2389
  %v2501 = vunpack.c.l.b16 %v2390
  %v2502 = vunpack.c.h.b16 %v2390
  %v2503 = vunpack.c.l.b16 %v2391
  %v2504 = vunpack.c.h.b16 %v2391
  %v2505 = vunpack.c.l.b16 %v2392
  %v2506 = vunpack.c.h.b16 %v2392
  %v2507 = vunpack.c.l.b16 %v2393
  %v2508 = vunpack.c.h.b16 %v2393
  %v2509 = vunpack.c.l.b16 %v2394
  %v2510 = vunpack.c.h.b16 %v2394
  %v2511 = vunpack.c.l.b16 %v2395
  %v2512 = vunpack.c.h.b16 %v2395
  %v2513 = vunpack.c.l.b16 %v2396
  %v2514 = vunpack.c.h.b16 %v2396
  %v2515 = vunpack.c.l.b16 %v2397
  %v2516 = vunpack.c.h.b16 %v2397
  %v2517 = vunpack.c.l.b16 %v2398
  %v2518 = vunpack.c.h.b16 %v2398
  %v2519 = vpack.c.b16 %v2447, %v2439
  %v2520 = vpack.c.b16 %v2448, %v2440
  %v2521 = vpack.c.b16 %v2449, %v2441
  %v2522 = vpack.c.b16 %v2450, %v2442
  %v2523 = vpack.c.b16 %v2451, %v2443
  %v2524 = vpack.c.b16 %v2452, %v2444
  %v2525 = vpack.c.b16 %v2453, %v2445
  %v2526 = vpack.c.b16 %v2454, %v2446
  %v2527 = vpack.c.b16 %v2463, %v2455
  %v2528 = vpack.c.b16 %v2464, %v2456
  %v2529 = vpack.c.b16 %v2465, %v2457
  %v2530 = vpack.c.b16 %v2466, %v2458
  %v2531 = vpack.c.b16 %v2467, %v2459
  %v2532 = vpack.c.b16 %v2468, %v2460
  %v2533 = vpack.c.b16 %v2469, %v2461
  %v2534 = vpack.c.b16 %v2470, %v2462
  %v2535 = vpack.c.b16 %v2479, %v2471
  %v2536 = vpack.c.b16 %v2480, %v2472
  %v2537 = vpack.c.b16 %v2481, %v2473
  %v2538 = vpack.c.b16 %v2482, %v2474
  %v2539 = vpack.c.b16 %v2483, %v2475
  %v2540 = vpack.c.b16 %v2484, %v2476
  %v2541 = vpack.c.b16 %v2485, %v2477
  %v2542 = vpack.c.b16 %v2486, %v2478
  %v2543 = vpack.c.b16 %v2495, %v2487
  %v2544 = vpack.c.b16 %v2496, %v2488
  %v2545 = vpack.c.b16 %v2497, %v2489
  %v2546 = vpack.c.b16 %v2498, %v2490
  %v2547 = vpack.c.b16 %v2499, %v2491
  %v2548 = vpack.c.b16 %v2500, %v2492
  %v2549 = vpack.c.b16 %v2501, %v2493
  %v2550 = vpack.c.b16 %v2502, %v2494
  %v2551 = vpack.c.b16 %v2511, %v2503
  %v2552 = vpack.c.b16 %v2512, %v2504
  %v2553 = vpack.c.b16 %v2513, %v2505
  %v2554 = vpack.c.b16 %v2514, %v2506
  %v2555 = vpack.c.b16 %v2515, %v2507
  %v2556 = vpack.c.b16 %v2516, %v2508
  %v2557 = vpack.c.b16 %v2517, %v2509
  %v2558 = vpack.c.b16 %v2518, %v2510
  %2599 = vmatprep.subr.bf16.mxu0 0
  %2600 = vmatpush1.bf16.msra.mxu0 %v1274
  %2601 = vmatprep.subr.bf16.mxu0 0
  %2602 = vmatpush1.bf16.msra.mxu0 %v1273
  %2603 = vmatprep.subr.bf16.mxu0 0
  %2604 = vmatpush1.bf16.msra.mxu0 %v1272
  %2605 = vmatprep.subr.bf16.mxu0 0
  %2606 = vmatpush1.bf16.msra.mxu0 %v1271
  %2607 = vmatprep.subr.bf16.mxu0 0
  %2608 = vmatpush1.bf16.msra.mxu0 %v1270
  %2609 = vmatprep.subr.bf16.mxu0 0
  %2610 = vmatpush1.bf16.msra.mxu0 %v1269
  %2611 = vmatprep.subr.bf16.mxu0 0
  %2612 = vmatpush1.bf16.msra.mxu0 %v1268
  %2613 = vmatprep.subr.bf16.mxu0 0
  %2614 = vmatpush1.bf16.msra.mxu0 %v1267
  %2615 = vmatprep.subr.bf16.mxu0 0
  %2616 = vmatpush2.bf16.msra.mxu0 %v1282
  %2617 = vmatprep.subr.bf16.mxu0 0
  %2618 = vmatpush2.bf16.msra.mxu0 %v1281
  %2619 = vmatprep.subr.bf16.mxu0 0
  %2620 = vmatpush2.bf16.msra.mxu0 %v1280
  %2621 = vmatprep.subr.bf16.mxu0 0
  %2622 = vmatpush2.bf16.msra.mxu0 %v1279
  %2623 = vmatprep.subr.bf16.mxu0 0
  %2624 = vmatpush2.bf16.msra.mxu0 %v1278
  %2625 = vmatprep.subr.bf16.mxu0 0
  %2626 = vmatpush2.bf16.msra.mxu0 %v1277
  %2627 = vmatprep.subr.bf16.mxu0 0
  %2628 = vmatpush2.bf16.msra.mxu0 %v1276
  %2629 = vmatprep.subr.bf16.mxu0 0
  %2630 = vmatpush2.bf16.msra.mxu0 %v1275
  %2631 = vmatprep.mubr.bf16.mxu0 %v2520
  %2632 = vmatmul.mubr.bf16.gmra.mxu0 %v2519
  %v2633 = vpop.f32.mrf.mxu0
  %v2634 = vadd.f32 %v641, %v2633
  %v2635 = vpop.f32.mrf.mxu0
  %v2636 = vpop.f32.mrf.mxu0
  %v2637 = vadd.f32 %v641, %v2636
  %v2638 = vpop.f32.mrf.mxu0
  %2639 = vmatprep.mubr.bf16.mxu0 %v2528
  %2640 = vmatmul.mubr.bf16.gmra.mxu0 %v2527
  %v2641 = vpop.f32.mrf.mxu0
  %v2642 = vadd.f32 %v641, %v2641
  %v2643 = vpop.f32.mrf.mxu0
  %v2644 = vpop.f32.mrf.mxu0
  %v2645 = vadd.f32 %v641, %v2644
  %v2646 = vpop.f32.mrf.mxu0
  %2647 = vmatprep.mubr.bf16.mxu0 %v2536
  %2648 = vmatmul.mubr.bf16.gmra.mxu0 %v2535
  %v2649 = vpop.f32.mrf.mxu0
  %v2650 = vadd.f32 %v641, %v2649
  %v2651 = vpop.f32.mrf.mxu0
  %v2652 = vpop.f32.mrf.mxu0
  %v2653 = vadd.f32 %v641, %v2652
  %v2654 = vpop.f32.mrf.mxu0
  %2655 = vmatprep.mubr.bf16.mxu0 %v2544
  %2656 = vmatmul.mubr.bf16.gmra.mxu0 %v2543
  %v2657 = vpop.f32.mrf.mxu0
  %v2658 = vadd.f32 %v641, %v2657
  %v2659 = vpop.f32.mrf.mxu0
  %v2660 = vpop.f32.mrf.mxu0
  %v2661 = vadd.f32 %v641, %v2660
  %v2662 = vpop.f32.mrf.mxu0
  %2663 = vmatprep.mubr.bf16.mxu0 %v2552
  %2664 = vmatmul.mubr.bf16.gmra.mxu0 %v2551
  %v2665 = vpop.f32.mrf.mxu0
  %v2666 = vadd.f32 %v641, %v2665
  %v2667 = vpop.f32.mrf.mxu0
  %v2668 = vpop.f32.mrf.mxu0
  %v2669 = vadd.f32 %v641, %v2668
  %v2670 = vpop.f32.mrf.mxu0
  %2671 = vdwg.mxu0
  %2672 = vmatprep.subr.bf16.mxu0 0
  %2673 = vmatpush1.bf16.msra.mxu0 %v1290
  %2674 = vmatprep.subr.bf16.mxu0 0
  %2675 = vmatpush1.bf16.msra.mxu0 %v1289
  %2676 = vmatprep.subr.bf16.mxu0 0
  %2677 = vmatpush1.bf16.msra.mxu0 %v1288
  %2678 = vmatprep.subr.bf16.mxu0 0
  %2679 = vmatpush1.bf16.msra.mxu0 %v1287
  %2680 = vmatprep.subr.bf16.mxu0 0
  %2681 = vmatpush1.bf16.msra.mxu0 %v1286
  %2682 = vmatprep.subr.bf16.mxu0 0
  %2683 = vmatpush1.bf16.msra.mxu0 %v1285
  %2684 = vmatprep.subr.bf16.mxu0 0
  %2685 = vmatpush1.bf16.msra.mxu0 %v1284
  %2686 = vmatprep.subr.bf16.mxu0 0
  %2687 = vmatpush1.bf16.msra.mxu0 %v1283
  %2688 = vmatprep.subr.bf16.mxu0 0
  %2689 = vmatpush2.bf16.msra.mxu0 %v1298
  %2690 = vmatprep.subr.bf16.mxu0 0
  %2691 = vmatpush2.bf16.msra.mxu0 %v1297
  %2692 = vmatprep.subr.bf16.mxu0 0
  %2693 = vmatpush2.bf16.msra.mxu0 %v1296
  %2694 = vmatprep.subr.bf16.mxu0 0
  %2695 = vmatpush2.bf16.msra.mxu0 %v1295
  %2696 = vmatprep.subr.bf16.mxu0 0
  %2697 = vmatpush2.bf16.msra.mxu0 %v1294
  %2698 = vmatprep.subr.bf16.mxu0 0
  %2699 = vmatpush2.bf16.msra.mxu0 %v1293
  %2700 = vmatprep.subr.bf16.mxu0 0
  %2701 = vmatpush2.bf16.msra.mxu0 %v1292
  %2702 = vmatprep.subr.bf16.mxu0 0
  %2703 = vmatpush2.bf16.msra.mxu0 %v1291
  %2704 = vmatprep.mubr.bf16.mxu0 %v2522
  %2705 = vmatmul.mubr.bf16.gmra.mxu0 %v2521
  %v2706 = vpop.f32.mrf.mxu0
  %v2707 = vadd.f32 %v2634, %v2706
  %v2708 = vpop.f32.mrf.mxu0
  %v2709 = vpop.f32.mrf.mxu0
  %v2710 = vadd.f32 %v2637, %v2709
  %v2711 = vpop.f32.mrf.mxu0
  %2712 = vmatprep.mubr.bf16.mxu0 %v2530
  %2713 = vmatmul.mubr.bf16.gmra.mxu0 %v2529
  %v2714 = vpop.f32.mrf.mxu0
  %v2715 = vadd.f32 %v2642, %v2714
  %v2716 = vpop.f32.mrf.mxu0
  %v2717 = vpop.f32.mrf.mxu0
  %v2718 = vadd.f32 %v2645, %v2717
  %v2719 = vpop.f32.mrf.mxu0
  %2720 = vmatprep.mubr.bf16.mxu0 %v2538
  %2721 = vmatmul.mubr.bf16.gmra.mxu0 %v2537
  %v2722 = vpop.f32.mrf.mxu0
  %v2723 = vadd.f32 %v2650, %v2722
  %v2724 = vpop.f32.mrf.mxu0
  %v2725 = vpop.f32.mrf.mxu0
  %v2726 = vadd.f32 %v2653, %v2725
  %v2727 = vpop.f32.mrf.mxu0
  %2728 = vmatprep.mubr.bf16.mxu0 %v2546
  %2729 = vmatmul.mubr.bf16.gmra.mxu0 %v2545
  %v2730 = vpop.f32.mrf.mxu0
  %v2731 = vadd.f32 %v2658, %v2730
  %v2732 = vpop.f32.mrf.mxu0
  %v2733 = vpop.f32.mrf.mxu0
  %v2734 = vadd.f32 %v2661, %v2733
  %v2735 = vpop.f32.mrf.mxu0
  %2736 = vmatprep.mubr.bf16.mxu0 %v2554
  %2737 = vmatmul.mubr.bf16.gmra.mxu0 %v2553
  %v2738 = vpop.f32.mrf.mxu0
  %v2739 = vadd.f32 %v2666, %v2738
  %v2740 = vpop.f32.mrf.mxu0
  %v2741 = vpop.f32.mrf.mxu0
  %v2742 = vadd.f32 %v2669, %v2741
  %v2743 = vpop.f32.mrf.mxu0
  %2744 = vdwg.mxu0
  %2745 = vmatprep.subr.bf16.mxu0 0
  %2746 = vmatpush1.bf16.msra.mxu0 %v1306
  %2747 = vmatprep.subr.bf16.mxu0 0
  %2748 = vmatpush1.bf16.msra.mxu0 %v1305
  %2749 = vmatprep.subr.bf16.mxu0 0
  %2750 = vmatpush1.bf16.msra.mxu0 %v1304
  %2751 = vmatprep.subr.bf16.mxu0 0
  %2752 = vmatpush1.bf16.msra.mxu0 %v1303
  %2753 = vmatprep.subr.bf16.mxu0 0
  %2754 = vmatpush1.bf16.msra.mxu0 %v1302
  %2755 = vmatprep.subr.bf16.mxu0 0
  %2756 = vmatpush1.bf16.msra.mxu0 %v1301
  %2757 = vmatprep.subr.bf16.mxu0 0
  %2758 = vmatpush1.bf16.msra.mxu0 %v1300
  %2759 = vmatprep.subr.bf16.mxu0 0
  %2760 = vmatpush1.bf16.msra.mxu0 %v1299
  %2761 = vmatprep.subr.bf16.mxu0 0
  %2762 = vmatpush2.bf16.msra.mxu0 %v1314
  %2763 = vmatprep.subr.bf16.mxu0 0
  %2764 = vmatpush2.bf16.msra.mxu0 %v1313
  %2765 = vmatprep.subr.bf16.mxu0 0
  %2766 = vmatpush2.bf16.msra.mxu0 %v1312
  %2767 = vmatprep.subr.bf16.mxu0 0
  %2768 = vmatpush2.bf16.msra.mxu0 %v1311
  %2769 = vmatprep.subr.bf16.mxu0 0
  %2770 = vmatpush2.bf16.msra.mxu0 %v1310
  %2771 = vmatprep.subr.bf16.mxu0 0
  %2772 = vmatpush2.bf16.msra.mxu0 %v1309
  %2773 = vmatprep.subr.bf16.mxu0 0
  %2774 = vmatpush2.bf16.msra.mxu0 %v1308
  %2775 = vmatprep.subr.bf16.mxu0 0
  %2776 = vmatpush2.bf16.msra.mxu0 %v1307
  %2777 = vmatprep.mubr.bf16.mxu0 %v2524
  %2778 = vmatmul.mubr.bf16.gmra.mxu0 %v2523
  %v2779 = vpop.f32.mrf.mxu0
  %v2780 = vadd.f32 %v2707, %v2779
  %v2781 = vpop.f32.mrf.mxu0
  %v2782 = vpop.f32.mrf.mxu0
  %v2783 = vadd.f32 %v2710, %v2782
  %v2784 = vpop.f32.mrf.mxu0
  %2785 = vmatprep.mubr.bf16.mxu0 %v2532
  %2786 = vmatmul.mubr.bf16.gmra.mxu0 %v2531
  %v2787 = vpop.f32.mrf.mxu0
  %v2788 = vadd.f32 %v2715, %v2787
  %v2789 = vpop.f32.mrf.mxu0
  %v2790 = vpop.f32.mrf.mxu0
  %v2791 = vadd.f32 %v2718, %v2790
  %v2792 = vpop.f32.mrf.mxu0
  %2793 = vmatprep.mubr.bf16.mxu0 %v2540
  %2794 = vmatmul.mubr.bf16.gmra.mxu0 %v2539
  %v2795 = vpop.f32.mrf.mxu0
  %v2796 = vadd.f32 %v2723, %v2795
  %v2797 = vpop.f32.mrf.mxu0
  %v2798 = vpop.f32.mrf.mxu0
  %v2799 = vadd.f32 %v2726, %v2798
  %v2800 = vpop.f32.mrf.mxu0
  %2801 = vmatprep.mubr.bf16.mxu0 %v2548
  %2802 = vmatmul.mubr.bf16.gmra.mxu0 %v2547
  %v2803 = vpop.f32.mrf.mxu0
  %v2804 = vadd.f32 %v2731, %v2803
  %v2805 = vpop.f32.mrf.mxu0
  %v2806 = vpop.f32.mrf.mxu0
  %v2807 = vadd.f32 %v2734, %v2806
  %v2808 = vpop.f32.mrf.mxu0
  %2809 = vmatprep.mubr.bf16.mxu0 %v2556
  %2810 = vmatmul.mubr.bf16.gmra.mxu0 %v2555
  %v2811 = vpop.f32.mrf.mxu0
  %v2812 = vadd.f32 %v2739, %v2811
  %v2813 = vpop.f32.mrf.mxu0
  %v2814 = vpop.f32.mrf.mxu0
  %v2815 = vadd.f32 %v2742, %v2814
  %v2816 = vpop.f32.mrf.mxu0
  %2817 = vdwg.mxu0
  %2818 = vmatprep.subr.bf16.mxu0 0
  %2819 = vmatpush1.bf16.msra.mxu0 %v1322
  %2820 = vmatprep.subr.bf16.mxu0 0
  %2821 = vmatpush1.bf16.msra.mxu0 %v1321
  %2822 = vmatprep.subr.bf16.mxu0 0
  %2823 = vmatpush1.bf16.msra.mxu0 %v1320
  %2824 = vmatprep.subr.bf16.mxu0 0
  %2825 = vmatpush1.bf16.msra.mxu0 %v1319
  %2826 = vmatprep.subr.bf16.mxu0 0
  %2827 = vmatpush1.bf16.msra.mxu0 %v1318
  %2828 = vmatprep.subr.bf16.mxu0 0
  %2829 = vmatpush1.bf16.msra.mxu0 %v1317
  %2830 = vmatprep.subr.bf16.mxu0 0
  %2831 = vmatpush1.bf16.msra.mxu0 %v1316
  %2832 = vmatprep.subr.bf16.mxu0 0
  %2833 = vmatpush1.bf16.msra.mxu0 %v1315
  %2834 = vmatprep.subr.bf16.mxu0 0
  %2835 = vmatpush2.bf16.msra.mxu0 %v1330
  %2836 = vmatprep.subr.bf16.mxu0 0
  %2837 = vmatpush2.bf16.msra.mxu0 %v1329
  %2838 = vmatprep.subr.bf16.mxu0 0
  %2839 = vmatpush2.bf16.msra.mxu0 %v1328
  %2840 = vmatprep.subr.bf16.mxu0 0
  %2841 = vmatpush2.bf16.msra.mxu0 %v1327
  %2842 = vmatprep.subr.bf16.mxu0 0
  %2843 = vmatpush2.bf16.msra.mxu0 %v1326
  %2844 = vmatprep.subr.bf16.mxu0 0
  %2845 = vmatpush2.bf16.msra.mxu0 %v1325
  %2846 = vmatprep.subr.bf16.mxu0 0
  %2847 = vmatpush2.bf16.msra.mxu0 %v1324
  %2848 = vmatprep.subr.bf16.mxu0 0
  %2849 = vmatpush2.bf16.msra.mxu0 %v1323
  %2850 = vmatprep.mubr.bf16.mxu0 %v2526
  %2851 = vmatmul.mubr.bf16.gmra.mxu0 %v2525
  %v2852 = vpop.f32.mrf.mxu0
  %v2853 = vadd.f32 %v2780, %v2852
  %v2854 = vpop.f32.mrf.mxu0
  %v2855 = vpop.f32.mrf.mxu0
  %v2856 = vadd.f32 %v2783, %v2855
  %v2857 = vpop.f32.mrf.mxu0
  %2858 = vmatprep.mubr.bf16.mxu0 %v2534
  %2859 = vmatmul.mubr.bf16.gmra.mxu0 %v2533
  %v2860 = vpop.f32.mrf.mxu0
  %v2861 = vadd.f32 %v2788, %v2860
  %v2862 = vpop.f32.mrf.mxu0
  %v2863 = vpop.f32.mrf.mxu0
  %v2864 = vadd.f32 %v2791, %v2863
  %v2865 = vpop.f32.mrf.mxu0
  %2866 = vmatprep.mubr.bf16.mxu0 %v2542
  %2867 = vmatmul.mubr.bf16.gmra.mxu0 %v2541
  %v2868 = vpop.f32.mrf.mxu0
  %v2869 = vadd.f32 %v2796, %v2868
  %v2870 = vpop.f32.mrf.mxu0
  %v2871 = vpop.f32.mrf.mxu0
  %v2872 = vadd.f32 %v2799, %v2871
  %v2873 = vpop.f32.mrf.mxu0
  %2874 = vmatprep.mubr.bf16.mxu0 %v2550
  %2875 = vmatmul.mubr.bf16.gmra.mxu0 %v2549
  %v2876 = vpop.f32.mrf.mxu0
  %v2877 = vadd.f32 %v2804, %v2876
  %v2878 = vpop.f32.mrf.mxu0
  %v2879 = vpop.f32.mrf.mxu0
  %v2880 = vadd.f32 %v2807, %v2879
  %v2881 = vpop.f32.mrf.mxu0
  %2882 = vmatprep.mubr.bf16.mxu0 %v2558
  %2883 = vmatmul.mubr.bf16.gmra.mxu0 %v2557
  %v2884 = vpop.f32.mrf.mxu0
  %v2885 = vadd.f32 %v2812, %v2884
  %v2886 = vpop.f32.mrf.mxu0
  %v2887 = vpop.f32.mrf.mxu0
  %v2888 = vadd.f32 %v2815, %v2887
  %v2889 = vpop.f32.mrf.mxu0
  %2890 = vdwg.mxu0
  %v2891 = vmul.f32 %v2853, 0.01
  %v2892 = vmul.f32 %v2856, 0.01
  %v2893 = vmul.f32 %v2861, 0.01
  %v2894 = vmul.f32 %v2864, 0.01
  %v2895 = vmul.f32 %v2869, 0.01
  %v2896 = vmul.f32 %v2872, 0.01
  %v2897 = vmul.f32 %v2877, 0.01
  %v2898 = vmul.f32 %v2880, 0.01
  %v2899 = vmul.f32 %v2885, 0.01
  %v2900 = vmul.f32 %v2888, 0.01
  %v2901 = vmax.f32 %v2853, %v2891
  %v2902 = vmax.f32 %v2856, %v2892
  %v2903 = vmax.f32 %v2861, %v2893
  %v2904 = vmax.f32 %v2864, %v2894
  %v2905 = vmax.f32 %v2869, %v2895
  %v2906 = vmax.f32 %v2872, %v2896
  %v2907 = vmax.f32 %v2877, %v2897
  %v2908 = vmax.f32 %v2880, %v2898
  %v2909 = vmax.f32 %v2885, %v2899
  %v2910 = vmax.f32 %v2888, %v2900
  %v2911 = vpack.c.bf16 %v2902, %v2901
  %v2912 = vpack.c.bf16 %v2904, %v2903
  %v2913 = vpack.c.bf16 %v2906, %v2905
  %v2914 = vpack.c.bf16 %v2908, %v2907
  %v2915 = vpack.c.bf16 %v2910, %v2909
  %v2921 = vunpack.c.l.b16 %v2911
  %v2922 = vunpack.c.h.b16 %v2911
  %v2923 = vunpack.c.l.b16 %v2912
  %v2924 = vunpack.c.h.b16 %v2912
  %v2925 = vunpack.c.l.b16 %v2913
  %v2926 = vunpack.c.h.b16 %v2913
  %v2927 = vunpack.c.l.b16 %v2914
  %v2928 = vunpack.c.h.b16 %v2914
  %v2929 = vunpack.c.l.b16 %v2915
  %v2930 = vunpack.c.h.b16 %v2915
  %v2931 = vpack.c.b16 %v2921, %v2921
  %v2932 = vpack.c.b16 %v2922, %v2922
  %v2933 = vpack.c.b16 %v2923, %v2923
  %v2934 = vpack.c.b16 %v2924, %v2924
  %v2935 = vpack.c.b16 %v2925, %v2925
  %v2936 = vpack.c.b16 %v2926, %v2926
  %v2937 = vpack.c.b16 %v2927, %v2927
  %v2938 = vpack.c.b16 %v2928, %v2928
  %v2939 = vpack.c.b16 %v2929, %v2929
  %v2940 = vpack.c.b16 %v2930, %v2930
  %2951 = vst [vmem:[#allocation2 + $0x8] sm:$0xf] %v2931
  %2952 = vst [vmem:[#allocation2 + $0x18] sm:$0xf] %v2932
  %2953 = vst [vmem:[#allocation2 + $0x28] sm:$0xf] %v2933
  %2954 = vst [vmem:[#allocation2 + $0x38] sm:$0xf] %v2934
  %2955 = vst [vmem:[#allocation2 + $0x48] sm:$0xf] %v2935
  %2956 = vst [vmem:[#allocation2 + $0x58] sm:$0xf] %v2936
  %2957 = vst [vmem:[#allocation2 + $0x68] sm:$0xf] %v2937
  %2958 = vst [vmem:[#allocation2 + $0x78] sm:$0xf] %v2938
  %2959 = vst [vmem:[#allocation2 + $0x88] sm:$0xf] %v2939
  %2960 = vst [vmem:[#allocation2 + $0x98] sm:$0xf] %v2940
  %v2961 = vld [vmem:[%s0 + $0x3c0] sm:$0xff]
  %v2962 = vld [vmem:[%s0 + $0x3c8] sm:$0xff]
  %v2963 = vld [vmem:[%s0 + $0x3d0] sm:$0xff]
  %v2964 = vld [vmem:[%s0 + $0x3d8] sm:$0xff]
  %v2965 = vld [vmem:[%s0 + $0x3e0] sm:$0xff]
  %v2966 = vld [vmem:[%s0 + $0x3e8] sm:$0xff]
  %v2967 = vld [vmem:[%s0 + $0x3f0] sm:$0xff]
  %v2968 = vld [vmem:[%s0 + $0x3f8] sm:$0xff]
  %v2969 = vld [vmem:[%s0 + $0x400] sm:$0xff]
  %v2970 = vld [vmem:[%s0 + $0x408] sm:$0xff]
  %v2971 = vld [vmem:[%s0 + $0x410] sm:$0xff]
  %v2972 = vld [vmem:[%s0 + $0x418] sm:$0xff]
  %v2973 = vld [vmem:[%s0 + $0x420] sm:$0xff]
  %v2974 = vld [vmem:[%s0 + $0x428] sm:$0xff]
  %v2975 = vld [vmem:[%s0 + $0x430] sm:$0xff]
  %v2976 = vld [vmem:[%s0 + $0x438] sm:$0xff]
  %v2977 = vld [vmem:[%s0 + $0x440] sm:$0xff]
  %v2978 = vld [vmem:[%s0 + $0x448] sm:$0xff]
  %v2979 = vld [vmem:[%s0 + $0x450] sm:$0xff]
  %v2980 = vld [vmem:[%s0 + $0x458] sm:$0xff]
  %v2981 = vld [vmem:[%s0 + $0x460] sm:$0xff]
  %v2982 = vld [vmem:[%s0 + $0x468] sm:$0xff]
  %v2983 = vld [vmem:[%s0 + $0x470] sm:$0xff]
  %v2984 = vld [vmem:[%s0 + $0x478] sm:$0xff]
  %v2985 = vld [vmem:[%s0 + $0x480] sm:$0xff]
  %v2986 = vld [vmem:[%s0 + $0x488] sm:$0xff]
  %v2987 = vld [vmem:[%s0 + $0x490] sm:$0xff]
  %v2988 = vld [vmem:[%s0 + $0x498] sm:$0xff]
  %v2989 = vld [vmem:[%s0 + $0x4a0] sm:$0xff]
  %v2990 = vld [vmem:[%s0 + $0x4a8] sm:$0xff]
  %v2991 = vld [vmem:[%s0 + $0x4b0] sm:$0xff]
  %v2992 = vld [vmem:[%s0 + $0x4b8] sm:$0xff]
  %v2993 = vld [vmem:[%s0 + $0x4c0] sm:$0xff]
  %v2994 = vld [vmem:[%s0 + $0x4c8] sm:$0xff]
  %v2995 = vld [vmem:[%s0 + $0x4d0] sm:$0xff]
  %v2996 = vld [vmem:[%s0 + $0x4d8] sm:$0xff]
  %v2997 = vld [vmem:[%s0 + $0x4e0] sm:$0xff]
  %v2998 = vld [vmem:[%s0 + $0x4e8] sm:$0xff]
  %v2999 = vld [vmem:[%s0 + $0x4f0] sm:$0xff]
  %v3000 = vld [vmem:[%s0 + $0x4f8] sm:$0xff]
  %v3041 = vunpack.c.l.b16 %v2961
  %v3042 = vunpack.c.h.b16 %v2961
  %v3043 = vunpack.c.l.b16 %v2962
  %v3044 = vunpack.c.h.b16 %v2962
  %v3045 = vunpack.c.l.b16 %v2963
  %v3046 = vunpack.c.h.b16 %v2963
  %v3047 = vunpack.c.l.b16 %v2964
  %v3048 = vunpack.c.h.b16 %v2964
  %v3049 = vunpack.c.l.b16 %v2965
  %v3050 = vunpack.c.h.b16 %v2965
  %v3051 = vunpack.c.l.b16 %v2966
  %v3052 = vunpack.c.h.b16 %v2966
  %v3053 = vunpack.c.l.b16 %v2967
  %v3054 = vunpack.c.h.b16 %v2967
  %v3055 = vunpack.c.l.b16 %v2968
  %v3056 = vunpack.c.h.b16 %v2968
  %v3057 = vunpack.c.l.b16 %v2969
  %v3058 = vunpack.c.h.b16 %v2969
  %v3059 = vunpack.c.l.b16 %v2970
  %v3060 = vunpack.c.h.b16 %v2970
  %v3061 = vunpack.c.l.b16 %v2971
  %v3062 = vunpack.c.h.b16 %v2971
  %v3063 = vunpack.c.l.b16 %v2972
  %v3064 = vunpack.c.h.b16 %v2972
  %v3065 = vunpack.c.l.b16 %v2973
  %v3066 = vunpack.c.h.b16 %v2973
  %v3067 = vunpack.c.l.b16 %v2974
  %v3068 = vunpack.c.h.b16 %v2974
  %v3069 = vunpack.c.l.b16 %v2975
  %v3070 = vunpack.c.h.b16 %v2975
  %v3071 = vunpack.c.l.b16 %v2976
  %v3072 = vunpack.c.h.b16 %v2976
  %v3073 = vunpack.c.l.b16 %v2977
  %v3074 = vunpack.c.h.b16 %v2977
  %v3075 = vunpack.c.l.b16 %v2978
  %v3076 = vunpack.c.h.b16 %v2978
  %v3077 = vunpack.c.l.b16 %v2979
  %v3078 = vunpack.c.h.b16 %v2979
  %v3079 = vunpack.c.l.b16 %v2980
  %v3080 = vunpack.c.h.b16 %v2980
  %v3081 = vunpack.c.l.b16 %v2981
  %v3082 = vunpack.c.h.b16 %v2981
  %v3083 = vunpack.c.l.b16 %v2982
  %v3084 = vunpack.c.h.b16 %v2982
  %v3085 = vunpack.c.l.b16 %v2983
  %v3086 = vunpack.c.h.b16 %v2983
  %v3087 = vunpack.c.l.b16 %v2984
  %v3088 = vunpack.c.h.b16 %v2984
  %v3089 = vunpack.c.l.b16 %v2985
  %v3090 = vunpack.c.h.b16 %v2985
  %v3091 = vunpack.c.l.b16 %v2986
  %v3092 = vunpack.c.h.b16 %v2986
  %v3093 = vunpack.c.l.b16 %v2987
  %v3094 = vunpack.c.h.b16 %v2987
  %v3095 = vunpack.c.l.b16 %v2988
  %v3096 = vunpack.c.h.b16 %v2988
  %v3097 = vunpack.c.l.b16 %v2989
  %v3098 = vunpack.c.h.b16 %v2989
  %v3099 = vunpack.c.l.b16 %v2990
  %v3100 = vunpack.c.h.b16 %v2990
  %v3101 = vunpack.c.l.b16 %v2991
  %v3102 = vunpack.c.h.b16 %v2991
  %v3103 = vunpack.c.l.b16 %v2992
  %v3104 = vunpack.c.h.b16 %v2992
  %v3105 = vunpack.c.l.b16 %v2993
  %v3106 = vunpack.c.h.b16 %v2993
  %v3107 = vunpack.c.l.b16 %v2994
  %v3108 = vunpack.c.h.b16 %v2994
  %v3109 = vunpack.c.l.b16 %v2995
  %v3110 = vunpack.c.h.b16 %v2995
  %v3111 = vunpack.c.l.b16 %v2996
  %v3112 = vunpack.c.h.b16 %v2996
  %v3113 = vunpack.c.l.b16 %v2997
  %v3114 = vunpack.c.h.b16 %v2997
  %v3115 = vunpack.c.l.b16 %v2998
  %v3116 = vunpack.c.h.b16 %v2998
  %v3117 = vunpack.c.l.b16 %v2999
  %v3118 = vunpack.c.h.b16 %v2999
  %v3119 = vunpack.c.l.b16 %v3000
  %v3120 = vunpack.c.h.b16 %v3000
  %v3121 = vpack.c.b16 %v3049, %v3041
  %v3122 = vpack.c.b16 %v3050, %v3042
  %v3123 = vpack.c.b16 %v3051, %v3043
  %v3124 = vpack.c.b16 %v3052, %v3044
  %v3125 = vpack.c.b16 %v3053, %v3045
  %v3126 = vpack.c.b16 %v3054, %v3046
  %v3127 = vpack.c.b16 %v3055, %v3047
  %v3128 = vpack.c.b16 %v3056, %v3048
  %v3129 = vpack.c.b16 %v3065, %v3057
  %v3130 = vpack.c.b16 %v3066, %v3058
  %v3131 = vpack.c.b16 %v3067, %v3059
  %v3132 = vpack.c.b16 %v3068, %v3060
  %v3133 = vpack.c.b16 %v3069, %v3061
  %v3134 = vpack.c.b16 %v3070, %v3062
  %v3135 = vpack.c.b16 %v3071, %v3063
  %v3136 = vpack.c.b16 %v3072, %v3064
  %v3137 = vpack.c.b16 %v3081, %v3073
  %v3138 = vpack.c.b16 %v3082, %v3074
  %v3139 = vpack.c.b16 %v3083, %v3075
  %v3140 = vpack.c.b16 %v3084, %v3076
  %v3141 = vpack.c.b16 %v3085, %v3077
  %v3142 = vpack.c.b16 %v3086, %v3078
  %v3143 = vpack.c.b16 %v3087, %v3079
  %v3144 = vpack.c.b16 %v3088, %v3080
  %v3145 = vpack.c.b16 %v3097, %v3089
  %v3146 = vpack.c.b16 %v3098, %v3090
  %v3147 = vpack.c.b16 %v3099, %v3091
  %v3148 = vpack.c.b16 %v3100, %v3092
  %v3149 = vpack.c.b16 %v3101, %v3093
  %v3150 = vpack.c.b16 %v3102, %v3094
  %v3151 = vpack.c.b16 %v3103, %v3095
  %v3152 = vpack.c.b16 %v3104, %v3096
  %v3153 = vpack.c.b16 %v3113, %v3105
  %v3154 = vpack.c.b16 %v3114, %v3106
  %v3155 = vpack.c.b16 %v3115, %v3107
  %v3156 = vpack.c.b16 %v3116, %v3108
  %v3157 = vpack.c.b16 %v3117, %v3109
  %v3158 = vpack.c.b16 %v3118, %v3110
  %v3159 = vpack.c.b16 %v3119, %v3111
  %v3160 = vpack.c.b16 %v3120, %v3112
  %3201 = vmatprep.subr.bf16.mxu0 0
  %3202 = vmatpush1.bf16.msra.mxu0 %v1274
  %3203 = vmatprep.subr.bf16.mxu0 0
  %3204 = vmatpush1.bf16.msra.mxu0 %v1273
  %3205 = vmatprep.subr.bf16.mxu0 0
  %3206 = vmatpush1.bf16.msra.mxu0 %v1272
  %3207 = vmatprep.subr.bf16.mxu0 0
  %3208 = vmatpush1.bf16.msra.mxu0 %v1271
  %3209 = vmatprep.subr.bf16.mxu0 0
  %3210 = vmatpush1.bf16.msra.mxu0 %v1270
  %3211 = vmatprep.subr.bf16.mxu0 0
  %3212 = vmatpush1.bf16.msra.mxu0 %v1269
  %3213 = vmatprep.subr.bf16.mxu0 0
  %3214 = vmatpush1.bf16.msra.mxu0 %v1268
  %3215 = vmatprep.subr.bf16.mxu0 0
  %3216 = vmatpush1.bf16.msra.mxu0 %v1267
  %3217 = vmatprep.subr.bf16.mxu0 0
  %3218 = vmatpush2.bf16.msra.mxu0 %v1282
  %3219 = vmatprep.subr.bf16.mxu0 0
  %3220 = vmatpush2.bf16.msra.mxu0 %v1281
  %3221 = vmatprep.subr.bf16.mxu0 0
  %3222 = vmatpush2.bf16.msra.mxu0 %v1280
  %3223 = vmatprep.subr.bf16.mxu0 0
  %3224 = vmatpush2.bf16.msra.mxu0 %v1279
  %3225 = vmatprep.subr.bf16.mxu0 0
  %3226 = vmatpush2.bf16.msra.mxu0 %v1278
  %3227 = vmatprep.subr.bf16.mxu0 0
  %3228 = vmatpush2.bf16.msra.mxu0 %v1277
  %3229 = vmatprep.subr.bf16.mxu0 0
  %3230 = vmatpush2.bf16.msra.mxu0 %v1276
  %3231 = vmatprep.subr.bf16.mxu0 0
  %3232 = vmatpush2.bf16.msra.mxu0 %v1275
  %3233 = vmatprep.mubr.bf16.mxu0 %v3122
  %3234 = vmatmul.mubr.bf16.gmra.mxu0 %v3121
  %v3235 = vpop.f32.mrf.mxu0
  %v3236 = vadd.f32 %v641, %v3235
  %v3237 = vpop.f32.mrf.mxu0
  %v3238 = vpop.f32.mrf.mxu0
  %v3239 = vadd.f32 %v641, %v3238
  %v3240 = vpop.f32.mrf.mxu0
  %3241 = vmatprep.mubr.bf16.mxu0 %v3130
  %3242 = vmatmul.mubr.bf16.gmra.mxu0 %v3129
  %v3243 = vpop.f32.mrf.mxu0
  %v3244 = vadd.f32 %v641, %v3243
  %v3245 = vpop.f32.mrf.mxu0
  %v3246 = vpop.f32.mrf.mxu0
  %v3247 = vadd.f32 %v641, %v3246
  %v3248 = vpop.f32.mrf.mxu0
  %3249 = vmatprep.mubr.bf16.mxu0 %v3138
  %3250 = vmatmul.mubr.bf16.gmra.mxu0 %v3137
  %v3251 = vpop.f32.mrf.mxu0
  %v3252 = vadd.f32 %v641, %v3251
  %v3253 = vpop.f32.mrf.mxu0
  %v3254 = vpop.f32.mrf.mxu0
  %v3255 = vadd.f32 %v641, %v3254
  %v3256 = vpop.f32.mrf.mxu0
  %3257 = vmatprep.mubr.bf16.mxu0 %v3146
  %3258 = vmatmul.mubr.bf16.gmra.mxu0 %v3145
  %v3259 = vpop.f32.mrf.mxu0
  %v3260 = vadd.f32 %v641, %v3259
  %v3261 = vpop.f32.mrf.mxu0
  %v3262 = vpop.f32.mrf.mxu0
  %v3263 = vadd.f32 %v641, %v3262
  %v3264 = vpop.f32.mrf.mxu0
  %3265 = vmatprep.mubr.bf16.mxu0 %v3154
  %3266 = vmatmul.mubr.bf16.gmra.mxu0 %v3153
  %v3267 = vpop.f32.mrf.mxu0
  %v3268 = vadd.f32 %v641, %v3267
  %v3269 = vpop.f32.mrf.mxu0
  %v3270 = vpop.f32.mrf.mxu0
  %v3271 = vadd.f32 %v641, %v3270
  %v3272 = vpop.f32.mrf.mxu0
  %3273 = vdwg.mxu0
  %3274 = vmatprep.subr.bf16.mxu0 0
  %3275 = vmatpush1.bf16.msra.mxu0 %v1290
  %3276 = vmatprep.subr.bf16.mxu0 0
  %3277 = vmatpush1.bf16.msra.mxu0 %v1289
  %3278 = vmatprep.subr.bf16.mxu0 0
  %3279 = vmatpush1.bf16.msra.mxu0 %v1288
  %3280 = vmatprep.subr.bf16.mxu0 0
  %3281 = vmatpush1.bf16.msra.mxu0 %v1287
  %3282 = vmatprep.subr.bf16.mxu0 0
  %3283 = vmatpush1.bf16.msra.mxu0 %v1286
  %3284 = vmatprep.subr.bf16.mxu0 0
  %3285 = vmatpush1.bf16.msra.mxu0 %v1285
  %3286 = vmatprep.subr.bf16.mxu0 0
  %3287 = vmatpush1.bf16.msra.mxu0 %v1284
  %3288 = vmatprep.subr.bf16.mxu0 0
  %3289 = vmatpush1.bf16.msra.mxu0 %v1283
  %3290 = vmatprep.subr.bf16.mxu0 0
  %3291 = vmatpush2.bf16.msra.mxu0 %v1298
  %3292 = vmatprep.subr.bf16.mxu0 0
  %3293 = vmatpush2.bf16.msra.mxu0 %v1297
  %3294 = vmatprep.subr.bf16.mxu0 0
  %3295 = vmatpush2.bf16.msra.mxu0 %v1296
  %3296 = vmatprep.subr.bf16.mxu0 0
  %3297 = vmatpush2.bf16.msra.mxu0 %v1295
  %3298 = vmatprep.subr.bf16.mxu0 0
  %3299 = vmatpush2.bf16.msra.mxu0 %v1294
  %3300 = vmatprep.subr.bf16.mxu0 0
  %3301 = vmatpush2.bf16.msra.mxu0 %v1293
  %3302 = vmatprep.subr.bf16.mxu0 0
  %3303 = vmatpush2.bf16.msra.mxu0 %v1292
  %3304 = vmatprep.subr.bf16.mxu0 0
  %3305 = vmatpush2.bf16.msra.mxu0 %v1291
  %3306 = vmatprep.mubr.bf16.mxu0 %v3124
  %3307 = vmatmul.mubr.bf16.gmra.mxu0 %v3123
  %v3308 = vpop.f32.mrf.mxu0
  %v3309 = vadd.f32 %v3236, %v3308
  %v3310 = vpop.f32.mrf.mxu0
  %v3311 = vpop.f32.mrf.mxu0
  %v3312 = vadd.f32 %v3239, %v3311
  %v3313 = vpop.f32.mrf.mxu0
  %3314 = vmatprep.mubr.bf16.mxu0 %v3132
  %3315 = vmatmul.mubr.bf16.gmra.mxu0 %v3131
  %v3316 = vpop.f32.mrf.mxu0
  %v3317 = vadd.f32 %v3244, %v3316
  %v3318 = vpop.f32.mrf.mxu0
  %v3319 = vpop.f32.mrf.mxu0
  %v3320 = vadd.f32 %v3247, %v3319
  %v3321 = vpop.f32.mrf.mxu0
  %3322 = vmatprep.mubr.bf16.mxu0 %v3140
  %3323 = vmatmul.mubr.bf16.gmra.mxu0 %v3139
  %v3324 = vpop.f32.mrf.mxu0
  %v3325 = vadd.f32 %v3252, %v3324
  %v3326 = vpop.f32.mrf.mxu0
  %v3327 = vpop.f32.mrf.mxu0
  %v3328 = vadd.f32 %v3255, %v3327
  %v3329 = vpop.f32.mrf.mxu0
  %3330 = vmatprep.mubr.bf16.mxu0 %v3148
  %3331 = vmatmul.mubr.bf16.gmra.mxu0 %v3147
  %v3332 = vpop.f32.mrf.mxu0
  %v3333 = vadd.f32 %v3260, %v3332
  %v3334 = vpop.f32.mrf.mxu0
  %v3335 = vpop.f32.mrf.mxu0
  %v3336 = vadd.f32 %v3263, %v3335
  %v3337 = vpop.f32.mrf.mxu0
  %3338 = vmatprep.mubr.bf16.mxu0 %v3156
  %3339 = vmatmul.mubr.bf16.gmra.mxu0 %v3155
  %v3340 = vpop.f32.mrf.mxu0
  %v3341 = vadd.f32 %v3268, %v3340
  %v3342 = vpop.f32.mrf.mxu0
  %v3343 = vpop.f32.mrf.mxu0
  %v3344 = vadd.f32 %v3271, %v3343
  %v3345 = vpop.f32.mrf.mxu0
  %3346 = vdwg.mxu0
  %3347 = vmatprep.subr.bf16.mxu0 0
  %3348 = vmatpush1.bf16.msra.mxu0 %v1306
  %3349 = vmatprep.subr.bf16.mxu0 0
  %3350 = vmatpush1.bf16.msra.mxu0 %v1305
  %3351 = vmatprep.subr.bf16.mxu0 0
  %3352 = vmatpush1.bf16.msra.mxu0 %v1304
  %3353 = vmatprep.subr.bf16.mxu0 0
  %3354 = vmatpush1.bf16.msra.mxu0 %v1303
  %3355 = vmatprep.subr.bf16.mxu0 0
  %3356 = vmatpush1.bf16.msra.mxu0 %v1302
  %3357 = vmatprep.subr.bf16.mxu0 0
  %3358 = vmatpush1.bf16.msra.mxu0 %v1301
  %3359 = vmatprep.subr.bf16.mxu0 0
  %3360 = vmatpush1.bf16.msra.mxu0 %v1300
  %3361 = vmatprep.subr.bf16.mxu0 0
  %3362 = vmatpush1.bf16.msra.mxu0 %v1299
  %3363 = vmatprep.subr.bf16.mxu0 0
  %3364 = vmatpush2.bf16.msra.mxu0 %v1314
  %3365 = vmatprep.subr.bf16.mxu0 0
  %3366 = vmatpush2.bf16.msra.mxu0 %v1313
  %3367 = vmatprep.subr.bf16.mxu0 0
  %3368 = vmatpush2.bf16.msra.mxu0 %v1312
  %3369 = vmatprep.subr.bf16.mxu0 0
  %3370 = vmatpush2.bf16.msra.mxu0 %v1311
  %3371 = vmatprep.subr.bf16.mxu0 0
  %3372 = vmatpush2.bf16.msra.mxu0 %v1310
  %3373 = vmatprep.subr.bf16.mxu0 0
  %3374 = vmatpush2.bf16.msra.mxu0 %v1309
  %3375 = vmatprep.subr.bf16.mxu0 0
  %3376 = vmatpush2.bf16.msra.mxu0 %v1308
  %3377 = vmatprep.subr.bf16.mxu0 0
  %3378 = vmatpush2.bf16.msra.mxu0 %v1307
  %3379 = vmatprep.mubr.bf16.mxu0 %v3126
  %3380 = vmatmul.mubr.bf16.gmra.mxu0 %v3125
  %v3381 = vpop.f32.mrf.mxu0
  %v3382 = vadd.f32 %v3309, %v3381
  %v3383 = vpop.f32.mrf.mxu0
  %v3384 = vpop.f32.mrf.mxu0
  %v3385 = vadd.f32 %v3312, %v3384
  %v3386 = vpop.f32.mrf.mxu0
  %3387 = vmatprep.mubr.bf16.mxu0 %v3134
  %3388 = vmatmul.mubr.bf16.gmra.mxu0 %v3133
  %v3389 = vpop.f32.mrf.mxu0
  %v3390 = vadd.f32 %v3317, %v3389
  %v3391 = vpop.f32.mrf.mxu0
  %v3392 = vpop.f32.mrf.mxu0
  %v3393 = vadd.f32 %v3320, %v3392
  %v3394 = vpop.f32.mrf.mxu0
  %3395 = vmatprep.mubr.bf16.mxu0 %v3142
  %3396 = vmatmul.mubr.bf16.gmra.mxu0 %v3141
  %v3397 = vpop.f32.mrf.mxu0
  %v3398 = vadd.f32 %v3325, %v3397
  %v3399 = vpop.f32.mrf.mxu0
  %v3400 = vpop.f32.mrf.mxu0
  %v3401 = vadd.f32 %v3328, %v3400
  %v3402 = vpop.f32.mrf.mxu0
  %3403 = vmatprep.mubr.bf16.mxu0 %v3150
  %3404 = vmatmul.mubr.bf16.gmra.mxu0 %v3149
  %v3405 = vpop.f32.mrf.mxu0
  %v3406 = vadd.f32 %v3333, %v3405
  %v3407 = vpop.f32.mrf.mxu0
  %v3408 = vpop.f32.mrf.mxu0
  %v3409 = vadd.f32 %v3336, %v3408
  %v3410 = vpop.f32.mrf.mxu0
  %3411 = vmatprep.mubr.bf16.mxu0 %v3158
  %3412 = vmatmul.mubr.bf16.gmra.mxu0 %v3157
  %v3413 = vpop.f32.mrf.mxu0
  %v3414 = vadd.f32 %v3341, %v3413
  %v3415 = vpop.f32.mrf.mxu0
  %v3416 = vpop.f32.mrf.mxu0
  %v3417 = vadd.f32 %v3344, %v3416
  %v3418 = vpop.f32.mrf.mxu0
  %3419 = vdwg.mxu0
  %3420 = vmatprep.subr.bf16.mxu0 0
  %3421 = vmatpush1.bf16.msra.mxu0 %v1322
  %3422 = vmatprep.subr.bf16.mxu0 0
  %3423 = vmatpush1.bf16.msra.mxu0 %v1321
  %3424 = vmatprep.subr.bf16.mxu0 0
  %3425 = vmatpush1.bf16.msra.mxu0 %v1320
  %3426 = vmatprep.subr.bf16.mxu0 0
  %3427 = vmatpush1.bf16.msra.mxu0 %v1319
  %3428 = vmatprep.subr.bf16.mxu0 0
  %3429 = vmatpush1.bf16.msra.mxu0 %v1318
  %3430 = vmatprep.subr.bf16.mxu0 0
  %3431 = vmatpush1.bf16.msra.mxu0 %v1317
  %3432 = vmatprep.subr.bf16.mxu0 0
  %3433 = vmatpush1.bf16.msra.mxu0 %v1316
  %3434 = vmatprep.subr.bf16.mxu0 0
  %3435 = vmatpush1.bf16.msra.mxu0 %v1315
  %3436 = vmatprep.subr.bf16.mxu0 0
  %3437 = vmatpush2.bf16.msra.mxu0 %v1330
  %3438 = vmatprep.subr.bf16.mxu0 0
  %3439 = vmatpush2.bf16.msra.mxu0 %v1329
  %3440 = vmatprep.subr.bf16.mxu0 0
  %3441 = vmatpush2.bf16.msra.mxu0 %v1328
  %3442 = vmatprep.subr.bf16.mxu0 0
  %3443 = vmatpush2.bf16.msra.mxu0 %v1327
  %3444 = vmatprep.subr.bf16.mxu0 0
  %3445 = vmatpush2.bf16.msra.mxu0 %v1326
  %3446 = vmatprep.subr.bf16.mxu0 0
  %3447 = vmatpush2.bf16.msra.mxu0 %v1325
  %3448 = vmatprep.subr.bf16.mxu0 0
  %3449 = vmatpush2.bf16.msra.mxu0 %v1324
  %3450 = vmatprep.subr.bf16.mxu0 0
  %3451 = vmatpush2.bf16.msra.mxu0 %v1323
  %3452 = vmatprep.mubr.bf16.mxu0 %v3128
  %3453 = vmatmul.mubr.bf16.gmra.mxu0 %v3127
  %v3454 = vpop.f32.mrf.mxu0
  %v3455 = vadd.f32 %v3382, %v3454
  %v3456 = vpop.f32.mrf.mxu0
  %v3457 = vpop.f32.mrf.mxu0
  %v3458 = vadd.f32 %v3385, %v3457
  %v3459 = vpop.f32.mrf.mxu0
  %3460 = vmatprep.mubr.bf16.mxu0 %v3136
  %3461 = vmatmul.mubr.bf16.gmra.mxu0 %v3135
  %v3462 = vpop.f32.mrf.mxu0
  %v3463 = vadd.f32 %v3390, %v3462
  %v3464 = vpop.f32.mrf.mxu0
  %v3465 = vpop.f32.mrf.mxu0
  %v3466 = vadd.f32 %v3393, %v3465
  %v3467 = vpop.f32.mrf.mxu0
  %3468 = vmatprep.mubr.bf16.mxu0 %v3144
  %3469 = vmatmul.mubr.bf16.gmra.mxu0 %v3143
  %v3470 = vpop.f32.mrf.mxu0
  %v3471 = vadd.f32 %v3398, %v3470
  %v3472 = vpop.f32.mrf.mxu0
  %v3473 = vpop.f32.mrf.mxu0
  %v3474 = vadd.f32 %v3401, %v3473
  %v3475 = vpop.f32.mrf.mxu0
  %3476 = vmatprep.mubr.bf16.mxu0 %v3152
  %3477 = vmatmul.mubr.bf16.gmra.mxu0 %v3151
  %v3478 = vpop.f32.mrf.mxu0
  %v3479 = vadd.f32 %v3406, %v3478
  %v3480 = vpop.f32.mrf.mxu0
  %v3481 = vpop.f32.mrf.mxu0
  %v3482 = vadd.f32 %v3409, %v3481
  %v3483 = vpop.f32.mrf.mxu0
  %3484 = vmatprep.mubr.bf16.mxu0 %v3160
  %3485 = vmatmul.mubr.bf16.gmra.mxu0 %v3159
  %v3486 = vpop.f32.mrf.mxu0
  %v3487 = vadd.f32 %v3414, %v3486
  %v3488 = vpop.f32.mrf.mxu0
  %v3489 = vpop.f32.mrf.mxu0
  %v3490 = vadd.f32 %v3417, %v3489
  %v3491 = vpop.f32.mrf.mxu0
  %3492 = vdwg.mxu0
  %v3493 = vmul.f32 %v3455, 0.01
  %v3494 = vmul.f32 %v3458, 0.01
  %v3495 = vmul.f32 %v3463, 0.01
  %v3496 = vmul.f32 %v3466, 0.01
  %v3497 = vmul.f32 %v3471, 0.01
  %v3498 = vmul.f32 %v3474, 0.01
  %v3499 = vmul.f32 %v3479, 0.01
  %v3500 = vmul.f32 %v3482, 0.01
  %v3501 = vmul.f32 %v3487, 0.01
  %v3502 = vmul.f32 %v3490, 0.01
  %v3503 = vmax.f32 %v3455, %v3493
  %v3504 = vmax.f32 %v3458, %v3494
  %v3505 = vmax.f32 %v3463, %v3495
  %v3506 = vmax.f32 %v3466, %v3496
  %v3507 = vmax.f32 %v3471, %v3497
  %v3508 = vmax.f32 %v3474, %v3498
  %v3509 = vmax.f32 %v3479, %v3499
  %v3510 = vmax.f32 %v3482, %v3500
  %v3511 = vmax.f32 %v3487, %v3501
  %v3512 = vmax.f32 %v3490, %v3502
  %v3513 = vpack.c.bf16 %v3504, %v3503
  %v3514 = vpack.c.bf16 %v3506, %v3505
  %v3515 = vpack.c.bf16 %v3508, %v3507
  %v3516 = vpack.c.bf16 %v3510, %v3509
  %v3517 = vpack.c.bf16 %v3512, %v3511
  %v3523 = vunpack.c.l.b16 %v3513
  %v3524 = vunpack.c.h.b16 %v3513
  %v3525 = vunpack.c.l.b16 %v3514
  %v3526 = vunpack.c.h.b16 %v3514
  %v3527 = vunpack.c.l.b16 %v3515
  %v3528 = vunpack.c.h.b16 %v3515
  %v3529 = vunpack.c.l.b16 %v3516
  %v3530 = vunpack.c.h.b16 %v3516
  %v3531 = vunpack.c.l.b16 %v3517
  %v3532 = vunpack.c.h.b16 %v3517
  %v3533 = vpack.c.b16 %v3523, %v3523
  %v3534 = vpack.c.b16 %v3524, %v3524
  %v3535 = vpack.c.b16 %v3525, %v3525
  %v3536 = vpack.c.b16 %v3526, %v3526
  %v3537 = vpack.c.b16 %v3527, %v3527
  %v3538 = vpack.c.b16 %v3528, %v3528
  %v3539 = vpack.c.b16 %v3529, %v3529
  %v3540 = vpack.c.b16 %v3530, %v3530
  %v3541 = vpack.c.b16 %v3531, %v3531
  %v3542 = vpack.c.b16 %v3532, %v3532
  %3553 = vst [vmem:[#allocation2 + $0xc] sm:$0xf] %v3533
  %3554 = vst [vmem:[#allocation2 + $0x1c] sm:$0xf] %v3534
  %3555 = vst [vmem:[#allocation2 + $0x2c] sm:$0xf] %v3535
  %3556 = vst [vmem:[#allocation2 + $0x3c] sm:$0xf] %v3536
  %3557 = vst [vmem:[#allocation2 + $0x4c] sm:$0xf] %v3537
  %3558 = vst [vmem:[#allocation2 + $0x5c] sm:$0xf] %v3538
  %3559 = vst [vmem:[#allocation2 + $0x6c] sm:$0xf] %v3539
  %3560 = vst [vmem:[#allocation2 + $0x7c] sm:$0xf] %v3540
  %3561 = vst [vmem:[#allocation2 + $0x8c] sm:$0xf] %v3541
  %3562 = vst [vmem:[#allocation2 + $0x9c] sm:$0xf] %v3542
  %v3563 = vld [vmem:[#allocation2] sm:$0xff]
  %v3564 = vld [vmem:[#allocation2 + $0x8] sm:$0xff]
  %v3565 = vld [vmem:[#allocation2 + $0x10] sm:$0xff]
  %v3566 = vld [vmem:[#allocation2 + $0x18] sm:$0xff]
  %v3567 = vld [vmem:[#allocation2 + $0x20] sm:$0xff]
  %v3568 = vld [vmem:[#allocation2 + $0x28] sm:$0xff]
  %v3569 = vld [vmem:[#allocation2 + $0x30] sm:$0xff]
  %v3570 = vld [vmem:[#allocation2 + $0x38] sm:$0xff]
  %v3571 = vld [vmem:[#allocation2 + $0x40] sm:$0xff]
  %v3572 = vld [vmem:[#allocation2 + $0x48] sm:$0xff]
  %v3573 = vld [vmem:[#allocation2 + $0x50] sm:$0xff]
  %v3574 = vld [vmem:[#allocation2 + $0x58] sm:$0xff]
  %v3575 = vld [vmem:[#allocation2 + $0x60] sm:$0xff]
  %v3576 = vld [vmem:[#allocation2 + $0x68] sm:$0xff]
  %v3577 = vld [vmem:[#allocation2 + $0x70] sm:$0xff]
  %v3578 = vld [vmem:[#allocation2 + $0x78] sm:$0xff]
  %v3579 = vld [vmem:[#allocation2 + $0x80] sm:$0xff]
  %v3580 = vld [vmem:[#allocation2 + $0x88] sm:$0xff]
  %v3581 = vld [vmem:[#allocation2 + $0x90] sm:$0xff]
  %v3582 = vld [vmem:[#allocation2 + $0x98] sm:$0xff]
  %v3583 = vld [vmem:[%s3] sm:$0xf]
  %v3584 = vld [vmem:[%s3 + $0x4] sm:$0xf]
  %v3585 = vld [vmem:[%s3 + $0x8] sm:$0xf]
  %v3586 = vld [vmem:[%s3 + $0xc] sm:$0xf]
  %v3587 = vld [vmem:[%s3 + $0x10] sm:$0xf]
  %v3588 = vld [vmem:[%s3 + $0x14] sm:$0xf]
  %v3589 = vld [vmem:[%s3 + $0x18] sm:$0xf]
  %v3590 = vld [vmem:[%s3 + $0x1c] sm:$0xf]
  %v3591 = vld [vmem:[%s3 + $0x20] sm:$0xf]
  %v3592 = vld [vmem:[%s3 + $0x24] sm:$0xf]
  %v3593 = vld [vmem:[%s3 + $0x28] sm:$0xf]
  %v3594 = vld [vmem:[%s3 + $0x2c] sm:$0xf]
  %v3595 = vld [vmem:[%s3 + $0x30] sm:$0xf]
  %v3596 = vld [vmem:[%s3 + $0x34] sm:$0xf]
  %v3597 = vld [vmem:[%s3 + $0x38] sm:$0xf]
  %v3598 = vld [vmem:[%s3 + $0x3c] sm:$0xf]
  %v3599 = vld [vmem:[%s3 + $0x40] sm:$0xf]
  %v3600 = vld [vmem:[%s3 + $0x44] sm:$0xf]
  %v3601 = vld [vmem:[%s3 + $0x48] sm:$0xf]
  %v3602 = vld [vmem:[%s3 + $0x4c] sm:$0xf]
  %v3603 = vld [vmem:[%s3 + $0x50] sm:$0xf]
  %v3604 = vld [vmem:[%s3 + $0x54] sm:$0xf]
  %v3605 = vld [vmem:[%s3 + $0x58] sm:$0xf]
  %v3606 = vld [vmem:[%s3 + $0x5c] sm:$0xf]
  %v3607 = vld [vmem:[%s3 + $0x60] sm:$0xf]
  %v3608 = vld [vmem:[%s3 + $0x64] sm:$0xf]
  %v3609 = vld [vmem:[%s3 + $0x68] sm:$0xf]
  %v3610 = vld [vmem:[%s3 + $0x6c] sm:$0xf]
  %v3611 = vld [vmem:[%s3 + $0x70] sm:$0xf]
  %v3612 = vld [vmem:[%s3 + $0x74] sm:$0xf]
  %v3613 = vld [vmem:[%s3 + $0x78] sm:$0xf]
  %v3614 = vld [vmem:[%s3 + $0x7c] sm:$0xf]
  %v3615 = vld [vmem:[%s3 + $0x80] sm:$0xf]
  %v3616 = vld [vmem:[%s3 + $0x84] sm:$0xf]
  %v3617 = vld [vmem:[%s3 + $0x88] sm:$0xf]
  %v3618 = vld [vmem:[%s3 + $0x8c] sm:$0xf]
  %v3619 = vld [vmem:[%s3 + $0x90] sm:$0xf]
  %v3620 = vld [vmem:[%s3 + $0x94] sm:$0xf]
  %v3621 = vld [vmem:[%s3 + $0x98] sm:$0xf]
  %v3622 = vld [vmem:[%s3 + $0x9c] sm:$0xf]
  %v3623 = vld [vmem:[%s3 + $0xa0] sm:$0xf]
  %v3624 = vld [vmem:[%s3 + $0xa4] sm:$0xf]
  %v3625 = vld [vmem:[%s3 + $0xa8] sm:$0xf]
  %v3626 = vld [vmem:[%s3 + $0xac] sm:$0xf]
  %v3627 = vld [vmem:[%s3 + $0xb0] sm:$0xf]
  %v3628 = vld [vmem:[%s3 + $0xb4] sm:$0xf]
  %v3629 = vld [vmem:[%s3 + $0xb8] sm:$0xf]
  %v3630 = vld [vmem:[%s3 + $0xbc] sm:$0xf]
  %v3631 = vld [vmem:[%s3 + $0xc0] sm:$0xf]
  %v3632 = vld [vmem:[%s3 + $0xc4] sm:$0xf]
  %v3633 = vld [vmem:[%s3 + $0xc8] sm:$0xf]
  %v3634 = vld [vmem:[%s3 + $0xcc] sm:$0xf]
  %v3635 = vld [vmem:[%s3 + $0xd0] sm:$0xf]
  %v3636 = vld [vmem:[%s3 + $0xd4] sm:$0xf]
  %v3637 = vld [vmem:[%s3 + $0xd8] sm:$0xf]
  %v3638 = vld [vmem:[%s3 + $0xdc] sm:$0xf]
  %v3639 = vld [vmem:[%s3 + $0xe0] sm:$0xf]
  %v3640 = vld [vmem:[%s3 + $0xe4] sm:$0xf]
  %v3641 = vld [vmem:[%s3 + $0xe8] sm:$0xf]
  %v3642 = vld [vmem:[%s3 + $0xec] sm:$0xf]
  %v3643 = vld [vmem:[%s3 + $0xf0] sm:$0xf]
  %v3644 = vld [vmem:[%s3 + $0xf4] sm:$0xf]
  %v3645 = vld [vmem:[%s3 + $0xf8] sm:$0xf]
  %v3646 = vld [vmem:[%s3 + $0xfc] sm:$0xf]
  %v3647 = vld [vmem:[%s4] sm:$0x1]
  %v3649 = vlaneseq
  %v3650 = vshrl.u32 %v3649, 7
  %v3651 = vsub.s32 0, %v3650
  %v3652 = vrot.slane %v3647, %v3651
  %v3674 = vunpack.c.l.b16 %v3563
  %v3675 = vunpack.c.h.b16 %v3563
  %v3676 = vunpack.c.l.b16 %v3564
  %v3677 = vunpack.c.h.b16 %v3564
  %v3678 = vunpack.c.l.b16 %v3565
  %v3679 = vunpack.c.h.b16 %v3565
  %v3680 = vunpack.c.l.b16 %v3566
  %v3681 = vunpack.c.h.b16 %v3566
  %v3682 = vunpack.c.l.b16 %v3567
  %v3683 = vunpack.c.h.b16 %v3567
  %v3684 = vunpack.c.l.b16 %v3568
  %v3685 = vunpack.c.h.b16 %v3568
  %v3686 = vunpack.c.l.b16 %v3569
  %v3687 = vunpack.c.h.b16 %v3569
  %v3688 = vunpack.c.l.b16 %v3570
  %v3689 = vunpack.c.h.b16 %v3570
  %v3690 = vunpack.c.l.b16 %v3571
  %v3691 = vunpack.c.h.b16 %v3571
  %v3692 = vunpack.c.l.b16 %v3572
  %v3693 = vunpack.c.h.b16 %v3572
  %v3694 = vunpack.c.l.b16 %v3573
  %v3695 = vunpack.c.h.b16 %v3573
  %v3696 = vunpack.c.l.b16 %v3574
  %v3697 = vunpack.c.h.b16 %v3574
  %v3698 = vunpack.c.l.b16 %v3575
  %v3699 = vunpack.c.h.b16 %v3575
  %v3700 = vunpack.c.l.b16 %v3576
  %v3701 = vunpack.c.h.b16 %v3576
  %v3702 = vunpack.c.l.b16 %v3577
  %v3703 = vunpack.c.h.b16 %v3577
  %v3704 = vunpack.c.l.b16 %v3578
  %v3705 = vunpack.c.h.b16 %v3578
  %v3706 = vunpack.c.l.b16 %v3579
  %v3707 = vunpack.c.h.b16 %v3579
  %v3708 = vunpack.c.l.b16 %v3580
  %v3709 = vunpack.c.h.b16 %v3580
  %v3710 = vunpack.c.l.b16 %v3581
  %v3711 = vunpack.c.h.b16 %v3581
  %v3712 = vunpack.c.l.b16 %v3582
  %v3713 = vunpack.c.h.b16 %v3582
  %v3714 = vpack.c.b16 %v3678, %v3674
  %v3715 = vpack.c.b16 %v3679, %v3675
  %v3716 = vpack.c.b16 %v3680, %v3676
  %v3717 = vpack.c.b16 %v3681, %v3677
  %v3718 = vpack.c.b16 %v3686, %v3682
  %v3719 = vpack.c.b16 %v3687, %v3683
  %v3720 = vpack.c.b16 %v3688, %v3684
  %v3721 = vpack.c.b16 %v3689, %v3685
  %v3722 = vpack.c.b16 %v3694, %v3690
  %v3723 = vpack.c.b16 %v3695, %v3691
  %v3724 = vpack.c.b16 %v3696, %v3692
  %v3725 = vpack.c.b16 %v3697, %v3693
  %v3726 = vpack.c.b16 %v3702, %v3698
  %v3727 = vpack.c.b16 %v3703, %v3699
  %v3728 = vpack.c.b16 %v3704, %v3700
  %v3729 = vpack.c.b16 %v3705, %v3701
  %v3730 = vpack.c.b16 %v3710, %v3706
  %v3731 = vpack.c.b16 %v3711, %v3707
  %v3732 = vpack.c.b16 %v3712, %v3708
  %v3733 = vpack.c.b16 %v3713, %v3709
  %v3818 = vunpack.c.l.b16 %v3583
  %v3819 = vunpack.c.l.b16 %v3584
  %v3820 = vunpack.c.l.b16 %v3585
  %v3821 = vunpack.c.l.b16 %v3586
  %v3822 = vunpack.c.l.b16 %v3587
  %v3823 = vunpack.c.l.b16 %v3588
  %v3824 = vunpack.c.l.b16 %v3589
  %v3825 = vunpack.c.l.b16 %v3590
  %v3826 = vunpack.c.l.b16 %v3591
  %v3827 = vunpack.c.l.b16 %v3592
  %v3828 = vunpack.c.l.b16 %v3593
  %v3829 = vunpack.c.l.b16 %v3594
  %v3830 = vunpack.c.l.b16 %v3595
  %v3831 = vunpack.c.l.b16 %v3596
  %v3832 = vunpack.c.l.b16 %v3597
  %v3833 = vunpack.c.l.b16 %v3598
  %v3834 = vunpack.c.l.b16 %v3599
  %v3835 = vunpack.c.l.b16 %v3600
  %v3836 = vunpack.c.l.b16 %v3601
  %v3837 = vunpack.c.l.b16 %v3602
  %v3838 = vunpack.c.l.b16 %v3603
  %v3839 = vunpack.c.l.b16 %v3604
  %v3840 = vunpack.c.l.b16 %v3605
  %v3841 = vunpack.c.l.b16 %v3606
  %v3842 = vunpack.c.l.b16 %v3607
  %v3843 = vunpack.c.l.b16 %v3608
  %v3844 = vunpack.c.l.b16 %v3609
  %v3845 = vunpack.c.l.b16 %v3610
  %v3846 = vunpack.c.l.b16 %v3611
  %v3847 = vunpack.c.l.b16 %v3612
  %v3848 = vunpack.c.l.b16 %v3613
  %v3849 = vunpack.c.l.b16 %v3614
  %v3850 = vunpack.c.l.b16 %v3615
  %v3851 = vunpack.c.l.b16 %v3616
  %v3852 = vunpack.c.l.b16 %v3617
  %v3853 = vunpack.c.l.b16 %v3618
  %v3854 = vunpack.c.l.b16 %v3619
  %v3855 = vunpack.c.l.b16 %v3620
  %v3856 = vunpack.c.l.b16 %v3621
  %v3857 = vunpack.c.l.b16 %v3622
  %v3858 = vunpack.c.l.b16 %v3623
  %v3859 = vunpack.c.l.b16 %v3624
  %v3860 = vunpack.c.l.b16 %v3625
  %v3861 = vunpack.c.l.b16 %v3626
  %v3862 = vunpack.c.l.b16 %v3627
  %v3863 = vunpack.c.l.b16 %v3628
  %v3864 = vunpack.c.l.b16 %v3629
  %v3865 = vunpack.c.l.b16 %v3630
  %v3866 = vunpack.c.l.b16 %v3631
  %v3867 = vunpack.c.l.b16 %v3632
  %v3868 = vunpack.c.l.b16 %v3633
  %v3869 = vunpack.c.l.b16 %v3634
  %v3870 = vunpack.c.l.b16 %v3635
  %v3871 = vunpack.c.l.b16 %v3636
  %v3872 = vunpack.c.l.b16 %v3637
  %v3873 = vunpack.c.l.b16 %v3638
  %v3874 = vunpack.c.l.b16 %v3639
  %v3875 = vunpack.c.l.b16 %v3640
  %v3876 = vunpack.c.l.b16 %v3641
  %v3877 = vunpack.c.l.b16 %v3642
  %v3878 = vunpack.c.l.b16 %v3643
  %v3879 = vunpack.c.l.b16 %v3644
  %v3880 = vunpack.c.l.b16 %v3645
  %v3881 = vunpack.c.l.b16 %v3646
  %v3882 = vpack.c.b16 %v3819, %v3818
  %v3883 = vpack.c.b16 %v3821, %v3820
  %v3884 = vpack.c.b16 %v3823, %v3822
  %v3885 = vpack.c.b16 %v3825, %v3824
  %v3886 = vpack.c.b16 %v3827, %v3826
  %v3887 = vpack.c.b16 %v3829, %v3828
  %v3888 = vpack.c.b16 %v3831, %v3830
  %v3889 = vpack.c.b16 %v3833, %v3832
  %v3890 = vpack.c.b16 %v3835, %v3834
  %v3891 = vpack.c.b16 %v3837, %v3836
  %v3892 = vpack.c.b16 %v3839, %v3838
  %v3893 = vpack.c.b16 %v3841, %v3840
  %v3894 = vpack.c.b16 %v3843, %v3842
  %v3895 = vpack.c.b16 %v3845, %v3844
  %v3896 = vpack.c.b16 %v3847, %v3846
  %v3897 = vpack.c.b16 %v3849, %v3848
  %v3898 = vpack.c.b16 %v3851, %v3850
  %v3899 = vpack.c.b16 %v3853, %v3852
  %v3900 = vpack.c.b16 %v3855, %v3854
  %v3901 = vpack.c.b16 %v3857, %v3856
  %v3902 = vpack.c.b16 %v3859, %v3858
  %v3903 = vpack.c.b16 %v3861, %v3860
  %v3904 = vpack.c.b16 %v3863, %v3862
  %v3905 = vpack.c.b16 %v3865, %v3864
  %v3906 = vpack.c.b16 %v3867, %v3866
  %v3907 = vpack.c.b16 %v3869, %v3868
  %v3908 = vpack.c.b16 %v3871, %v3870
  %v3909 = vpack.c.b16 %v3873, %v3872
  %v3910 = vpack.c.b16 %v3875, %v3874
  %v3911 = vpack.c.b16 %v3877, %v3876
  %v3912 = vpack.c.b16 %v3879, %v3878
  %v3913 = vpack.c.b16 %v3881, %v3880
  %3946 = vmatprep.subr.bf16.mxu0 0
  %3947 = vmatpush1.bf16.msra.mxu0 %v3889
  %3948 = vmatprep.subr.bf16.mxu0 0
  %3949 = vmatpush1.bf16.msra.mxu0 %v3888
  %3950 = vmatprep.subr.bf16.mxu0 0
  %3951 = vmatpush1.bf16.msra.mxu0 %v3887
  %3952 = vmatprep.subr.bf16.mxu0 0
  %3953 = vmatpush1.bf16.msra.mxu0 %v3886
  %3954 = vmatprep.subr.bf16.mxu0 0
  %3955 = vmatpush1.bf16.msra.mxu0 %v3885
  %3956 = vmatprep.subr.bf16.mxu0 0
  %3957 = vmatpush1.bf16.msra.mxu0 %v3884
  %3958 = vmatprep.subr.bf16.mxu0 0
  %3959 = vmatpush1.bf16.msra.mxu0 %v3883
  %3960 = vmatprep.subr.bf16.mxu0 0
  %3961 = vmatpush1.bf16.msra.mxu0 %v3882
  %3962 = vmatprep.subr.bf16.mxu0 0
  %3963 = vmatpush2.bf16.msra.mxu0 %v3897
  %3964 = vmatprep.subr.bf16.mxu0 0
  %3965 = vmatpush2.bf16.msra.mxu0 %v3896
  %3966 = vmatprep.subr.bf16.mxu0 0
  %3967 = vmatpush2.bf16.msra.mxu0 %v3895
  %3968 = vmatprep.subr.bf16.mxu0 0
  %3969 = vmatpush2.bf16.msra.mxu0 %v3894
  %3970 = vmatprep.subr.bf16.mxu0 0
  %3971 = vmatpush2.bf16.msra.mxu0 %v3893
  %3972 = vmatprep.subr.bf16.mxu0 0
  %3973 = vmatpush2.bf16.msra.mxu0 %v3892
  %3974 = vmatprep.subr.bf16.mxu0 0
  %3975 = vmatpush2.bf16.msra.mxu0 %v3891
  %3976 = vmatprep.subr.bf16.mxu0 0
  %3977 = vmatpush2.bf16.msra.mxu0 %v3890
  %3978 = vmatprep.mubr.bf16.mxu0 %v3715
  %3979 = vmatmul.mubr.bf16.gmra.mxu0 %v3714
  %v3980 = vpop.f32.mrf.mxu0
  %v3981 = vadd.f32 %v3652, %v3980
  %v3982 = vpop.f32.mrf.mxu0
  %v3983 = vpop.f32.mrf.mxu0
  %v3984 = vadd.f32 %v3652, %v3983
  %v3985 = vpop.f32.mrf.mxu0
  %3986 = vmatprep.mubr.bf16.mxu0 %v3719
  %3987 = vmatmul.mubr.bf16.gmra.mxu0 %v3718
  %v3988 = vpop.f32.mrf.mxu0
  %v3989 = vadd.f32 %v3652, %v3988
  %v3990 = vpop.f32.mrf.mxu0
  %v3991 = vpop.f32.mrf.mxu0
  %v3992 = vadd.f32 %v3652, %v3991
  %v3993 = vpop.f32.mrf.mxu0
  %3994 = vmatprep.mubr.bf16.mxu0 %v3723
  %3995 = vmatmul.mubr.bf16.gmra.mxu0 %v3722
  %v3996 = vpop.f32.mrf.mxu0
  %v3997 = vadd.f32 %v3652, %v3996
  %v3998 = vpop.f32.mrf.mxu0
  %v3999 = vpop.f32.mrf.mxu0
  %v4000 = vadd.f32 %v3652, %v3999
  %v4001 = vpop.f32.mrf.mxu0
  %4002 = vmatprep.mubr.bf16.mxu0 %v3727
  %4003 = vmatmul.mubr.bf16.gmra.mxu0 %v3726
  %v4004 = vpop.f32.mrf.mxu0
  %v4005 = vadd.f32 %v3652, %v4004
  %v4006 = vpop.f32.mrf.mxu0
  %v4007 = vpop.f32.mrf.mxu0
  %v4008 = vadd.f32 %v3652, %v4007
  %v4009 = vpop.f32.mrf.mxu0
  %4010 = vmatprep.mubr.bf16.mxu0 %v3731
  %4011 = vmatmul.mubr.bf16.gmra.mxu0 %v3730
  %v4012 = vpop.f32.mrf.mxu0
  %v4013 = vadd.f32 %v3652, %v4012
  %v4014 = vpop.f32.mrf.mxu0
  %v4015 = vpop.f32.mrf.mxu0
  %v4016 = vadd.f32 %v3652, %v4015
  %v4017 = vpop.f32.mrf.mxu0
  %4018 = vdwg.mxu0
  %4019 = vmatprep.subr.bf16.mxu0 0
  %4020 = vmatpush1.bf16.msra.mxu0 %v3905
  %4021 = vmatprep.subr.bf16.mxu0 0
  %4022 = vmatpush1.bf16.msra.mxu0 %v3904
  %4023 = vmatprep.subr.bf16.mxu0 0
  %4024 = vmatpush1.bf16.msra.mxu0 %v3903
  %4025 = vmatprep.subr.bf16.mxu0 0
  %4026 = vmatpush1.bf16.msra.mxu0 %v3902
  %4027 = vmatprep.subr.bf16.mxu0 0
  %4028 = vmatpush1.bf16.msra.mxu0 %v3901
  %4029 = vmatprep.subr.bf16.mxu0 0
  %4030 = vmatpush1.bf16.msra.mxu0 %v3900
  %4031 = vmatprep.subr.bf16.mxu0 0
  %4032 = vmatpush1.bf16.msra.mxu0 %v3899
  %4033 = vmatprep.subr.bf16.mxu0 0
  %4034 = vmatpush1.bf16.msra.mxu0 %v3898
  %4035 = vmatprep.subr.bf16.mxu0 0
  %4036 = vmatpush2.bf16.msra.mxu0 %v3913
  %4037 = vmatprep.subr.bf16.mxu0 0
  %4038 = vmatpush2.bf16.msra.mxu0 %v3912
  %4039 = vmatprep.subr.bf16.mxu0 0
  %4040 = vmatpush2.bf16.msra.mxu0 %v3911
  %4041 = vmatprep.subr.bf16.mxu0 0
  %4042 = vmatpush2.bf16.msra.mxu0 %v3910
  %4043 = vmatprep.subr.bf16.mxu0 0
  %4044 = vmatpush2.bf16.msra.mxu0 %v3909
  %4045 = vmatprep.subr.bf16.mxu0 0
  %4046 = vmatpush2.bf16.msra.mxu0 %v3908
  %4047 = vmatprep.subr.bf16.mxu0 0
  %4048 = vmatpush2.bf16.msra.mxu0 %v3907
  %4049 = vmatprep.subr.bf16.mxu0 0
  %4050 = vmatpush2.bf16.msra.mxu0 %v3906
  %4051 = vmatprep.mubr.bf16.mxu0 %v3717
  %4052 = vmatmul.mubr.bf16.gmra.mxu0 %v3716
  %v4053 = vpop.f32.mrf.mxu0
  %v4054 = vadd.f32 %v3981, %v4053
  %v4055 = vpop.f32.mrf.mxu0
  %v4056 = vpop.f32.mrf.mxu0
  %v4057 = vadd.f32 %v3984, %v4056
  %v4058 = vpop.f32.mrf.mxu0
  %4059 = vmatprep.mubr.bf16.mxu0 %v3721
  %4060 = vmatmul.mubr.bf16.gmra.mxu0 %v3720
  %v4061 = vpop.f32.mrf.mxu0
  %v4062 = vadd.f32 %v3989, %v4061
  %v4063 = vpop.f32.mrf.mxu0
  %v4064 = vpop.f32.mrf.mxu0
  %v4065 = vadd.f32 %v3992, %v4064
  %v4066 = vpop.f32.mrf.mxu0
  %4067 = vmatprep.mubr.bf16.mxu0 %v3725
  %4068 = vmatmul.mubr.bf16.gmra.mxu0 %v3724
  %v4069 = vpop.f32.mrf.mxu0
  %v4070 = vadd.f32 %v3997, %v4069
  %v4071 = vpop.f32.mrf.mxu0
  %v4072 = vpop.f32.mrf.mxu0
  %v4073 = vadd.f32 %v4000, %v4072
  %v4074 = vpop.f32.mrf.mxu0
  %4075 = vmatprep.mubr.bf16.mxu0 %v3729
  %4076 = vmatmul.mubr.bf16.gmra.mxu0 %v3728
  %v4077 = vpop.f32.mrf.mxu0
  %v4078 = vadd.f32 %v4005, %v4077
  %v4079 = vpop.f32.mrf.mxu0
  %v4080 = vpop.f32.mrf.mxu0
  %v4081 = vadd.f32 %v4008, %v4080
  %v4082 = vpop.f32.mrf.mxu0
  %4083 = vmatprep.mubr.bf16.mxu0 %v3733
  %4084 = vmatmul.mubr.bf16.gmra.mxu0 %v3732
  %v4085 = vpop.f32.mrf.mxu0
  %v4086 = vadd.f32 %v4013, %v4085
  %v4087 = vpop.f32.mrf.mxu0
  %v4088 = vpop.f32.mrf.mxu0
  %v4089 = vadd.f32 %v4016, %v4088
  %v4090 = vpop.f32.mrf.mxu0
  %4091 = vdwg.mxu0
  %v4092 = vmul.f32 %v4054, 0.01
  %v4093 = vmul.f32 %v4057, 0.01
  %v4094 = vmul.f32 %v4062, 0.01
  %v4095 = vmul.f32 %v4065, 0.01
  %v4096 = vmul.f32 %v4070, 0.01
  %v4097 = vmul.f32 %v4073, 0.01
  %v4098 = vmul.f32 %v4078, 0.01
  %v4099 = vmul.f32 %v4081, 0.01
  %v4100 = vmul.f32 %v4086, 0.01
  %v4101 = vmul.f32 %v4089, 0.01
  %v4102 = vmax.f32 %v4054, %v4092
  %v4103 = vmax.f32 %v4057, %v4093
  %v4104 = vmax.f32 %v4062, %v4094
  %v4105 = vmax.f32 %v4065, %v4095
  %v4106 = vmax.f32 %v4070, %v4096
  %v4107 = vmax.f32 %v4073, %v4097
  %v4108 = vmax.f32 %v4078, %v4098
  %v4109 = vmax.f32 %v4081, %v4099
  %v4110 = vmax.f32 %v4086, %v4100
  %v4111 = vmax.f32 %v4089, %v4101
  %vm4112 = vcmask 523264
  %4113 = vst.msk [vmem:[#allocation3] sm:$0xff] %vm4112, %v4102
  %4114 = vst.msk [vmem:[#allocation3 + $0x8] sm:$0xff] %vm4112, %v4103
  %4115 = vst.msk [vmem:[#allocation3 + $0x10] sm:$0xff] %vm4112, %v4104
  %4116 = vst.msk [vmem:[#allocation3 + $0x18] sm:$0xff] %vm4112, %v4105
  %4117 = vst.msk [vmem:[#allocation3 + $0x20] sm:$0xff] %vm4112, %v4106
  %4118 = vst.msk [vmem:[#allocation3 + $0x28] sm:$0xff] %vm4112, %v4107
  %4119 = vst.msk [vmem:[#allocation3 + $0x30] sm:$0xff] %vm4112, %v4108
  %4120 = vst.msk [vmem:[#allocation3 + $0x38] sm:$0xff] %vm4112, %v4109
  %4121 = vst.msk [vmem:[#allocation3 + $0x40] sm:$0xff] %vm4112, %v4110
  %4122 = vst.msk [vmem:[#allocation3 + $0x48] sm:$0xff] %vm4112, %v4111
  %v4123 = vld [vmem:[%s6] sm:$0x1]
  %v4125 = vlaneseq
  %v4126 = vshrl.u32 %v4125, 7
  %v4127 = vsub.s32 0, %v4126
  %v4128 = vrot.slane %v4123, %v4127
  %v4130 = vld [vmem:[#allocation3] sm:$0xff]
  %v4131 = vpack.c.bf16 %v4130, %v4130
  %v4132 = vld [vmem:[%s5] sm:$0xf]
  %v4133 = vld [vmem:[%s5 + $0x4] sm:$0xf]
  %v4134 = vld [vmem:[%s5 + $0x8] sm:$0xf]
  %v4135 = vld [vmem:[%s5 + $0xc] sm:$0xf]
  %v4136 = vld [vmem:[%s5 + $0x10] sm:$0xf]
  %v4137 = vld [vmem:[%s5 + $0x14] sm:$0xf]
  %v4138 = vld [vmem:[%s5 + $0x18] sm:$0xf]
  %v4139 = vld [vmem:[%s5 + $0x1c] sm:$0xf]
  %v4148 = vunpack.c.l.b16 %v4132
  %v4149 = vunpack.c.l.b16 %v4133
  %v4150 = vunpack.c.l.b16 %v4134
  %v4151 = vunpack.c.l.b16 %v4135
  %v4152 = vunpack.c.l.b16 %v4136
  %v4153 = vunpack.c.l.b16 %v4137
  %v4154 = vunpack.c.l.b16 %v4138
  %v4155 = vunpack.c.l.b16 %v4139
  %v4156 = vpack.c.b16 %v4149, %v4148
  %v4157 = vpack.c.b16 %v4151, %v4150
  %v4158 = vpack.c.b16 %v4153, %v4152
  %v4159 = vpack.c.b16 %v4155, %v4154
  %v4165 = vsel %vm4112, %v4131, 0
  %4167 = vmatprep.subr.bf16.mxu0 0
  %4168 = vmatpush1.bf16.msra.mxu0 0
  %4169 = vmatprep.subr.bf16.mxu0 0
  %4170 = vmatpush1.bf16.msra.mxu0 0
  %4171 = vmatprep.subr.bf16.mxu0 0
  %4172 = vmatpush1.bf16.msra.mxu0 0
  %4173 = vmatprep.subr.bf16.mxu0 0
  %4174 = vmatpush1.bf16.msra.mxu0 0
  %4175 = vmatprep.subr.bf16.mxu0 0
  %4176 = vmatpush1.bf16.msra.mxu0 %v4159
  %4177 = vmatprep.subr.bf16.mxu0 0
  %4178 = vmatpush1.bf16.msra.mxu0 %v4158
  %4179 = vmatprep.subr.bf16.mxu0 0
  %4180 = vmatpush1.bf16.msra.mxu0 %v4157
  %4181 = vmatprep.subr.bf16.mxu0 0
  %4182 = vmatpush1.bf16.msra.mxu0 %v4156
  %4183 = vmatprep.subr.bf16.mxu0 0
  %4184 = vmatpush2.bf16.msra.mxu0 0
  %4185 = vmatprep.subr.bf16.mxu0 0
  %4186 = vmatpush2.bf16.msra.mxu0 0
  %4187 = vmatprep.subr.bf16.mxu0 0
  %4188 = vmatpush2.bf16.msra.mxu0 0
  %4189 = vmatprep.subr.bf16.mxu0 0
  %4190 = vmatpush2.bf16.msra.mxu0 0
  %4191 = vmatprep.subr.bf16.mxu0 0
  %4192 = vmatpush2.bf16.msra.mxu0 0
  %4193 = vmatprep.subr.bf16.mxu0 0
  %4194 = vmatpush2.bf16.msra.mxu0 0
  %4195 = vmatprep.subr.bf16.mxu0 0
  %4196 = vmatpush2.bf16.msra.mxu0 0
  %4197 = vmatprep.subr.bf16.mxu0 0
  %4198 = vmatpush2.bf16.msra.mxu0 0
  %4199 = vmatprep.mubr.bf16.mxu0 0
  %4200 = vmatmul.mubr.bf16.gmra.mxu0 %v4165
  %v4201 = vpop.f32.mrf.mxu0
  %v4202 = vadd.f32 0.0, %v4201
  %v4203 = vpop.f32.mrf.mxu0
  %v4204 = vpop.f32.mrf.mxu0
  %v4205 = vpop.f32.mrf.mxu0
  %4206 = vdwg.mxu0
  %v4207 = vadd.f32 %v4128, %v4202
  %v4208 = vld [vmem:[#allocation3 + $0x8] sm:$0xff]
  %v4209 = vpack.c.bf16 %v4208, %v4208
  %v4210 = vld [vmem:[%s5 + $0x20] sm:$0xf]
  %v4211 = vld [vmem:[%s5 + $0x24] sm:$0xf]
  %v4212 = vld [vmem:[%s5 + $0x28] sm:$0xf]
  %v4213 = vld [vmem:[%s5 + $0x2c] sm:$0xf]
  %v4214 = vld [vmem:[%s5 + $0x30] sm:$0xf]
  %v4215 = vld [vmem:[%s5 + $0x34] sm:$0xf]
  %v4216 = vld [vmem:[%s5 + $0x38] sm:$0xf]
  %v4217 = vld [vmem:[%s5 + $0x3c] sm:$0xf]
  %v4226 = vunpack.c.l.b16 %v4210
  %v4227 = vunpack.c.l.b16 %v4211
  %v4228 = vunpack.c.l.b16 %v4212
  %v4229 = vunpack.c.l.b16 %v4213
  %v4230 = vunpack.c.l.b16 %v4214
  %v4231 = vunpack.c.l.b16 %v4215
  %v4232 = vunpack.c.l.b16 %v4216
  %v4233 = vunpack.c.l.b16 %v4217
  %v4234 = vpack.c.b16 %v4227, %v4226
  %v4235 = vpack.c.b16 %v4229, %v4228
  %v4236 = vpack.c.b16 %v4231, %v4230
  %v4237 = vpack.c.b16 %v4233, %v4232
  %v4243 = vsel %vm4112, %v4209, 0
  %4245 = vmatprep.subr.bf16.mxu0 0
  %4246 = vmatpush1.bf16.msra.mxu0 0
  %4247 = vmatprep.subr.bf16.mxu0 0
  %4248 = vmatpush1.bf16.msra.mxu0 0
  %4249 = vmatprep.subr.bf16.mxu0 0
  %4250 = vmatpush1.bf16.msra.mxu0 0
  %4251 = vmatprep.subr.bf16.mxu0 0
  %4252 = vmatpush1.bf16.msra.mxu0 0
  %4253 = vmatprep.subr.bf16.mxu0 0
  %4254 = vmatpush1.bf16.msra.mxu0 %v4237
  %4255 = vmatprep.subr.bf16.mxu0 0
  %4256 = vmatpush1.bf16.msra.mxu0 %v4236
  %4257 = vmatprep.subr.bf16.mxu0 0
  %4258 = vmatpush1.bf16.msra.mxu0 %v4235
  %4259 = vmatprep.subr.bf16.mxu0 0
  %4260 = vmatpush1.bf16.msra.mxu0 %v4234
  %4261 = vmatprep.subr.bf16.mxu0 0
  %4262 = vmatpush2.bf16.msra.mxu0 0
  %4263 = vmatprep.subr.bf16.mxu0 0
  %4264 = vmatpush2.bf16.msra.mxu0 0
  %4265 = vmatprep.subr.bf16.mxu0 0
  %4266 = vmatpush2.bf16.msra.mxu0 0
  %4267 = vmatprep.subr.bf16.mxu0 0
  %4268 = vmatpush2.bf16.msra.mxu0 0
  %4269 = vmatprep.subr.bf16.mxu0 0
  %4270 = vmatpush2.bf16.msra.mxu0 0
  %4271 = vmatprep.subr.bf16.mxu0 0
  %4272 = vmatpush2.bf16.msra.mxu0 0
  %4273 = vmatprep.subr.bf16.mxu0 0
  %4274 = vmatpush2.bf16.msra.mxu0 0
  %4275 = vmatprep.subr.bf16.mxu0 0
  %4276 = vmatpush2.bf16.msra.mxu0 0
  %4277 = vmatprep.mubr.bf16.mxu0 0
  %4278 = vmatmul.mubr.bf16.gmra.mxu0 %v4243
  %v4279 = vpop.f32.mrf.mxu0
  %v4280 = vadd.f32 0.0, %v4279
  %v4281 = vpop.f32.mrf.mxu0
  %v4282 = vpop.f32.mrf.mxu0
  %v4283 = vpop.f32.mrf.mxu0
  %4284 = vdwg.mxu0
  %v4285 = vadd.f32 %v4207, %v4280
  %v4286 = vld [vmem:[#allocation3 + $0x10] sm:$0xff]
  %v4287 = vpack.c.bf16 %v4286, %v4286
  %v4288 = vld [vmem:[%s5 + $0x40] sm:$0xf]
  %v4289 = vld [vmem:[%s5 + $0x44] sm:$0xf]
  %v4290 = vld [vmem:[%s5 + $0x48] sm:$0xf]
  %v4291 = vld [vmem:[%s5 + $0x4c] sm:$0xf]
  %v4292 = vld [vmem:[%s5 + $0x50] sm:$0xf]
  %v4293 = vld [vmem:[%s5 + $0x54] sm:$0xf]
  %v4294 = vld [vmem:[%s5 + $0x58] sm:$0xf]
  %v4295 = vld [vmem:[%s5 + $0x5c] sm:$0xf]
  %v4304 = vunpack.c.l.b16 %v4288
  %v4305 = vunpack.c.l.b16 %v4289
  %v4306 = vunpack.c.l.b16 %v4290
  %v4307 = vunpack.c.l.b16 %v4291
  %v4308 = vunpack.c.l.b16 %v4292
  %v4309 = vunpack.c.l.b16 %v4293
  %v4310 = vunpack.c.l.b16 %v4294
  %v4311 = vunpack.c.l.b16 %v4295
  %v4312 = vpack.c.b16 %v4305, %v4304
  %v4313 = vpack.c.b16 %v4307, %v4306
  %v4314 = vpack.c.b16 %v4309, %v4308
  %v4315 = vpack.c.b16 %v4311, %v4310
  %v4321 = vsel %vm4112, %v4287, 0
  %4323 = vmatprep.subr.bf16.mxu0 0
  %4324 = vmatpush1.bf16.msra.mxu0 0
  %4325 = vmatprep.subr.bf16.mxu0 0
  %4326 = vmatpush1.bf16.msra.mxu0 0
  %4327 = vmatprep.subr.bf16.mxu0 0
  %4328 = vmatpush1.bf16.msra.mxu0 0
  %4329 = vmatprep.subr.bf16.mxu0 0
  %4330 = vmatpush1.bf16.msra.mxu0 0
  %4331 = vmatprep.subr.bf16.mxu0 0
  %4332 = vmatpush1.bf16.msra.mxu0 %v4315
  %4333 = vmatprep.subr.bf16.mxu0 0
  %4334 = vmatpush1.bf16.msra.mxu0 %v4314
  %4335 = vmatprep.subr.bf16.mxu0 0
  %4336 = vmatpush1.bf16.msra.mxu0 %v4313
  %4337 = vmatprep.subr.bf16.mxu0 0
  %4338 = vmatpush1.bf16.msra.mxu0 %v4312
  %4339 = vmatprep.subr.bf16.mxu0 0
  %4340 = vmatpush2.bf16.msra.mxu0 0
  %4341 = vmatprep.subr.bf16.mxu0 0
  %4342 = vmatpush2.bf16.msra.mxu0 0
  %4343 = vmatprep.subr.bf16.mxu0 0
  %4344 = vmatpush2.bf16.msra.mxu0 0
  %4345 = vmatprep.subr.bf16.mxu0 0
  %4346 = vmatpush2.bf16.msra.mxu0 0
  %4347 = vmatprep.subr.bf16.mxu0 0
  %4348 = vmatpush2.bf16.msra.mxu0 0
  %4349 = vmatprep.subr.bf16.mxu0 0
  %4350 = vmatpush2.bf16.msra.mxu0 0
  %4351 = vmatprep.subr.bf16.mxu0 0
  %4352 = vmatpush2.bf16.msra.mxu0 0
  %4353 = vmatprep.subr.bf16.mxu0 0
  %4354 = vmatpush2.bf16.msra.mxu0 0
  %4355 = vmatprep.mubr.bf16.mxu0 0
  %4356 = vmatmul.mubr.bf16.gmra.mxu0 %v4321
  %v4357 = vpop.f32.mrf.mxu0
  %v4358 = vadd.f32 0.0, %v4357
  %v4359 = vpop.f32.mrf.mxu0
  %v4360 = vpop.f32.mrf.mxu0
  %v4361 = vpop.f32.mrf.mxu0
  %4362 = vdwg.mxu0
  %v4363 = vadd.f32 %v4285, %v4358
  %v4364 = vld [vmem:[#allocation3 + $0x18] sm:$0xff]
  %v4365 = vpack.c.bf16 %v4364, %v4364
  %v4366 = vld [vmem:[%s5 + $0x60] sm:$0xf]
  %v4367 = vld [vmem:[%s5 + $0x64] sm:$0xf]
  %v4368 = vld [vmem:[%s5 + $0x68] sm:$0xf]
  %v4369 = vld [vmem:[%s5 + $0x6c] sm:$0xf]
  %v4370 = vld [vmem:[%s5 + $0x70] sm:$0xf]
  %v4371 = vld [vmem:[%s5 + $0x74] sm:$0xf]
  %v4372 = vld [vmem:[%s5 + $0x78] sm:$0xf]
  %v4373 = vld [vmem:[%s5 + $0x7c] sm:$0xf]
  %v4382 = vunpack.c.l.b16 %v4366
  %v4383 = vunpack.c.l.b16 %v4367
  %v4384 = vunpack.c.l.b16 %v4368
  %v4385 = vunpack.c.l.b16 %v4369
  %v4386 = vunpack.c.l.b16 %v4370
  %v4387 = vunpack.c.l.b16 %v4371
  %v4388 = vunpack.c.l.b16 %v4372
  %v4389 = vunpack.c.l.b16 %v4373
  %v4390 = vpack.c.b16 %v4383, %v4382
  %v4391 = vpack.c.b16 %v4385, %v4384
  %v4392 = vpack.c.b16 %v4387, %v4386
  %v4393 = vpack.c.b16 %v4389, %v4388
  %v4399 = vsel %vm4112, %v4365, 0
  %4401 = vmatprep.subr.bf16.mxu0 0
  %4402 = vmatpush1.bf16.msra.mxu0 0
  %4403 = vmatprep.subr.bf16.mxu0 0
  %4404 = vmatpush1.bf16.msra.mxu0 0
  %4405 = vmatprep.subr.bf16.mxu0 0
  %4406 = vmatpush1.bf16.msra.mxu0 0
  %4407 = vmatprep.subr.bf16.mxu0 0
  %4408 = vmatpush1.bf16.msra.mxu0 0
  %4409 = vmatprep.subr.bf16.mxu0 0
  %4410 = vmatpush1.bf16.msra.mxu0 %v4393
  %4411 = vmatprep.subr.bf16.mxu0 0
  %4412 = vmatpush1.bf16.msra.mxu0 %v4392
  %4413 = vmatprep.subr.bf16.mxu0 0
  %4414 = vmatpush1.bf16.msra.mxu0 %v4391
  %4415 = vmatprep.subr.bf16.mxu0 0
  %4416 = vmatpush1.bf16.msra.mxu0 %v4390
  %4417 = vmatprep.subr.bf16.mxu0 0
  %4418 = vmatpush2.bf16.msra.mxu0 0
  %4419 = vmatprep.subr.bf16.mxu0 0
  %4420 = vmatpush2.bf16.msra.mxu0 0
  %4421 = vmatprep.subr.bf16.mxu0 0
  %4422 = vmatpush2.bf16.msra.mxu0 0
  %4423 = vmatprep.subr.bf16.mxu0 0
  %4424 = vmatpush2.bf16.msra.mxu0 0
  %4425 = vmatprep.subr.bf16.mxu0 0
  %4426 = vmatpush2.bf16.msra.mxu0 0
  %4427 = vmatprep.subr.bf16.mxu0 0
  %4428 = vmatpush2.bf16.msra.mxu0 0
  %4429 = vmatprep.subr.bf16.mxu0 0
  %4430 = vmatpush2.bf16.msra.mxu0 0
  %4431 = vmatprep.subr.bf16.mxu0 0
  %4432 = vmatpush2.bf16.msra.mxu0 0
  %4433 = vmatprep.mubr.bf16.mxu0 0
  %4434 = vmatmul.mubr.bf16.gmra.mxu0 %v4399
  %v4435 = vpop.f32.mrf.mxu0
  %v4436 = vadd.f32 0.0, %v4435
  %v4437 = vpop.f32.mrf.mxu0
  %v4438 = vpop.f32.mrf.mxu0
  %v4439 = vpop.f32.mrf.mxu0
  %4440 = vdwg.mxu0
  %v4441 = vadd.f32 %v4363, %v4436
  %v4442 = vld [vmem:[#allocation3 + $0x20] sm:$0xff]
  %v4443 = vpack.c.bf16 %v4442, %v4442
  %v4444 = vld [vmem:[%s5 + $0x80] sm:$0xf]
  %v4445 = vld [vmem:[%s5 + $0x84] sm:$0xf]
  %v4446 = vld [vmem:[%s5 + $0x88] sm:$0xf]
  %v4447 = vld [vmem:[%s5 + $0x8c] sm:$0xf]
  %v4448 = vld [vmem:[%s5 + $0x90] sm:$0xf]
  %v4449 = vld [vmem:[%s5 + $0x94] sm:$0xf]
  %v4450 = vld [vmem:[%s5 + $0x98] sm:$0xf]
  %v4451 = vld [vmem:[%s5 + $0x9c] sm:$0xf]
  %v4460 = vunpack.c.l.b16 %v4444
  %v4461 = vunpack.c.l.b16 %v4445
  %v4462 = vunpack.c.l.b16 %v4446
  %v4463 = vunpack.c.l.b16 %v4447
  %v4464 = vunpack.c.l.b16 %v4448
  %v4465 = vunpack.c.l.b16 %v4449
  %v4466 = vunpack.c.l.b16 %v4450
  %v4467 = vunpack.c.l.b16 %v4451
  %v4468 = vpack.c.b16 %v4461, %v4460
  %v4469 = vpack.c.b16 %v4463, %v4462
  %v4470 = vpack.c.b16 %v4465, %v4464
  %v4471 = vpack.c.b16 %v4467, %v4466
  %v4477 = vsel %vm4112, %v4443, 0
  %4479 = vmatprep.subr.bf16.mxu0 0
  %4480 = vmatpush1.bf16.msra.mxu0 0
  %4481 = vmatprep.subr.bf16.mxu0 0
  %4482 = vmatpush1.bf16.msra.mxu0 0
  %4483 = vmatprep.subr.bf16.mxu0 0
  %4484 = vmatpush1.bf16.msra.mxu0 0
  %4485 = vmatprep.subr.bf16.mxu0 0
  %4486 = vmatpush1.bf16.msra.mxu0 0
  %4487 = vmatprep.subr.bf16.mxu0 0
  %4488 = vmatpush1.bf16.msra.mxu0 %v4471
  %4489 = vmatprep.subr.bf16.mxu0 0
  %4490 = vmatpush1.bf16.msra.mxu0 %v4470
  %4491 = vmatprep.subr.bf16.mxu0 0
  %4492 = vmatpush1.bf16.msra.mxu0 %v4469
  %4493 = vmatprep.subr.bf16.mxu0 0
  %4494 = vmatpush1.bf16.msra.mxu0 %v4468
  %4495 = vmatprep.subr.bf16.mxu0 0
  %4496 = vmatpush2.bf16.msra.mxu0 0
  %4497 = vmatprep.subr.bf16.mxu0 0
  %4498 = vmatpush2.bf16.msra.mxu0 0
  %4499 = vmatprep.subr.bf16.mxu0 0
  %4500 = vmatpush2.bf16.msra.mxu0 0
  %4501 = vmatprep.subr.bf16.mxu0 0
  %4502 = vmatpush2.bf16.msra.mxu0 0
  %4503 = vmatprep.subr.bf16.mxu0 0
  %4504 = vmatpush2.bf16.msra.mxu0 0
  %4505 = vmatprep.subr.bf16.mxu0 0
  %4506 = vmatpush2.bf16.msra.mxu0 0
  %4507 = vmatprep.subr.bf16.mxu0 0
  %4508 = vmatpush2.bf16.msra.mxu0 0
  %4509 = vmatprep.subr.bf16.mxu0 0
  %4510 = vmatpush2.bf16.msra.mxu0 0
  %4511 = vmatprep.mubr.bf16.mxu0 0
  %4512 = vmatmul.mubr.bf16.gmra.mxu0 %v4477
  %v4513 = vpop.f32.mrf.mxu0
  %v4514 = vadd.f32 0.0, %v4513
  %v4515 = vpop.f32.mrf.mxu0
  %v4516 = vpop.f32.mrf.mxu0
  %v4517 = vpop.f32.mrf.mxu0
  %4518 = vdwg.mxu0
  %v4519 = vadd.f32 %v4441, %v4514
  %v4520 = vld [vmem:[#allocation3 + $0x28] sm:$0xff]
  %v4521 = vpack.c.bf16 %v4520, %v4520
  %v4522 = vld [vmem:[%s5 + $0xa0] sm:$0xf]
  %v4523 = vld [vmem:[%s5 + $0xa4] sm:$0xf]
  %v4524 = vld [vmem:[%s5 + $0xa8] sm:$0xf]
  %v4525 = vld [vmem:[%s5 + $0xac] sm:$0xf]
  %v4526 = vld [vmem:[%s5 + $0xb0] sm:$0xf]
  %v4527 = vld [vmem:[%s5 + $0xb4] sm:$0xf]
  %v4528 = vld [vmem:[%s5 + $0xb8] sm:$0xf]
  %v4529 = vld [vmem:[%s5 + $0xbc] sm:$0xf]
  %v4538 = vunpack.c.l.b16 %v4522
  %v4539 = vunpack.c.l.b16 %v4523
  %v4540 = vunpack.c.l.b16 %v4524
  %v4541 = vunpack.c.l.b16 %v4525
  %v4542 = vunpack.c.l.b16 %v4526
  %v4543 = vunpack.c.l.b16 %v4527
  %v4544 = vunpack.c.l.b16 %v4528
  %v4545 = vunpack.c.l.b16 %v4529
  %v4546 = vpack.c.b16 %v4539, %v4538
  %v4547 = vpack.c.b16 %v4541, %v4540
  %v4548 = vpack.c.b16 %v4543, %v4542
  %v4549 = vpack.c.b16 %v4545, %v4544
  %v4555 = vsel %vm4112, %v4521, 0
  %4557 = vmatprep.subr.bf16.mxu0 0
  %4558 = vmatpush1.bf16.msra.mxu0 0
  %4559 = vmatprep.subr.bf16.mxu0 0
  %4560 = vmatpush1.bf16.msra.mxu0 0
  %4561 = vmatprep.subr.bf16.mxu0 0
  %4562 = vmatpush1.bf16.msra.mxu0 0
  %4563 = vmatprep.subr.bf16.mxu0 0
  %4564 = vmatpush1.bf16.msra.mxu0 0
  %4565 = vmatprep.subr.bf16.mxu0 0
  %4566 = vmatpush1.bf16.msra.mxu0 %v4549
  %4567 = vmatprep.subr.bf16.mxu0 0
  %4568 = vmatpush1.bf16.msra.mxu0 %v4548
  %4569 = vmatprep.subr.bf16.mxu0 0
  %4570 = vmatpush1.bf16.msra.mxu0 %v4547
  %4571 = vmatprep.subr.bf16.mxu0 0
  %4572 = vmatpush1.bf16.msra.mxu0 %v4546
  %4573 = vmatprep.subr.bf16.mxu0 0
  %4574 = vmatpush2.bf16.msra.mxu0 0
  %4575 = vmatprep.subr.bf16.mxu0 0
  %4576 = vmatpush2.bf16.msra.mxu0 0
  %4577 = vmatprep.subr.bf16.mxu0 0
  %4578 = vmatpush2.bf16.msra.mxu0 0
  %4579 = vmatprep.subr.bf16.mxu0 0
  %4580 = vmatpush2.bf16.msra.mxu0 0
  %4581 = vmatprep.subr.bf16.mxu0 0
  %4582 = vmatpush2.bf16.msra.mxu0 0
  %4583 = vmatprep.subr.bf16.mxu0 0
  %4584 = vmatpush2.bf16.msra.mxu0 0
  %4585 = vmatprep.subr.bf16.mxu0 0
  %4586 = vmatpush2.bf16.msra.mxu0 0
  %4587 = vmatprep.subr.bf16.mxu0 0
  %4588 = vmatpush2.bf16.msra.mxu0 0
  %4589 = vmatprep.mubr.bf16.mxu0 0
  %4590 = vmatmul.mubr.bf16.gmra.mxu0 %v4555
  %v4591 = vpop.f32.mrf.mxu0
  %v4592 = vadd.f32 0.0, %v4591
  %v4593 = vpop.f32.mrf.mxu0
  %v4594 = vpop.f32.mrf.mxu0
  %v4595 = vpop.f32.mrf.mxu0
  %4596 = vdwg.mxu0
  %v4597 = vadd.f32 %v4519, %v4592
  %v4598 = vld [vmem:[#allocation3 + $0x30] sm:$0xff]
  %v4599 = vpack.c.bf16 %v4598, %v4598
  %v4600 = vld [vmem:[%s5 + $0xc0] sm:$0xf]
  %v4601 = vld [vmem:[%s5 + $0xc4] sm:$0xf]
  %v4602 = vld [vmem:[%s5 + $0xc8] sm:$0xf]
  %v4603 = vld [vmem:[%s5 + $0xcc] sm:$0xf]
  %v4604 = vld [vmem:[%s5 + $0xd0] sm:$0xf]
  %v4605 = vld [vmem:[%s5 + $0xd4] sm:$0xf]
  %v4606 = vld [vmem:[%s5 + $0xd8] sm:$0xf]
  %v4607 = vld [vmem:[%s5 + $0xdc] sm:$0xf]
  %v4616 = vunpack.c.l.b16 %v4600
  %v4617 = vunpack.c.l.b16 %v4601
  %v4618 = vunpack.c.l.b16 %v4602
  %v4619 = vunpack.c.l.b16 %v4603
  %v4620 = vunpack.c.l.b16 %v4604
  %v4621 = vunpack.c.l.b16 %v4605
  %v4622 = vunpack.c.l.b16 %v4606
  %v4623 = vunpack.c.l.b16 %v4607
  %v4624 = vpack.c.b16 %v4617, %v4616
  %v4625 = vpack.c.b16 %v4619, %v4618
  %v4626 = vpack.c.b16 %v4621, %v4620
  %v4627 = vpack.c.b16 %v4623, %v4622
  %v4633 = vsel %vm4112, %v4599, 0
  %4635 = vmatprep.subr.bf16.mxu0 0
  %4636 = vmatpush1.bf16.msra.mxu0 0
  %4637 = vmatprep.subr.bf16.mxu0 0
  %4638 = vmatpush1.bf16.msra.mxu0 0
  %4639 = vmatprep.subr.bf16.mxu0 0
  %4640 = vmatpush1.bf16.msra.mxu0 0
  %4641 = vmatprep.subr.bf16.mxu0 0
  %4642 = vmatpush1.bf16.msra.mxu0 0
  %4643 = vmatprep.subr.bf16.mxu0 0
  %4644 = vmatpush1.bf16.msra.mxu0 %v4627
  %4645 = vmatprep.subr.bf16.mxu0 0
  %4646 = vmatpush1.bf16.msra.mxu0 %v4626
  %4647 = vmatprep.subr.bf16.mxu0 0
  %4648 = vmatpush1.bf16.msra.mxu0 %v4625
  %4649 = vmatprep.subr.bf16.mxu0 0
  %4650 = vmatpush1.bf16.msra.mxu0 %v4624
  %4651 = vmatprep.subr.bf16.mxu0 0
  %4652 = vmatpush2.bf16.msra.mxu0 0
  %4653 = vmatprep.subr.bf16.mxu0 0
  %4654 = vmatpush2.bf16.msra.mxu0 0
  %4655 = vmatprep.subr.bf16.mxu0 0
  %4656 = vmatpush2.bf16.msra.mxu0 0
  %4657 = vmatprep.subr.bf16.mxu0 0
  %4658 = vmatpush2.bf16.msra.mxu0 0
  %4659 = vmatprep.subr.bf16.mxu0 0
  %4660 = vmatpush2.bf16.msra.mxu0 0
  %4661 = vmatprep.subr.bf16.mxu0 0
  %4662 = vmatpush2.bf16.msra.mxu0 0
  %4663 = vmatprep.subr.bf16.mxu0 0
  %4664 = vmatpush2.bf16.msra.mxu0 0
  %4665 = vmatprep.subr.bf16.mxu0 0
  %4666 = vmatpush2.bf16.msra.mxu0 0
  %4667 = vmatprep.mubr.bf16.mxu0 0
  %4668 = vmatmul.mubr.bf16.gmra.mxu0 %v4633
  %v4669 = vpop.f32.mrf.mxu0
  %v4670 = vadd.f32 0.0, %v4669
  %v4671 = vpop.f32.mrf.mxu0
  %v4672 = vpop.f32.mrf.mxu0
  %v4673 = vpop.f32.mrf.mxu0
  %4674 = vdwg.mxu0
  %v4675 = vadd.f32 %v4597, %v4670
  %v4676 = vld [vmem:[#allocation3 + $0x38] sm:$0xff]
  %v4677 = vpack.c.bf16 %v4676, %v4676
  %v4678 = vld [vmem:[%s5 + $0xe0] sm:$0xf]
  %v4679 = vld [vmem:[%s5 + $0xe4] sm:$0xf]
  %v4680 = vld [vmem:[%s5 + $0xe8] sm:$0xf]
  %v4681 = vld [vmem:[%s5 + $0xec] sm:$0xf]
  %v4682 = vld [vmem:[%s5 + $0xf0] sm:$0xf]
  %v4683 = vld [vmem:[%s5 + $0xf4] sm:$0xf]
  %v4684 = vld [vmem:[%s5 + $0xf8] sm:$0xf]
  %v4685 = vld [vmem:[%s5 + $0xfc] sm:$0xf]
  %v4694 = vunpack.c.l.b16 %v4678
  %v4695 = vunpack.c.l.b16 %v4679
  %v4696 = vunpack.c.l.b16 %v4680
  %v4697 = vunpack.c.l.b16 %v4681
  %v4698 = vunpack.c.l.b16 %v4682
  %v4699 = vunpack.c.l.b16 %v4683
  %v4700 = vunpack.c.l.b16 %v4684
  %v4701 = vunpack.c.l.b16 %v4685
  %v4702 = vpack.c.b16 %v4695, %v4694
  %v4703 = vpack.c.b16 %v4697, %v4696
  %v4704 = vpack.c.b16 %v4699, %v4698
  %v4705 = vpack.c.b16 %v4701, %v4700
  %v4711 = vsel %vm4112, %v4677, 0
  %4713 = vmatprep.subr.bf16.mxu0 0
  %4714 = vmatpush1.bf16.msra.mxu0 0
  %4715 = vmatprep.subr.bf16.mxu0 0
  %4716 = vmatpush1.bf16.msra.mxu0 0
  %4717 = vmatprep.subr.bf16.mxu0 0
  %4718 = vmatpush1.bf16.msra.mxu0 0
  %4719 = vmatprep.subr.bf16.mxu0 0
  %4720 = vmatpush1.bf16.msra.mxu0 0
  %4721 = vmatprep.subr.bf16.mxu0 0
  %4722 = vmatpush1.bf16.msra.mxu0 %v4705
  %4723 = vmatprep.subr.bf16.mxu0 0
  %4724 = vmatpush1.bf16.msra.mxu0 %v4704
  %4725 = vmatprep.subr.bf16.mxu0 0
  %4726 = vmatpush1.bf16.msra.mxu0 %v4703
  %4727 = vmatprep.subr.bf16.mxu0 0
  %4728 = vmatpush1.bf16.msra.mxu0 %v4702
  %4729 = vmatprep.subr.bf16.mxu0 0
  %4730 = vmatpush2.bf16.msra.mxu0 0
  %4731 = vmatprep.subr.bf16.mxu0 0
  %4732 = vmatpush2.bf16.msra.mxu0 0
  %4733 = vmatprep.subr.bf16.mxu0 0
  %4734 = vmatpush2.bf16.msra.mxu0 0
  %4735 = vmatprep.subr.bf16.mxu0 0
  %4736 = vmatpush2.bf16.msra.mxu0 0
  %4737 = vmatprep.subr.bf16.mxu0 0
  %4738 = vmatpush2.bf16.msra.mxu0 0
  %4739 = vmatprep.subr.bf16.mxu0 0
  %4740 = vmatpush2.bf16.msra.mxu0 0
  %4741 = vmatprep.subr.bf16.mxu0 0
  %4742 = vmatpush2.bf16.msra.mxu0 0
  %4743 = vmatprep.subr.bf16.mxu0 0
  %4744 = vmatpush2.bf16.msra.mxu0 0
  %4745 = vmatprep.mubr.bf16.mxu0 0
  %4746 = vmatmul.mubr.bf16.gmra.mxu0 %v4711
  %v4747 = vpop.f32.mrf.mxu0
  %v4748 = vadd.f32 0.0, %v4747
  %v4749 = vpop.f32.mrf.mxu0
  %v4750 = vpop.f32.mrf.mxu0
  %v4751 = vpop.f32.mrf.mxu0
  %4752 = vdwg.mxu0
  %v4753 = vadd.f32 %v4675, %v4748
  %v4754 = vld [vmem:[#allocation3 + $0x40] sm:$0xff]
  %v4755 = vpack.c.bf16 %v4754, %v4754
  %v4756 = vld [vmem:[%s5 + $0x100] sm:$0xf]
  %v4757 = vld [vmem:[%s5 + $0x104] sm:$0xf]
  %v4758 = vld [vmem:[%s5 + $0x108] sm:$0xf]
  %v4759 = vld [vmem:[%s5 + $0x10c] sm:$0xf]
  %v4760 = vld [vmem:[%s5 + $0x110] sm:$0xf]
  %v4761 = vld [vmem:[%s5 + $0x114] sm:$0xf]
  %v4762 = vld [vmem:[%s5 + $0x118] sm:$0xf]
  %v4763 = vld [vmem:[%s5 + $0x11c] sm:$0xf]
  %v4772 = vunpack.c.l.b16 %v4756
  %v4773 = vunpack.c.l.b16 %v4757
  %v4774 = vunpack.c.l.b16 %v4758
  %v4775 = vunpack.c.l.b16 %v4759
  %v4776 = vunpack.c.l.b16 %v4760
  %v4777 = vunpack.c.l.b16 %v4761
  %v4778 = vunpack.c.l.b16 %v4762
  %v4779 = vunpack.c.l.b16 %v4763
  %v4780 = vpack.c.b16 %v4773, %v4772
  %v4781 = vpack.c.b16 %v4775, %v4774
  %v4782 = vpack.c.b16 %v4777, %v4776
  %v4783 = vpack.c.b16 %v4779, %v4778
  %v4789 = vsel %vm4112, %v4755, 0
  %4791 = vmatprep.subr.bf16.mxu0 0
  %4792 = vmatpush1.bf16.msra.mxu0 0
  %4793 = vmatprep.subr.bf16.mxu0 0
  %4794 = vmatpush1.bf16.msra.mxu0 0
  %4795 = vmatprep.subr.bf16.mxu0 0
  %4796 = vmatpush1.bf16.msra.mxu0 0
  %4797 = vmatprep.subr.bf16.mxu0 0
  %4798 = vmatpush1.bf16.msra.mxu0 0
  %4799 = vmatprep.subr.bf16.mxu0 0
  %4800 = vmatpush1.bf16.msra.mxu0 %v4783
  %4801 = vmatprep.subr.bf16.mxu0 0
  %4802 = vmatpush1.bf16.msra.mxu0 %v4782
  %4803 = vmatprep.subr.bf16.mxu0 0
  %4804 = vmatpush1.bf16.msra.mxu0 %v4781
  %4805 = vmatprep.subr.bf16.mxu0 0
  %4806 = vmatpush1.bf16.msra.mxu0 %v4780
  %4807 = vmatprep.subr.bf16.mxu0 0
  %4808 = vmatpush2.bf16.msra.mxu0 0
  %4809 = vmatprep.subr.bf16.mxu0 0
  %4810 = vmatpush2.bf16.msra.mxu0 0
  %4811 = vmatprep.subr.bf16.mxu0 0
  %4812 = vmatpush2.bf16.msra.mxu0 0
  %4813 = vmatprep.subr.bf16.mxu0 0
  %4814 = vmatpush2.bf16.msra.mxu0 0
  %4815 = vmatprep.subr.bf16.mxu0 0
  %4816 = vmatpush2.bf16.msra.mxu0 0
  %4817 = vmatprep.subr.bf16.mxu0 0
  %4818 = vmatpush2.bf16.msra.mxu0 0
  %4819 = vmatprep.subr.bf16.mxu0 0
  %4820 = vmatpush2.bf16.msra.mxu0 0
  %4821 = vmatprep.subr.bf16.mxu0 0
  %4822 = vmatpush2.bf16.msra.mxu0 0
  %4823 = vmatprep.mubr.bf16.mxu0 0
  %4824 = vmatmul.mubr.bf16.gmra.mxu0 %v4789
  %v4825 = vpop.f32.mrf.mxu0
  %v4826 = vadd.f32 0.0, %v4825
  %v4827 = vpop.f32.mrf.mxu0
  %v4828 = vpop.f32.mrf.mxu0
  %v4829 = vpop.f32.mrf.mxu0
  %4830 = vdwg.mxu0
  %v4831 = vadd.f32 %v4753, %v4826
  %v4832 = vmul.f32 %v4831, 0.01
  %v4833 = vmax.f32 %v4831, %v4832
  %v4834 = vpack.c.bf16 %v4833, %v4833
  %v4835 = vld [vmem:[%s7] sm:$0xff]
  %v4836 = vld [vmem:[%s7 + $0x8] sm:$0xff]
  %v4837 = vld [vmem:[%s7 + $0x10] sm:$0xff]
  %v4838 = vld [vmem:[%s7 + $0x18] sm:$0xff]
  %v4839 = vld [vmem:[%s7 + $0x20] sm:$0xff]
  %v4840 = vld [vmem:[%s7 + $0x28] sm:$0xff]
  %v4841 = vld [vmem:[%s7 + $0x30] sm:$0xff]
  %v4842 = vld [vmem:[%s7 + $0x38] sm:$0xff]
  %v4843 = vld [vmem:[%s7 + $0x40] sm:$0xff]
  %v4844 = vld [vmem:[%s7 + $0x48] sm:$0xff]
  %v4845 = vld [vmem:[%s7 + $0x50] sm:$0xff]
  %v4846 = vld [vmem:[%s7 + $0x58] sm:$0xff]
  %v4847 = vld [vmem:[%s7 + $0x60] sm:$0xff]
  %v4848 = vld [vmem:[%s7 + $0x68] sm:$0xff]
  %v4849 = vld [vmem:[%s7 + $0x70] sm:$0xff]
  %v4850 = vld [vmem:[%s7 + $0x78] sm:$0xff]
  %v4851 = vld [vmem:[%s8] sm:$0xf]
  %v4853 = vlaneseq
  %v4854 = vshrl.u32 %v4853, 7
  %v4855 = vsub.s32 0, %v4854
  %v4856 = vrot.slane %v4851, %v4855
  %v4857 = vlaneseq
  %v4858 = vshrl.u32 %v4857, 7
  %v4859 = vsub.s32 1, %v4858
  %v4860 = vrot.slane %v4851, %v4859
  %v4861 = vlaneseq
  %v4862 = vshrl.u32 %v4861, 7
  %v4863 = vsub.s32 2, %v4862
  %v4864 = vrot.slane %v4851, %v4863
  %v4865 = vlaneseq
  %v4866 = vshrl.u32 %v4865, 7
  %v4867 = vsub.s32 3, %v4866
  %v4868 = vrot.slane %v4851, %v4867
  %v4889 = vunpack.c.l.b16 %v4835
  %v4890 = vunpack.c.h.b16 %v4835
  %v4891 = vunpack.c.l.b16 %v4836
  %v4892 = vunpack.c.h.b16 %v4836
  %v4893 = vunpack.c.l.b16 %v4837
  %v4894 = vunpack.c.h.b16 %v4837
  %v4895 = vunpack.c.l.b16 %v4838
  %v4896 = vunpack.c.h.b16 %v4838
  %v4897 = vunpack.c.l.b16 %v4839
  %v4898 = vunpack.c.h.b16 %v4839
  %v4899 = vunpack.c.l.b16 %v4840
  %v4900 = vunpack.c.h.b16 %v4840
  %v4901 = vunpack.c.l.b16 %v4841
  %v4902 = vunpack.c.h.b16 %v4841
  %v4903 = vunpack.c.l.b16 %v4842
  %v4904 = vunpack.c.h.b16 %v4842
  %v4905 = vunpack.c.l.b16 %v4843
  %v4906 = vunpack.c.h.b16 %v4843
  %v4907 = vunpack.c.l.b16 %v4844
  %v4908 = vunpack.c.h.b16 %v4844
  %v4909 = vunpack.c.l.b16 %v4845
  %v4910 = vunpack.c.h.b16 %v4845
  %v4911 = vunpack.c.l.b16 %v4846
  %v4912 = vunpack.c.h.b16 %v4846
  %v4913 = vunpack.c.l.b16 %v4847
  %v4914 = vunpack.c.h.b16 %v4847
  %v4915 = vunpack.c.l.b16 %v4848
  %v4916 = vunpack.c.h.b16 %v4848
  %v4917 = vunpack.c.l.b16 %v4849
  %v4918 = vunpack.c.h.b16 %v4849
  %v4919 = vunpack.c.l.b16 %v4850
  %v4920 = vunpack.c.h.b16 %v4850
  %v4921 = vpack.c.b16 %v4893, %v4889
  %v4922 = vpack.c.b16 %v4894, %v4890
  %v4923 = vpack.c.b16 %v4895, %v4891
  %v4924 = vpack.c.b16 %v4896, %v4892
  %v4925 = vpack.c.b16 %v4901, %v4897
  %v4926 = vpack.c.b16 %v4902, %v4898
  %v4927 = vpack.c.b16 %v4903, %v4899
  %v4928 = vpack.c.b16 %v4904, %v4900
  %v4929 = vpack.c.b16 %v4909, %v4905
  %v4930 = vpack.c.b16 %v4910, %v4906
  %v4931 = vpack.c.b16 %v4911, %v4907
  %v4932 = vpack.c.b16 %v4912, %v4908
  %v4933 = vpack.c.b16 %v4917, %v4913
  %v4934 = vpack.c.b16 %v4918, %v4914
  %v4935 = vpack.c.b16 %v4919, %v4915
  %v4936 = vpack.c.b16 %v4920, %v4916
  %v4954 = vsel %vm4112, %v4834, 0
  %4956 = vmatprep.subr.bf16.mxu0 0
  %4957 = vmatpush1.bf16.msra.mxu0 0
  %4958 = vmatprep.subr.bf16.mxu0 0
  %4959 = vmatpush1.bf16.msra.mxu0 0
  %4960 = vmatprep.subr.bf16.mxu0 0
  %4961 = vmatpush1.bf16.msra.mxu0 0
  %4962 = vmatprep.subr.bf16.mxu0 0
  %4963 = vmatpush1.bf16.msra.mxu0 0
  %4964 = vmatprep.subr.bf16.mxu0 %v4934
  %4965 = vmatpush1.bf16.msra.mxu0 %v4933
  %4966 = vmatprep.subr.bf16.mxu0 %v4930
  %4967 = vmatpush1.bf16.msra.mxu0 %v4929
  %4968 = vmatprep.subr.bf16.mxu0 %v4926
  %4969 = vmatpush1.bf16.msra.mxu0 %v4925
  %4970 = vmatprep.subr.bf16.mxu0 %v4922
  %4971 = vmatpush1.bf16.msra.mxu0 %v4921
  %4972 = vmatprep.subr.bf16.mxu0 0
  %4973 = vmatpush2.bf16.msra.mxu0 0
  %4974 = vmatprep.subr.bf16.mxu0 0
  %4975 = vmatpush2.bf16.msra.mxu0 0
  %4976 = vmatprep.subr.bf16.mxu0 0
  %4977 = vmatpush2.bf16.msra.mxu0 0
  %4978 = vmatprep.subr.bf16.mxu0 0
  %4979 = vmatpush2.bf16.msra.mxu0 0
  %4980 = vmatprep.subr.bf16.mxu0 0
  %4981 = vmatpush2.bf16.msra.mxu0 0
  %4982 = vmatprep.subr.bf16.mxu0 0
  %4983 = vmatpush2.bf16.msra.mxu0 0
  %4984 = vmatprep.subr.bf16.mxu0 0
  %4985 = vmatpush2.bf16.msra.mxu0 0
  %4986 = vmatprep.subr.bf16.mxu0 0
  %4987 = vmatpush2.bf16.msra.mxu0 0
  %4988 = vmatprep.mubr.bf16.mxu0 0
  %4989 = vmatmul.mubr.bf16.gmra.mxu0 %v4954
  %v4990 = vpop.f32.mrf.mxu0
  %v4991 = vadd.f32 %v4856, %v4990
  %v4992 = vpop.f32.mrf.mxu0
  %v4993 = vadd.f32 %v4860, %v4992
  %v4994 = vpop.f32.mrf.mxu0
  %v4995 = vpop.f32.mrf.mxu0
  %4996 = vdwg.mxu0
  %4997 = vmatprep.subr.bf16.mxu0 0
  %4998 = vmatpush1.bf16.msra.mxu0 0
  %4999 = vmatprep.subr.bf16.mxu0 0
  %5000 = vmatpush1.bf16.msra.mxu0 0
  %5001 = vmatprep.subr.bf16.mxu0 0
  %5002 = vmatpush1.bf16.msra.mxu0 0
  %5003 = vmatprep.subr.bf16.mxu0 0
  %5004 = vmatpush1.bf16.msra.mxu0 0
  %5005 = vmatprep.subr.bf16.mxu0 %v4936
  %5006 = vmatpush1.bf16.msra.mxu0 %v4935
  %5007 = vmatprep.subr.bf16.mxu0 %v4932
  %5008 = vmatpush1.bf16.msra.mxu0 %v4931
  %5009 = vmatprep.subr.bf16.mxu0 %v4928
  %5010 = vmatpush1.bf16.msra.mxu0 %v4927
  %5011 = vmatprep.subr.bf16.mxu0 %v4924
  %5012 = vmatpush1.bf16.msra.mxu0 %v4923
  %5013 = vmatprep.subr.bf16.mxu0 0
  %5014 = vmatpush2.bf16.msra.mxu0 0
  %5015 = vmatprep.subr.bf16.mxu0 0
  %5016 = vmatpush2.bf16.msra.mxu0 0
  %5017 = vmatprep.subr.bf16.mxu0 0
  %5018 = vmatpush2.bf16.msra.mxu0 0
  %5019 = vmatprep.subr.bf16.mxu0 0
  %5020 = vmatpush2.bf16.msra.mxu0 0
  %5021 = vmatprep.subr.bf16.mxu0 0
  %5022 = vmatpush2.bf16.msra.mxu0 0
  %5023 = vmatprep.subr.bf16.mxu0 0
  %5024 = vmatpush2.bf16.msra.mxu0 0
  %5025 = vmatprep.subr.bf16.mxu0 0
  %5026 = vmatpush2.bf16.msra.mxu0 0
  %5027 = vmatprep.subr.bf16.mxu0 0
  %5028 = vmatpush2.bf16.msra.mxu0 0
  %5029 = vmatprep.mubr.bf16.mxu0 0
  %5030 = vmatmul.mubr.bf16.gmra.mxu0 %v4954
  %v5031 = vpop.f32.mrf.mxu0
  %v5032 = vadd.f32 %v4864, %v5031
  %v5033 = vpop.f32.mrf.mxu0
  %v5034 = vadd.f32 %v4868, %v5033
  %v5035 = vpop.f32.mrf.mxu0
  %v5036 = vpop.f32.mrf.mxu0
  %5037 = vdwg.mxu0
  %v5038 = vmax.f32 %v4991, 0.0
  %v5039 = vmax.f32 %v4993, 0.0
  %v5040 = vmax.f32 %v5032, 0.0
  %v5041 = vmax.f32 %v5034, 0.0
  %s5042 = smul.u32 4, 64
  %s5043 = smul.u32 %s5042, 4
  %s5044 = sshll.u32 %s5043, 4
  %5045 = dma.done [#allocation6], %s5044
  %v5046 = vpack.c.bf16 %v5038, %v5038
  %v5047 = vpack.c.bf16 %v5039, %v5039
  %v5048 = vpack.c.bf16 %v5040, %v5040
  %v5049 = vpack.c.bf16 %v5041, %v5041
  %v5050 = vld [vmem:[#allocation4] sm:$0xff]
  %v5051 = vld [vmem:[#allocation4 + $0x8] sm:$0xff]
  %v5052 = vld [vmem:[#allocation4 + $0x10] sm:$0xff]
  %v5053 = vld [vmem:[#allocation4 + $0x18] sm:$0xff]
  %v5054 = vld [vmem:[#allocation4 + $0x20] sm:$0xff]
  %v5055 = vld [vmem:[#allocation4 + $0x28] sm:$0xff]
  %v5056 = vld [vmem:[#allocation4 + $0x30] sm:$0xff]
  %v5057 = vld [vmem:[#allocation4 + $0x38] sm:$0xff]
  %v5058 = vld [vmem:[#allocation4 + $0x40] sm:$0xff]
  %v5059 = vld [vmem:[#allocation4 + $0x48] sm:$0xff]
  %v5060 = vld [vmem:[#allocation4 + $0x50] sm:$0xff]
  %v5061 = vld [vmem:[#allocation4 + $0x58] sm:$0xff]
  %v5062 = vld [vmem:[#allocation4 + $0x60] sm:$0xff]
  %v5063 = vld [vmem:[#allocation4 + $0x68] sm:$0xff]
  %v5064 = vld [vmem:[#allocation4 + $0x70] sm:$0xff]
  %v5065 = vld [vmem:[#allocation4 + $0x78] sm:$0xff]
  %v5066 = vld [vmem:[#allocation4 + $0x80] sm:$0xff]
  %v5067 = vld [vmem:[#allocation4 + $0x88] sm:$0xff]
  %v5068 = vld [vmem:[#allocation4 + $0x90] sm:$0xff]
  %v5069 = vld [vmem:[#allocation4 + $0x98] sm:$0xff]
  %v5070 = vld [vmem:[#allocation4 + $0xa0] sm:$0xff]
  %v5071 = vld [vmem:[#allocation4 + $0xa8] sm:$0xff]
  %v5072 = vld [vmem:[#allocation4 + $0xb0] sm:$0xff]
  %v5073 = vld [vmem:[#allocation4 + $0xb8] sm:$0xff]
  %v5074 = vld [vmem:[#allocation4 + $0xc0] sm:$0xff]
  %v5075 = vld [vmem:[#allocation4 + $0xc8] sm:$0xff]
  %v5076 = vld [vmem:[#allocation4 + $0xd0] sm:$0xff]
  %v5077 = vld [vmem:[#allocation4 + $0xd8] sm:$0xff]
  %v5078 = vld [vmem:[#allocation4 + $0xe0] sm:$0xff]
  %v5079 = vld [vmem:[#allocation4 + $0xe8] sm:$0xff]
  %v5080 = vld [vmem:[#allocation4 + $0xf0] sm:$0xff]
  %v5081 = vld [vmem:[#allocation4 + $0xf8] sm:$0xff]
  %v5082 = vld [vmem:[#allocation4 + $0x100] sm:$0xff]
  %v5083 = vld [vmem:[#allocation4 + $0x108] sm:$0xff]
  %v5084 = vld [vmem:[#allocation4 + $0x110] sm:$0xff]
  %v5085 = vld [vmem:[#allocation4 + $0x118] sm:$0xff]
  %v5086 = vld [vmem:[#allocation4 + $0x120] sm:$0xff]
  %v5087 = vld [vmem:[#allocation4 + $0x128] sm:$0xff]
  %v5088 = vld [vmem:[#allocation4 + $0x130] sm:$0xff]
  %v5089 = vld [vmem:[#allocation4 + $0x138] sm:$0xff]
  %v5090 = vld [vmem:[#allocation4 + $0x140] sm:$0xff]
  %v5091 = vld [vmem:[#allocation4 + $0x148] sm:$0xff]
  %v5092 = vld [vmem:[#allocation4 + $0x150] sm:$0xff]
  %v5093 = vld [vmem:[#allocation4 + $0x158] sm:$0xff]
  %v5094 = vld [vmem:[#allocation4 + $0x160] sm:$0xff]
  %v5095 = vld [vmem:[#allocation4 + $0x168] sm:$0xff]
  %v5096 = vld [vmem:[#allocation4 + $0x170] sm:$0xff]
  %v5097 = vld [vmem:[#allocation4 + $0x178] sm:$0xff]
  %v5098 = vld [vmem:[#allocation4 + $0x180] sm:$0xff]
  %v5099 = vld [vmem:[#allocation4 + $0x188] sm:$0xff]
  %v5100 = vld [vmem:[#allocation4 + $0x190] sm:$0xff]
  %v5101 = vld [vmem:[#allocation4 + $0x198] sm:$0xff]
  %v5102 = vld [vmem:[#allocation4 + $0x1a0] sm:$0xff]
  %v5103 = vld [vmem:[#allocation4 + $0x1a8] sm:$0xff]
  %v5104 = vld [vmem:[#allocation4 + $0x1b0] sm:$0xff]
  %v5105 = vld [vmem:[#allocation4 + $0x1b8] sm:$0xff]
  %v5106 = vld [vmem:[#allocation4 + $0x1c0] sm:$0xff]
  %v5107 = vld [vmem:[#allocation4 + $0x1c8] sm:$0xff]
  %v5108 = vld [vmem:[#allocation4 + $0x1d0] sm:$0xff]
  %v5109 = vld [vmem:[#allocation4 + $0x1d8] sm:$0xff]
  %v5110 = vld [vmem:[#allocation4 + $0x1e0] sm:$0xff]
  %v5111 = vld [vmem:[#allocation4 + $0x1e8] sm:$0xff]
  %v5112 = vld [vmem:[#allocation4 + $0x1f0] sm:$0xff]
  %v5113 = vld [vmem:[#allocation4 + $0x1f8] sm:$0xff]
  %v5114 = vld [vmem:[#allocation4 + $0x200] sm:$0xff]
  %v5115 = vld [vmem:[#allocation4 + $0x208] sm:$0xff]
  %v5116 = vld [vmem:[#allocation4 + $0x210] sm:$0xff]
  %v5117 = vld [vmem:[#allocation4 + $0x218] sm:$0xff]
  %v5118 = vld [vmem:[#allocation4 + $0x220] sm:$0xff]
  %v5119 = vld [vmem:[#allocation4 + $0x228] sm:$0xff]
  %v5120 = vld [vmem:[#allocation4 + $0x230] sm:$0xff]
  %v5121 = vld [vmem:[#allocation4 + $0x238] sm:$0xff]
  %v5122 = vld [vmem:[#allocation4 + $0x240] sm:$0xff]
  %v5123 = vld [vmem:[#allocation4 + $0x248] sm:$0xff]
  %v5124 = vld [vmem:[#allocation4 + $0x250] sm:$0xff]
  %v5125 = vld [vmem:[#allocation4 + $0x258] sm:$0xff]
  %v5126 = vld [vmem:[#allocation4 + $0x260] sm:$0xff]
  %v5127 = vld [vmem:[#allocation4 + $0x268] sm:$0xff]
  %v5128 = vld [vmem:[#allocation4 + $0x270] sm:$0xff]
  %v5129 = vld [vmem:[#allocation4 + $0x278] sm:$0xff]
  %v5130 = vld [vmem:[#allocation4 + $0x280] sm:$0xff]
  %v5131 = vld [vmem:[#allocation4 + $0x288] sm:$0xff]
  %v5132 = vld [vmem:[#allocation4 + $0x290] sm:$0xff]
  %v5133 = vld [vmem:[#allocation4 + $0x298] sm:$0xff]
  %v5134 = vld [vmem:[#allocation4 + $0x2a0] sm:$0xff]
  %v5135 = vld [vmem:[#allocation4 + $0x2a8] sm:$0xff]
  %v5136 = vld [vmem:[#allocation4 + $0x2b0] sm:$0xff]
  %v5137 = vld [vmem:[#allocation4 + $0x2b8] sm:$0xff]
  %v5138 = vld [vmem:[#allocation4 + $0x2c0] sm:$0xff]
  %v5139 = vld [vmem:[#allocation4 + $0x2c8] sm:$0xff]
  %v5140 = vld [vmem:[#allocation4 + $0x2d0] sm:$0xff]
  %v5141 = vld [vmem:[#allocation4 + $0x2d8] sm:$0xff]
  %v5142 = vld [vmem:[#allocation4 + $0x2e0] sm:$0xff]
  %v5143 = vld [vmem:[#allocation4 + $0x2e8] sm:$0xff]
  %v5144 = vld [vmem:[#allocation4 + $0x2f0] sm:$0xff]
  %v5145 = vld [vmem:[#allocation4 + $0x2f8] sm:$0xff]
  %v5146 = vld [vmem:[#allocation4 + $0x300] sm:$0xff]
  %v5147 = vld [vmem:[#allocation4 + $0x308] sm:$0xff]
  %v5148 = vld [vmem:[#allocation4 + $0x310] sm:$0xff]
  %v5149 = vld [vmem:[#allocation4 + $0x318] sm:$0xff]
  %v5150 = vld [vmem:[#allocation4 + $0x320] sm:$0xff]
  %v5151 = vld [vmem:[#allocation4 + $0x328] sm:$0xff]
  %v5152 = vld [vmem:[#allocation4 + $0x330] sm:$0xff]
  %v5153 = vld [vmem:[#allocation4 + $0x338] sm:$0xff]
  %v5154 = vld [vmem:[#allocation4 + $0x340] sm:$0xff]
  %v5155 = vld [vmem:[#allocation4 + $0x348] sm:$0xff]
  %v5156 = vld [vmem:[#allocation4 + $0x350] sm:$0xff]
  %v5157 = vld [vmem:[#allocation4 + $0x358] sm:$0xff]
  %v5158 = vld [vmem:[#allocation4 + $0x360] sm:$0xff]
  %v5159 = vld [vmem:[#allocation4 + $0x368] sm:$0xff]
  %v5160 = vld [vmem:[#allocation4 + $0x370] sm:$0xff]
  %v5161 = vld [vmem:[#allocation4 + $0x378] sm:$0xff]
  %v5162 = vld [vmem:[#allocation4 + $0x380] sm:$0xff]
  %v5163 = vld [vmem:[#allocation4 + $0x388] sm:$0xff]
  %v5164 = vld [vmem:[#allocation4 + $0x390] sm:$0xff]
  %v5165 = vld [vmem:[#allocation4 + $0x398] sm:$0xff]
  %v5166 = vld [vmem:[#allocation4 + $0x3a0] sm:$0xff]
  %v5167 = vld [vmem:[#allocation4 + $0x3a8] sm:$0xff]
  %v5168 = vld [vmem:[#allocation4 + $0x3b0] sm:$0xff]
  %v5169 = vld [vmem:[#allocation4 + $0x3b8] sm:$0xff]
  %v5170 = vld [vmem:[#allocation4 + $0x3c0] sm:$0xff]
  %v5171 = vld [vmem:[#allocation4 + $0x3c8] sm:$0xff]
  %v5172 = vld [vmem:[#allocation4 + $0x3d0] sm:$0xff]
  %v5173 = vld [vmem:[#allocation4 + $0x3d8] sm:$0xff]
  %v5174 = vld [vmem:[#allocation4 + $0x3e0] sm:$0xff]
  %v5175 = vld [vmem:[#allocation4 + $0x3e8] sm:$0xff]
  %v5176 = vld [vmem:[#allocation4 + $0x3f0] sm:$0xff]
  %v5177 = vld [vmem:[#allocation4 + $0x3f8] sm:$0xff]
  %v5178 = vld [vmem:[%s9] sm:$0xf]
  %v5180 = vlaneseq
  %v5181 = vshrl.u32 %v5180, 7
  %v5182 = vsub.s32 0, %v5181
  %v5183 = vrot.slane %v5178, %v5182
  %v5184 = vlaneseq
  %v5185 = vshrl.u32 %v5184, 7
  %v5186 = vsub.s32 1, %v5185
  %v5187 = vrot.slane %v5178, %v5186
  %v5188 = vlaneseq
  %v5189 = vshrl.u32 %v5188, 7
  %v5190 = vsub.s32 2, %v5189
  %v5191 = vrot.slane %v5178, %v5190
  %v5192 = vlaneseq
  %v5193 = vshrl.u32 %v5192, 7
  %v5194 = vsub.s32 3, %v5193
  %v5195 = vrot.slane %v5178, %v5194
  %v5328 = vunpack.c.l.b16 %v5050
  %v5329 = vunpack.c.h.b16 %v5050
  %v5330 = vunpack.c.l.b16 %v5051
  %v5331 = vunpack.c.h.b16 %v5051
  %v5332 = vunpack.c.l.b16 %v5052
  %v5333 = vunpack.c.h.b16 %v5052
  %v5334 = vunpack.c.l.b16 %v5053
  %v5335 = vunpack.c.h.b16 %v5053
  %v5336 = vunpack.c.l.b16 %v5054
  %v5337 = vunpack.c.h.b16 %v5054
  %v5338 = vunpack.c.l.b16 %v5055
  %v5339 = vunpack.c.h.b16 %v5055
  %v5340 = vunpack.c.l.b16 %v5056
  %v5341 = vunpack.c.h.b16 %v5056
  %v5342 = vunpack.c.l.b16 %v5057
  %v5343 = vunpack.c.h.b16 %v5057
  %v5344 = vunpack.c.l.b16 %v5058
  %v5345 = vunpack.c.h.b16 %v5058
  %v5346 = vunpack.c.l.b16 %v5059
  %v5347 = vunpack.c.h.b16 %v5059
  %v5348 = vunpack.c.l.b16 %v5060
  %v5349 = vunpack.c.h.b16 %v5060
  %v5350 = vunpack.c.l.b16 %v5061
  %v5351 = vunpack.c.h.b16 %v5061
  %v5352 = vunpack.c.l.b16 %v5062
  %v5353 = vunpack.c.h.b16 %v5062
  %v5354 = vunpack.c.l.b16 %v5063
  %v5355 = vunpack.c.h.b16 %v5063
  %v5356 = vunpack.c.l.b16 %v5064
  %v5357 = vunpack.c.h.b16 %v5064
  %v5358 = vunpack.c.l.b16 %v5065
  %v5359 = vunpack.c.h.b16 %v5065
  %v5360 = vunpack.c.l.b16 %v5066
  %v5361 = vunpack.c.h.b16 %v5066
  %v5362 = vunpack.c.l.b16 %v5067
  %v5363 = vunpack.c.h.b16 %v5067
  %v5364 = vunpack.c.l.b16 %v5068
  %v5365 = vunpack.c.h.b16 %v5068
  %v5366 = vunpack.c.l.b16 %v5069
  %v5367 = vunpack.c.h.b16 %v5069
  %v5368 = vunpack.c.l.b16 %v5070
  %v5369 = vunpack.c.h.b16 %v5070
  %v5370 = vunpack.c.l.b16 %v5071
  %v5371 = vunpack.c.h.b16 %v5071
  %v5372 = vunpack.c.l.b16 %v5072
  %v5373 = vunpack.c.h.b16 %v5072
  %v5374 = vunpack.c.l.b16 %v5073
  %v5375 = vunpack.c.h.b16 %v5073
  %v5376 = vunpack.c.l.b16 %v5074
  %v5377 = vunpack.c.h.b16 %v5074
  %v5378 = vunpack.c.l.b16 %v5075
  %v5379 = vunpack.c.h.b16 %v5075
  %v5380 = vunpack.c.l.b16 %v5076
  %v5381 = vunpack.c.h.b16 %v5076
  %v5382 = vunpack.c.l.b16 %v5077
  %v5383 = vunpack.c.h.b16 %v5077
  %v5384 = vunpack.c.l.b16 %v5078
  %v5385 = vunpack.c.h.b16 %v5078
  %v5386 = vunpack.c.l.b16 %v5079
  %v5387 = vunpack.c.h.b16 %v5079
  %v5388 = vunpack.c.l.b16 %v5080
  %v5389 = vunpack.c.h.b16 %v5080
  %v5390 = vunpack.c.l.b16 %v5081
  %v5391 = vunpack.c.h.b16 %v5081
  %v5392 = vunpack.c.l.b16 %v5082
  %v5393 = vunpack.c.h.b16 %v5082
  %v5394 = vunpack.c.l.b16 %v5083
  %v5395 = vunpack.c.h.b16 %v5083
  %v5396 = vunpack.c.l.b16 %v5084
  %v5397 = vunpack.c.h.b16 %v5084
  %v5398 = vunpack.c.l.b16 %v5085
  %v5399 = vunpack.c.h.b16 %v5085
  %v5400 = vunpack.c.l.b16 %v5086
  %v5401 = vunpack.c.h.b16 %v5086
  %v5402 = vunpack.c.l.b16 %v5087
  %v5403 = vunpack.c.h.b16 %v5087
  %v5404 = vunpack.c.l.b16 %v5088
  %v5405 = vunpack.c.h.b16 %v5088
  %v5406 = vunpack.c.l.b16 %v5089
  %v5407 = vunpack.c.h.b16 %v5089
  %v5408 = vunpack.c.l.b16 %v5090
  %v5409 = vunpack.c.h.b16 %v5090
  %v5410 = vunpack.c.l.b16 %v5091
  %v5411 = vunpack.c.h.b16 %v5091
  %v5412 = vunpack.c.l.b16 %v5092
  %v5413 = vunpack.c.h.b16 %v5092
  %v5414 = vunpack.c.l.b16 %v5093
  %v5415 = vunpack.c.h.b16 %v5093
  %v5416 = vunpack.c.l.b16 %v5094
  %v5417 = vunpack.c.h.b16 %v5094
  %v5418 = vunpack.c.l.b16 %v5095
  %v5419 = vunpack.c.h.b16 %v5095
  %v5420 = vunpack.c.l.b16 %v5096
  %v5421 = vunpack.c.h.b16 %v5096
  %v5422 = vunpack.c.l.b16 %v5097
  %v5423 = vunpack.c.h.b16 %v5097
  %v5424 = vunpack.c.l.b16 %v5098
  %v5425 = vunpack.c.h.b16 %v5098
  %v5426 = vunpack.c.l.b16 %v5099
  %v5427 = vunpack.c.h.b16 %v5099
  %v5428 = vunpack.c.l.b16 %v5100
  %v5429 = vunpack.c.h.b16 %v5100
  %v5430 = vunpack.c.l.b16 %v5101
  %v5431 = vunpack.c.h.b16 %v5101
  %v5432 = vunpack.c.l.b16 %v5102
  %v5433 = vunpack.c.h.b16 %v5102
  %v5434 = vunpack.c.l.b16 %v5103
  %v5435 = vunpack.c.h.b16 %v5103
  %v5436 = vunpack.c.l.b16 %v5104
  %v5437 = vunpack.c.h.b16 %v5104
  %v5438 = vunpack.c.l.b16 %v5105
  %v5439 = vunpack.c.h.b16 %v5105
  %v5440 = vunpack.c.l.b16 %v5106
  %v5441 = vunpack.c.h.b16 %v5106
  %v5442 = vunpack.c.l.b16 %v5107
  %v5443 = vunpack.c.h.b16 %v5107
  %v5444 = vunpack.c.l.b16 %v5108
  %v5445 = vunpack.c.h.b16 %v5108
  %v5446 = vunpack.c.l.b16 %v5109
  %v5447 = vunpack.c.h.b16 %v5109
  %v5448 = vunpack.c.l.b16 %v5110
  %v5449 = vunpack.c.h.b16 %v5110
  %v5450 = vunpack.c.l.b16 %v5111
  %v5451 = vunpack.c.h.b16 %v5111
  %v5452 = vunpack.c.l.b16 %v5112
  %v5453 = vunpack.c.h.b16 %v5112
  %v5454 = vunpack.c.l.b16 %v5113
  %v5455 = vunpack.c.h.b16 %v5113
  %v5456 = vunpack.c.l.b16 %v5114
  %v5457 = vunpack.c.h.b16 %v5114
  %v5458 = vunpack.c.l.b16 %v5115
  %v5459 = vunpack.c.h.b16 %v5115
  %v5460 = vunpack.c.l.b16 %v5116
  %v5461 = vunpack.c.h.b16 %v5116
  %v5462 = vunpack.c.l.b16 %v5117
  %v5463 = vunpack.c.h.b16 %v5117
  %v5464 = vunpack.c.l.b16 %v5118
  %v5465 = vunpack.c.h.b16 %v5118
  %v5466 = vunpack.c.l.b16 %v5119
  %v5467 = vunpack.c.h.b16 %v5119
  %v5468 = vunpack.c.l.b16 %v5120
  %v5469 = vunpack.c.h.b16 %v5120
  %v5470 = vunpack.c.l.b16 %v5121
  %v5471 = vunpack.c.h.b16 %v5121
  %v5472 = vunpack.c.l.b16 %v5122
  %v5473 = vunpack.c.h.b16 %v5122
  %v5474 = vunpack.c.l.b16 %v5123
  %v5475 = vunpack.c.h.b16 %v5123
  %v5476 = vunpack.c.l.b16 %v5124
  %v5477 = vunpack.c.h.b16 %v5124
  %v5478 = vunpack.c.l.b16 %v5125
  %v5479 = vunpack.c.h.b16 %v5125
  %v5480 = vunpack.c.l.b16 %v5126
  %v5481 = vunpack.c.h.b16 %v5126
  %v5482 = vunpack.c.l.b16 %v5127
  %v5483 = vunpack.c.h.b16 %v5127
  %v5484 = vunpack.c.l.b16 %v5128
  %v5485 = vunpack.c.h.b16 %v5128
  %v5486 = vunpack.c.l.b16 %v5129
  %v5487 = vunpack.c.h.b16 %v5129
  %v5488 = vunpack.c.l.b16 %v5130
  %v5489 = vunpack.c.h.b16 %v5130
  %v5490 = vunpack.c.l.b16 %v5131
  %v5491 = vunpack.c.h.b16 %v5131
  %v5492 = vunpack.c.l.b16 %v5132
  %v5493 = vunpack.c.h.b16 %v5132
  %v5494 = vunpack.c.l.b16 %v5133
  %v5495 = vunpack.c.h.b16 %v5133
  %v5496 = vunpack.c.l.b16 %v5134
  %v5497 = vunpack.c.h.b16 %v5134
  %v5498 = vunpack.c.l.b16 %v5135
  %v5499 = vunpack.c.h.b16 %v5135
  %v5500 = vunpack.c.l.b16 %v5136
  %v5501 = vunpack.c.h.b16 %v5136
  %v5502 = vunpack.c.l.b16 %v5137
  %v5503 = vunpack.c.h.b16 %v5137
  %v5504 = vunpack.c.l.b16 %v5138
  %v5505 = vunpack.c.h.b16 %v5138
  %v5506 = vunpack.c.l.b16 %v5139
  %v5507 = vunpack.c.h.b16 %v5139
  %v5508 = vunpack.c.l.b16 %v5140
  %v5509 = vunpack.c.h.b16 %v5140
  %v5510 = vunpack.c.l.b16 %v5141
  %v5511 = vunpack.c.h.b16 %v5141
  %v5512 = vunpack.c.l.b16 %v5142
  %v5513 = vunpack.c.h.b16 %v5142
  %v5514 = vunpack.c.l.b16 %v5143
  %v5515 = vunpack.c.h.b16 %v5143
  %v5516 = vunpack.c.l.b16 %v5144
  %v5517 = vunpack.c.h.b16 %v5144
  %v5518 = vunpack.c.l.b16 %v5145
  %v5519 = vunpack.c.h.b16 %v5145
  %v5520 = vunpack.c.l.b16 %v5146
  %v5521 = vunpack.c.h.b16 %v5146
  %v5522 = vunpack.c.l.b16 %v5147
  %v5523 = vunpack.c.h.b16 %v5147
  %v5524 = vunpack.c.l.b16 %v5148
  %v5525 = vunpack.c.h.b16 %v5148
  %v5526 = vunpack.c.l.b16 %v5149
  %v5527 = vunpack.c.h.b16 %v5149
  %v5528 = vunpack.c.l.b16 %v5150
  %v5529 = vunpack.c.h.b16 %v5150
  %v5530 = vunpack.c.l.b16 %v5151
  %v5531 = vunpack.c.h.b16 %v5151
  %v5532 = vunpack.c.l.b16 %v5152
  %v5533 = vunpack.c.h.b16 %v5152
  %v5534 = vunpack.c.l.b16 %v5153
  %v5535 = vunpack.c.h.b16 %v5153
  %v5536 = vunpack.c.l.b16 %v5154
  %v5537 = vunpack.c.h.b16 %v5154
  %v5538 = vunpack.c.l.b16 %v5155
  %v5539 = vunpack.c.h.b16 %v5155
  %v5540 = vunpack.c.l.b16 %v5156
  %v5541 = vunpack.c.h.b16 %v5156
  %v5542 = vunpack.c.l.b16 %v5157
  %v5543 = vunpack.c.h.b16 %v5157
  %v5544 = vunpack.c.l.b16 %v5158
  %v5545 = vunpack.c.h.b16 %v5158
  %v5546 = vunpack.c.l.b16 %v5159
  %v5547 = vunpack.c.h.b16 %v5159
  %v5548 = vunpack.c.l.b16 %v5160
  %v5549 = vunpack.c.h.b16 %v5160
  %v5550 = vunpack.c.l.b16 %v5161
  %v5551 = vunpack.c.h.b16 %v5161
  %v5552 = vunpack.c.l.b16 %v5162
  %v5553 = vunpack.c.h.b16 %v5162
  %v5554 = vunpack.c.l.b16 %v5163
  %v5555 = vunpack.c.h.b16 %v5163
  %v5556 = vunpack.c.l.b16 %v5164
  %v5557 = vunpack.c.h.b16 %v5164
  %v5558 = vunpack.c.l.b16 %v5165
  %v5559 = vunpack.c.h.b16 %v5165
  %v5560 = vunpack.c.l.b16 %v5166
  %v5561 = vunpack.c.h.b16 %v5166
  %v5562 = vunpack.c.l.b16 %v5167
  %v5563 = vunpack.c.h.b16 %v5167
  %v5564 = vunpack.c.l.b16 %v5168
  %v5565 = vunpack.c.h.b16 %v5168
  %v5566 = vunpack.c.l.b16 %v5169
  %v5567 = vunpack.c.h.b16 %v5169
  %v5568 = vunpack.c.l.b16 %v5170
  %v5569 = vunpack.c.h.b16 %v5170
  %v5570 = vunpack.c.l.b16 %v5171
  %v5571 = vunpack.c.h.b16 %v5171
  %v5572 = vunpack.c.l.b16 %v5172
  %v5573 = vunpack.c.h.b16 %v5172
  %v5574 = vunpack.c.l.b16 %v5173
  %v5575 = vunpack.c.h.b16 %v5173
  %v5576 = vunpack.c.l.b16 %v5174
  %v5577 = vunpack.c.h.b16 %v5174
  %v5578 = vunpack.c.l.b16 %v5175
  %v5579 = vunpack.c.h.b16 %v5175
  %v5580 = vunpack.c.l.b16 %v5176
  %v5581 = vunpack.c.h.b16 %v5176
  %v5582 = vunpack.c.l.b16 %v5177
  %v5583 = vunpack.c.h.b16 %v5177
  %v5584 = vpack.c.b16 %v5332, %v5328
  %v5585 = vpack.c.b16 %v5333, %v5329
  %v5586 = vpack.c.b16 %v5334, %v5330
  %v5587 = vpack.c.b16 %v5335, %v5331
  %v5588 = vpack.c.b16 %v5340, %v5336
  %v5589 = vpack.c.b16 %v5341, %v5337
  %v5590 = vpack.c.b16 %v5342, %v5338
  %v5591 = vpack.c.b16 %v5343, %v5339
  %v5592 = vpack.c.b16 %v5348, %v5344
  %v5593 = vpack.c.b16 %v5349, %v5345
  %v5594 = vpack.c.b16 %v5350, %v5346
  %v5595 = vpack.c.b16 %v5351, %v5347
  %v5596 = vpack.c.b16 %v5356, %v5352
  %v5597 = vpack.c.b16 %v5357, %v5353
  %v5598 = vpack.c.b16 %v5358, %v5354
  %v5599 = vpack.c.b16 %v5359, %v5355
  %v5600 = vpack.c.b16 %v5364, %v5360
  %v5601 = vpack.c.b16 %v5365, %v5361
  %v5602 = vpack.c.b16 %v5366, %v5362
  %v5603 = vpack.c.b16 %v5367, %v5363
  %v5604 = vpack.c.b16 %v5372, %v5368
  %v5605 = vpack.c.b16 %v5373, %v5369
  %v5606 = vpack.c.b16 %v5374, %v5370
  %v5607 = vpack.c.b16 %v5375, %v5371
  %v5608 = vpack.c.b16 %v5380, %v5376
  %v5609 = vpack.c.b16 %v5381, %v5377
  %v5610 = vpack.c.b16 %v5382, %v5378
  %v5611 = vpack.c.b16 %v5383, %v5379
  %v5612 = vpack.c.b16 %v5388, %v5384
  %v5613 = vpack.c.b16 %v5389, %v5385
  %v5614 = vpack.c.b16 %v5390, %v5386
  %v5615 = vpack.c.b16 %v5391, %v5387
  %v5616 = vpack.c.b16 %v5396, %v5392
  %v5617 = vpack.c.b16 %v5397, %v5393
  %v5618 = vpack.c.b16 %v5398, %v5394
  %v5619 = vpack.c.b16 %v5399, %v5395
  %v5620 = vpack.c.b16 %v5404, %v5400
  %v5621 = vpack.c.b16 %v5405, %v5401
  %v5622 = vpack.c.b16 %v5406, %v5402
  %v5623 = vpack.c.b16 %v5407, %v5403
  %v5624 = vpack.c.b16 %v5412, %v5408
  %v5625 = vpack.c.b16 %v5413, %v5409
  %v5626 = vpack.c.b16 %v5414, %v5410
  %v5627 = vpack.c.b16 %v5415, %v5411
  %v5628 = vpack.c.b16 %v5420, %v5416
  %v5629 = vpack.c.b16 %v5421, %v5417
  %v5630 = vpack.c.b16 %v5422, %v5418
  %v5631 = vpack.c.b16 %v5423, %v5419
  %v5632 = vpack.c.b16 %v5428, %v5424
  %v5633 = vpack.c.b16 %v5429, %v5425
  %v5634 = vpack.c.b16 %v5430, %v5426
  %v5635 = vpack.c.b16 %v5431, %v5427
  %v5636 = vpack.c.b16 %v5436, %v5432
  %v5637 = vpack.c.b16 %v5437, %v5433
  %v5638 = vpack.c.b16 %v5438, %v5434
  %v5639 = vpack.c.b16 %v5439, %v5435
  %v5640 = vpack.c.b16 %v5444, %v5440
  %v5641 = vpack.c.b16 %v5445, %v5441
  %v5642 = vpack.c.b16 %v5446, %v5442
  %v5643 = vpack.c.b16 %v5447, %v5443
  %v5644 = vpack.c.b16 %v5452, %v5448
  %v5645 = vpack.c.b16 %v5453, %v5449
  %v5646 = vpack.c.b16 %v5454, %v5450
  %v5647 = vpack.c.b16 %v5455, %v5451
  %v5648 = vpack.c.b16 %v5460, %v5456
  %v5649 = vpack.c.b16 %v5461, %v5457
  %v5650 = vpack.c.b16 %v5462, %v5458
  %v5651 = vpack.c.b16 %v5463, %v5459
  %v5652 = vpack.c.b16 %v5468, %v5464
  %v5653 = vpack.c.b16 %v5469, %v5465
  %v5654 = vpack.c.b16 %v5470, %v5466
  %v5655 = vpack.c.b16 %v5471, %v5467
  %v5656 = vpack.c.b16 %v5476, %v5472
  %v5657 = vpack.c.b16 %v5477, %v5473
  %v5658 = vpack.c.b16 %v5478, %v5474
  %v5659 = vpack.c.b16 %v5479, %v5475
  %v5660 = vpack.c.b16 %v5484, %v5480
  %v5661 = vpack.c.b16 %v5485, %v5481
  %v5662 = vpack.c.b16 %v5486, %v5482
  %v5663 = vpack.c.b16 %v5487, %v5483
  %v5664 = vpack.c.b16 %v5492, %v5488
  %v5665 = vpack.c.b16 %v5493, %v5489
  %v5666 = vpack.c.b16 %v5494, %v5490
  %v5667 = vpack.c.b16 %v5495, %v5491
  %v5668 = vpack.c.b16 %v5500, %v5496
  %v5669 = vpack.c.b16 %v5501, %v5497
  %v5670 = vpack.c.b16 %v5502, %v5498
  %v5671 = vpack.c.b16 %v5503, %v5499
  %v5672 = vpack.c.b16 %v5508, %v5504
  %v5673 = vpack.c.b16 %v5509, %v5505
  %v5674 = vpack.c.b16 %v5510, %v5506
  %v5675 = vpack.c.b16 %v5511, %v5507
  %v5676 = vpack.c.b16 %v5516, %v5512
  %v5677 = vpack.c.b16 %v5517, %v5513
  %v5678 = vpack.c.b16 %v5518, %v5514
  %v5679 = vpack.c.b16 %v5519, %v5515
  %v5680 = vpack.c.b16 %v5524, %v5520
  %v5681 = vpack.c.b16 %v5525, %v5521
  %v5682 = vpack.c.b16 %v5526, %v5522
  %v5683 = vpack.c.b16 %v5527, %v5523
  %v5684 = vpack.c.b16 %v5532, %v5528
  %v5685 = vpack.c.b16 %v5533, %v5529
  %v5686 = vpack.c.b16 %v5534, %v5530
  %v5687 = vpack.c.b16 %v5535, %v5531
  %v5688 = vpack.c.b16 %v5540, %v5536
  %v5689 = vpack.c.b16 %v5541, %v5537
  %v5690 = vpack.c.b16 %v5542, %v5538
  %v5691 = vpack.c.b16 %v5543, %v5539
  %v5692 = vpack.c.b16 %v5548, %v5544
  %v5693 = vpack.c.b16 %v5549, %v5545
  %v5694 = vpack.c.b16 %v5550, %v5546
  %v5695 = vpack.c.b16 %v5551, %v5547
  %v5696 = vpack.c.b16 %v5556, %v5552
  %v5697 = vpack.c.b16 %v5557, %v5553
  %v5698 = vpack.c.b16 %v5558, %v5554
  %v5699 = vpack.c.b16 %v5559, %v5555
  %v5700 = vpack.c.b16 %v5564, %v5560
  %v5701 = vpack.c.b16 %v5565, %v5561
  %v5702 = vpack.c.b16 %v5566, %v5562
  %v5703 = vpack.c.b16 %v5567, %v5563
  %v5704 = vpack.c.b16 %v5572, %v5568
  %v5705 = vpack.c.b16 %v5573, %v5569
  %v5706 = vpack.c.b16 %v5574, %v5570
  %v5707 = vpack.c.b16 %v5575, %v5571
  %v5708 = vpack.c.b16 %v5580, %v5576
  %v5709 = vpack.c.b16 %v5581, %v5577
  %v5710 = vpack.c.b16 %v5582, %v5578
  %v5711 = vpack.c.b16 %v5583, %v5579
  %5840 = vmatprep.subr.bf16.mxu0 %v5613
  %5841 = vmatpush1.bf16.msra.mxu0 %v5612
  %5842 = vmatprep.subr.bf16.mxu0 %v5609
  %5843 = vmatpush1.bf16.msra.mxu0 %v5608
  %5844 = vmatprep.subr.bf16.mxu0 %v5605
  %5845 = vmatpush1.bf16.msra.mxu0 %v5604
  %5846 = vmatprep.subr.bf16.mxu0 %v5601
  %5847 = vmatpush1.bf16.msra.mxu0 %v5600
  %5848 = vmatprep.subr.bf16.mxu0 %v5597
  %5849 = vmatpush1.bf16.msra.mxu0 %v5596
  %5850 = vmatprep.subr.bf16.mxu0 %v5593
  %5851 = vmatpush1.bf16.msra.mxu0 %v5592
  %5852 = vmatprep.subr.bf16.mxu0 %v5589
  %5853 = vmatpush1.bf16.msra.mxu0 %v5588
  %5854 = vmatprep.subr.bf16.mxu0 %v5585
  %5855 = vmatpush1.bf16.msra.mxu0 %v5584
  %5856 = vmatprep.subr.bf16.mxu0 %v5645
  %5857 = vmatpush2.bf16.msra.mxu0 %v5644
  %5858 = vmatprep.subr.bf16.mxu0 %v5641
  %5859 = vmatpush2.bf16.msra.mxu0 %v5640
  %5860 = vmatprep.subr.bf16.mxu0 %v5637
  %5861 = vmatpush2.bf16.msra.mxu0 %v5636
  %5862 = vmatprep.subr.bf16.mxu0 %v5633
  %5863 = vmatpush2.bf16.msra.mxu0 %v5632
  %5864 = vmatprep.subr.bf16.mxu0 %v5629
  %5865 = vmatpush2.bf16.msra.mxu0 %v5628
  %5866 = vmatprep.subr.bf16.mxu0 %v5625
  %5867 = vmatpush2.bf16.msra.mxu0 %v5624
  %5868 = vmatprep.subr.bf16.mxu0 %v5621
  %5869 = vmatpush2.bf16.msra.mxu0 %v5620
  %5870 = vmatprep.subr.bf16.mxu0 %v5617
  %5871 = vmatpush2.bf16.msra.mxu0 %v5616
  %5872 = vmatprep.mubr.bf16.mxu0 %v5047
  %5873 = vmatmul.mubr.bf16.gmra.mxu0 %v5046
  %v5874 = vpop.f32.mrf.mxu0
  %v5875 = vadd.f32 %v5183, %v5874
  %v5876 = vpop.f32.mrf.mxu0
  %v5877 = vadd.f32 %v5187, %v5876
  %v5878 = vpop.f32.mrf.mxu0
  %v5879 = vpop.f32.mrf.mxu0
  %5880 = vdwg.mxu0
  %5881 = vmatprep.subr.bf16.mxu0 %v5677
  %5882 = vmatpush1.bf16.msra.mxu0 %v5676
  %5883 = vmatprep.subr.bf16.mxu0 %v5673
  %5884 = vmatpush1.bf16.msra.mxu0 %v5672
  %5885 = vmatprep.subr.bf16.mxu0 %v5669
  %5886 = vmatpush1.bf16.msra.mxu0 %v5668
  %5887 = vmatprep.subr.bf16.mxu0 %v5665
  %5888 = vmatpush1.bf16.msra.mxu0 %v5664
  %5889 = vmatprep.subr.bf16.mxu0 %v5661
  %5890 = vmatpush1.bf16.msra.mxu0 %v5660
  %5891 = vmatprep.subr.bf16.mxu0 %v5657
  %5892 = vmatpush1.bf16.msra.mxu0 %v5656
  %5893 = vmatprep.subr.bf16.mxu0 %v5653
  %5894 = vmatpush1.bf16.msra.mxu0 %v5652
  %5895 = vmatprep.subr.bf16.mxu0 %v5649
  %5896 = vmatpush1.bf16.msra.mxu0 %v5648
  %5897 = vmatprep.subr.bf16.mxu0 %v5709
  %5898 = vmatpush2.bf16.msra.mxu0 %v5708
  %5899 = vmatprep.subr.bf16.mxu0 %v5705
  %5900 = vmatpush2.bf16.msra.mxu0 %v5704
  %5901 = vmatprep.subr.bf16.mxu0 %v5701
  %5902 = vmatpush2.bf16.msra.mxu0 %v5700
  %5903 = vmatprep.subr.bf16.mxu0 %v5697
  %5904 = vmatpush2.bf16.msra.mxu0 %v5696
  %5905 = vmatprep.subr.bf16.mxu0 %v5693
  %5906 = vmatpush2.bf16.msra.mxu0 %v5692
  %5907 = vmatprep.subr.bf16.mxu0 %v5689
  %5908 = vmatpush2.bf16.msra.mxu0 %v5688
  %5909 = vmatprep.subr.bf16.mxu0 %v5685
  %5910 = vmatpush2.bf16.msra.mxu0 %v5684
  %5911 = vmatprep.subr.bf16.mxu0 %v5681
  %5912 = vmatpush2.bf16.msra.mxu0 %v5680
  %5913 = vmatprep.mubr.bf16.mxu0 %v5049
  %5914 = vmatmul.mubr.bf16.gmra.mxu0 %v5048
  %v5915 = vpop.f32.mrf.mxu0
  %v5916 = vadd.f32 %v5875, %v5915
  %v5917 = vpop.f32.mrf.mxu0
  %v5918 = vadd.f32 %v5877, %v5917
  %v5919 = vpop.f32.mrf.mxu0
  %v5920 = vpop.f32.mrf.mxu0
  %5921 = vdwg.mxu0
  %5922 = vmatprep.subr.bf16.mxu0 %v5615
  %5923 = vmatpush1.bf16.msra.mxu0 %v5614
  %5924 = vmatprep.subr.bf16.mxu0 %v5611
  %5925 = vmatpush1.bf16.msra.mxu0 %v5610
  %5926 = vmatprep.subr.bf16.mxu0 %v5607
  %5927 = vmatpush1.bf16.msra.mxu0 %v5606
  %5928 = vmatprep.subr.bf16.mxu0 %v5603
  %5929 = vmatpush1.bf16.msra.mxu0 %v5602
  %5930 = vmatprep.subr.bf16.mxu0 %v5599
  %5931 = vmatpush1.bf16.msra.mxu0 %v5598
  %5932 = vmatprep.subr.bf16.mxu0 %v5595
  %5933 = vmatpush1.bf16.msra.mxu0 %v5594
  %5934 = vmatprep.subr.bf16.mxu0 %v5591
  %5935 = vmatpush1.bf16.msra.mxu0 %v5590
  %5936 = vmatprep.subr.bf16.mxu0 %v5587
  %5937 = vmatpush1.bf16.msra.mxu0 %v5586
  %5938 = vmatprep.subr.bf16.mxu0 %v5647
  %5939 = vmatpush2.bf16.msra.mxu0 %v5646
  %5940 = vmatprep.subr.bf16.mxu0 %v5643
  %5941 = vmatpush2.bf16.msra.mxu0 %v5642
  %5942 = vmatprep.subr.bf16.mxu0 %v5639
  %5943 = vmatpush2.bf16.msra.mxu0 %v5638
  %5944 = vmatprep.subr.bf16.mxu0 %v5635
  %5945 = vmatpush2.bf16.msra.mxu0 %v5634
  %5946 = vmatprep.subr.bf16.mxu0 %v5631
  %5947 = vmatpush2.bf16.msra.mxu0 %v5630
  %5948 = vmatprep.subr.bf16.mxu0 %v5627
  %5949 = vmatpush2.bf16.msra.mxu0 %v5626
  %5950 = vmatprep.subr.bf16.mxu0 %v5623
  %5951 = vmatpush2.bf16.msra.mxu0 %v5622
  %5952 = vmatprep.subr.bf16.mxu0 %v5619
  %5953 = vmatpush2.bf16.msra.mxu0 %v5618
  %5954 = vmatprep.mubr.bf16.mxu0 %v5047
  %5955 = vmatmul.mubr.bf16.gmra.mxu0 %v5046
  %v5956 = vpop.f32.mrf.mxu0
  %v5957 = vadd.f32 %v5191, %v5956
  %v5958 = vpop.f32.mrf.mxu0
  %v5959 = vadd.f32 %v5195, %v5958
  %v5960 = vpop.f32.mrf.mxu0
  %v5961 = vpop.f32.mrf.mxu0
  %5962 = vdwg.mxu0
  %5963 = vmatprep.subr.bf16.mxu0 %v5679
  %5964 = vmatpush1.bf16.msra.mxu0 %v5678
  %5965 = vmatprep.subr.bf16.mxu0 %v5675
  %5966 = vmatpush1.bf16.msra.mxu0 %v5674
  %5967 = vmatprep.subr.bf16.mxu0 %v5671
  %5968 = vmatpush1.bf16.msra.mxu0 %v5670
  %5969 = vmatprep.subr.bf16.mxu0 %v5667
  %5970 = vmatpush1.bf16.msra.mxu0 %v5666
  %5971 = vmatprep.subr.bf16.mxu0 %v5663
  %5972 = vmatpush1.bf16.msra.mxu0 %v5662
  %5973 = vmatprep.subr.bf16.mxu0 %v5659
  %5974 = vmatpush1.bf16.msra.mxu0 %v5658
  %5975 = vmatprep.subr.bf16.mxu0 %v5655
  %5976 = vmatpush1.bf16.msra.mxu0 %v5654
  %5977 = vmatprep.subr.bf16.mxu0 %v5651
  %5978 = vmatpush1.bf16.msra.mxu0 %v5650
  %5979 = vmatprep.subr.bf16.mxu0 %v5711
  %5980 = vmatpush2.bf16.msra.mxu0 %v5710
  %5981 = vmatprep.subr.bf16.mxu0 %v5707
  %5982 = vmatpush2.bf16.msra.mxu0 %v5706
  %5983 = vmatprep.subr.bf16.mxu0 %v5703
  %5984 = vmatpush2.bf16.msra.mxu0 %v5702
  %5985 = vmatprep.subr.bf16.mxu0 %v5699
  %5986 = vmatpush2.bf16.msra.mxu0 %v5698
  %5987 = vmatprep.subr.bf16.mxu0 %v5695
  %5988 = vmatpush2.bf16.msra.mxu0 %v5694
  %5989 = vmatprep.subr.bf16.mxu0 %v5691
  %5990 = vmatpush2.bf16.msra.mxu0 %v5690
  %5991 = vmatprep.subr.bf16.mxu0 %v5687
  %5992 = vmatpush2.bf16.msra.mxu0 %v5686
  %5993 = vmatprep.subr.bf16.mxu0 %v5683
  %5994 = vmatpush2.bf16.msra.mxu0 %v5682
  %5995 = vmatprep.mubr.bf16.mxu0 %v5049
  %5996 = vmatmul.mubr.bf16.gmra.mxu0 %v5048
  %v5997 = vpop.f32.mrf.mxu0
  %v5998 = vadd.f32 %v5957, %v5997
  %v5999 = vpop.f32.mrf.mxu0
  %v6000 = vadd.f32 %v5959, %v5999
  %v6001 = vpop.f32.mrf.mxu0
  %v6002 = vpop.f32.mrf.mxu0
  %6003 = vdwg.mxu0
  %v6004 = vmax.f32 %v5916, 0.0
  %v6005 = vmax.f32 %v5918, 0.0
  %v6006 = vmax.f32 %v5998, 0.0
  %v6007 = vmax.f32 %v6000, 0.0
  %s6008 = sshll.u32 %s5043, 4
  %6009 = dma.done %s338, %s6008
  %v6010 = vpack.c.bf16 %v6004, %v6004
  %v6011 = vpack.c.bf16 %v6005, %v6005
  %v6012 = vpack.c.bf16 %v6006, %v6006
  %v6013 = vpack.c.bf16 %v6007, %v6007
  %v6014 = vld [vmem:[#allocation5] sm:$0xff]
  %v6015 = vld [vmem:[#allocation5 + $0x8] sm:$0xff]
  %v6016 = vld [vmem:[#allocation5 + $0x10] sm:$0xff]
  %v6017 = vld [vmem:[#allocation5 + $0x18] sm:$0xff]
  %v6018 = vld [vmem:[#allocation5 + $0x20] sm:$0xff]
  %v6019 = vld [vmem:[#allocation5 + $0x28] sm:$0xff]
  %v6020 = vld [vmem:[#allocation5 + $0x30] sm:$0xff]
  %v6021 = vld [vmem:[#allocation5 + $0x38] sm:$0xff]
  %v6022 = vld [vmem:[#allocation5 + $0x40] sm:$0xff]
  %v6023 = vld [vmem:[#allocation5 + $0x48] sm:$0xff]
  %v6024 = vld [vmem:[#allocation5 + $0x50] sm:$0xff]
  %v6025 = vld [vmem:[#allocation5 + $0x58] sm:$0xff]
  %v6026 = vld [vmem:[#allocation5 + $0x60] sm:$0xff]
  %v6027 = vld [vmem:[#allocation5 + $0x68] sm:$0xff]
  %v6028 = vld [vmem:[#allocation5 + $0x70] sm:$0xff]
  %v6029 = vld [vmem:[#allocation5 + $0x78] sm:$0xff]
  %v6030 = vld [vmem:[#allocation5 + $0x80] sm:$0xff]
  %v6031 = vld [vmem:[#allocation5 + $0x88] sm:$0xff]
  %v6032 = vld [vmem:[#allocation5 + $0x90] sm:$0xff]
  %v6033 = vld [vmem:[#allocation5 + $0x98] sm:$0xff]
  %v6034 = vld [vmem:[#allocation5 + $0xa0] sm:$0xff]
  %v6035 = vld [vmem:[#allocation5 + $0xa8] sm:$0xff]
  %v6036 = vld [vmem:[#allocation5 + $0xb0] sm:$0xff]
  %v6037 = vld [vmem:[#allocation5 + $0xb8] sm:$0xff]
  %v6038 = vld [vmem:[#allocation5 + $0xc0] sm:$0xff]
  %v6039 = vld [vmem:[#allocation5 + $0xc8] sm:$0xff]
  %v6040 = vld [vmem:[#allocation5 + $0xd0] sm:$0xff]
  %v6041 = vld [vmem:[#allocation5 + $0xd8] sm:$0xff]
  %v6042 = vld [vmem:[#allocation5 + $0xe0] sm:$0xff]
  %v6043 = vld [vmem:[#allocation5 + $0xe8] sm:$0xff]
  %v6044 = vld [vmem:[#allocation5 + $0xf0] sm:$0xff]
  %v6045 = vld [vmem:[#allocation5 + $0xf8] sm:$0xff]
  %v6046 = vld [vmem:[#allocation5 + $0x100] sm:$0xff]
  %v6047 = vld [vmem:[#allocation5 + $0x108] sm:$0xff]
  %v6048 = vld [vmem:[#allocation5 + $0x110] sm:$0xff]
  %v6049 = vld [vmem:[#allocation5 + $0x118] sm:$0xff]
  %v6050 = vld [vmem:[#allocation5 + $0x120] sm:$0xff]
  %v6051 = vld [vmem:[#allocation5 + $0x128] sm:$0xff]
  %v6052 = vld [vmem:[#allocation5 + $0x130] sm:$0xff]
  %v6053 = vld [vmem:[#allocation5 + $0x138] sm:$0xff]
  %v6054 = vld [vmem:[#allocation5 + $0x140] sm:$0xff]
  %v6055 = vld [vmem:[#allocation5 + $0x148] sm:$0xff]
  %v6056 = vld [vmem:[#allocation5 + $0x150] sm:$0xff]
  %v6057 = vld [vmem:[#allocation5 + $0x158] sm:$0xff]
  %v6058 = vld [vmem:[#allocation5 + $0x160] sm:$0xff]
  %v6059 = vld [vmem:[#allocation5 + $0x168] sm:$0xff]
  %v6060 = vld [vmem:[#allocation5 + $0x170] sm:$0xff]
  %v6061 = vld [vmem:[#allocation5 + $0x178] sm:$0xff]
  %v6062 = vld [vmem:[#allocation5 + $0x180] sm:$0xff]
  %v6063 = vld [vmem:[#allocation5 + $0x188] sm:$0xff]
  %v6064 = vld [vmem:[#allocation5 + $0x190] sm:$0xff]
  %v6065 = vld [vmem:[#allocation5 + $0x198] sm:$0xff]
  %v6066 = vld [vmem:[#allocation5 + $0x1a0] sm:$0xff]
  %v6067 = vld [vmem:[#allocation5 + $0x1a8] sm:$0xff]
  %v6068 = vld [vmem:[#allocation5 + $0x1b0] sm:$0xff]
  %v6069 = vld [vmem:[#allocation5 + $0x1b8] sm:$0xff]
  %v6070 = vld [vmem:[#allocation5 + $0x1c0] sm:$0xff]
  %v6071 = vld [vmem:[#allocation5 + $0x1c8] sm:$0xff]
  %v6072 = vld [vmem:[#allocation5 + $0x1d0] sm:$0xff]
  %v6073 = vld [vmem:[#allocation5 + $0x1d8] sm:$0xff]
  %v6074 = vld [vmem:[#allocation5 + $0x1e0] sm:$0xff]
  %v6075 = vld [vmem:[#allocation5 + $0x1e8] sm:$0xff]
  %v6076 = vld [vmem:[#allocation5 + $0x1f0] sm:$0xff]
  %v6077 = vld [vmem:[#allocation5 + $0x1f8] sm:$0xff]
  %v6078 = vld [vmem:[#allocation5 + $0x200] sm:$0xff]
  %v6079 = vld [vmem:[#allocation5 + $0x208] sm:$0xff]
  %v6080 = vld [vmem:[#allocation5 + $0x210] sm:$0xff]
  %v6081 = vld [vmem:[#allocation5 + $0x218] sm:$0xff]
  %v6082 = vld [vmem:[#allocation5 + $0x220] sm:$0xff]
  %v6083 = vld [vmem:[#allocation5 + $0x228] sm:$0xff]
  %v6084 = vld [vmem:[#allocation5 + $0x230] sm:$0xff]
  %v6085 = vld [vmem:[#allocation5 + $0x238] sm:$0xff]
  %v6086 = vld [vmem:[#allocation5 + $0x240] sm:$0xff]
  %v6087 = vld [vmem:[#allocation5 + $0x248] sm:$0xff]
  %v6088 = vld [vmem:[#allocation5 + $0x250] sm:$0xff]
  %v6089 = vld [vmem:[#allocation5 + $0x258] sm:$0xff]
  %v6090 = vld [vmem:[#allocation5 + $0x260] sm:$0xff]
  %v6091 = vld [vmem:[#allocation5 + $0x268] sm:$0xff]
  %v6092 = vld [vmem:[#allocation5 + $0x270] sm:$0xff]
  %v6093 = vld [vmem:[#allocation5 + $0x278] sm:$0xff]
  %v6094 = vld [vmem:[#allocation5 + $0x280] sm:$0xff]
  %v6095 = vld [vmem:[#allocation5 + $0x288] sm:$0xff]
  %v6096 = vld [vmem:[#allocation5 + $0x290] sm:$0xff]
  %v6097 = vld [vmem:[#allocation5 + $0x298] sm:$0xff]
  %v6098 = vld [vmem:[#allocation5 + $0x2a0] sm:$0xff]
  %v6099 = vld [vmem:[#allocation5 + $0x2a8] sm:$0xff]
  %v6100 = vld [vmem:[#allocation5 + $0x2b0] sm:$0xff]
  %v6101 = vld [vmem:[#allocation5 + $0x2b8] sm:$0xff]
  %v6102 = vld [vmem:[#allocation5 + $0x2c0] sm:$0xff]
  %v6103 = vld [vmem:[#allocation5 + $0x2c8] sm:$0xff]
  %v6104 = vld [vmem:[#allocation5 + $0x2d0] sm:$0xff]
  %v6105 = vld [vmem:[#allocation5 + $0x2d8] sm:$0xff]
  %v6106 = vld [vmem:[#allocation5 + $0x2e0] sm:$0xff]
  %v6107 = vld [vmem:[#allocation5 + $0x2e8] sm:$0xff]
  %v6108 = vld [vmem:[#allocation5 + $0x2f0] sm:$0xff]
  %v6109 = vld [vmem:[#allocation5 + $0x2f8] sm:$0xff]
  %v6110 = vld [vmem:[#allocation5 + $0x300] sm:$0xff]
  %v6111 = vld [vmem:[#allocation5 + $0x308] sm:$0xff]
  %v6112 = vld [vmem:[#allocation5 + $0x310] sm:$0xff]
  %v6113 = vld [vmem:[#allocation5 + $0x318] sm:$0xff]
  %v6114 = vld [vmem:[#allocation5 + $0x320] sm:$0xff]
  %v6115 = vld [vmem:[#allocation5 + $0x328] sm:$0xff]
  %v6116 = vld [vmem:[#allocation5 + $0x330] sm:$0xff]
  %v6117 = vld [vmem:[#allocation5 + $0x338] sm:$0xff]
  %v6118 = vld [vmem:[#allocation5 + $0x340] sm:$0xff]
  %v6119 = vld [vmem:[#allocation5 + $0x348] sm:$0xff]
  %v6120 = vld [vmem:[#allocation5 + $0x350] sm:$0xff]
  %v6121 = vld [vmem:[#allocation5 + $0x358] sm:$0xff]
  %v6122 = vld [vmem:[#allocation5 + $0x360] sm:$0xff]
  %v6123 = vld [vmem:[#allocation5 + $0x368] sm:$0xff]
  %v6124 = vld [vmem:[#allocation5 + $0x370] sm:$0xff]
  %v6125 = vld [vmem:[#allocation5 + $0x378] sm:$0xff]
  %v6126 = vld [vmem:[#allocation5 + $0x380] sm:$0xff]
  %v6127 = vld [vmem:[#allocation5 + $0x388] sm:$0xff]
  %v6128 = vld [vmem:[#allocation5 + $0x390] sm:$0xff]
  %v6129 = vld [vmem:[#allocation5 + $0x398] sm:$0xff]
  %v6130 = vld [vmem:[#allocation5 + $0x3a0] sm:$0xff]
  %v6131 = vld [vmem:[#allocation5 + $0x3a8] sm:$0xff]
  %v6132 = vld [vmem:[#allocation5 + $0x3b0] sm:$0xff]
  %v6133 = vld [vmem:[#allocation5 + $0x3b8] sm:$0xff]
  %v6134 = vld [vmem:[#allocation5 + $0x3c0] sm:$0xff]
  %v6135 = vld [vmem:[#allocation5 + $0x3c8] sm:$0xff]
  %v6136 = vld [vmem:[#allocation5 + $0x3d0] sm:$0xff]
  %v6137 = vld [vmem:[#allocation5 + $0x3d8] sm:$0xff]
  %v6138 = vld [vmem:[#allocation5 + $0x3e0] sm:$0xff]
  %v6139 = vld [vmem:[#allocation5 + $0x3e8] sm:$0xff]
  %v6140 = vld [vmem:[#allocation5 + $0x3f0] sm:$0xff]
  %v6141 = vld [vmem:[#allocation5 + $0x3f8] sm:$0xff]
  %v6142 = vld [vmem:[%s10] sm:$0xf]
  %v6144 = vlaneseq
  %v6145 = vshrl.u32 %v6144, 7
  %v6146 = vsub.s32 0, %v6145
  %v6147 = vrot.slane %v6142, %v6146
  %v6148 = vlaneseq
  %v6149 = vshrl.u32 %v6148, 7
  %v6150 = vsub.s32 1, %v6149
  %v6151 = vrot.slane %v6142, %v6150
  %v6152 = vlaneseq
  %v6153 = vshrl.u32 %v6152, 7
  %v6154 = vsub.s32 2, %v6153
  %v6155 = vrot.slane %v6142, %v6154
  %v6156 = vlaneseq
  %v6157 = vshrl.u32 %v6156, 7
  %v6158 = vsub.s32 3, %v6157
  %v6159 = vrot.slane %v6142, %v6158
  %v6292 = vunpack.c.l.b16 %v6014
  %v6293 = vunpack.c.h.b16 %v6014
  %v6294 = vunpack.c.l.b16 %v6015
  %v6295 = vunpack.c.h.b16 %v6015
  %v6296 = vunpack.c.l.b16 %v6016
  %v6297 = vunpack.c.h.b16 %v6016
  %v6298 = vunpack.c.l.b16 %v6017
  %v6299 = vunpack.c.h.b16 %v6017
  %v6300 = vunpack.c.l.b16 %v6018
  %v6301 = vunpack.c.h.b16 %v6018
  %v6302 = vunpack.c.l.b16 %v6019
  %v6303 = vunpack.c.h.b16 %v6019
  %v6304 = vunpack.c.l.b16 %v6020
  %v6305 = vunpack.c.h.b16 %v6020
  %v6306 = vunpack.c.l.b16 %v6021
  %v6307 = vunpack.c.h.b16 %v6021
  %v6308 = vunpack.c.l.b16 %v6022
  %v6309 = vunpack.c.h.b16 %v6022
  %v6310 = vunpack.c.l.b16 %v6023
  %v6311 = vunpack.c.h.b16 %v6023
  %v6312 = vunpack.c.l.b16 %v6024
  %v6313 = vunpack.c.h.b16 %v6024
  %v6314 = vunpack.c.l.b16 %v6025
  %v6315 = vunpack.c.h.b16 %v6025
  %v6316 = vunpack.c.l.b16 %v6026
  %v6317 = vunpack.c.h.b16 %v6026
  %v6318 = vunpack.c.l.b16 %v6027
  %v6319 = vunpack.c.h.b16 %v6027
  %v6320 = vunpack.c.l.b16 %v6028
  %v6321 = vunpack.c.h.b16 %v6028
  %v6322 = vunpack.c.l.b16 %v6029
  %v6323 = vunpack.c.h.b16 %v6029
  %v6324 = vunpack.c.l.b16 %v6030
  %v6325 = vunpack.c.h.b16 %v6030
  %v6326 = vunpack.c.l.b16 %v6031
  %v6327 = vunpack.c.h.b16 %v6031
  %v6328 = vunpack.c.l.b16 %v6032
  %v6329 = vunpack.c.h.b16 %v6032
  %v6330 = vunpack.c.l.b16 %v6033
  %v6331 = vunpack.c.h.b16 %v6033
  %v6332 = vunpack.c.l.b16 %v6034
  %v6333 = vunpack.c.h.b16 %v6034
  %v6334 = vunpack.c.l.b16 %v6035
  %v6335 = vunpack.c.h.b16 %v6035
  %v6336 = vunpack.c.l.b16 %v6036
  %v6337 = vunpack.c.h.b16 %v6036
  %v6338 = vunpack.c.l.b16 %v6037
  %v6339 = vunpack.c.h.b16 %v6037
  %v6340 = vunpack.c.l.b16 %v6038
  %v6341 = vunpack.c.h.b16 %v6038
  %v6342 = vunpack.c.l.b16 %v6039
  %v6343 = vunpack.c.h.b16 %v6039
  %v6344 = vunpack.c.l.b16 %v6040
  %v6345 = vunpack.c.h.b16 %v6040
  %v6346 = vunpack.c.l.b16 %v6041
  %v6347 = vunpack.c.h.b16 %v6041
  %v6348 = vunpack.c.l.b16 %v6042
  %v6349 = vunpack.c.h.b16 %v6042
  %v6350 = vunpack.c.l.b16 %v6043
  %v6351 = vunpack.c.h.b16 %v6043
  %v6352 = vunpack.c.l.b16 %v6044
  %v6353 = vunpack.c.h.b16 %v6044
  %v6354 = vunpack.c.l.b16 %v6045
  %v6355 = vunpack.c.h.b16 %v6045
  %v6356 = vunpack.c.l.b16 %v6046
  %v6357 = vunpack.c.h.b16 %v6046
  %v6358 = vunpack.c.l.b16 %v6047
  %v6359 = vunpack.c.h.b16 %v6047
  %v6360 = vunpack.c.l.b16 %v6048
  %v6361 = vunpack.c.h.b16 %v6048
  %v6362 = vunpack.c.l.b16 %v6049
  %v6363 = vunpack.c.h.b16 %v6049
  %v6364 = vunpack.c.l.b16 %v6050
  %v6365 = vunpack.c.h.b16 %v6050
  %v6366 = vunpack.c.l.b16 %v6051
  %v6367 = vunpack.c.h.b16 %v6051
  %v6368 = vunpack.c.l.b16 %v6052
  %v6369 = vunpack.c.h.b16 %v6052
  %v6370 = vunpack.c.l.b16 %v6053
  %v6371 = vunpack.c.h.b16 %v6053
  %v6372 = vunpack.c.l.b16 %v6054
  %v6373 = vunpack.c.h.b16 %v6054
  %v6374 = vunpack.c.l.b16 %v6055
  %v6375 = vunpack.c.h.b16 %v6055
  %v6376 = vunpack.c.l.b16 %v6056
  %v6377 = vunpack.c.h.b16 %v6056
  %v6378 = vunpack.c.l.b16 %v6057
  %v6379 = vunpack.c.h.b16 %v6057
  %v6380 = vunpack.c.l.b16 %v6058
  %v6381 = vunpack.c.h.b16 %v6058
  %v6382 = vunpack.c.l.b16 %v6059
  %v6383 = vunpack.c.h.b16 %v6059
  %v6384 = vunpack.c.l.b16 %v6060
  %v6385 = vunpack.c.h.b16 %v6060
  %v6386 = vunpack.c.l.b16 %v6061
  %v6387 = vunpack.c.h.b16 %v6061
  %v6388 = vunpack.c.l.b16 %v6062
  %v6389 = vunpack.c.h.b16 %v6062
  %v6390 = vunpack.c.l.b16 %v6063
  %v6391 = vunpack.c.h.b16 %v6063
  %v6392 = vunpack.c.l.b16 %v6064
  %v6393 = vunpack.c.h.b16 %v6064
  %v6394 = vunpack.c.l.b16 %v6065
  %v6395 = vunpack.c.h.b16 %v6065
  %v6396 = vunpack.c.l.b16 %v6066
  %v6397 = vunpack.c.h.b16 %v6066
  %v6398 = vunpack.c.l.b16 %v6067
  %v6399 = vunpack.c.h.b16 %v6067
  %v6400 = vunpack.c.l.b16 %v6068
  %v6401 = vunpack.c.h.b16 %v6068
  %v6402 = vunpack.c.l.b16 %v6069
  %v6403 = vunpack.c.h.b16 %v6069
  %v6404 = vunpack.c.l.b16 %v6070
  %v6405 = vunpack.c.h.b16 %v6070
  %v6406 = vunpack.c.l.b16 %v6071
  %v6407 = vunpack.c.h.b16 %v6071
  %v6408 = vunpack.c.l.b16 %v6072
  %v6409 = vunpack.c.h.b16 %v6072
  %v6410 = vunpack.c.l.b16 %v6073
  %v6411 = vunpack.c.h.b16 %v6073
  %v6412 = vunpack.c.l.b16 %v6074
  %v6413 = vunpack.c.h.b16 %v6074
  %v6414 = vunpack.c.l.b16 %v6075
  %v6415 = vunpack.c.h.b16 %v6075
  %v6416 = vunpack.c.l.b16 %v6076
  %v6417 = vunpack.c.h.b16 %v6076
  %v6418 = vunpack.c.l.b16 %v6077
  %v6419 = vunpack.c.h.b16 %v6077
  %v6420 = vunpack.c.l.b16 %v6078
  %v6421 = vunpack.c.h.b16 %v6078
  %v6422 = vunpack.c.l.b16 %v6079
  %v6423 = vunpack.c.h.b16 %v6079
  %v6424 = vunpack.c.l.b16 %v6080
  %v6425 = vunpack.c.h.b16 %v6080
  %v6426 = vunpack.c.l.b16 %v6081
  %v6427 = vunpack.c.h.b16 %v6081
  %v6428 = vunpack.c.l.b16 %v6082
  %v6429 = vunpack.c.h.b16 %v6082
  %v6430 = vunpack.c.l.b16 %v6083
  %v6431 = vunpack.c.h.b16 %v6083
  %v6432 = vunpack.c.l.b16 %v6084
  %v6433 = vunpack.c.h.b16 %v6084
  %v6434 = vunpack.c.l.b16 %v6085
  %v6435 = vunpack.c.h.b16 %v6085
  %v6436 = vunpack.c.l.b16 %v6086
  %v6437 = vunpack.c.h.b16 %v6086
  %v6438 = vunpack.c.l.b16 %v6087
  %v6439 = vunpack.c.h.b16 %v6087
  %v6440 = vunpack.c.l.b16 %v6088
  %v6441 = vunpack.c.h.b16 %v6088
  %v6442 = vunpack.c.l.b16 %v6089
  %v6443 = vunpack.c.h.b16 %v6089
  %v6444 = vunpack.c.l.b16 %v6090
  %v6445 = vunpack.c.h.b16 %v6090
  %v6446 = vunpack.c.l.b16 %v6091
  %v6447 = vunpack.c.h.b16 %v6091
  %v6448 = vunpack.c.l.b16 %v6092
  %v6449 = vunpack.c.h.b16 %v6092
  %v6450 = vunpack.c.l.b16 %v6093
  %v6451 = vunpack.c.h.b16 %v6093
  %v6452 = vunpack.c.l.b16 %v6094
  %v6453 = vunpack.c.h.b16 %v6094
  %v6454 = vunpack.c.l.b16 %v6095
  %v6455 = vunpack.c.h.b16 %v6095
  %v6456 = vunpack.c.l.b16 %v6096
  %v6457 = vunpack.c.h.b16 %v6096
  %v6458 = vunpack.c.l.b16 %v6097
  %v6459 = vunpack.c.h.b16 %v6097
  %v6460 = vunpack.c.l.b16 %v6098
  %v6461 = vunpack.c.h.b16 %v6098
  %v6462 = vunpack.c.l.b16 %v6099
  %v6463 = vunpack.c.h.b16 %v6099
  %v6464 = vunpack.c.l.b16 %v6100
  %v6465 = vunpack.c.h.b16 %v6100
  %v6466 = vunpack.c.l.b16 %v6101
  %v6467 = vunpack.c.h.b16 %v6101
  %v6468 = vunpack.c.l.b16 %v6102
  %v6469 = vunpack.c.h.b16 %v6102
  %v6470 = vunpack.c.l.b16 %v6103
  %v6471 = vunpack.c.h.b16 %v6103
  %v6472 = vunpack.c.l.b16 %v6104
  %v6473 = vunpack.c.h.b16 %v6104
  %v6474 = vunpack.c.l.b16 %v6105
  %v6475 = vunpack.c.h.b16 %v6105
  %v6476 = vunpack.c.l.b16 %v6106
  %v6477 = vunpack.c.h.b16 %v6106
  %v6478 = vunpack.c.l.b16 %v6107
  %v6479 = vunpack.c.h.b16 %v6107
  %v6480 = vunpack.c.l.b16 %v6108
  %v6481 = vunpack.c.h.b16 %v6108
  %v6482 = vunpack.c.l.b16 %v6109
  %v6483 = vunpack.c.h.b16 %v6109
  %v6484 = vunpack.c.l.b16 %v6110
  %v6485 = vunpack.c.h.b16 %v6110
  %v6486 = vunpack.c.l.b16 %v6111
  %v6487 = vunpack.c.h.b16 %v6111
  %v6488 = vunpack.c.l.b16 %v6112
  %v6489 = vunpack.c.h.b16 %v6112
  %v6490 = vunpack.c.l.b16 %v6113
  %v6491 = vunpack.c.h.b16 %v6113
  %v6492 = vunpack.c.l.b16 %v6114
  %v6493 = vunpack.c.h.b16 %v6114
  %v6494 = vunpack.c.l.b16 %v6115
  %v6495 = vunpack.c.h.b16 %v6115
  %v6496 = vunpack.c.l.b16 %v6116
  %v6497 = vunpack.c.h.b16 %v6116
  %v6498 = vunpack.c.l.b16 %v6117
  %v6499 = vunpack.c.h.b16 %v6117
  %v6500 = vunpack.c.l.b16 %v6118
  %v6501 = vunpack.c.h.b16 %v6118
  %v6502 = vunpack.c.l.b16 %v6119
  %v6503 = vunpack.c.h.b16 %v6119
  %v6504 = vunpack.c.l.b16 %v6120
  %v6505 = vunpack.c.h.b16 %v6120
  %v6506 = vunpack.c.l.b16 %v6121
  %v6507 = vunpack.c.h.b16 %v6121
  %v6508 = vunpack.c.l.b16 %v6122
  %v6509 = vunpack.c.h.b16 %v6122
  %v6510 = vunpack.c.l.b16 %v6123
  %v6511 = vunpack.c.h.b16 %v6123
  %v6512 = vunpack.c.l.b16 %v6124
  %v6513 = vunpack.c.h.b16 %v6124
  %v6514 = vunpack.c.l.b16 %v6125
  %v6515 = vunpack.c.h.b16 %v6125
  %v6516 = vunpack.c.l.b16 %v6126
  %v6517 = vunpack.c.h.b16 %v6126
  %v6518 = vunpack.c.l.b16 %v6127
  %v6519 = vunpack.c.h.b16 %v6127
  %v6520 = vunpack.c.l.b16 %v6128
  %v6521 = vunpack.c.h.b16 %v6128
  %v6522 = vunpack.c.l.b16 %v6129
  %v6523 = vunpack.c.h.b16 %v6129
  %v6524 = vunpack.c.l.b16 %v6130
  %v6525 = vunpack.c.h.b16 %v6130
  %v6526 = vunpack.c.l.b16 %v6131
  %v6527 = vunpack.c.h.b16 %v6131
  %v6528 = vunpack.c.l.b16 %v6132
  %v6529 = vunpack.c.h.b16 %v6132
  %v6530 = vunpack.c.l.b16 %v6133
  %v6531 = vunpack.c.h.b16 %v6133
  %v6532 = vunpack.c.l.b16 %v6134
  %v6533 = vunpack.c.h.b16 %v6134
  %v6534 = vunpack.c.l.b16 %v6135
  %v6535 = vunpack.c.h.b16 %v6135
  %v6536 = vunpack.c.l.b16 %v6136
  %v6537 = vunpack.c.h.b16 %v6136
  %v6538 = vunpack.c.l.b16 %v6137
  %v6539 = vunpack.c.h.b16 %v6137
  %v6540 = vunpack.c.l.b16 %v6138
  %v6541 = vunpack.c.h.b16 %v6138
  %v6542 = vunpack.c.l.b16 %v6139
  %v6543 = vunpack.c.h.b16 %v6139
  %v6544 = vunpack.c.l.b16 %v6140
  %v6545 = vunpack.c.h.b16 %v6140
  %v6546 = vunpack.c.l.b16 %v6141
  %v6547 = vunpack.c.h.b16 %v6141
  %v6548 = vpack.c.b16 %v6296, %v6292
  %v6549 = vpack.c.b16 %v6297, %v6293
  %v6550 = vpack.c.b16 %v6298, %v6294
  %v6551 = vpack.c.b16 %v6299, %v6295
  %v6552 = vpack.c.b16 %v6304, %v6300
  %v6553 = vpack.c.b16 %v6305, %v6301
  %v6554 = vpack.c.b16 %v6306, %v6302
  %v6555 = vpack.c.b16 %v6307, %v6303
  %v6556 = vpack.c.b16 %v6312, %v6308
  %v6557 = vpack.c.b16 %v6313, %v6309
  %v6558 = vpack.c.b16 %v6314, %v6310
  %v6559 = vpack.c.b16 %v6315, %v6311
  %v6560 = vpack.c.b16 %v6320, %v6316
  %v6561 = vpack.c.b16 %v6321, %v6317
  %v6562 = vpack.c.b16 %v6322, %v6318
  %v6563 = vpack.c.b16 %v6323, %v6319
  %v6564 = vpack.c.b16 %v6328, %v6324
  %v6565 = vpack.c.b16 %v6329, %v6325
  %v6566 = vpack.c.b16 %v6330, %v6326
  %v6567 = vpack.c.b16 %v6331, %v6327
  %v6568 = vpack.c.b16 %v6336, %v6332
  %v6569 = vpack.c.b16 %v6337, %v6333
  %v6570 = vpack.c.b16 %v6338, %v6334
  %v6571 = vpack.c.b16 %v6339, %v6335
  %v6572 = vpack.c.b16 %v6344, %v6340
  %v6573 = vpack.c.b16 %v6345, %v6341
  %v6574 = vpack.c.b16 %v6346, %v6342
  %v6575 = vpack.c.b16 %v6347, %v6343
  %v6576 = vpack.c.b16 %v6352, %v6348
  %v6577 = vpack.c.b16 %v6353, %v6349
  %v6578 = vpack.c.b16 %v6354, %v6350
  %v6579 = vpack.c.b16 %v6355, %v6351
  %v6580 = vpack.c.b16 %v6360, %v6356
  %v6581 = vpack.c.b16 %v6361, %v6357
  %v6582 = vpack.c.b16 %v6362, %v6358
  %v6583 = vpack.c.b16 %v6363, %v6359
  %v6584 = vpack.c.b16 %v6368, %v6364
  %v6585 = vpack.c.b16 %v6369, %v6365
  %v6586 = vpack.c.b16 %v6370, %v6366
  %v6587 = vpack.c.b16 %v6371, %v6367
  %v6588 = vpack.c.b16 %v6376, %v6372
  %v6589 = vpack.c.b16 %v6377, %v6373
  %v6590 = vpack.c.b16 %v6378, %v6374
  %v6591 = vpack.c.b16 %v6379, %v6375
  %v6592 = vpack.c.b16 %v6384, %v6380
  %v6593 = vpack.c.b16 %v6385, %v6381
  %v6594 = vpack.c.b16 %v6386, %v6382
  %v6595 = vpack.c.b16 %v6387, %v6383
  %v6596 = vpack.c.b16 %v6392, %v6388
  %v6597 = vpack.c.b16 %v6393, %v6389
  %v6598 = vpack.c.b16 %v6394, %v6390
  %v6599 = vpack.c.b16 %v6395, %v6391
  %v6600 = vpack.c.b16 %v6400, %v6396
  %v6601 = vpack.c.b16 %v6401, %v6397
  %v6602 = vpack.c.b16 %v6402, %v6398
  %v6603 = vpack.c.b16 %v6403, %v6399
  %v6604 = vpack.c.b16 %v6408, %v6404
  %v6605 = vpack.c.b16 %v6409, %v6405
  %v6606 = vpack.c.b16 %v6410, %v6406
  %v6607 = vpack.c.b16 %v6411, %v6407
  %v6608 = vpack.c.b16 %v6416, %v6412
  %v6609 = vpack.c.b16 %v6417, %v6413
  %v6610 = vpack.c.b16 %v6418, %v6414
  %v6611 = vpack.c.b16 %v6419, %v6415
  %v6612 = vpack.c.b16 %v6424, %v6420
  %v6613 = vpack.c.b16 %v6425, %v6421
  %v6614 = vpack.c.b16 %v6426, %v6422
  %v6615 = vpack.c.b16 %v6427, %v6423
  %v6616 = vpack.c.b16 %v6432, %v6428
  %v6617 = vpack.c.b16 %v6433, %v6429
  %v6618 = vpack.c.b16 %v6434, %v6430
  %v6619 = vpack.c.b16 %v6435, %v6431
  %v6620 = vpack.c.b16 %v6440, %v6436
  %v6621 = vpack.c.b16 %v6441, %v6437
  %v6622 = vpack.c.b16 %v6442, %v6438
  %v6623 = vpack.c.b16 %v6443, %v6439
  %v6624 = vpack.c.b16 %v6448, %v6444
  %v6625 = vpack.c.b16 %v6449, %v6445
  %v6626 = vpack.c.b16 %v6450, %v6446
  %v6627 = vpack.c.b16 %v6451, %v6447
  %v6628 = vpack.c.b16 %v6456, %v6452
  %v6629 = vpack.c.b16 %v6457, %v6453
  %v6630 = vpack.c.b16 %v6458, %v6454
  %v6631 = vpack.c.b16 %v6459, %v6455
  %v6632 = vpack.c.b16 %v6464, %v6460
  %v6633 = vpack.c.b16 %v6465, %v6461
  %v6634 = vpack.c.b16 %v6466, %v6462
  %v6635 = vpack.c.b16 %v6467, %v6463
  %v6636 = vpack.c.b16 %v6472, %v6468
  %v6637 = vpack.c.b16 %v6473, %v6469
  %v6638 = vpack.c.b16 %v6474, %v6470
  %v6639 = vpack.c.b16 %v6475, %v6471
  %v6640 = vpack.c.b16 %v6480, %v6476
  %v6641 = vpack.c.b16 %v6481, %v6477
  %v6642 = vpack.c.b16 %v6482, %v6478
  %v6643 = vpack.c.b16 %v6483, %v6479
  %v6644 = vpack.c.b16 %v6488, %v6484
  %v6645 = vpack.c.b16 %v6489, %v6485
  %v6646 = vpack.c.b16 %v6490, %v6486
  %v6647 = vpack.c.b16 %v6491, %v6487
  %v6648 = vpack.c.b16 %v6496, %v6492
  %v6649 = vpack.c.b16 %v6497, %v6493
  %v6650 = vpack.c.b16 %v6498, %v6494
  %v6651 = vpack.c.b16 %v6499, %v6495
  %v6652 = vpack.c.b16 %v6504, %v6500
  %v6653 = vpack.c.b16 %v6505, %v6501
  %v6654 = vpack.c.b16 %v6506, %v6502
  %v6655 = vpack.c.b16 %v6507, %v6503
  %v6656 = vpack.c.b16 %v6512, %v6508
  %v6657 = vpack.c.b16 %v6513, %v6509
  %v6658 = vpack.c.b16 %v6514, %v6510
  %v6659 = vpack.c.b16 %v6515, %v6511
  %v6660 = vpack.c.b16 %v6520, %v6516
  %v6661 = vpack.c.b16 %v6521, %v6517
  %v6662 = vpack.c.b16 %v6522, %v6518
  %v6663 = vpack.c.b16 %v6523, %v6519
  %v6664 = vpack.c.b16 %v6528, %v6524
  %v6665 = vpack.c.b16 %v6529, %v6525
  %v6666 = vpack.c.b16 %v6530, %v6526
  %v6667 = vpack.c.b16 %v6531, %v6527
  %v6668 = vpack.c.b16 %v6536, %v6532
  %v6669 = vpack.c.b16 %v6537, %v6533
  %v6670 = vpack.c.b16 %v6538, %v6534
  %v6671 = vpack.c.b16 %v6539, %v6535
  %v6672 = vpack.c.b16 %v6544, %v6540
  %v6673 = vpack.c.b16 %v6545, %v6541
  %v6674 = vpack.c.b16 %v6546, %v6542
  %v6675 = vpack.c.b16 %v6547, %v6543
  %6804 = vmatprep.subr.bf16.mxu0 %v6577
  %6805 = vmatpush1.bf16.msra.mxu0 %v6576
  %6806 = vmatprep.subr.bf16.mxu0 %v6573
  %6807 = vmatpush1.bf16.msra.mxu0 %v6572
  %6808 = vmatprep.subr.bf16.mxu0 %v6569
  %6809 = vmatpush1.bf16.msra.mxu0 %v6568
  %6810 = vmatprep.subr.bf16.mxu0 %v6565
  %6811 = vmatpush1.bf16.msra.mxu0 %v6564
  %6812 = vmatprep.subr.bf16.mxu0 %v6561
  %6813 = vmatpush1.bf16.msra.mxu0 %v6560
  %6814 = vmatprep.subr.bf16.mxu0 %v6557
  %6815 = vmatpush1.bf16.msra.mxu0 %v6556
  %6816 = vmatprep.subr.bf16.mxu0 %v6553
  %6817 = vmatpush1.bf16.msra.mxu0 %v6552
  %6818 = vmatprep.subr.bf16.mxu0 %v6549
  %6819 = vmatpush1.bf16.msra.mxu0 %v6548
  %6820 = vmatprep.subr.bf16.mxu0 %v6609
  %6821 = vmatpush2.bf16.msra.mxu0 %v6608
  %6822 = vmatprep.subr.bf16.mxu0 %v6605
  %6823 = vmatpush2.bf16.msra.mxu0 %v6604
  %6824 = vmatprep.subr.bf16.mxu0 %v6601
  %6825 = vmatpush2.bf16.msra.mxu0 %v6600
  %6826 = vmatprep.subr.bf16.mxu0 %v6597
  %6827 = vmatpush2.bf16.msra.mxu0 %v6596
  %6828 = vmatprep.subr.bf16.mxu0 %v6593
  %6829 = vmatpush2.bf16.msra.mxu0 %v6592
  %6830 = vmatprep.subr.bf16.mxu0 %v6589
  %6831 = vmatpush2.bf16.msra.mxu0 %v6588
  %6832 = vmatprep.subr.bf16.mxu0 %v6585
  %6833 = vmatpush2.bf16.msra.mxu0 %v6584
  %6834 = vmatprep.subr.bf16.mxu0 %v6581
  %6835 = vmatpush2.bf16.msra.mxu0 %v6580
  %6836 = vmatprep.mubr.bf16.mxu0 %v6011
  %6837 = vmatmul.mubr.bf16.gmra.mxu0 %v6010
  %v6838 = vpop.f32.mrf.mxu0
  %v6839 = vadd.f32 %v6147, %v6838
  %v6840 = vpop.f32.mrf.mxu0
  %v6841 = vadd.f32 %v6151, %v6840
  %v6842 = vpop.f32.mrf.mxu0
  %v6843 = vpop.f32.mrf.mxu0
  %6844 = vdwg.mxu0
  %6845 = vmatprep.subr.bf16.mxu0 %v6641
  %6846 = vmatpush1.bf16.msra.mxu0 %v6640
  %6847 = vmatprep.subr.bf16.mxu0 %v6637
  %6848 = vmatpush1.bf16.msra.mxu0 %v6636
  %6849 = vmatprep.subr.bf16.mxu0 %v6633
  %6850 = vmatpush1.bf16.msra.mxu0 %v6632
  %6851 = vmatprep.subr.bf16.mxu0 %v6629
  %6852 = vmatpush1.bf16.msra.mxu0 %v6628
  %6853 = vmatprep.subr.bf16.mxu0 %v6625
  %6854 = vmatpush1.bf16.msra.mxu0 %v6624
  %6855 = vmatprep.subr.bf16.mxu0 %v6621
  %6856 = vmatpush1.bf16.msra.mxu0 %v6620
  %6857 = vmatprep.subr.bf16.mxu0 %v6617
  %6858 = vmatpush1.bf16.msra.mxu0 %v6616
  %6859 = vmatprep.subr.bf16.mxu0 %v6613
  %6860 = vmatpush1.bf16.msra.mxu0 %v6612
  %6861 = vmatprep.subr.bf16.mxu0 %v6673
  %6862 = vmatpush2.bf16.msra.mxu0 %v6672
  %6863 = vmatprep.subr.bf16.mxu0 %v6669
  %6864 = vmatpush2.bf16.msra.mxu0 %v6668
  %6865 = vmatprep.subr.bf16.mxu0 %v6665
  %6866 = vmatpush2.bf16.msra.mxu0 %v6664
  %6867 = vmatprep.subr.bf16.mxu0 %v6661
  %6868 = vmatpush2.bf16.msra.mxu0 %v6660
  %6869 = vmatprep.subr.bf16.mxu0 %v6657
  %6870 = vmatpush2.bf16.msra.mxu0 %v6656
  %6871 = vmatprep.subr.bf16.mxu0 %v6653
  %6872 = vmatpush2.bf16.msra.mxu0 %v6652
  %6873 = vmatprep.subr.bf16.mxu0 %v6649
  %6874 = vmatpush2.bf16.msra.mxu0 %v6648
  %6875 = vmatprep.subr.bf16.mxu0 %v6645
  %6876 = vmatpush2.bf16.msra.mxu0 %v6644
  %6877 = vmatprep.mubr.bf16.mxu0 %v6013
  %6878 = vmatmul.mubr.bf16.gmra.mxu0 %v6012
  %v6879 = vpop.f32.mrf.mxu0
  %v6880 = vadd.f32 %v6839, %v6879
  %v6881 = vpop.f32.mrf.mxu0
  %v6882 = vadd.f32 %v6841, %v6881
  %v6883 = vpop.f32.mrf.mxu0
  %v6884 = vpop.f32.mrf.mxu0
  %6885 = vdwg.mxu0
  %6886 = vmatprep.subr.bf16.mxu0 %v6579
  %6887 = vmatpush1.bf16.msra.mxu0 %v6578
  %6888 = vmatprep.subr.bf16.mxu0 %v6575
  %6889 = vmatpush1.bf16.msra.mxu0 %v6574
  %6890 = vmatprep.subr.bf16.mxu0 %v6571
  %6891 = vmatpush1.bf16.msra.mxu0 %v6570
  %6892 = vmatprep.subr.bf16.mxu0 %v6567
  %6893 = vmatpush1.bf16.msra.mxu0 %v6566
  %6894 = vmatprep.subr.bf16.mxu0 %v6563
  %6895 = vmatpush1.bf16.msra.mxu0 %v6562
  %6896 = vmatprep.subr.bf16.mxu0 %v6559
  %6897 = vmatpush1.bf16.msra.mxu0 %v6558
  %6898 = vmatprep.subr.bf16.mxu0 %v6555
  %6899 = vmatpush1.bf16.msra.mxu0 %v6554
  %6900 = vmatprep.subr.bf16.mxu0 %v6551
  %6901 = vmatpush1.bf16.msra.mxu0 %v6550
  %6902 = vmatprep.subr.bf16.mxu0 %v6611
  %6903 = vmatpush2.bf16.msra.mxu0 %v6610
  %6904 = vmatprep.subr.bf16.mxu0 %v6607
  %6905 = vmatpush2.bf16.msra.mxu0 %v6606
  %6906 = vmatprep.subr.bf16.mxu0 %v6603
  %6907 = vmatpush2.bf16.msra.mxu0 %v6602
  %6908 = vmatprep.subr.bf16.mxu0 %v6599
  %6909 = vmatpush2.bf16.msra.mxu0 %v6598
  %6910 = vmatprep.subr.bf16.mxu0 %v6595
  %6911 = vmatpush2.bf16.msra.mxu0 %v6594
  %6912 = vmatprep.subr.bf16.mxu0 %v6591
  %6913 = vmatpush2.bf16.msra.mxu0 %v6590
  %6914 = vmatprep.subr.bf16.mxu0 %v6587
  %6915 = vmatpush2.bf16.msra.mxu0 %v6586
  %6916 = vmatprep.subr.bf16.mxu0 %v6583
  %6917 = vmatpush2.bf16.msra.mxu0 %v6582
  %6918 = vmatprep.mubr.bf16.mxu0 %v6011
  %6919 = vmatmul.mubr.bf16.gmra.mxu0 %v6010
  %v6920 = vpop.f32.mrf.mxu0
  %v6921 = vadd.f32 %v6155, %v6920
  %v6922 = vpop.f32.mrf.mxu0
  %v6923 = vadd.f32 %v6159, %v6922
  %v6924 = vpop.f32.mrf.mxu0
  %v6925 = vpop.f32.mrf.mxu0
  %6926 = vdwg.mxu0
  %6927 = vmatprep.subr.bf16.mxu0 %v6643
  %6928 = vmatpush1.bf16.msra.mxu0 %v6642
  %6929 = vmatprep.subr.bf16.mxu0 %v6639
  %6930 = vmatpush1.bf16.msra.mxu0 %v6638
  %6931 = vmatprep.subr.bf16.mxu0 %v6635
  %6932 = vmatpush1.bf16.msra.mxu0 %v6634
  %6933 = vmatprep.subr.bf16.mxu0 %v6631
  %6934 = vmatpush1.bf16.msra.mxu0 %v6630
  %6935 = vmatprep.subr.bf16.mxu0 %v6627
  %6936 = vmatpush1.bf16.msra.mxu0 %v6626
  %6937 = vmatprep.subr.bf16.mxu0 %v6623
  %6938 = vmatpush1.bf16.msra.mxu0 %v6622
  %6939 = vmatprep.subr.bf16.mxu0 %v6619
  %6940 = vmatpush1.bf16.msra.mxu0 %v6618
  %6941 = vmatprep.subr.bf16.mxu0 %v6615
  %6942 = vmatpush1.bf16.msra.mxu0 %v6614
  %6943 = vmatprep.subr.bf16.mxu0 %v6675
  %6944 = vmatpush2.bf16.msra.mxu0 %v6674
  %6945 = vmatprep.subr.bf16.mxu0 %v6671
  %6946 = vmatpush2.bf16.msra.mxu0 %v6670
  %6947 = vmatprep.subr.bf16.mxu0 %v6667
  %6948 = vmatpush2.bf16.msra.mxu0 %v6666
  %6949 = vmatprep.subr.bf16.mxu0 %v6663
  %6950 = vmatpush2.bf16.msra.mxu0 %v6662
  %6951 = vmatprep.subr.bf16.mxu0 %v6659
  %6952 = vmatpush2.bf16.msra.mxu0 %v6658
  %6953 = vmatprep.subr.bf16.mxu0 %v6655
  %6954 = vmatpush2.bf16.msra.mxu0 %v6654
  %6955 = vmatprep.subr.bf16.mxu0 %v6651
  %6956 = vmatpush2.bf16.msra.mxu0 %v6650
  %6957 = vmatprep.subr.bf16.mxu0 %v6647
  %6958 = vmatpush2.bf16.msra.mxu0 %v6646
  %6959 = vmatprep.mubr.bf16.mxu0 %v6013
  %6960 = vmatmul.mubr.bf16.gmra.mxu0 %v6012
  %v6961 = vpop.f32.mrf.mxu0
  %v6962 = vadd.f32 %v6921, %v6961
  %v6963 = vpop.f32.mrf.mxu0
  %v6964 = vadd.f32 %v6923, %v6963
  %v6965 = vpop.f32.mrf.mxu0
  %v6966 = vpop.f32.mrf.mxu0
  %6967 = vdwg.mxu0
  %6968 = vst [vmem:[%s13] sm:$0xff] %v6880
  %6969 = vst [vmem:[%s13 + $0x8] sm:$0xff] %v6882
  %6970 = vst [vmem:[%s13 + $0x10] sm:$0xff] %v6962
  %6971 = vst [vmem:[%s13 + $0x18] sm:$0xff] %v6964
  // Predicated region
  $region114: #{predictor_forward.1} parent=0 // pred_check
    _
  $region115: #{predictor_forward.1} parent=0 // pred_check_branch
    %6973 = sbr.rel (0) target = $region117
  $region116: #{predictor_forward.1} parent=0 // pred_region
    _
  $region117: #{predictor_forward.1} parent=0 // pred_fallthru
    _
  // Predicated region
  $region118: #{predictor_forward.1} parent=0 // pred_check
    _
  $region119: #{predictor_forward.1} parent=0 // pred_check_branch
    %6975 = sbr.rel (0) target = $region121
  $region120: #{predictor_forward.1} parent=0 // pred_region
    _
  $region121: #{predictor_forward.1} parent=0 // pred_fallthru
    _
  %6976 = vsyncmov [#allocation6]
  %s6977 = vpop.sfrf %6976
  %p6978 = scmp.eq.s32.totalorder %s6977, 0
  %p6979 = pneg %p6978
  %6981 = shalt.err (%p6979)
  %s6982 = scalar_lea.sflag [#allocation6], 1
  %6983 = vsyncmov %s6982
  %s6984 = vpop.sfrf %6983
  %p6985 = scmp.eq.s32.totalorder %s6984, 0
  %p6986 = pneg %p6985
  %6988 = shalt.err (%p6986)

</llo_original>
